<compile_context>
chip_gen: v7x
topology: tpu7x:2x2x1
jax: 0.10.0
libtpu: 0.0.40
codegen_flags: <defaults>
</compile_context>

<pallas_src>
import math
import functools

import jax
import jax.numpy as jnp
from jax.experimental import pallas as pl
from jax.experimental.pallas import tpu as pltpu


# ---------------------------------------------------------------------------
# helpers
# ---------------------------------------------------------------------------
W_KEYS = ("wqkv", "bqkv", "wo", "bo", "ln1w", "ln1b",
          "w1", "b1", "w2", "b2", "ln2w", "ln2b")

_VMEM_LIMIT = 48 * 1024 * 1024   # fits v5e/v6e (128 MiB) and v7x (64 MiB) physical


def sinusoidal_pe(max_len: int, d_model: int) -> jnp.ndarray:
    position = jnp.arange(max_len, dtype=jnp.float32)[:, None]
    div_term = jnp.exp(
        jnp.arange(0, d_model, 2, dtype=jnp.float32) * (-math.log(10000.0) / d_model)
    )
    pe = jnp.zeros((max_len, d_model), dtype=jnp.float32)
    pe = pe.at[:, 0::2].set(jnp.sin(position * div_term))
    pe = pe.at[:, 1::2].set(jnp.cos(position * div_term))
    return pe


def _layer_norm(x, gamma, beta, eps=1e-5):
    mean = jnp.mean(x, axis=-1, keepdims=True)
    var = jnp.mean((x - mean) ** 2, axis=-1, keepdims=True)
    return (x - mean) * jax.lax.rsqrt(var + eps) * gamma + beta


def _encoder_layer(h, w, l, nhead, key_bias=None):
    """One post-norm PyTorch-style TransformerEncoderLayer on a (Bb, S, D) block.

    All token-pointwise projections run as flattened (Bb*S, D) @ (D, E) matmuls
    (MXU M dimension filled, no broadcasted weight copies).  Attention scores
    are batched over Bb per head; head contexts are concatenated and the output
    projection wo is applied once (K=D).
    """
    Bb, S, D = h.shape
    dh = D // nhead
    scale = 1.0 / math.sqrt(dh)

    h2 = h.reshape(Bb * S, D)

    qkv = jnp.dot(h2, w["wqkv"][l], preferred_element_type=jnp.float32) + w["bqkv"][l]
    qkv = qkv.reshape(Bb, S, 3 * D)
    q = qkv[:, :, 0:D]
    k = qkv[:, :, D:2 * D]
    v = qkv[:, :, 2 * D:3 * D]

    ctx_heads = []
    for hh in range(nhead):                               # static, small loop
        sl = slice(hh * dh, (hh + 1) * dh)
        s = jnp.einsum("bqd,bkd->bqk", q[:, :, sl], k[:, :, sl],
                       preferred_element_type=jnp.float32) * scale
        if key_bias is not None:
            s = s + key_bias                              # (Bb, 1, S): mask padded keys
        s = s - jnp.max(s, axis=-1, keepdims=True)
        p = jnp.exp(s)
        p = p * pl.reciprocal(jnp.sum(p, axis=-1, keepdims=True), approx=True)
        ctx_heads.append(jnp.einsum("bqk,bkd->bqd", p, v[:, :, sl],
                                    preferred_element_type=jnp.float32))
    ctx = jnp.concatenate(ctx_heads, axis=-1)             # (Bb, S, D)

    attn = jnp.dot(ctx.reshape(Bb * S, D), w["wo"][l],
                   preferred_element_type=jnp.float32) + w["bo"][l]

    # residual + LayerNorm 1 (post-norm)
    y = _layer_norm(h2 + attn, w["ln1w"][l], w["ln1b"][l])     # (Bb*S, D)

    # feed-forward (ReLU)
    f = jnp.dot(y, w["w1"][l], preferred_element_type=jnp.float32) + w["b1"][l]
    f = jnp.maximum(f, 0.0)
    f = jnp.dot(f, w["w2"][l], preferred_element_type=jnp.float32) + w["b2"][l]

    # residual + LayerNorm 2
    out = _layer_norm(y + f, w["ln2w"][l], w["ln2b"][l])
    return out.reshape(Bb, S, D)


# ---------------------------------------------------------------------------
# kernel 1: all spatial encoder layers + joint partial sum (per joint-group)
# ---------------------------------------------------------------------------
def spatial_kernel(h_ref, *rest, nhead, n_layers):
    *w_refs, o_ref = rest
    w = dict(zip(W_KEYS, w_refs))

    h = h_ref[...]                                         # (Jg, N=B*F, D), emb+PE done
    for l in range(n_layers):                              # attention over B*F, batch=joints
        h = _encoder_layer(h, w, l, nhead)

    # partial sum over this group's joints; the temporal kernel finishes the mean
    o_ref[0] = jnp.sum(h, axis=0)                          # (N, D)


# ---------------------------------------------------------------------------
# kernel 2: joint-mean + temporal PE + temporal layers + masked pool + classifier
# ---------------------------------------------------------------------------
def temporal_kernel(sp_ref, pe_ref, pw_ref, *rest,
                    nhead, n_layers, inv_joints, has_mask):
    if has_mask:
        kb_ref, *rest = rest
    *w_refs, cw_ref, cb_ref, o_ref = rest
    w = dict(zip(W_KEYS, w_refs))

    B = o_ref.shape[0]
    _, F, D = pe_ref.shape

    # finish mean over joints (sum of per-group partial sums) + temporal PE
    xt = jnp.sum(sp_ref[...], axis=0) * inv_joints         # (B*F, D)
    xt = xt.reshape(B, F, D) + pe_ref[...]                 # (B, F, D)

    key_bias = kb_ref[...] if has_mask else None           # (B, 1, F) or None

    for l in range(n_layers):
        xt = _encoder_layer(xt, w, l, nhead, key_bias=key_bias)

    # pooled mean over frames: pool weights (mask/count or 1/F) precomputed host-side
    pooled = jnp.sum(xt * pw_ref[...], axis=1)              # (B,F,D)*(B,F,1) -> (B, D)

    o_ref[...] = jnp.dot(pooled, cw_ref[...],
                         preferred_element_type=jnp.float32) + cb_ref[...]   # (B, C)


# ---------------------------------------------------------------------------
# full model forward (2 pallas_calls)
# ---------------------------------------------------------------------------
def _stack_layers(layers):
    return {k: jnp.stack([lp[k] for lp in layers], axis=0) for k in W_KEYS}


def _full_spec(shape):
    rank = len(shape)
    return pl.BlockSpec(shape, lambda *_, _r=rank: (0,) * _r)


def hierarchical_transformer_forward(params, x, nhead, temporal_mask=None):
    B, F, J, _ = x.shape
    D = params["emb_w"].shape[1]
    n_classes = params["cls_w"].shape[1]
    n_sp = len(params["spatial_layers"])
    n_tm = len(params["temporal_layers"])
    N = B * F

    # 2-way split over joints: shards the fused spatial kernel across v7x's two
    # TensorCores; on v5e/v6e the grid is just a 2-step sequential loop.
    n_groups = 2 if (J % 2 == 0 and J >= 2) else 1
    Jg = J // n_groups

    sp_w = _stack_layers(params["spatial_layers"])
    tm_w = _stack_layers(params["temporal_layers"])
    sp_vals = [sp_w[k] for k in W_KEYS]
    tm_vals = [tm_w[k] for k in W_KEYS]

    # Embedding (3 -> D) + per-joint PE host-side in XLA; kernel input is the
    # lane-dense (J, B*F, D) layout the reference's batch_first encoder sees
    # (spatial self-attention over the B*F axis with joints as batch).
    h0 = x.astype(jnp.float32) @ params["emb_w"] + params["emb_b"]        # (B,F,J,D)
    h0 = jnp.transpose(h0.reshape(N, J, D), (1, 0, 2))                    # (J, N, D)
    h0 = h0 + params["pe_spatial"][:, None, :]

    sp_partial = pl.pallas_call(
        functools.partial(spatial_kernel, nhead=nhead, n_layers=n_sp),
        out_shape=jax.ShapeDtypeStruct((n_groups, N, D), jnp.float32),
        grid=(n_groups,),
        in_specs=[pl.BlockSpec((Jg, N, D), lambda g: (g, 0, 0))]
                 + [_full_spec(v.shape) for v in sp_vals],
        out_specs=pl.BlockSpec((1, N, D), lambda g: (g, 0, 0)),
        compiler_params=pltpu.CompilerParams(
            dimension_semantics=("parallel",),
            vmem_limit_bytes=_VMEM_LIMIT),
    )(h0, *sp_vals)

    pe_t = params["pe_temporal"].reshape(1, F, D)

    has_mask = temporal_mask is not None
    if has_mask:
        m = temporal_mask.astype(jnp.float32)                             # (B, F)
        key_bias = jnp.where(m == 0.0, jnp.float32(-1e30),
                             jnp.float32(0.0)).reshape(B, 1, F)
        pool_w = (m / (jnp.sum(m, axis=1, keepdims=True) + 1e-8)).reshape(B, F, 1)
        mask_args = [key_bias]
        mask_specs = [_full_spec((B, 1, F))]
    else:
        pool_w = jnp.full((B, F, 1), 1.0 / F, jnp.float32)                # exact mean
        mask_args, mask_specs = [], []

    logits = pl.pallas_call(
        functools.partial(temporal_kernel, nhead=nhead, n_layers=n_tm,
                          inv_joints=1.0 / J, has_mask=has_mask),
        out_shape=jax.ShapeDtypeStruct((B, n_classes), jnp.float32),
        grid=(1,),
        in_specs=[_full_spec((n_groups, N, D)),
                  _full_spec((1, F, D)),
                  _full_spec((B, F, 1))]
                 + mask_specs
                 + [_full_spec(v.shape) for v in tm_vals]
                 + [_full_spec((D, n_classes)), _full_spec((1, n_classes))],
        out_specs=_full_spec((B, n_classes)),
        compiler_params=pltpu.CompilerParams(
            dimension_semantics=("arbitrary",),
            vmem_limit_bytes=_VMEM_LIMIT),
    )(sp_partial, pe_t, pool_w, *mask_args, *tm_vals,
      params["cls_w"], params["cls_b"])

    return logits


# ---------------------------------------------------------------------------
# pure-JAX reference (mirrors the PyTorch module) for a numerical self-check
# ---------------------------------------------------------------------------
def _ref_encoder_layer(x, lp, nhead, key_bias=None):
    Bb, S, D = x.shape
    dh = D // nhead
    qkv = x @ lp["wqkv"] + lp["bqkv"]
    q, k, v = qkv[..., :D], qkv[..., D:2 * D], qkv[..., 2 * D:]
    q = q.reshape(Bb, S, nhead, dh).transpose(0, 2, 1, 3)
    k = k.reshape(Bb, S, nhead, dh).transpose(0, 2, 1, 3)
    v = v.reshape(Bb, S, nhead, dh).transpose(0, 2, 1, 3)
    s = jnp.einsum("bhqd,bhkd->bhqk", q, k) / math.sqrt(dh)
    if key_bias is not None:
        s = s + key_bias[:, None, None, :]
    p = jax.nn.softmax(s, axis=-1)
    ctx = jnp.einsum("bhqk,bhkd->bhqd", p, v).transpose(0, 2, 1, 3).reshape(Bb, S, D)
    attn = ctx @ lp["wo"] + lp["bo"]
    y = _layer_norm(x + attn, lp["ln1w"], lp["ln1b"])
    f = jnp.maximum(y @ lp["w1"] + lp["b1"], 0.0) @ lp["w2"] + lp["b2"]
    return _layer_norm(y + f, lp["ln2w"], lp["ln2b"])


def reference_forward(params, x, nhead, temporal_mask=None):
    B, F, J, _ = x.shape
    D = params["emb_w"].shape[1]
    h = x.astype(jnp.float32) @ params["emb_w"] + params["emb_b"]      # (B,F,J,D)
    hs = jnp.transpose(h.reshape(B * F, J, D), (1, 0, 2))              # (J, B*F, D)
    hs = hs + params["pe_spatial"][:, None, :]
    for lp in params["spatial_layers"]:
        hs = _ref_encoder_layer(hs, lp, nhead)
    h = jnp.transpose(hs, (1, 0, 2)).reshape(B, F, J, D)
    xt = h.mean(axis=2) + params["pe_temporal"][None]
    kb = None
    if temporal_mask is not None:
        kb = jnp.where(temporal_mask.astype(jnp.float32) == 0.0, -1e30, 0.0)
    for lp in params["temporal_layers"]:
        xt = _ref_encoder_layer(xt, lp, nhead, key_bias=kb)
    if temporal_mask is not None:
        m = temporal_mask.astype(jnp.float32)
        pooled = (xt * m[:, :, None]).sum(axis=1) / (m.sum(axis=1, keepdims=True) + 1e-8)
    else:
        pooled = xt.mean(axis=1)
    return pooled @ params["cls_w"] + params["cls_b"]


# ---------------------------------------------------------------------------
# deterministic parameter init (synthetic weights; W stored as torch-weight^T)
# ---------------------------------------------------------------------------
def init_params(key, num_joints, num_frames, d_model, n_sp, n_tm, num_classes, dff):
    keys = iter(jax.random.split(key, 64))

    def w(shape, scale=0.05):
        return (scale * jax.random.normal(next(keys), shape)).astype(jnp.float32)

    def layer_params():
        return dict(
            wqkv=w((d_model, 3 * d_model)), bqkv=w((1, 3 * d_model)),
            wo=w((d_model, d_model)), bo=w((1, d_model)),
            ln1w=jnp.ones((1, d_model), jnp.float32),
            ln1b=jnp.zeros((1, d_model), jnp.float32),
            w1=w((d_model, dff)), b1=w((1, dff)),
            w2=w((dff, d_model)), b2=w((1, d_model)),
            ln2w=jnp.ones((1, d_model), jnp.float32),
            ln2b=jnp.zeros((1, d_model), jnp.float32),
        )

    return dict(
        emb_w=w((3, d_model)), emb_b=w((1, d_model)),
        pe_spatial=sinusoidal_pe(num_joints, d_model),
        pe_temporal=sinusoidal_pe(num_frames, d_model),
        spatial_layers=[layer_params() for _ in range(n_sp)],
        temporal_layers=[layer_params() for _ in range(n_tm)],
        cls_w=w((d_model, num_classes)), cls_b=w((1, num_classes)),
    )


# ---------------------------------------------------------------------------
if __name__ == "__main__":
    B, F, J = 2, 8, 8
    d_model, nhead, num_classes, dff = 32, 4, 5, 64
    num_spatial_layers, num_temporal_layers = 1, 1

    key = jax.random.PRNGKey(0)
    kp, kx = jax.random.split(key)
    params = init_params(kp, J, F, d_model, num_spatial_layers,
                         num_temporal_layers, num_classes, dff)

    x = jax.random.normal(kx, (B, F, J, 3), dtype=jnp.float32)
    temporal_mask = jnp.array(
        [[1, 1, 1, 1, 1, 1, 1, 1],
         [1, 1, 1, 1, 1, 1, 0, 0]], dtype=jnp.float32
    )

    @jax.jit
    def run_masked(p, xx, mm):
        return hierarchical_transformer_forward(p, xx, nhead, temporal_mask=mm)

    @jax.jit
    def run_nomask(p, xx):
        return hierarchical_transformer_forward(p, xx, nhead, temporal_mask=None)

    logits = jax.block_until_ready(run_masked(params, x, temporal_mask))
    logits_nm = jax.block_until_ready(run_nomask(params, x))

    ref = reference_forward(params, x, nhead, temporal_mask=temporal_mask)
    ref_nm = reference_forward(params, x, nhead, temporal_mask=None)

    assert logits.shape == (B, num_classes)
    assert bool(jnp.all(jnp.isfinite(logits)))
    assert bool(jnp.allclose(logits, ref, atol=2e-3, rtol=2e-3))
    assert bool(jnp.allclose(logits_nm, ref_nm, atol=2e-3, rtol=2e-3))
    print("KERNEL_OK")
</pallas_src>

<mosaic_0001>
module attributes {stable_mosaic.version = 11 : i64} {
  func.func @spatial_kernel(%arg0: i32, %arg1: memref<4x16x32xf32, #tpu.memory_space<vmem>>, %arg2: memref<1x32x96xf32, #tpu.memory_space<vmem>>, %arg3: memref<1x1x96xf32, #tpu.memory_space<vmem>>, %arg4: memref<1x32x32xf32, #tpu.memory_space<vmem>>, %arg5: memref<1x1x32xf32, #tpu.memory_space<vmem>>, %arg6: memref<1x1x32xf32, #tpu.memory_space<vmem>>, %arg7: memref<1x1x32xf32, #tpu.memory_space<vmem>>, %arg8: memref<1x32x64xf32, #tpu.memory_space<vmem>>, %arg9: memref<1x1x64xf32, #tpu.memory_space<vmem>>, %arg10: memref<1x64x32xf32, #tpu.memory_space<vmem>>, %arg11: memref<1x1x32xf32, #tpu.memory_space<vmem>>, %arg12: memref<1x1x32xf32, #tpu.memory_space<vmem>>, %arg13: memref<1x1x32xf32, #tpu.memory_space<vmem>>, %arg14: memref<1x16x32xf32, #tpu.memory_space<vmem>>) attributes {dimension_semantics = [#tpu.dimension_semantics<parallel>], iteration_bounds = array<i64: 2>, scalar_prefetch = 0 : i64, scratch_operands = 0 : i64, tpu.core_type = #tpu.core_type<tc>, window_params = [{transform_indices = @transform_0, window_bounds = array<i64: 4, 16, 32>}, {pipeline_mode = #tpu.pipeline_mode<synchronous>, transform_indices = @transform_1, window_bounds = array<i64: 1, 32, 96>}, {pipeline_mode = #tpu.pipeline_mode<synchronous>, transform_indices = @transform_2, window_bounds = array<i64: 1, 1, 96>}, {pipeline_mode = #tpu.pipeline_mode<synchronous>, transform_indices = @transform_3, window_bounds = array<i64: 1, 32, 32>}, {pipeline_mode = #tpu.pipeline_mode<synchronous>, transform_indices = @transform_4, window_bounds = array<i64: 1, 1, 32>}, {pipeline_mode = #tpu.pipeline_mode<synchronous>, transform_indices = @transform_5, window_bounds = array<i64: 1, 1, 32>}, {pipeline_mode = #tpu.pipeline_mode<synchronous>, transform_indices = @transform_6, window_bounds = array<i64: 1, 1, 32>}, {pipeline_mode = #tpu.pipeline_mode<synchronous>, transform_indices = @transform_7, window_bounds = array<i64: 1, 32, 64>}, {pipeline_mode = #tpu.pipeline_mode<synchronous>, transform_indices = @transform_8, window_bounds = array<i64: 1, 1, 64>}, {pipeline_mode = #tpu.pipeline_mode<synchronous>, transform_indices = @transform_9, window_bounds = array<i64: 1, 64, 32>}, {pipeline_mode = #tpu.pipeline_mode<synchronous>, transform_indices = @transform_10, window_bounds = array<i64: 1, 1, 32>}, {pipeline_mode = #tpu.pipeline_mode<synchronous>, transform_indices = @transform_11, window_bounds = array<i64: 1, 1, 32>}, {pipeline_mode = #tpu.pipeline_mode<synchronous>, transform_indices = @transform_12, window_bounds = array<i64: 1, 1, 32>}, {transform_indices = @transform_13, window_bounds = array<i64: 1, 16, 32>}]} {
    %c0 = arith.constant 0 : index
    %c0_0 = arith.constant 0 : index
    %c0_1 = arith.constant 0 : index
    %0 = vector.load %arg1[%c0, %c0_0, %c0_1] : memref<4x16x32xf32, #tpu.memory_space<vmem>>, vector<4x16x32xf32>
    %1 = vector.shape_cast %0 : vector<4x16x32xf32> to vector<64x32xf32>
    %c0_2 = arith.constant 0 : index
    %c0_3 = arith.constant 0 : index
    %c0_4 = arith.constant 0 : index
    %2 = vector.load %arg2[%c0_2, %c0_3, %c0_4] : memref<1x32x96xf32, #tpu.memory_space<vmem>>, vector<1x32x96xf32>
    %3 = vector.shape_cast %2 : vector<1x32x96xf32> to vector<32x96xf32>
    %cst = arith.constant dense<0.000000e+00> : vector<64x96xf32>
    %4 = tpu.matmul %1, %3, %cst {dimension_numbers = #tpu.dot_dimension_numbers<[1], [0], [0], [1], [0, 0, 1, 1], [], []>} : vector<64x32xf32>, vector<32x96xf32>, vector<64x96xf32> -> vector<64x96xf32>
    %c0_5 = arith.constant 0 : index
    %c0_6 = arith.constant 0 : index
    %c0_7 = arith.constant 0 : index
    %5 = vector.load %arg3[%c0_5, %c0_6, %c0_7] : memref<1x1x96xf32, #tpu.memory_space<vmem>>, vector<1x1x96xf32>
    %6 = vector.shape_cast %5 : vector<1x1x96xf32> to vector<1x96xf32>
    %7 = vector.broadcast %6 : vector<1x96xf32> to vector<64x96xf32>
    %8 = arith.addf %4, %7 : vector<64x96xf32>
    %9 = vector.shape_cast %8 : vector<64x96xf32> to vector<4x16x96xf32>
    %10 = vector.extract_strided_slice %9 {offsets = [0, 0, 0], sizes = [4, 16, 32], strides = [1, 1, 1]} : vector<4x16x96xf32> to vector<4x16x32xf32>
    %11 = vector.extract_strided_slice %9 {offsets = [0, 0, 32], sizes = [4, 16, 32], strides = [1, 1, 1]} : vector<4x16x96xf32> to vector<4x16x32xf32>
    %12 = vector.extract_strided_slice %9 {offsets = [0, 0, 64], sizes = [4, 16, 32], strides = [1, 1, 1]} : vector<4x16x96xf32> to vector<4x16x32xf32>
    %13 = vector.extract_strided_slice %10 {offsets = [0, 0, 0], sizes = [4, 16, 8], strides = [1, 1, 1]} : vector<4x16x32xf32> to vector<4x16x8xf32>
    %14 = vector.extract_strided_slice %11 {offsets = [0, 0, 0], sizes = [4, 16, 8], strides = [1, 1, 1]} : vector<4x16x32xf32> to vector<4x16x8xf32>
    "tpu.trace_start"() <{level = 10 : i32, message = "bqd,bkd->bqk"}> : () -> ()
    %cst_8 = arith.constant dense<0.000000e+00> : vector<4x16x16xf32>
    %15 = tpu.matmul %13, %14, %cst_8 {dimension_numbers = #tpu.dot_dimension_numbers<[2], [2], [1], [1], [0, 0, 0, 1, 1, 1], [0], [0]>} : vector<4x16x8xf32>, vector<4x16x8xf32>, vector<4x16x16xf32> -> vector<4x16x16xf32>
    "tpu.trace_stop"() : () -> ()
    %cst_9 = arith.constant 0.353553385 : f32
    %16 = vector.broadcast %cst_9 : f32 to vector<4x16x16xf32>
    %17 = arith.mulf %15, %16 : vector<4x16x16xf32>
    %cst_10 = arith.constant dense<0xFF800000> : vector<4x16xf32>
    %18 = vector.multi_reduction <maximumf>, %17, %cst_10 [2] : vector<4x16x16xf32> to vector<4x16xf32>
    %19 = vector.shape_cast %18 : vector<4x16xf32> to vector<4x16x1xf32>
    %20 = vector.broadcast %19 : vector<4x16x1xf32> to vector<4x16x16xf32>
    %21 = arith.subf %17, %20 : vector<4x16x16xf32>
    %22 = math.exp %21 : vector<4x16x16xf32>
    %cst_11 = arith.constant dense<0.000000e+00> : vector<4x16xf32>
    %23 = vector.multi_reduction <add>, %22, %cst_11 [2] : vector<4x16x16xf32> to vector<4x16xf32>
    %24 = vector.shape_cast %23 : vector<4x16xf32> to vector<4x16x1xf32>
    %25 = tpu.reciprocal %24 {approx = true} : vector<4x16x1xf32> -> vector<4x16x1xf32>
    %26 = vector.broadcast %25 : vector<4x16x1xf32> to vector<4x16x16xf32>
    %27 = arith.mulf %22, %26 : vector<4x16x16xf32>
    %28 = vector.extract_strided_slice %12 {offsets = [0, 0, 0], sizes = [4, 16, 8], strides = [1, 1, 1]} : vector<4x16x32xf32> to vector<4x16x8xf32>
    "tpu.trace_start"() <{level = 10 : i32, message = "bqk,bkd->bqd"}> : () -> ()
    %cst_12 = arith.constant dense<0.000000e+00> : vector<4x16x8xf32>
    %29 = tpu.matmul %27, %28, %cst_12 {dimension_numbers = #tpu.dot_dimension_numbers<[2], [1], [1], [2], [0, 0, 0, 1, 1, 2], [0], [0]>} : vector<4x16x16xf32>, vector<4x16x8xf32>, vector<4x16x8xf32> -> vector<4x16x8xf32>
    "tpu.trace_stop"() : () -> ()
    %30 = vector.extract_strided_slice %10 {offsets = [0, 0, 8], sizes = [4, 16, 8], strides = [1, 1, 1]} : vector<4x16x32xf32> to vector<4x16x8xf32>
    %31 = vector.extract_strided_slice %11 {offsets = [0, 0, 8], sizes = [4, 16, 8], strides = [1, 1, 1]} : vector<4x16x32xf32> to vector<4x16x8xf32>
    "tpu.trace_start"() <{level = 10 : i32, message = "bqd,bkd->bqk"}> : () -> ()
    %cst_13 = arith.constant dense<0.000000e+00> : vector<4x16x16xf32>
    %32 = tpu.matmul %30, %31, %cst_13 {dimension_numbers = #tpu.dot_dimension_numbers<[2], [2], [1], [1], [0, 0, 0, 1, 1, 1], [0], [0]>} : vector<4x16x8xf32>, vector<4x16x8xf32>, vector<4x16x16xf32> -> vector<4x16x16xf32>
    "tpu.trace_stop"() : () -> ()
    %cst_14 = arith.constant 0.353553385 : f32
    %33 = vector.broadcast %cst_14 : f32 to vector<4x16x16xf32>
    %34 = arith.mulf %32, %33 : vector<4x16x16xf32>
    %cst_15 = arith.constant dense<0xFF800000> : vector<4x16xf32>
    %35 = vector.multi_reduction <maximumf>, %34, %cst_15 [2] : vector<4x16x16xf32> to vector<4x16xf32>
    %36 = vector.shape_cast %35 : vector<4x16xf32> to vector<4x16x1xf32>
    %37 = vector.broadcast %36 : vector<4x16x1xf32> to vector<4x16x16xf32>
    %38 = arith.subf %34, %37 : vector<4x16x16xf32>
    %39 = math.exp %38 : vector<4x16x16xf32>
    %cst_16 = arith.constant dense<0.000000e+00> : vector<4x16xf32>
    %40 = vector.multi_reduction <add>, %39, %cst_16 [2] : vector<4x16x16xf32> to vector<4x16xf32>
    %41 = vector.shape_cast %40 : vector<4x16xf32> to vector<4x16x1xf32>
    %42 = tpu.reciprocal %41 {approx = true} : vector<4x16x1xf32> -> vector<4x16x1xf32>
    %43 = vector.broadcast %42 : vector<4x16x1xf32> to vector<4x16x16xf32>
    %44 = arith.mulf %39, %43 : vector<4x16x16xf32>
    %45 = vector.extract_strided_slice %12 {offsets = [0, 0, 8], sizes = [4, 16, 8], strides = [1, 1, 1]} : vector<4x16x32xf32> to vector<4x16x8xf32>
    "tpu.trace_start"() <{level = 10 : i32, message = "bqk,bkd->bqd"}> : () -> ()
    %cst_17 = arith.constant dense<0.000000e+00> : vector<4x16x8xf32>
    %46 = tpu.matmul %44, %45, %cst_17 {dimension_numbers = #tpu.dot_dimension_numbers<[2], [1], [1], [2], [0, 0, 0, 1, 1, 2], [0], [0]>} : vector<4x16x16xf32>, vector<4x16x8xf32>, vector<4x16x8xf32> -> vector<4x16x8xf32>
    "tpu.trace_stop"() : () -> ()
    %47 = vector.extract_strided_slice %10 {offsets = [0, 0, 16], sizes = [4, 16, 8], strides = [1, 1, 1]} : vector<4x16x32xf32> to vector<4x16x8xf32>
    %48 = vector.extract_strided_slice %11 {offsets = [0, 0, 16], sizes = [4, 16, 8], strides = [1, 1, 1]} : vector<4x16x32xf32> to vector<4x16x8xf32>
    "tpu.trace_start"() <{level = 10 : i32, message = "bqd,bkd->bqk"}> : () -> ()
    %cst_18 = arith.constant dense<0.000000e+00> : vector<4x16x16xf32>
    %49 = tpu.matmul %47, %48, %cst_18 {dimension_numbers = #tpu.dot_dimension_numbers<[2], [2], [1], [1], [0, 0, 0, 1, 1, 1], [0], [0]>} : vector<4x16x8xf32>, vector<4x16x8xf32>, vector<4x16x16xf32> -> vector<4x16x16xf32>
    "tpu.trace_stop"() : () -> ()
    %cst_19 = arith.constant 0.353553385 : f32
    %50 = vector.broadcast %cst_19 : f32 to vector<4x16x16xf32>
    %51 = arith.mulf %49, %50 : vector<4x16x16xf32>
    %cst_20 = arith.constant dense<0xFF800000> : vector<4x16xf32>
    %52 = vector.multi_reduction <maximumf>, %51, %cst_20 [2] : vector<4x16x16xf32> to vector<4x16xf32>
    %53 = vector.shape_cast %52 : vector<4x16xf32> to vector<4x16x1xf32>
    %54 = vector.broadcast %53 : vector<4x16x1xf32> to vector<4x16x16xf32>
    %55 = arith.subf %51, %54 : vector<4x16x16xf32>
    %56 = math.exp %55 : vector<4x16x16xf32>
    %cst_21 = arith.constant dense<0.000000e+00> : vector<4x16xf32>
    %57 = vector.multi_reduction <add>, %56, %cst_21 [2] : vector<4x16x16xf32> to vector<4x16xf32>
    %58 = vector.shape_cast %57 : vector<4x16xf32> to vector<4x16x1xf32>
    %59 = tpu.reciprocal %58 {approx = true} : vector<4x16x1xf32> -> vector<4x16x1xf32>
    %60 = vector.broadcast %59 : vector<4x16x1xf32> to vector<4x16x16xf32>
    %61 = arith.mulf %56, %60 : vector<4x16x16xf32>
    %62 = vector.extract_strided_slice %12 {offsets = [0, 0, 16], sizes = [4, 16, 8], strides = [1, 1, 1]} : vector<4x16x32xf32> to vector<4x16x8xf32>
    "tpu.trace_start"() <{level = 10 : i32, message = "bqk,bkd->bqd"}> : () -> ()
    %cst_22 = arith.constant dense<0.000000e+00> : vector<4x16x8xf32>
    %63 = tpu.matmul %61, %62, %cst_22 {dimension_numbers = #tpu.dot_dimension_numbers<[2], [1], [1], [2], [0, 0, 0, 1, 1, 2], [0], [0]>} : vector<4x16x16xf32>, vector<4x16x8xf32>, vector<4x16x8xf32> -> vector<4x16x8xf32>
    "tpu.trace_stop"() : () -> ()
    %64 = vector.extract_strided_slice %10 {offsets = [0, 0, 24], sizes = [4, 16, 8], strides = [1, 1, 1]} : vector<4x16x32xf32> to vector<4x16x8xf32>
    %65 = vector.extract_strided_slice %11 {offsets = [0, 0, 24], sizes = [4, 16, 8], strides = [1, 1, 1]} : vector<4x16x32xf32> to vector<4x16x8xf32>
    "tpu.trace_start"() <{level = 10 : i32, message = "bqd,bkd->bqk"}> : () -> ()
    %cst_23 = arith.constant dense<0.000000e+00> : vector<4x16x16xf32>
    %66 = tpu.matmul %64, %65, %cst_23 {dimension_numbers = #tpu.dot_dimension_numbers<[2], [2], [1], [1], [0, 0, 0, 1, 1, 1], [0], [0]>} : vector<4x16x8xf32>, vector<4x16x8xf32>, vector<4x16x16xf32> -> vector<4x16x16xf32>
    "tpu.trace_stop"() : () -> ()
    %cst_24 = arith.constant 0.353553385 : f32
    %67 = vector.broadcast %cst_24 : f32 to vector<4x16x16xf32>
    %68 = arith.mulf %66, %67 : vector<4x16x16xf32>
    %cst_25 = arith.constant dense<0xFF800000> : vector<4x16xf32>
    %69 = vector.multi_reduction <maximumf>, %68, %cst_25 [2] : vector<4x16x16xf32> to vector<4x16xf32>
    %70 = vector.shape_cast %69 : vector<4x16xf32> to vector<4x16x1xf32>
    %71 = vector.broadcast %70 : vector<4x16x1xf32> to vector<4x16x16xf32>
    %72 = arith.subf %68, %71 : vector<4x16x16xf32>
    %73 = math.exp %72 : vector<4x16x16xf32>
    %cst_26 = arith.constant dense<0.000000e+00> : vector<4x16xf32>
    %74 = vector.multi_reduction <add>, %73, %cst_26 [2] : vector<4x16x16xf32> to vector<4x16xf32>
    %75 = vector.shape_cast %74 : vector<4x16xf32> to vector<4x16x1xf32>
    %76 = tpu.reciprocal %75 {approx = true} : vector<4x16x1xf32> -> vector<4x16x1xf32>
    %77 = vector.broadcast %76 : vector<4x16x1xf32> to vector<4x16x16xf32>
    %78 = arith.mulf %73, %77 : vector<4x16x16xf32>
    %79 = vector.extract_strided_slice %12 {offsets = [0, 0, 24], sizes = [4, 16, 8], strides = [1, 1, 1]} : vector<4x16x32xf32> to vector<4x16x8xf32>
    "tpu.trace_start"() <{level = 10 : i32, message = "bqk,bkd->bqd"}> : () -> ()
    %cst_27 = arith.constant dense<0.000000e+00> : vector<4x16x8xf32>
    %80 = tpu.matmul %78, %79, %cst_27 {dimension_numbers = #tpu.dot_dimension_numbers<[2], [1], [1], [2], [0, 0, 0, 1, 1, 2], [0], [0]>} : vector<4x16x16xf32>, vector<4x16x8xf32>, vector<4x16x8xf32> -> vector<4x16x8xf32>
    "tpu.trace_stop"() : () -> ()
    %81 = tpu.concatenate %29, %46, %63, %80 in 2 : vector<4x16x8xf32>, vector<4x16x8xf32>, vector<4x16x8xf32>, vector<4x16x8xf32> -> vector<4x16x32xf32>
    %82 = vector.shape_cast %81 : vector<4x16x32xf32> to vector<64x32xf32>
    %c0_28 = arith.constant 0 : index
    %c0_29 = arith.constant 0 : index
    %c0_30 = arith.constant 0 : index
    %83 = vector.load %arg4[%c0_28, %c0_29, %c0_30] : memref<1x32x32xf32, #tpu.memory_space<vmem>>, vector<1x32x32xf32>
    %84 = vector.shape_cast %83 : vector<1x32x32xf32> to vector<32x32xf32>
    %cst_31 = arith.constant dense<0.000000e+00> : vector<64x32xf32>
    %85 = tpu.matmul %82, %84, %cst_31 {dimension_numbers = #tpu.dot_dimension_numbers<[1], [0], [0], [1], [0, 0, 1, 1], [], []>} : vector<64x32xf32>, vector<32x32xf32>, vector<64x32xf32> -> vector<64x32xf32>
    %c0_32 = arith.constant 0 : index
    %c0_33 = arith.constant 0 : index
    %c0_34 = arith.constant 0 : index
    %86 = vector.load %arg5[%c0_32, %c0_33, %c0_34] : memref<1x1x32xf32, #tpu.memory_space<vmem>>, vector<1x1x32xf32>
    %87 = vector.shape_cast %86 : vector<1x1x32xf32> to vector<1x32xf32>
    %88 = vector.broadcast %87 : vector<1x32xf32> to vector<64x32xf32>
    %89 = arith.addf %85, %88 : vector<64x32xf32>
    %90 = arith.addf %1, %89 : vector<64x32xf32>
    %c0_35 = arith.constant 0 : index
    %c0_36 = arith.constant 0 : index
    %c0_37 = arith.constant 0 : index
    %91 = vector.load %arg6[%c0_35, %c0_36, %c0_37] : memref<1x1x32xf32, #tpu.memory_space<vmem>>, vector<1x1x32xf32>
    %92 = vector.shape_cast %91 : vector<1x1x32xf32> to vector<1x32xf32>
    %c0_38 = arith.constant 0 : index
    %c0_39 = arith.constant 0 : index
    %c0_40 = arith.constant 0 : index
    %93 = vector.load %arg7[%c0_38, %c0_39, %c0_40] : memref<1x1x32xf32, #tpu.memory_space<vmem>>, vector<1x1x32xf32>
    %94 = vector.shape_cast %93 : vector<1x1x32xf32> to vector<1x32xf32>
    %cst_41 = arith.constant dense<0.000000e+00> : vector<64xf32>
    %95 = vector.multi_reduction <add>, %90, %cst_41 [1] : vector<64x32xf32> to vector<64xf32>
    %96 = vector.shape_cast %95 : vector<64xf32> to vector<64x1xf32>
    %cst_42 = arith.constant 3.200000e+01 : f32
    %97 = vector.broadcast %cst_42 : f32 to vector<64x1xf32>
    %98 = arith.divf %96, %97 : vector<64x1xf32>
    %99 = vector.broadcast %98 : vector<64x1xf32> to vector<64x32xf32>
    %100 = arith.subf %90, %99 : vector<64x32xf32>
    %101 = arith.mulf %100, %100 : vector<64x32xf32>
    %cst_43 = arith.constant dense<0.000000e+00> : vector<64xf32>
    %102 = vector.multi_reduction <add>, %101, %cst_43 [1] : vector<64x32xf32> to vector<64xf32>
    %103 = vector.shape_cast %102 : vector<64xf32> to vector<64x1xf32>
    %cst_44 = arith.constant 3.200000e+01 : f32
    %104 = vector.broadcast %cst_44 : f32 to vector<64x1xf32>
    %105 = arith.divf %103, %104 : vector<64x1xf32>
    %106 = vector.broadcast %98 : vector<64x1xf32> to vector<64x32xf32>
    %107 = arith.subf %90, %106 : vector<64x32xf32>
    %cst_45 = arith.constant 9.99999974E-6 : f32
    %108 = vector.broadcast %cst_45 : f32 to vector<64x1xf32>
    %109 = arith.addf %105, %108 : vector<64x1xf32>
    %110 = math.rsqrt %109 : vector<64x1xf32>
    %111 = vector.broadcast %110 : vector<64x1xf32> to vector<64x32xf32>
    %112 = arith.mulf %107, %111 : vector<64x32xf32>
    %113 = vector.broadcast %92 : vector<1x32xf32> to vector<64x32xf32>
    %114 = arith.mulf %112, %113 : vector<64x32xf32>
    %115 = vector.broadcast %94 : vector<1x32xf32> to vector<64x32xf32>
    %116 = arith.addf %114, %115 : vector<64x32xf32>
    %c0_46 = arith.constant 0 : index
    %c0_47 = arith.constant 0 : index
    %c0_48 = arith.constant 0 : index
    %117 = vector.load %arg8[%c0_46, %c0_47, %c0_48] : memref<1x32x64xf32, #tpu.memory_space<vmem>>, vector<1x32x64xf32>
    %118 = vector.shape_cast %117 : vector<1x32x64xf32> to vector<32x64xf32>
    %cst_49 = arith.constant dense<0.000000e+00> : vector<64x64xf32>
    %119 = tpu.matmul %116, %118, %cst_49 {dimension_numbers = #tpu.dot_dimension_numbers<[1], [0], [0], [1], [0, 0, 1, 1], [], []>} : vector<64x32xf32>, vector<32x64xf32>, vector<64x64xf32> -> vector<64x64xf32>
    %c0_50 = arith.constant 0 : index
    %c0_51 = arith.constant 0 : index
    %c0_52 = arith.constant 0 : index
    %120 = vector.load %arg9[%c0_50, %c0_51, %c0_52] : memref<1x1x64xf32, #tpu.memory_space<vmem>>, vector<1x1x64xf32>
    %121 = vector.shape_cast %120 : vector<1x1x64xf32> to vector<1x64xf32>
    %122 = vector.broadcast %121 : vector<1x64xf32> to vector<64x64xf32>
    %123 = arith.addf %119, %122 : vector<64x64xf32>
    %cst_53 = arith.constant 0.000000e+00 : f32
    %124 = vector.broadcast %cst_53 : f32 to vector<64x64xf32>
    %125 = arith.maximumf %123, %124 : vector<64x64xf32>
    %c0_54 = arith.constant 0 : index
    %c0_55 = arith.constant 0 : index
    %c0_56 = arith.constant 0 : index
    %126 = vector.load %arg10[%c0_54, %c0_55, %c0_56] : memref<1x64x32xf32, #tpu.memory_space<vmem>>, vector<1x64x32xf32>
    %127 = vector.shape_cast %126 : vector<1x64x32xf32> to vector<64x32xf32>
    %cst_57 = arith.constant dense<0.000000e+00> : vector<64x32xf32>
    %128 = tpu.matmul %125, %127, %cst_57 {dimension_numbers = #tpu.dot_dimension_numbers<[1], [0], [0], [1], [0, 0, 1, 1], [], []>} : vector<64x64xf32>, vector<64x32xf32>, vector<64x32xf32> -> vector<64x32xf32>
    %c0_58 = arith.constant 0 : index
    %c0_59 = arith.constant 0 : index
    %c0_60 = arith.constant 0 : index
    %129 = vector.load %arg11[%c0_58, %c0_59, %c0_60] : memref<1x1x32xf32, #tpu.memory_space<vmem>>, vector<1x1x32xf32>
    %130 = vector.shape_cast %129 : vector<1x1x32xf32> to vector<1x32xf32>
    %131 = vector.broadcast %130 : vector<1x32xf32> to vector<64x32xf32>
    %132 = arith.addf %128, %131 : vector<64x32xf32>
    %133 = arith.addf %116, %132 : vector<64x32xf32>
    %c0_61 = arith.constant 0 : index
    %c0_62 = arith.constant 0 : index
    %c0_63 = arith.constant 0 : index
    %134 = vector.load %arg12[%c0_61, %c0_62, %c0_63] : memref<1x1x32xf32, #tpu.memory_space<vmem>>, vector<1x1x32xf32>
    %135 = vector.shape_cast %134 : vector<1x1x32xf32> to vector<1x32xf32>
    %c0_64 = arith.constant 0 : index
    %c0_65 = arith.constant 0 : index
    %c0_66 = arith.constant 0 : index
    %136 = vector.load %arg13[%c0_64, %c0_65, %c0_66] : memref<1x1x32xf32, #tpu.memory_space<vmem>>, vector<1x1x32xf32>
    %137 = vector.shape_cast %136 : vector<1x1x32xf32> to vector<1x32xf32>
    %cst_67 = arith.constant dense<0.000000e+00> : vector<64xf32>
    %138 = vector.multi_reduction <add>, %133, %cst_67 [1] : vector<64x32xf32> to vector<64xf32>
    %139 = vector.shape_cast %138 : vector<64xf32> to vector<64x1xf32>
    %cst_68 = arith.constant 3.200000e+01 : f32
    %140 = vector.broadcast %cst_68 : f32 to vector<64x1xf32>
    %141 = arith.divf %139, %140 : vector<64x1xf32>
    %142 = vector.broadcast %141 : vector<64x1xf32> to vector<64x32xf32>
    %143 = arith.subf %133, %142 : vector<64x32xf32>
    %144 = arith.mulf %143, %143 : vector<64x32xf32>
    %cst_69 = arith.constant dense<0.000000e+00> : vector<64xf32>
    %145 = vector.multi_reduction <add>, %144, %cst_69 [1] : vector<64x32xf32> to vector<64xf32>
    %146 = vector.shape_cast %145 : vector<64xf32> to vector<64x1xf32>
    %cst_70 = arith.constant 3.200000e+01 : f32
    %147 = vector.broadcast %cst_70 : f32 to vector<64x1xf32>
    %148 = arith.divf %146, %147 : vector<64x1xf32>
    %149 = vector.broadcast %141 : vector<64x1xf32> to vector<64x32xf32>
    %150 = arith.subf %133, %149 : vector<64x32xf32>
    %cst_71 = arith.constant 9.99999974E-6 : f32
    %151 = vector.broadcast %cst_71 : f32 to vector<64x1xf32>
    %152 = arith.addf %148, %151 : vector<64x1xf32>
    %153 = math.rsqrt %152 : vector<64x1xf32>
    %154 = vector.broadcast %153 : vector<64x1xf32> to vector<64x32xf32>
    %155 = arith.mulf %150, %154 : vector<64x32xf32>
    %156 = vector.broadcast %135 : vector<1x32xf32> to vector<64x32xf32>
    %157 = arith.mulf %155, %156 : vector<64x32xf32>
    %158 = vector.broadcast %137 : vector<1x32xf32> to vector<64x32xf32>
    %159 = arith.addf %157, %158 : vector<64x32xf32>
    %160 = vector.shape_cast %159 : vector<64x32xf32> to vector<4x16x32xf32>
    %cst_72 = arith.constant dense<0.000000e+00> : vector<16x32xf32>
    %161 = vector.multi_reduction <add>, %160, %cst_72 [0] : vector<4x16x32xf32> to vector<16x32xf32>
    %c0_73 = arith.constant 0 : index
    %c0_74 = arith.constant 0 : index
    %c0_75 = arith.constant 0 : index
    %162 = vector.load %arg14[%c0_73, %c0_74, %c0_75] : memref<1x16x32xf32, #tpu.memory_space<vmem>>, vector<1x16x32xf32>
    %163 = vector.shape_cast %162 : vector<1x16x32xf32> to vector<16x32xf32>
    %164 = vector.shape_cast %161 : vector<16x32xf32> to vector<1x16x32xf32>
    tpu.vector_store %arg14[%c0_73, %c0_74, %c0_75], %164 {strides = array<i32>} : memref<1x16x32xf32, #tpu.memory_space<vmem>>, vector<1x16x32xf32>,
    return
  }
  func.func @transform_0(%arg0: i32) -> (i32, i32, i32) {
    %c0_i32 = arith.constant 0 : i32
    %c0_i32_0 = arith.constant 0 : i32
    %c0_i32_1 = arith.constant 0 : i32
    return %arg0, %c0_i32, %c0_i32_0 : i32, i32, i32
  }
  func.func @transform_1(%arg0: i32) -> (i32, i32, i32) {
    %c0_i32 = arith.constant 0 : i32
    %c0_i32_0 = arith.constant 0 : i32
    %c0_i32_1 = arith.constant 0 : i32
    %c0_i32_2 = arith.constant 0 : i32
    return %c0_i32, %c0_i32_0, %c0_i32_1 : i32, i32, i32
  }
  func.func @transform_2(%arg0: i32) -> (i32, i32, i32) {
    %c0_i32 = arith.constant 0 : i32
    %c0_i32_0 = arith.constant 0 : i32
    %c0_i32_1 = arith.constant 0 : i32
    %c0_i32_2 = arith.constant 0 : i32
    return %c0_i32, %c0_i32_0, %c0_i32_1 : i32, i32, i32
  }
  func.func @transform_3(%arg0: i32) -> (i32, i32, i32) {
    %c0_i32 = arith.constant 0 : i32
    %c0_i32_0 = arith.constant 0 : i32
    %c0_i32_1 = arith.constant 0 : i32
    %c0_i32_2 = arith.constant 0 : i32
    return %c0_i32, %c0_i32_0, %c0_i32_1 : i32, i32, i32
  }
  func.func @transform_4(%arg0: i32) -> (i32, i32, i32) {
    %c0_i32 = arith.constant 0 : i32
    %c0_i32_0 = arith.constant 0 : i32
    %c0_i32_1 = arith.constant 0 : i32
    %c0_i32_2 = arith.constant 0 : i32
    return %c0_i32, %c0_i32_0, %c0_i32_1 : i32, i32, i32
  }
  func.func @transform_5(%arg0: i32) -> (i32, i32, i32) {
    %c0_i32 = arith.constant 0 : i32
    %c0_i32_0 = arith.constant 0 : i32
    %c0_i32_1 = arith.constant 0 : i32
    %c0_i32_2 = arith.constant 0 : i32
    return %c0_i32, %c0_i32_0, %c0_i32_1 : i32, i32, i32
  }
  func.func @transform_6(%arg0: i32) -> (i32, i32, i32) {
    %c0_i32 = arith.constant 0 : i32
    %c0_i32_0 = arith.constant 0 : i32
    %c0_i32_1 = arith.constant 0 : i32
    %c0_i32_2 = arith.constant 0 : i32
    return %c0_i32, %c0_i32_0, %c0_i32_1 : i32, i32, i32
  }
  func.func @transform_7(%arg0: i32) -> (i32, i32, i32) {
    %c0_i32 = arith.constant 0 : i32
    %c0_i32_0 = arith.constant 0 : i32
    %c0_i32_1 = arith.constant 0 : i32
    %c0_i32_2 = arith.constant 0 : i32
    return %c0_i32, %c0_i32_0, %c0_i32_1 : i32, i32, i32
  }
  func.func @transform_8(%arg0: i32) -> (i32, i32, i32) {
    %c0_i32 = arith.constant 0 : i32
    %c0_i32_0 = arith.constant 0 : i32
    %c0_i32_1 = arith.constant 0 : i32
    %c0_i32_2 = arith.constant 0 : i32
    return %c0_i32, %c0_i32_0, %c0_i32_1 : i32, i32, i32
  }
  func.func @transform_9(%arg0: i32) -> (i32, i32, i32) {
    %c0_i32 = arith.constant 0 : i32
    %c0_i32_0 = arith.constant 0 : i32
    %c0_i32_1 = arith.constant 0 : i32
    %c0_i32_2 = arith.constant 0 : i32
    return %c0_i32, %c0_i32_0, %c0_i32_1 : i32, i32, i32
  }
  func.func @transform_10(%arg0: i32) -> (i32, i32, i32) {
    %c0_i32 = arith.constant 0 : i32
    %c0_i32_0 = arith.constant 0 : i32
    %c0_i32_1 = arith.constant 0 : i32
    %c0_i32_2 = arith.constant 0 : i32
    return %c0_i32, %c0_i32_0, %c0_i32_1 : i32, i32, i32
  }
  func.func @transform_11(%arg0: i32) -> (i32, i32, i32) {
    %c0_i32 = arith.constant 0 : i32
    %c0_i32_0 = arith.constant 0 : i32
    %c0_i32_1 = arith.constant 0 : i32
    %c0_i32_2 = arith.constant 0 : i32
    return %c0_i32, %c0_i32_0, %c0_i32_1 : i32, i32, i32
  }
  func.func @transform_12(%arg0: i32) -> (i32, i32, i32) {
    %c0_i32 = arith.constant 0 : i32
    %c0_i32_0 = arith.constant 0 : i32
    %c0_i32_1 = arith.constant 0 : i32
    %c0_i32_2 = arith.constant 0 : i32
    return %c0_i32, %c0_i32_0, %c0_i32_1 : i32, i32, i32
  }
  func.func @transform_13(%arg0: i32) -> (i32, i32, i32) {
    %c0_i32 = arith.constant 0 : i32
    %c0_i32_0 = arith.constant 0 : i32
    %c0_i32_1 = arith.constant 0 : i32
    return %arg0, %c0_i32, %c0_i32_0 : i32, i32, i32
  }
}

module attributes {stable_mosaic.version = 11 : i64} {
  func.func @temporal_kernel(%arg0: i32, %arg1: memref<2x16x32xf32, #tpu.memory_space<vmem>>, %arg2: memref<1x8x32xf32, #tpu.memory_space<vmem>>, %arg3: memref<2x8x1xf32, #tpu.memory_space<vmem>>, %arg4: memref<2x1x8xf32, #tpu.memory_space<vmem>>, %arg5: memref<1x32x96xf32, #tpu.memory_space<vmem>>, %arg6: memref<1x1x96xf32, #tpu.memory_space<vmem>>, %arg7: memref<1x32x32xf32, #tpu.memory_space<vmem>>, %arg8: memref<1x1x32xf32, #tpu.memory_space<vmem>>, %arg9: memref<1x1x32xf32, #tpu.memory_space<vmem>>, %arg10: memref<1x1x32xf32, #tpu.memory_space<vmem>>, %arg11: memref<1x32x64xf32, #tpu.memory_space<vmem>>, %arg12: memref<1x1x64xf32, #tpu.memory_space<vmem>>, %arg13: memref<1x64x32xf32, #tpu.memory_space<vmem>>, %arg14: memref<1x1x32xf32, #tpu.memory_space<vmem>>, %arg15: memref<1x1x32xf32, #tpu.memory_space<vmem>>, %arg16: memref<1x1x32xf32, #tpu.memory_space<vmem>>, %arg17: memref<32x5xf32, #tpu.memory_space<vmem>>, %arg18: memref<1x5xf32, #tpu.memory_space<vmem>>, %arg19: memref<2x5xf32, #tpu.memory_space<vmem>>) attributes {dimension_semantics = [#tpu.dimension_semantics<arbitrary>], iteration_bounds = array<i64: 1>, scalar_prefetch = 0 : i64, scratch_operands = 0 : i64, tpu.core_type = #tpu.core_type<tc>, window_params = [{pipeline_mode = #tpu.pipeline_mode<synchronous>, transform_indices = @transform_0, window_bounds = array<i64: 2, 16, 32>}, {pipeline_mode = #tpu.pipeline_mode<synchronous>, transform_indices = @transform_1, window_bounds = array<i64: 1, 8, 32>}, {pipeline_mode = #tpu.pipeline_mode<synchronous>, transform_indices = @transform_2, window_bounds = array<i64: 2, 8, 1>}, {pipeline_mode = #tpu.pipeline_mode<synchronous>, transform_indices = @transform_3, window_bounds = array<i64: 2, 1, 8>}, {pipeline_mode = #tpu.pipeline_mode<synchronous>, transform_indices = @transform_4, window_bounds = array<i64: 1, 32, 96>}, {pipeline_mode = #tpu.pipeline_mode<synchronous>, transform_indices = @transform_5, window_bounds = array<i64: 1, 1, 96>}, {pipeline_mode = #tpu.pipeline_mode<synchronous>, transform_indices = @transform_6, window_bounds = array<i64: 1, 32, 32>}, {pipeline_mode = #tpu.pipeline_mode<synchronous>, transform_indices = @transform_7, window_bounds = array<i64: 1, 1, 32>}, {pipeline_mode = #tpu.pipeline_mode<synchronous>, transform_indices = @transform_8, window_bounds = array<i64: 1, 1, 32>}, {pipeline_mode = #tpu.pipeline_mode<synchronous>, transform_indices = @transform_9, window_bounds = array<i64: 1, 1, 32>}, {pipeline_mode = #tpu.pipeline_mode<synchronous>, transform_indices = @transform_10, window_bounds = array<i64: 1, 32, 64>}, {pipeline_mode = #tpu.pipeline_mode<synchronous>, transform_indices = @transform_11, window_bounds = array<i64: 1, 1, 64>}, {pipeline_mode = #tpu.pipeline_mode<synchronous>, transform_indices = @transform_12, window_bounds = array<i64: 1, 64, 32>}, {pipeline_mode = #tpu.pipeline_mode<synchronous>, transform_indices = @transform_13, window_bounds = array<i64: 1, 1, 32>}, {pipeline_mode = #tpu.pipeline_mode<synchronous>, transform_indices = @transform_14, window_bounds = array<i64: 1, 1, 32>}, {pipeline_mode = #tpu.pipeline_mode<synchronous>, transform_indices = @transform_15, window_bounds = array<i64: 1, 1, 32>}, {pipeline_mode = #tpu.pipeline_mode<synchronous>, transform_indices = @transform_16, window_bounds = array<i64: 32, 5>}, {pipeline_mode = #tpu.pipeline_mode<synchronous>, transform_indices = @transform_17, window_bounds = array<i64: 1, 5>}, {pipeline_mode = #tpu.pipeline_mode<synchronous>, transform_indices = @transform_18, window_bounds = array<i64: 2, 5>}]} {
    %c0 = arith.constant 0 : index
    %c0_0 = arith.constant 0 : index
    %c0_1 = arith.constant 0 : index
    %0 = vector.load %arg1[%c0, %c0_0, %c0_1] : memref<2x16x32xf32, #tpu.memory_space<vmem>>, vector<2x16x32xf32>
    %cst = arith.constant dense<0.000000e+00> : vector<16x32xf32>
    %1 = vector.multi_reduction <add>, %0, %cst [0] : vector<2x16x32xf32> to vector<16x32xf32>
    %cst_2 = arith.constant 1.250000e-01 : f32
    %2 = vector.broadcast %cst_2 : f32 to vector<16x32xf32>
    %3 = arith.mulf %1, %2 : vector<16x32xf32>
    %4 = vector.shape_cast %3 : vector<16x32xf32> to vector<2x8x32xf32>
    %c0_3 = arith.constant 0 : index
    %c0_4 = arith.constant 0 : index
    %c0_5 = arith.constant 0 : index
    %5 = vector.load %arg2[%c0_3, %c0_4, %c0_5] : memref<1x8x32xf32, #tpu.memory_space<vmem>>, vector<1x8x32xf32>
    %6 = vector.broadcast %5 : vector<1x8x32xf32> to vector<2x8x32xf32>
    %7 = arith.addf %4, %6 : vector<2x8x32xf32>
    %c0_6 = arith.constant 0 : index
    %c0_7 = arith.constant 0 : index
    %c0_8 = arith.constant 0 : index
    %8 = vector.load %arg4[%c0_6, %c0_7, %c0_8] : memref<2x1x8xf32, #tpu.memory_space<vmem>>, vector<2x1x8xf32>
    %9 = vector.shape_cast %7 : vector<2x8x32xf32> to vector<16x32xf32>
    %c0_9 = arith.constant 0 : index
    %c0_10 = arith.constant 0 : index
    %c0_11 = arith.constant 0 : index
    %10 = vector.load %arg5[%c0_9, %c0_10, %c0_11] : memref<1x32x96xf32, #tpu.memory_space<vmem>>, vector<1x32x96xf32>
    %11 = vector.shape_cast %10 : vector<1x32x96xf32> to vector<32x96xf32>
    %cst_12 = arith.constant dense<0.000000e+00> : vector<16x96xf32>
    %12 = tpu.matmul %9, %11, %cst_12 {dimension_numbers = #tpu.dot_dimension_numbers<[1], [0], [0], [1], [0, 0, 1, 1], [], []>} : vector<16x32xf32>, vector<32x96xf32>, vector<16x96xf32> -> vector<16x96xf32>
    %c0_13 = arith.constant 0 : index
    %c0_14 = arith.constant 0 : index
    %c0_15 = arith.constant 0 : index
    %13 = vector.load %arg6[%c0_13, %c0_14, %c0_15] : memref<1x1x96xf32, #tpu.memory_space<vmem>>, vector<1x1x96xf32>
    %14 = vector.shape_cast %13 : vector<1x1x96xf32> to vector<1x96xf32>
    %15 = vector.broadcast %14 : vector<1x96xf32> to vector<16x96xf32>
    %16 = arith.addf %12, %15 : vector<16x96xf32>
    %17 = vector.shape_cast %16 : vector<16x96xf32> to vector<2x8x96xf32>
    %18 = vector.extract_strided_slice %17 {offsets = [0, 0, 0], sizes = [2, 8, 32], strides = [1, 1, 1]} : vector<2x8x96xf32> to vector<2x8x32xf32>
    %19 = vector.extract_strided_slice %17 {offsets = [0, 0, 32], sizes = [2, 8, 32], strides = [1, 1, 1]} : vector<2x8x96xf32> to vector<2x8x32xf32>
    %20 = vector.extract_strided_slice %17 {offsets = [0, 0, 64], sizes = [2, 8, 32], strides = [1, 1, 1]} : vector<2x8x96xf32> to vector<2x8x32xf32>
    %21 = vector.extract_strided_slice %18 {offsets = [0, 0, 0], sizes = [2, 8, 8], strides = [1, 1, 1]} : vector<2x8x32xf32> to vector<2x8x8xf32>
    %22 = vector.extract_strided_slice %19 {offsets = [0, 0, 0], sizes = [2, 8, 8], strides = [1, 1, 1]} : vector<2x8x32xf32> to vector<2x8x8xf32>
    "tpu.trace_start"() <{level = 10 : i32, message = "bqd,bkd->bqk"}> : () -> ()
    %cst_16 = arith.constant dense<0.000000e+00> : vector<2x8x8xf32>
    %23 = tpu.matmul %21, %22, %cst_16 {dimension_numbers = #tpu.dot_dimension_numbers<[2], [2], [1], [1], [0, 0, 0, 1, 1, 1], [0], [0]>} : vector<2x8x8xf32>, vector<2x8x8xf32>, vector<2x8x8xf32> -> vector<2x8x8xf32>
    "tpu.trace_stop"() : () -> ()
    %cst_17 = arith.constant 0.353553385 : f32
    %24 = vector.broadcast %cst_17 : f32 to vector<2x8x8xf32>
    %25 = arith.mulf %23, %24 : vector<2x8x8xf32>
    %26 = vector.broadcast %8 : vector<2x1x8xf32> to vector<2x8x8xf32>
    %27 = arith.addf %25, %26 : vector<2x8x8xf32>
    %cst_18 = arith.constant dense<0xFF800000> : vector<2x8xf32>
    %28 = vector.multi_reduction <maximumf>, %27, %cst_18 [2] : vector<2x8x8xf32> to vector<2x8xf32>
    %29 = vector.shape_cast %28 : vector<2x8xf32> to vector<2x8x1xf32>
    %30 = vector.broadcast %29 : vector<2x8x1xf32> to vector<2x8x8xf32>
    %31 = arith.subf %27, %30 : vector<2x8x8xf32>
    %32 = math.exp %31 : vector<2x8x8xf32>
    %cst_19 = arith.constant dense<0.000000e+00> : vector<2x8xf32>
    %33 = vector.multi_reduction <add>, %32, %cst_19 [2] : vector<2x8x8xf32> to vector<2x8xf32>
    %34 = vector.shape_cast %33 : vector<2x8xf32> to vector<2x8x1xf32>
    %35 = tpu.reciprocal %34 {approx = true} : vector<2x8x1xf32> -> vector<2x8x1xf32>
    %36 = vector.broadcast %35 : vector<2x8x1xf32> to vector<2x8x8xf32>
    %37 = arith.mulf %32, %36 : vector<2x8x8xf32>
    %38 = vector.extract_strided_slice %20 {offsets = [0, 0, 0], sizes = [2, 8, 8], strides = [1, 1, 1]} : vector<2x8x32xf32> to vector<2x8x8xf32>
    "tpu.trace_start"() <{level = 10 : i32, message = "bqk,bkd->bqd"}> : () -> ()
    %cst_20 = arith.constant dense<0.000000e+00> : vector<2x8x8xf32>
    %39 = tpu.matmul %37, %38, %cst_20 {dimension_numbers = #tpu.dot_dimension_numbers<[2], [1], [1], [2], [0, 0, 0, 1, 1, 2], [0], [0]>} : vector<2x8x8xf32>, vector<2x8x8xf32>, vector<2x8x8xf32> -> vector<2x8x8xf32>
    "tpu.trace_stop"() : () -> ()
    %40 = vector.extract_strided_slice %18 {offsets = [0, 0, 8], sizes = [2, 8, 8], strides = [1, 1, 1]} : vector<2x8x32xf32> to vector<2x8x8xf32>
    %41 = vector.extract_strided_slice %19 {offsets = [0, 0, 8], sizes = [2, 8, 8], strides = [1, 1, 1]} : vector<2x8x32xf32> to vector<2x8x8xf32>
    "tpu.trace_start"() <{level = 10 : i32, message = "bqd,bkd->bqk"}> : () -> ()
    %cst_21 = arith.constant dense<0.000000e+00> : vector<2x8x8xf32>
    %42 = tpu.matmul %40, %41, %cst_21 {dimension_numbers = #tpu.dot_dimension_numbers<[2], [2], [1], [1], [0, 0, 0, 1, 1, 1], [0], [0]>} : vector<2x8x8xf32>, vector<2x8x8xf32>, vector<2x8x8xf32> -> vector<2x8x8xf32>
    "tpu.trace_stop"() : () -> ()
    %cst_22 = arith.constant 0.353553385 : f32
    %43 = vector.broadcast %cst_22 : f32 to vector<2x8x8xf32>
    %44 = arith.mulf %42, %43 : vector<2x8x8xf32>
    %45 = vector.broadcast %8 : vector<2x1x8xf32> to vector<2x8x8xf32>
    %46 = arith.addf %44, %45 : vector<2x8x8xf32>
    %cst_23 = arith.constant dense<0xFF800000> : vector<2x8xf32>
    %47 = vector.multi_reduction <maximumf>, %46, %cst_23 [2] : vector<2x8x8xf32> to vector<2x8xf32>
    %48 = vector.shape_cast %47 : vector<2x8xf32> to vector<2x8x1xf32>
    %49 = vector.broadcast %48 : vector<2x8x1xf32> to vector<2x8x8xf32>
    %50 = arith.subf %46, %49 : vector<2x8x8xf32>
    %51 = math.exp %50 : vector<2x8x8xf32>
    %cst_24 = arith.constant dense<0.000000e+00> : vector<2x8xf32>
    %52 = vector.multi_reduction <add>, %51, %cst_24 [2] : vector<2x8x8xf32> to vector<2x8xf32>
    %53 = vector.shape_cast %52 : vector<2x8xf32> to vector<2x8x1xf32>
    %54 = tpu.reciprocal %53 {approx = true} : vector<2x8x1xf32> -> vector<2x8x1xf32>
    %55 = vector.broadcast %54 : vector<2x8x1xf32> to vector<2x8x8xf32>
    %56 = arith.mulf %51, %55 : vector<2x8x8xf32>
    %57 = vector.extract_strided_slice %20 {offsets = [0, 0, 8], sizes = [2, 8, 8], strides = [1, 1, 1]} : vector<2x8x32xf32> to vector<2x8x8xf32>
    "tpu.trace_start"() <{level = 10 : i32, message = "bqk,bkd->bqd"}> : () -> ()
    %cst_25 = arith.constant dense<0.000000e+00> : vector<2x8x8xf32>
    %58 = tpu.matmul %56, %57, %cst_25 {dimension_numbers = #tpu.dot_dimension_numbers<[2], [1], [1], [2], [0, 0, 0, 1, 1, 2], [0], [0]>} : vector<2x8x8xf32>, vector<2x8x8xf32>, vector<2x8x8xf32> -> vector<2x8x8xf32>
    "tpu.trace_stop"() : () -> ()
    %59 = vector.extract_strided_slice %18 {offsets = [0, 0, 16], sizes = [2, 8, 8], strides = [1, 1, 1]} : vector<2x8x32xf32> to vector<2x8x8xf32>
    %60 = vector.extract_strided_slice %19 {offsets = [0, 0, 16], sizes = [2, 8, 8], strides = [1, 1, 1]} : vector<2x8x32xf32> to vector<2x8x8xf32>
    "tpu.trace_start"() <{level = 10 : i32, message = "bqd,bkd->bqk"}> : () -> ()
    %cst_26 = arith.constant dense<0.000000e+00> : vector<2x8x8xf32>
    %61 = tpu.matmul %59, %60, %cst_26 {dimension_numbers = #tpu.dot_dimension_numbers<[2], [2], [1], [1], [0, 0, 0, 1, 1, 1], [0], [0]>} : vector<2x8x8xf32>, vector<2x8x8xf32>, vector<2x8x8xf32> -> vector<2x8x8xf32>
    "tpu.trace_stop"() : () -> ()
    %cst_27 = arith.constant 0.353553385 : f32
    %62 = vector.broadcast %cst_27 : f32 to vector<2x8x8xf32>
    %63 = arith.mulf %61, %62 : vector<2x8x8xf32>
    %64 = vector.broadcast %8 : vector<2x1x8xf32> to vector<2x8x8xf32>
    %65 = arith.addf %63, %64 : vector<2x8x8xf32>
    %cst_28 = arith.constant dense<0xFF800000> : vector<2x8xf32>
    %66 = vector.multi_reduction <maximumf>, %65, %cst_28 [2] : vector<2x8x8xf32> to vector<2x8xf32>
    %67 = vector.shape_cast %66 : vector<2x8xf32> to vector<2x8x1xf32>
    %68 = vector.broadcast %67 : vector<2x8x1xf32> to vector<2x8x8xf32>
    %69 = arith.subf %65, %68 : vector<2x8x8xf32>
    %70 = math.exp %69 : vector<2x8x8xf32>
    %cst_29 = arith.constant dense<0.000000e+00> : vector<2x8xf32>
    %71 = vector.multi_reduction <add>, %70, %cst_29 [2] : vector<2x8x8xf32> to vector<2x8xf32>
    %72 = vector.shape_cast %71 : vector<2x8xf32> to vector<2x8x1xf32>
    %73 = tpu.reciprocal %72 {approx = true} : vector<2x8x1xf32> -> vector<2x8x1xf32>
    %74 = vector.broadcast %73 : vector<2x8x1xf32> to vector<2x8x8xf32>
    %75 = arith.mulf %70, %74 : vector<2x8x8xf32>
    %76 = vector.extract_strided_slice %20 {offsets = [0, 0, 16], sizes = [2, 8, 8], strides = [1, 1, 1]} : vector<2x8x32xf32> to vector<2x8x8xf32>
    "tpu.trace_start"() <{level = 10 : i32, message = "bqk,bkd->bqd"}> : () -> ()
    %cst_30 = arith.constant dense<0.000000e+00> : vector<2x8x8xf32>
    %77 = tpu.matmul %75, %76, %cst_30 {dimension_numbers = #tpu.dot_dimension_numbers<[2], [1], [1], [2], [0, 0, 0, 1, 1, 2], [0], [0]>} : vector<2x8x8xf32>, vector<2x8x8xf32>, vector<2x8x8xf32> -> vector<2x8x8xf32>
    "tpu.trace_stop"() : () -> ()
    %78 = vector.extract_strided_slice %18 {offsets = [0, 0, 24], sizes = [2, 8, 8], strides = [1, 1, 1]} : vector<2x8x32xf32> to vector<2x8x8xf32>
    %79 = vector.extract_strided_slice %19 {offsets = [0, 0, 24], sizes = [2, 8, 8], strides = [1, 1, 1]} : vector<2x8x32xf32> to vector<2x8x8xf32>
    "tpu.trace_start"() <{level = 10 : i32, message = "bqd,bkd->bqk"}> : () -> ()
    %cst_31 = arith.constant dense<0.000000e+00> : vector<2x8x8xf32>
    %80 = tpu.matmul %78, %79, %cst_31 {dimension_numbers = #tpu.dot_dimension_numbers<[2], [2], [1], [1], [0, 0, 0, 1, 1, 1], [0], [0]>} : vector<2x8x8xf32>, vector<2x8x8xf32>, vector<2x8x8xf32> -> vector<2x8x8xf32>
    "tpu.trace_stop"() : () -> ()
    %cst_32 = arith.constant 0.353553385 : f32
    %81 = vector.broadcast %cst_32 : f32 to vector<2x8x8xf32>
    %82 = arith.mulf %80, %81 : vector<2x8x8xf32>
    %83 = vector.broadcast %8 : vector<2x1x8xf32> to vector<2x8x8xf32>
    %84 = arith.addf %82, %83 : vector<2x8x8xf32>
    %cst_33 = arith.constant dense<0xFF800000> : vector<2x8xf32>
    %85 = vector.multi_reduction <maximumf>, %84, %cst_33 [2] : vector<2x8x8xf32> to vector<2x8xf32>
    %86 = vector.shape_cast %85 : vector<2x8xf32> to vector<2x8x1xf32>
    %87 = vector.broadcast %86 : vector<2x8x1xf32> to vector<2x8x8xf32>
    %88 = arith.subf %84, %87 : vector<2x8x8xf32>
    %89 = math.exp %88 : vector<2x8x8xf32>
    %cst_34 = arith.constant dense<0.000000e+00> : vector<2x8xf32>
    %90 = vector.multi_reduction <add>, %89, %cst_34 [2] : vector<2x8x8xf32> to vector<2x8xf32>
    %91 = vector.shape_cast %90 : vector<2x8xf32> to vector<2x8x1xf32>
    %92 = tpu.reciprocal %91 {approx = true} : vector<2x8x1xf32> -> vector<2x8x1xf32>
    %93 = vector.broadcast %92 : vector<2x8x1xf32> to vector<2x8x8xf32>
    %94 = arith.mulf %89, %93 : vector<2x8x8xf32>
    %95 = vector.extract_strided_slice %20 {offsets = [0, 0, 24], sizes = [2, 8, 8], strides = [1, 1, 1]} : vector<2x8x32xf32> to vector<2x8x8xf32>
    "tpu.trace_start"() <{level = 10 : i32, message = "bqk,bkd->bqd"}> : () -> ()
    %cst_35 = arith.constant dense<0.000000e+00> : vector<2x8x8xf32>
    %96 = tpu.matmul %94, %95, %cst_35 {dimension_numbers = #tpu.dot_dimension_numbers<[2], [1], [1], [2], [0, 0, 0, 1, 1, 2], [0], [0]>} : vector<2x8x8xf32>, vector<2x8x8xf32>, vector<2x8x8xf32> -> vector<2x8x8xf32>
    "tpu.trace_stop"() : () -> ()
    %97 = tpu.concatenate %39, %58, %77, %96 in 2 : vector<2x8x8xf32>, vector<2x8x8xf32>, vector<2x8x8xf32>, vector<2x8x8xf32> -> vector<2x8x32xf32>
    %98 = vector.shape_cast %97 : vector<2x8x32xf32> to vector<16x32xf32>
    %c0_36 = arith.constant 0 : index
    %c0_37 = arith.constant 0 : index
    %c0_38 = arith.constant 0 : index
    %99 = vector.load %arg7[%c0_36, %c0_37, %c0_38] : memref<1x32x32xf32, #tpu.memory_space<vmem>>, vector<1x32x32xf32>
    %100 = vector.shape_cast %99 : vector<1x32x32xf32> to vector<32x32xf32>
    %cst_39 = arith.constant dense<0.000000e+00> : vector<16x32xf32>
    %101 = tpu.matmul %98, %100, %cst_39 {dimension_numbers = #tpu.dot_dimension_numbers<[1], [0], [0], [1], [0, 0, 1, 1], [], []>} : vector<16x32xf32>, vector<32x32xf32>, vector<16x32xf32> -> vector<16x32xf32>
    %c0_40 = arith.constant 0 : index
    %c0_41 = arith.constant 0 : index
    %c0_42 = arith.constant 0 : index
    %102 = vector.load %arg8[%c0_40, %c0_41, %c0_42] : memref<1x1x32xf32, #tpu.memory_space<vmem>>, vector<1x1x32xf32>
    %103 = vector.shape_cast %102 : vector<1x1x32xf32> to vector<1x32xf32>
    %104 = vector.broadcast %103 : vector<1x32xf32> to vector<16x32xf32>
    %105 = arith.addf %101, %104 : vector<16x32xf32>
    %106 = arith.addf %9, %105 : vector<16x32xf32>
    %c0_43 = arith.constant 0 : index
    %c0_44 = arith.constant 0 : index
    %c0_45 = arith.constant 0 : index
    %107 = vector.load %arg9[%c0_43, %c0_44, %c0_45] : memref<1x1x32xf32, #tpu.memory_space<vmem>>, vector<1x1x32xf32>
    %108 = vector.shape_cast %107 : vector<1x1x32xf32> to vector<1x32xf32>
    %c0_46 = arith.constant 0 : index
    %c0_47 = arith.constant 0 : index
    %c0_48 = arith.constant 0 : index
    %109 = vector.load %arg10[%c0_46, %c0_47, %c0_48] : memref<1x1x32xf32, #tpu.memory_space<vmem>>, vector<1x1x32xf32>
    %110 = vector.shape_cast %109 : vector<1x1x32xf32> to vector<1x32xf32>
    %cst_49 = arith.constant dense<0.000000e+00> : vector<16xf32>
    %111 = vector.multi_reduction <add>, %106, %cst_49 [1] : vector<16x32xf32> to vector<16xf32>
    %112 = vector.shape_cast %111 : vector<16xf32> to vector<16x1xf32>
    %cst_50 = arith.constant 3.200000e+01 : f32
    %113 = vector.broadcast %cst_50 : f32 to vector<16x1xf32>
    %114 = arith.divf %112, %113 : vector<16x1xf32>
    %115 = vector.broadcast %114 : vector<16x1xf32> to vector<16x32xf32>
    %116 = arith.subf %106, %115 : vector<16x32xf32>
    %117 = arith.mulf %116, %116 : vector<16x32xf32>
    %cst_51 = arith.constant dense<0.000000e+00> : vector<16xf32>
    %118 = vector.multi_reduction <add>, %117, %cst_51 [1] : vector<16x32xf32> to vector<16xf32>
    %119 = vector.shape_cast %118 : vector<16xf32> to vector<16x1xf32>
    %cst_52 = arith.constant 3.200000e+01 : f32
    %120 = vector.broadcast %cst_52 : f32 to vector<16x1xf32>
    %121 = arith.divf %119, %120 : vector<16x1xf32>
    %122 = vector.broadcast %114 : vector<16x1xf32> to vector<16x32xf32>
    %123 = arith.subf %106, %122 : vector<16x32xf32>
    %cst_53 = arith.constant 9.99999974E-6 : f32
    %124 = vector.broadcast %cst_53 : f32 to vector<16x1xf32>
    %125 = arith.addf %121, %124 : vector<16x1xf32>
    %126 = math.rsqrt %125 : vector<16x1xf32>
    %127 = vector.broadcast %126 : vector<16x1xf32> to vector<16x32xf32>
    %128 = arith.mulf %123, %127 : vector<16x32xf32>
    %129 = vector.broadcast %108 : vector<1x32xf32> to vector<16x32xf32>
    %130 = arith.mulf %128, %129 : vector<16x32xf32>
    %131 = vector.broadcast %110 : vector<1x32xf32> to vector<16x32xf32>
    %132 = arith.addf %130, %131 : vector<16x32xf32>
    %c0_54 = arith.constant 0 : index
    %c0_55 = arith.constant 0 : index
    %c0_56 = arith.constant 0 : index
    %133 = vector.load %arg11[%c0_54, %c0_55, %c0_56] : memref<1x32x64xf32, #tpu.memory_space<vmem>>, vector<1x32x64xf32>
    %134 = vector.shape_cast %133 : vector<1x32x64xf32> to vector<32x64xf32>
    %cst_57 = arith.constant dense<0.000000e+00> : vector<16x64xf32>
    %135 = tpu.matmul %132, %134, %cst_57 {dimension_numbers = #tpu.dot_dimension_numbers<[1], [0], [0], [1], [0, 0, 1, 1], [], []>} : vector<16x32xf32>, vector<32x64xf32>, vector<16x64xf32> -> vector<16x64xf32>
    %c0_58 = arith.constant 0 : index
    %c0_59 = arith.constant 0 : index
    %c0_60 = arith.constant 0 : index
    %136 = vector.load %arg12[%c0_58, %c0_59, %c0_60] : memref<1x1x64xf32, #tpu.memory_space<vmem>>, vector<1x1x64xf32>
    %137 = vector.shape_cast %136 : vector<1x1x64xf32> to vector<1x64xf32>
    %138 = vector.broadcast %137 : vector<1x64xf32> to vector<16x64xf32>
    %139 = arith.addf %135, %138 : vector<16x64xf32>
    %cst_61 = arith.constant 0.000000e+00 : f32
    %140 = vector.broadcast %cst_61 : f32 to vector<16x64xf32>
    %141 = arith.maximumf %139, %140 : vector<16x64xf32>
    %c0_62 = arith.constant 0 : index
    %c0_63 = arith.constant 0 : index
    %c0_64 = arith.constant 0 : index
    %142 = vector.load %arg13[%c0_62, %c0_63, %c0_64] : memref<1x64x32xf32, #tpu.memory_space<vmem>>, vector<1x64x32xf32>
    %143 = vector.shape_cast %142 : vector<1x64x32xf32> to vector<64x32xf32>
    %cst_65 = arith.constant dense<0.000000e+00> : vector<16x32xf32>
    %144 = tpu.matmul %141, %143, %cst_65 {dimension_numbers = #tpu.dot_dimension_numbers<[1], [0], [0], [1], [0, 0, 1, 1], [], []>} : vector<16x64xf32>, vector<64x32xf32>, vector<16x32xf32> -> vector<16x32xf32>
    %c0_66 = arith.constant 0 : index
    %c0_67 = arith.constant 0 : index
    %c0_68 = arith.constant 0 : index
    %145 = vector.load %arg14[%c0_66, %c0_67, %c0_68] : memref<1x1x32xf32, #tpu.memory_space<vmem>>, vector<1x1x32xf32>
    %146 = vector.shape_cast %145 : vector<1x1x32xf32> to vector<1x32xf32>
    %147 = vector.broadcast %146 : vector<1x32xf32> to vector<16x32xf32>
    %148 = arith.addf %144, %147 : vector<16x32xf32>
    %149 = arith.addf %132, %148 : vector<16x32xf32>
    %c0_69 = arith.constant 0 : index
    %c0_70 = arith.constant 0 : index
    %c0_71 = arith.constant 0 : index
    %150 = vector.load %arg15[%c0_69, %c0_70, %c0_71] : memref<1x1x32xf32, #tpu.memory_space<vmem>>, vector<1x1x32xf32>
    %151 = vector.shape_cast %150 : vector<1x1x32xf32> to vector<1x32xf32>
    %c0_72 = arith.constant 0 : index
    %c0_73 = arith.constant 0 : index
    %c0_74 = arith.constant 0 : index
    %152 = vector.load %arg16[%c0_72, %c0_73, %c0_74] : memref<1x1x32xf32, #tpu.memory_space<vmem>>, vector<1x1x32xf32>
    %153 = vector.shape_cast %152 : vector<1x1x32xf32> to vector<1x32xf32>
    %cst_75 = arith.constant dense<0.000000e+00> : vector<16xf32>
    %154 = vector.multi_reduction <add>, %149, %cst_75 [1] : vector<16x32xf32> to vector<16xf32>
    %155 = vector.shape_cast %154 : vector<16xf32> to vector<16x1xf32>
    %cst_76 = arith.constant 3.200000e+01 : f32
    %156 = vector.broadcast %cst_76 : f32 to vector<16x1xf32>
    %157 = arith.divf %155, %156 : vector<16x1xf32>
    %158 = vector.broadcast %157 : vector<16x1xf32> to vector<16x32xf32>
    %159 = arith.subf %149, %158 : vector<16x32xf32>
    %160 = arith.mulf %159, %159 : vector<16x32xf32>
    %cst_77 = arith.constant dense<0.000000e+00> : vector<16xf32>
    %161 = vector.multi_reduction <add>, %160, %cst_77 [1] : vector<16x32xf32> to vector<16xf32>
    %162 = vector.shape_cast %161 : vector<16xf32> to vector<16x1xf32>
    %cst_78 = arith.constant 3.200000e+01 : f32
    %163 = vector.broadcast %cst_78 : f32 to vector<16x1xf32>
    %164 = arith.divf %162, %163 : vector<16x1xf32>
    %165 = vector.broadcast %157 : vector<16x1xf32> to vector<16x32xf32>
    %166 = arith.subf %149, %165 : vector<16x32xf32>
    %cst_79 = arith.constant 9.99999974E-6 : f32
    %167 = vector.broadcast %cst_79 : f32 to vector<16x1xf32>
    %168 = arith.addf %164, %167 : vector<16x1xf32>
    %169 = math.rsqrt %168 : vector<16x1xf32>
    %170 = vector.broadcast %169 : vector<16x1xf32> to vector<16x32xf32>
    %171 = arith.mulf %166, %170 : vector<16x32xf32>
    %172 = vector.broadcast %151 : vector<1x32xf32> to vector<16x32xf32>
    %173 = arith.mulf %171, %172 : vector<16x32xf32>
    %174 = vector.broadcast %153 : vector<1x32xf32> to vector<16x32xf32>
    %175 = arith.addf %173, %174 : vector<16x32xf32>
    %176 = vector.shape_cast %175 : vector<16x32xf32> to vector<2x8x32xf32>
    %c0_80 = arith.constant 0 : index
    %c0_81 = arith.constant 0 : index
    %c0_82 = arith.constant 0 : index
    %177 = vector.load %arg3[%c0_80, %c0_81, %c0_82] : memref<2x8x1xf32, #tpu.memory_space<vmem>>, vector<2x8x1xf32>
    %178 = vector.broadcast %177 : vector<2x8x1xf32> to vector<2x8x32xf32>
    %179 = arith.mulf %176, %178 : vector<2x8x32xf32>
    %cst_83 = arith.constant dense<0.000000e+00> : vector<2x32xf32>
    %180 = vector.multi_reduction <add>, %179, %cst_83 [1] : vector<2x8x32xf32> to vector<2x32xf32>
    %c0_84 = arith.constant 0 : index
    %c0_85 = arith.constant 0 : index
    %181 = vector.load %arg17[%c0_84, %c0_85] : memref<32x5xf32, #tpu.memory_space<vmem>>, vector<32x5xf32>
    %cst_86 = arith.constant dense<0.000000e+00> : vector<2x5xf32>
    %182 = tpu.matmul %180, %181, %cst_86 {dimension_numbers = #tpu.dot_dimension_numbers<[1], [0], [0], [1], [0, 0, 1, 1], [], []>} : vector<2x32xf32>, vector<32x5xf32>, vector<2x5xf32> -> vector<2x5xf32>
    %c0_87 = arith.constant 0 : index
    %c0_88 = arith.constant 0 : index
    %183 = vector.load %arg18[%c0_87, %c0_88] : memref<1x5xf32, #tpu.memory_space<vmem>>, vector<1x5xf32>
    %184 = vector.broadcast %183 : vector<1x5xf32> to vector<2x5xf32>
    %185 = arith.addf %182, %184 : vector<2x5xf32>
    %c0_89 = arith.constant 0 : index
    %c0_90 = arith.constant 0 : index
    %186 = vector.load %arg19[%c0_89, %c0_90] : memref<2x5xf32, #tpu.memory_space<vmem>>, vector<2x5xf32>
    tpu.vector_store %arg19[%c0_89, %c0_90], %185 {strides = array<i32>} : memref<2x5xf32, #tpu.memory_space<vmem>>, vector<2x5xf32>,
    return
  }
  func.func @transform_0(%arg0: i32) -> (i32, i32, i32) {
    %c0_i32 = arith.constant 0 : i32
    %c0_i32_0 = arith.constant 0 : i32
    %c0_i32_1 = arith.constant 0 : i32
    %c0_i32_2 = arith.constant 0 : i32
    return %c0_i32, %c0_i32_0, %c0_i32_1 : i32, i32, i32
  }
  func.func @transform_1(%arg0: i32) -> (i32, i32, i32) {
    %c0_i32 = arith.constant 0 : i32
    %c0_i32_0 = arith.constant 0 : i32
    %c0_i32_1 = arith.constant 0 : i32
    %c0_i32_2 = arith.constant 0 : i32
    return %c0_i32, %c0_i32_0, %c0_i32_1 : i32, i32, i32
  }
  func.func @transform_2(%arg0: i32) -> (i32, i32, i32) {
    %c0_i32 = arith.constant 0 : i32
    %c0_i32_0 = arith.constant 0 : i32
    %c0_i32_1 = arith.constant 0 : i32
    %c0_i32_2 = arith.constant 0 : i32
    return %c0_i32, %c0_i32_0, %c0_i32_1 : i32, i32, i32
  }
  func.func @transform_3(%arg0: i32) -> (i32, i32, i32) {
    %c0_i32 = arith.constant 0 : i32
    %c0_i32_0 = arith.constant 0 : i32
    %c0_i32_1 = arith.constant 0 : i32
    %c0_i32_2 = arith.constant 0 : i32
    return %c0_i32, %c0_i32_0, %c0_i32_1 : i32, i32, i32
  }
  func.func @transform_4(%arg0: i32) -> (i32, i32, i32) {
    %c0_i32 = arith.constant 0 : i32
    %c0_i32_0 = arith.constant 0 : i32
    %c0_i32_1 = arith.constant 0 : i32
    %c0_i32_2 = arith.constant 0 : i32
    return %c0_i32, %c0_i32_0, %c0_i32_1 : i32, i32, i32
  }
  func.func @transform_5(%arg0: i32) -> (i32, i32, i32) {
    %c0_i32 = arith.constant 0 : i32
    %c0_i32_0 = arith.constant 0 : i32
    %c0_i32_1 = arith.constant 0 : i32
    %c0_i32_2 = arith.constant 0 : i32
    return %c0_i32, %c0_i32_0, %c0_i32_1 : i32, i32, i32
  }
  func.func @transform_6(%arg0: i32) -> (i32, i32, i32) {
    %c0_i32 = arith.constant 0 : i32
    %c0_i32_0 = arith.constant 0 : i32
    %c0_i32_1 = arith.constant 0 : i32
    %c0_i32_2 = arith.constant 0 : i32
    return %c0_i32, %c0_i32_0, %c0_i32_1 : i32, i32, i32
  }
  func.func @transform_7(%arg0: i32) -> (i32, i32, i32) {
    %c0_i32 = arith.constant 0 : i32
    %c0_i32_0 = arith.constant 0 : i32
    %c0_i32_1 = arith.constant 0 : i32
    %c0_i32_2 = arith.constant 0 : i32
    return %c0_i32, %c0_i32_0, %c0_i32_1 : i32, i32, i32
  }
  func.func @transform_8(%arg0: i32) -> (i32, i32, i32) {
    %c0_i32 = arith.constant 0 : i32
    %c0_i32_0 = arith.constant 0 : i32
    %c0_i32_1 = arith.constant 0 : i32
    %c0_i32_2 = arith.constant 0 : i32
    return %c0_i32, %c0_i32_0, %c0_i32_1 : i32, i32, i32
  }
  func.func @transform_9(%arg0: i32) -> (i32, i32, i32) {
    %c0_i32 = arith.constant 0 : i32
    %c0_i32_0 = arith.constant 0 : i32
    %c0_i32_1 = arith.constant 0 : i32
    %c0_i32_2 = arith.constant 0 : i32
    return %c0_i32, %c0_i32_0, %c0_i32_1 : i32, i32, i32
  }
  func.func @transform_10(%arg0: i32) -> (i32, i32, i32) {
    %c0_i32 = arith.constant 0 : i32
    %c0_i32_0 = arith.constant 0 : i32
    %c0_i32_1 = arith.constant 0 : i32
    %c0_i32_2 = arith.constant 0 : i32
    return %c0_i32, %c0_i32_0, %c0_i32_1 : i32, i32, i32
  }
  func.func @transform_11(%arg0: i32) -> (i32, i32, i32) {
    %c0_i32 = arith.constant 0 : i32
    %c0_i32_0 = arith.constant 0 : i32
    %c0_i32_1 = arith.constant 0 : i32
    %c0_i32_2 = arith.constant 0 : i32
    return %c0_i32, %c0_i32_0, %c0_i32_1 : i32, i32, i32
  }
  func.func @transform_12(%arg0: i32) -> (i32, i32, i32) {
    %c0_i32 = arith.constant 0 : i32
    %c0_i32_0 = arith.constant 0 : i32
    %c0_i32_1 = arith.constant 0 : i32
    %c0_i32_2 = arith.constant 0 : i32
    return %c0_i32, %c0_i32_0, %c0_i32_1 : i32, i32, i32
  }
  func.func @transform_13(%arg0: i32) -> (i32, i32, i32) {
    %c0_i32 = arith.constant 0 : i32
    %c0_i32_0 = arith.constant 0 : i32
    %c0_i32_1 = arith.constant 0 : i32
    %c0_i32_2 = arith.constant 0 : i32
    return %c0_i32, %c0_i32_0, %c0_i32_1 : i32, i32, i32
  }
  func.func @transform_14(%arg0: i32) -> (i32, i32, i32) {
    %c0_i32 = arith.constant 0 : i32
    %c0_i32_0 = arith.constant 0 : i32
    %c0_i32_1 = arith.constant 0 : i32
    %c0_i32_2 = arith.constant 0 : i32
    return %c0_i32, %c0_i32_0, %c0_i32_1 : i32, i32, i32
  }
  func.func @transform_15(%arg0: i32) -> (i32, i32, i32) {
    %c0_i32 = arith.constant 0 : i32
    %c0_i32_0 = arith.constant 0 : i32
    %c0_i32_1 = arith.constant 0 : i32
    %c0_i32_2 = arith.constant 0 : i32
    return %c0_i32, %c0_i32_0, %c0_i32_1 : i32, i32, i32
  }
  func.func @transform_16(%arg0: i32) -> (i32, i32) {
    %c0_i32 = arith.constant 0 : i32
    %c0_i32_0 = arith.constant 0 : i32
    %c0_i32_1 = arith.constant 0 : i32
    return %c0_i32, %c0_i32_0 : i32, i32
  }
  func.func @transform_17(%arg0: i32) -> (i32, i32) {
    %c0_i32 = arith.constant 0 : i32
    %c0_i32_0 = arith.constant 0 : i32
    %c0_i32_1 = arith.constant 0 : i32
    return %c0_i32, %c0_i32_0 : i32, i32
  }
  func.func @transform_18(%arg0: i32) -> (i32, i32) {
    %c0_i32 = arith.constant 0 : i32
    %c0_i32_0 = arith.constant 0 : i32
    %c0_i32_1 = arith.constant 0 : i32
    return %c0_i32, %c0_i32_0 : i32, i32
  }
}

</mosaic_0001>

<llo_original>
// kernel: run_masked.3
$region0: #{run_masked.3}
  #allocation0 [shape = 'u32[]', space=smem, size = 0x4, offset = 0x4, fixed_abs, tag = 'smem constant byte address 0x4 - core index']
  #allocation1 [shape = 'u32[144,128]{1,0:T(1,128)}', space=vmem, size = 0x12000, scoped, tag = 'internal scratch']
  %s0 = inlined_call_operand.vmem [shape: f32[2,16,32], index: 0, kind: input, shape index: {}]
  %s1 = inlined_call_operand.vmem [shape: f32[1,8,32], index: 1, kind: input, shape index: {}]
  %s2 = inlined_call_operand.vmem [shape: f32[2,8,1], index: 2, kind: input, shape index: {}]
  %s3 = inlined_call_operand.vmem [shape: f32[2,1,8], index: 3, kind: input, shape index: {}]
  %s4 = inlined_call_operand.vmem [shape: f32[1,32,96], index: 4, kind: input, shape index: {}]
  %s5 = inlined_call_operand.vmem [shape: f32[1,1,96], index: 5, kind: input, shape index: {}]
  %s6 = inlined_call_operand.vmem [shape: f32[1,32,32], index: 6, kind: input, shape index: {}]
  %s7 = inlined_call_operand.vmem [shape: f32[1,1,32], index: 7, kind: input, shape index: {}]
  %s8 = inlined_call_operand.vmem [shape: f32[1,1,32], index: 8, kind: input, shape index: {}]
  %s9 = inlined_call_operand.vmem [shape: f32[1,1,32], index: 9, kind: input, shape index: {}]
  %s10 = inlined_call_operand.vmem [shape: f32[1,32,64], index: 10, kind: input, shape index: {}]
  %s11 = inlined_call_operand.vmem [shape: f32[1,1,64], index: 11, kind: input, shape index: {}]
  %s12 = inlined_call_operand.vmem [shape: f32[1,64,32], index: 12, kind: input, shape index: {}]
  %s13 = inlined_call_operand.vmem [shape: f32[1,1,32], index: 13, kind: input, shape index: {}]
  %s14 = inlined_call_operand.vmem [shape: f32[1,1,32], index: 14, kind: input, shape index: {}]
  %s15 = inlined_call_operand.vmem [shape: f32[1,1,32], index: 15, kind: input, shape index: {}]
  %s16 = inlined_call_operand.vmem [shape: f32[32,5], index: 16, kind: input, shape index: {}]
  %s17 = inlined_call_operand.vmem [shape: f32[1,5], index: 17, kind: input, shape index: {}]
  %s18 = inlined_call_operand.hbm [shape: f32[2,5], index: 18, kind: output, shape index: {}]
  %s19 = sld [smem:[#allocation0]]
  $region82: #{run_masked.3} parent=0
    _
  %s21 = ssub.s32 1, %s19
  %s22 = scalar_select 0, %s21, %s19
  $region1: #{run_masked.3} parent=0
    #allocation2 [shape = 'u8[1024]{0}', space=vmem, size = 0x400, scoped, tag = 'output window, operand 0, single buffered']
    #allocation3 [shape = 's32[1]{0}', space=sflag, size = 0x4, scoped, tag = 'scoped memory for run_masked.3']
    %23 = vsyncpa [#allocation3], 0
    // Predicated region
    $region2: #{run_masked.3} parent=1 // pred_check
      _
    $region3: #{run_masked.3} parent=1 // pred_check_branch
      %25 = sbr.rel (0) target = $region5
    $region4: #{run_masked.3} parent=1 // pred_region
      _
    $region5: #{run_masked.3} parent=1 // pred_fallthru
      _
    // Predicated region
    $region6: #{run_masked.3} parent=1 // pred_check
      _
    $region7: #{run_masked.3} parent=1 // pred_check_branch
      %27 = sbr.rel (0) target = $region9
    $region8: #{run_masked.3} parent=1 // pred_region
      _
    $region9: #{run_masked.3} parent=1 // pred_fallthru
      _
    // Predicated region
    $region10: #{run_masked.3} parent=1 // pred_check
      _
    $region11: #{run_masked.3} parent=1 // pred_check_branch
      %29 = sbr.rel (0) target = $region13
    $region12: #{run_masked.3} parent=1 // pred_region
      _
    $region13: #{run_masked.3} parent=1 // pred_fallthru
      _
    // Predicated region
    $region14: #{run_masked.3} parent=1 // pred_check
      _
    $region15: #{run_masked.3} parent=1 // pred_check_branch
      %31 = sbr.rel (0) target = $region17
    $region16: #{run_masked.3} parent=1 // pred_region
      _
    $region17: #{run_masked.3} parent=1 // pred_fallthru
      _
    // Predicated region
    $region18: #{run_masked.3} parent=1 // pred_check
      _
    $region19: #{run_masked.3} parent=1 // pred_check_branch
      %33 = sbr.rel (0) target = $region21
    $region20: #{run_masked.3} parent=1 // pred_region
      _
    $region21: #{run_masked.3} parent=1 // pred_fallthru
      _
    // Predicated region
    $region22: #{run_masked.3} parent=1 // pred_check
      _
    $region23: #{run_masked.3} parent=1 // pred_check_branch
      %35 = sbr.rel (0) target = $region25
    $region24: #{run_masked.3} parent=1 // pred_region
      _
    $region25: #{run_masked.3} parent=1 // pred_fallthru
      _
    // Predicated region
    $region26: #{run_masked.3} parent=1 // pred_check
      _
    $region27: #{run_masked.3} parent=1 // pred_check_branch
      %37 = sbr.rel (0) target = $region29
    $region28: #{run_masked.3} parent=1 // pred_region
      _
    $region29: #{run_masked.3} parent=1 // pred_fallthru
      _
    // Predicated region
    $region30: #{run_masked.3} parent=1 // pred_check
      _
    $region31: #{run_masked.3} parent=1 // pred_check_branch
      %39 = sbr.rel (0) target = $region33
    $region32: #{run_masked.3} parent=1 // pred_region
      _
    $region33: #{run_masked.3} parent=1 // pred_fallthru
      _
    // Predicated region
    $region34: #{run_masked.3} parent=1 // pred_check
      _
    $region35: #{run_masked.3} parent=1 // pred_check_branch
      %41 = sbr.rel (0) target = $region37
    $region36: #{run_masked.3} parent=1 // pred_region
      _
    $region37: #{run_masked.3} parent=1 // pred_fallthru
      _
    // Predicated region
    $region38: #{run_masked.3} parent=1 // pred_check
      _
    $region39: #{run_masked.3} parent=1 // pred_check_branch
      %43 = sbr.rel (0) target = $region41
    $region40: #{run_masked.3} parent=1 // pred_region
      _
    $region41: #{run_masked.3} parent=1 // pred_fallthru
      _
    // Predicated region
    $region42: #{run_masked.3} parent=1 // pred_check
      _
    $region43: #{run_masked.3} parent=1 // pred_check_branch
      %45 = sbr.rel (0) target = $region45
    $region44: #{run_masked.3} parent=1 // pred_region
      _
    $region45: #{run_masked.3} parent=1 // pred_fallthru
      _
    // Predicated region
    $region46: #{run_masked.3} parent=1 // pred_check
      _
    $region47: #{run_masked.3} parent=1 // pred_check_branch
      %47 = sbr.rel (0) target = $region49
    $region48: #{run_masked.3} parent=1 // pred_region
      _
    $region49: #{run_masked.3} parent=1 // pred_fallthru
      _
    // Predicated region
    $region50: #{run_masked.3} parent=1 // pred_check
      _
    $region51: #{run_masked.3} parent=1 // pred_check_branch
      %49 = sbr.rel (0) target = $region53
    $region52: #{run_masked.3} parent=1 // pred_region
      _
    $region53: #{run_masked.3} parent=1 // pred_fallthru
      _
    // Predicated region
    $region54: #{run_masked.3} parent=1 // pred_check
      _
    $region55: #{run_masked.3} parent=1 // pred_check_branch
      %51 = sbr.rel (0) target = $region57
    $region56: #{run_masked.3} parent=1 // pred_region
      _
    $region57: #{run_masked.3} parent=1 // pred_fallthru
      _
    // Predicated region
    $region58: #{run_masked.3} parent=1 // pred_check
      _
    $region59: #{run_masked.3} parent=1 // pred_check_branch
      %53 = sbr.rel (0) target = $region61
    $region60: #{run_masked.3} parent=1 // pred_region
      _
    $region61: #{run_masked.3} parent=1 // pred_fallthru
      _
    // Predicated region
    $region62: #{run_masked.3} parent=1 // pred_check
      _
    $region63: #{run_masked.3} parent=1 // pred_check_branch
      %55 = sbr.rel (0) target = $region65
    $region64: #{run_masked.3} parent=1 // pred_region
      _
    $region65: #{run_masked.3} parent=1 // pred_fallthru
      _
    // Predicated region
    $region66: #{run_masked.3} parent=1 // pred_check
      _
    $region67: #{run_masked.3} parent=1 // pred_check_branch
      %57 = sbr.rel (0) target = $region69
    $region68: #{run_masked.3} parent=1 // pred_region
      _
    $region69: #{run_masked.3} parent=1 // pred_fallthru
      _
    // Predicated region
    $region70: #{run_masked.3} parent=1 // pred_check
      _
    $region71: #{run_masked.3} parent=1 // pred_check_branch
      %59 = sbr.rel (0) target = $region73
    $region72: #{run_masked.3} parent=1 // pred_region
      _
    $region73: #{run_masked.3} parent=1 // pred_fallthru
      _
    %v60 = vld [vmem:[%s0] sm:$0xff]
    %v61 = vld [vmem:[%s0 + $0x8] sm:$0xff]
    %v62 = vld [vmem:[%s0 + $0x10] sm:$0xff]
    %v63 = vld [vmem:[%s0 + $0x18] sm:$0xff]
    %vm64 = vcmask 261120
    %v65 = vsel %vm64, %v60, 0.0
    %v66 = vsel %vm64, %v62, 0.0
    %v67 = vadd.f32 %v65, %v66
    %v68 = vsel %vm64, %v61, 0.0
    %v69 = vsel %vm64, %v63, 0.0
    %v70 = vadd.f32 %v68, %v69
    %v71 = vmul.f32 %v67, 0.125
    %v72 = vmul.f32 %v70, 0.125
    %v73 = vld [vmem:[%s1] sm:$0xff]
    %v74 = vadd.f32 %v71, %v73
    %v75 = vadd.f32 %v72, %v73
    %v76 = vld [vmem:[%s3] sm:$0x1]
    %v77 = vld [vmem:[%s3 + $0x1] sm:$0x1]
    %v78 = vld [vmem:[%s4] sm:$0xff]
    %v79 = vld [vmem:[%s4 + $0x8] sm:$0xff]
    %v80 = vld [vmem:[%s4 + $0x10] sm:$0xff]
    %v81 = vld [vmem:[%s4 + $0x18] sm:$0xff]
    %v82 = vld [vmem:[%s5] sm:$0x1]
    %v84 = vlaneseq
    %v85 = vshrl.u32 %v84, 7
    %v86 = vsub.s32 0, %v85
    %v87 = vrot.slane %v82, %v86
    %v90 = vsel %vm64, %v74, 0
    %v93 = vsel %vm64, %v75, 0
    %95 = vmatprep.subr.mxu0 0.0
    %96 = vmatpush1.msra.mxu0 %v78
    %97 = vmatprep.subr.mxu0 0.0
    %98 = vmatpush1.msra.mxu0 %v79
    %99 = vmatprep.subr.mxu0 0.0
    %100 = vmatpush1.msra.mxu0 %v80
    %101 = vmatprep.subr.mxu0 0.0
    %102 = vmatpush1.msra.mxu0 %v81
    %103 = vmatprep.subr.mxu0 0.0
    %104 = vmatpush1.msra.mxu0 0.0
    %105 = vmatprep.subr.mxu0 0.0
    %106 = vmatpush1.msra.mxu0 0.0
    %107 = vmatprep.subr.mxu0 0.0
    %108 = vmatpush1.msra.mxu0 0.0
    %109 = vmatprep.subr.mxu0 0.0
    %110 = vmatpush1.msra.mxu0 0.0
    %111 = vmatprep.subr.mxu0 0.0
    %112 = vmatpush1.msra.mxu0 0.0
    %113 = vmatprep.subr.mxu0 0.0
    %114 = vmatpush1.msra.mxu0 0.0
    %115 = vmatprep.subr.mxu0 0.0
    %116 = vmatpush1.msra.mxu0 0.0
    %117 = vmatprep.subr.mxu0 0.0
    %118 = vmatpush1.msra.mxu0 0.0
    %119 = vmatprep.subr.mxu0 0.0
    %120 = vmatpush1.msra.mxu0 0.0
    %121 = vmatprep.subr.mxu0 0.0
    %122 = vmatpush1.msra.mxu0 0.0
    %123 = vmatprep.subr.mxu0 0.0
    %124 = vmatpush1.msra.mxu0 0.0
    %125 = vmatprep.subr.mxu0 0.0
    %126 = vmatpush1.msra.mxu0 0.0
    %127 = vmatprep.subr.mxu0 0.0
    %128 = vmatpush1.msra.mxu0 0.0
    %129 = vmatprep.subr.mxu0 0.0
    %130 = vmatpush1.msra.mxu0 0.0
    %131 = vmatprep.subr.mxu0 0.0
    %132 = vmatpush1.msra.mxu0 0.0
    %133 = vmatprep.subr.mxu0 0.0
    %134 = vmatpush1.msra.mxu0 0.0
    %135 = vmatprep.subr.mxu0 0.0
    %136 = vmatpush1.msra.mxu0 0.0
    %137 = vmatprep.subr.mxu0 0.0
    %138 = vmatpush1.msra.mxu0 0.0
    %139 = vmatprep.subr.mxu0 0.0
    %140 = vmatpush1.msra.mxu0 0.0
    %141 = vmatprep.subr.mxu0 0.0
    %142 = vmatpush1.msra.mxu0 0.0
    %143 = vmatprep.subr.mxu0 0.0
    %144 = vmatpush1.msra.mxu0 0.0
    %145 = vmatprep.subr.mxu0 0.0
    %146 = vmatpush1.msra.mxu0 0.0
    %147 = vmatprep.subr.mxu0 0.0
    %148 = vmatpush1.msra.mxu0 0.0
    %149 = vmatprep.subr.mxu0 0.0
    %150 = vmatpush1.msra.mxu0 0.0
    %151 = vmatprep.subr.mxu0 0.0
    %152 = vmatpush1.msra.mxu0 0.0
    %153 = vmatprep.subr.mxu0 0.0
    %154 = vmatpush1.msra.mxu0 0.0
    %155 = vmatprep.subr.mxu0 0.0
    %156 = vmatpush1.msra.mxu0 0.0
    %157 = vmatprep.subr.mxu0 0.0
    %158 = vmatpush1.msra.mxu0 0.0
    %159 = vmatprep.mubr.f32.mxu0 0.0
    %160 = vmatmul.mubr.f32.gmra.mrb[0].mxu0 %v90
    %v161 = vpop.f32.mrb[0].mxu0
    %v162 = vadd.f32 %v87, %v161
    %v163 = vpop.f32.mrb[0].mxu0
    %164 = vmatprep.mubr.f32.mxu0 0.0
    %165 = vmatmul.mubr.f32.gmra.mrb[0].mxu0 %v93
    %v166 = vpop.f32.mrb[0].mxu0
    %v167 = vadd.f32 %v87, %v166
    %v168 = vpop.f32.mrb[0].mxu0
    %169 = vdwg.mxu0
    %171 = vrot.lane.b32.xlu0 %v162, 96
    %v172 = vpop.permute.xlu0 %171
    %vm173 = vcmask 64512
    %v174 = vsel %vm173, %v162, 0
    %v176 = vsel %vm173, %v172, 0
    %178 = vmatprep.subr.mxu0 0.0
    %179 = vmatpush1.xpose.msra.mxu0 %v176
    %180 = vmatprep.subr.mxu0 0.0
    %181 = vmatpush1.xpose.msra.mxu0 0.0
    %182 = vmatprep.subr.mxu0 0.0
    %183 = vmatpush1.xpose.msra.mxu0 0.0
    %184 = vmatprep.subr.mxu0 0.0
    %185 = vmatpush1.xpose.msra.mxu0 0.0
    %186 = vmatprep.subr.mxu0 0.0
    %187 = vmatpush1.xpose.msra.mxu0 0.0
    %188 = vmatprep.subr.mxu0 0.0
    %189 = vmatpush1.xpose.msra.mxu0 0.0
    %190 = vmatprep.subr.mxu0 0.0
    %191 = vmatpush1.xpose.msra.mxu0 0.0
    %192 = vmatprep.subr.mxu0 0.0
    %193 = vmatpush1.xpose.msra.mxu0 0.0
    %194 = vmatprep.subr.mxu0 0.0
    %195 = vmatpush1.xpose.msra.mxu0 0.0
    %196 = vmatprep.subr.mxu0 0.0
    %197 = vmatpush1.xpose.msra.mxu0 0.0
    %198 = vmatprep.subr.mxu0 0.0
    %199 = vmatpush1.xpose.msra.mxu0 0.0
    %200 = vmatprep.subr.mxu0 0.0
    %201 = vmatpush1.xpose.msra.mxu0 0.0
    %202 = vmatprep.subr.mxu0 0.0
    %203 = vmatpush1.xpose.msra.mxu0 0.0
    %204 = vmatprep.subr.mxu0 0.0
    %205 = vmatpush1.xpose.msra.mxu0 0.0
    %206 = vmatprep.subr.mxu0 0.0
    %207 = vmatpush1.xpose.msra.mxu0 0.0
    %208 = vmatprep.subr.mxu0 0.0
    %209 = vmatpush1.xpose.msra.mxu0 0.0
    %210 = vmatprep.subr.mxu0 0.0
    %211 = vmatpush1.xpose.msra.mxu0 0.0
    %212 = vmatprep.subr.mxu0 0.0
    %213 = vmatpush1.xpose.msra.mxu0 0.0
    %214 = vmatprep.subr.mxu0 0.0
    %215 = vmatpush1.xpose.msra.mxu0 0.0
    %216 = vmatprep.subr.mxu0 0.0
    %217 = vmatpush1.xpose.msra.mxu0 0.0
    %218 = vmatprep.subr.mxu0 0.0
    %219 = vmatpush1.xpose.msra.mxu0 0.0
    %220 = vmatprep.subr.mxu0 0.0
    %221 = vmatpush1.xpose.msra.mxu0 0.0
    %222 = vmatprep.subr.mxu0 0.0
    %223 = vmatpush1.xpose.msra.mxu0 0.0
    %224 = vmatprep.subr.mxu0 0.0
    %225 = vmatpush1.xpose.msra.mxu0 0.0
    %226 = vmatprep.subr.mxu0 0.0
    %227 = vmatpush1.xpose.msra.mxu0 0.0
    %228 = vmatprep.subr.mxu0 0.0
    %229 = vmatpush1.xpose.msra.mxu0 0.0
    %230 = vmatprep.subr.mxu0 0.0
    %231 = vmatpush1.xpose.msra.mxu0 0.0
    %232 = vmatprep.subr.mxu0 0.0
    %233 = vmatpush1.xpose.msra.mxu0 0.0
    %234 = vmatprep.subr.mxu0 0.0
    %235 = vmatpush1.xpose.msra.mxu0 0.0
    %236 = vmatprep.subr.mxu0 0.0
    %237 = vmatpush1.xpose.msra.mxu0 0.0
    %238 = vmatprep.subr.mxu0 0.0
    %239 = vmatpush1.xpose.msra.mxu0 0.0
    %240 = vmatprep.subr.mxu0 0.0
    %241 = vmatpush1.xpose.msra.mxu0 0.0
    %242 = vmatprep.mubr.f32.mxu0 0.0
    %243 = vmatmul.mubr.f32.gmra.mrb[0].mxu0 %v174
    %v244 = vpop.f32.mrb[0].mxu0
    %v245 = vadd.f32 0.0, %v244
    %v246 = vpop.f32.mrb[0].mxu0
    %247 = vdwg.mxu0
    %249 = vrot.lane.b32.xlu0 %v167, 96
    %v250 = vpop.permute.xlu0 %249
    %v251 = vsel %vm173, %v167, 0
    %v253 = vsel %vm173, %v250, 0
    %255 = vmatprep.subr.mxu0 0.0
    %256 = vmatpush1.xpose.msra.mxu0 %v253
    %257 = vmatprep.subr.mxu0 0.0
    %258 = vmatpush1.xpose.msra.mxu0 0.0
    %259 = vmatprep.subr.mxu0 0.0
    %260 = vmatpush1.xpose.msra.mxu0 0.0
    %261 = vmatprep.subr.mxu0 0.0
    %262 = vmatpush1.xpose.msra.mxu0 0.0
    %263 = vmatprep.subr.mxu0 0.0
    %264 = vmatpush1.xpose.msra.mxu0 0.0
    %265 = vmatprep.subr.mxu0 0.0
    %266 = vmatpush1.xpose.msra.mxu0 0.0
    %267 = vmatprep.subr.mxu0 0.0
    %268 = vmatpush1.xpose.msra.mxu0 0.0
    %269 = vmatprep.subr.mxu0 0.0
    %270 = vmatpush1.xpose.msra.mxu0 0.0
    %271 = vmatprep.subr.mxu0 0.0
    %272 = vmatpush1.xpose.msra.mxu0 0.0
    %273 = vmatprep.subr.mxu0 0.0
    %274 = vmatpush1.xpose.msra.mxu0 0.0
    %275 = vmatprep.subr.mxu0 0.0
    %276 = vmatpush1.xpose.msra.mxu0 0.0
    %277 = vmatprep.subr.mxu0 0.0
    %278 = vmatpush1.xpose.msra.mxu0 0.0
    %279 = vmatprep.subr.mxu0 0.0
    %280 = vmatpush1.xpose.msra.mxu0 0.0
    %281 = vmatprep.subr.mxu0 0.0
    %282 = vmatpush1.xpose.msra.mxu0 0.0
    %283 = vmatprep.subr.mxu0 0.0
    %284 = vmatpush1.xpose.msra.mxu0 0.0
    %285 = vmatprep.subr.mxu0 0.0
    %286 = vmatpush1.xpose.msra.mxu0 0.0
    %287 = vmatprep.subr.mxu0 0.0
    %288 = vmatpush1.xpose.msra.mxu0 0.0
    %289 = vmatprep.subr.mxu0 0.0
    %290 = vmatpush1.xpose.msra.mxu0 0.0
    %291 = vmatprep.subr.mxu0 0.0
    %292 = vmatpush1.xpose.msra.mxu0 0.0
    %293 = vmatprep.subr.mxu0 0.0
    %294 = vmatpush1.xpose.msra.mxu0 0.0
    %295 = vmatprep.subr.mxu0 0.0
    %296 = vmatpush1.xpose.msra.mxu0 0.0
    %297 = vmatprep.subr.mxu0 0.0
    %298 = vmatpush1.xpose.msra.mxu0 0.0
    %299 = vmatprep.subr.mxu0 0.0
    %300 = vmatpush1.xpose.msra.mxu0 0.0
    %301 = vmatprep.subr.mxu0 0.0
    %302 = vmatpush1.xpose.msra.mxu0 0.0
    %303 = vmatprep.subr.mxu0 0.0
    %304 = vmatpush1.xpose.msra.mxu0 0.0
    %305 = vmatprep.subr.mxu0 0.0
    %306 = vmatpush1.xpose.msra.mxu0 0.0
    %307 = vmatprep.subr.mxu0 0.0
    %308 = vmatpush1.xpose.msra.mxu0 0.0
    %309 = vmatprep.subr.mxu0 0.0
    %310 = vmatpush1.xpose.msra.mxu0 0.0
    %311 = vmatprep.subr.mxu0 0.0
    %312 = vmatpush1.xpose.msra.mxu0 0.0
    %313 = vmatprep.subr.mxu0 0.0
    %314 = vmatpush1.xpose.msra.mxu0 0.0
    %315 = vmatprep.subr.mxu0 0.0
    %316 = vmatpush1.xpose.msra.mxu0 0.0
    %317 = vmatprep.subr.mxu0 0.0
    %318 = vmatpush1.xpose.msra.mxu0 0.0
    %319 = vmatprep.mubr.f32.mxu0 0.0
    %320 = vmatmul.mubr.f32.gmra.mrb[0].mxu0 %v251
    %v321 = vpop.f32.mrb[0].mxu0
    %v322 = vadd.f32 0.0, %v321
    %v323 = vpop.f32.mrb[0].mxu0
    %324 = vdwg.mxu0
    %v325 = vmul.f32 %v245, 0.35355338
    %v326 = vmul.f32 %v322, 0.35355338
    %v329 = vlaneseq
    %v330 = vshrl.u32 %v329, 7
    %v331 = vsub.s32 0, %v330
    %v332 = vrot.slane %v76, %v331
    %v333 = vlaneseq
    %v334 = vshrl.u32 %v333, 7
    %v335 = vsub.s32 0, %v334
    %v336 = vrot.slane %v77, %v335
    %v339 = vadd.f32 %v325, %v332
    %v340 = vadd.f32 %v326, %v336
    %v341 = vsel %vm173, %v339, -inf
    %342 = vmax.xlane.f32.xlu0 %v341
    %v343 = vpop.xlane.xlu0 %342
    %v344 = vsel %vm173, %v340, -inf
    %345 = vmax.xlane.f32.xlu0 %v344
    %v346 = vpop.xlane.xlu0 %345
    %v347 = vsub.f32 %v339, %v343
    %v348 = vsub.f32 %v340, %v346
    %v349 = vmul.f32 %v347, 1.442695
    %v350 = vpow.pop %v349
    %v351 = vmul.f32 %v348, 1.442695
    %v352 = vpow.pop %v351
    %v353 = vsel %vm173, %v350, 0.0
    %354 = vadd.xlane.f32.xlu0 %v353
    %v355 = vpop.xlane.xlu0 %354
    %v356 = vsel %vm173, %v352, 0.0
    %357 = vadd.xlane.f32.xlu0 %v356
    %v358 = vpop.xlane.xlu0 %357
    %v359 = vrcp.pop %v355
    %v360 = vrcp.pop %v358
    %v361 = vmul.f32 %v350, %v359
    %v362 = vmul.f32 %v352, %v360
    %363 = vrot.lane.b32.xlu0 %v162, 64
    %v364 = vpop.permute.xlu0 %363
    %v367 = vsel %vm173, %v361, 0
    %369 = vmatprep.subr.mxu0 0.0
    %370 = vmatpush1.msra.mxu0 %v364
    %371 = vmatprep.subr.mxu0 0.0
    %372 = vmatpush1.msra.mxu0 0.0
    %373 = vmatprep.subr.mxu0 0.0
    %374 = vmatpush1.msra.mxu0 0.0
    %375 = vmatprep.subr.mxu0 0.0
    %376 = vmatpush1.msra.mxu0 0.0
    %377 = vmatprep.subr.mxu0 0.0
    %378 = vmatpush1.msra.mxu0 0.0
    %379 = vmatprep.subr.mxu0 0.0
    %380 = vmatpush1.msra.mxu0 0.0
    %381 = vmatprep.subr.mxu0 0.0
    %382 = vmatpush1.msra.mxu0 0.0
    %383 = vmatprep.subr.mxu0 0.0
    %384 = vmatpush1.msra.mxu0 0.0
    %385 = vmatprep.subr.mxu0 0.0
    %386 = vmatpush1.msra.mxu0 0.0
    %387 = vmatprep.subr.mxu0 0.0
    %388 = vmatpush1.msra.mxu0 0.0
    %389 = vmatprep.subr.mxu0 0.0
    %390 = vmatpush1.msra.mxu0 0.0
    %391 = vmatprep.subr.mxu0 0.0
    %392 = vmatpush1.msra.mxu0 0.0
    %393 = vmatprep.subr.mxu0 0.0
    %394 = vmatpush1.msra.mxu0 0.0
    %395 = vmatprep.subr.mxu0 0.0
    %396 = vmatpush1.msra.mxu0 0.0
    %397 = vmatprep.subr.mxu0 0.0
    %398 = vmatpush1.msra.mxu0 0.0
    %399 = vmatprep.subr.mxu0 0.0
    %400 = vmatpush1.msra.mxu0 0.0
    %401 = vmatprep.subr.mxu0 0.0
    %402 = vmatpush1.msra.mxu0 0.0
    %403 = vmatprep.subr.mxu0 0.0
    %404 = vmatpush1.msra.mxu0 0.0
    %405 = vmatprep.subr.mxu0 0.0
    %406 = vmatpush1.msra.mxu0 0.0
    %407 = vmatprep.subr.mxu0 0.0
    %408 = vmatpush1.msra.mxu0 0.0
    %409 = vmatprep.subr.mxu0 0.0
    %410 = vmatpush1.msra.mxu0 0.0
    %411 = vmatprep.subr.mxu0 0.0
    %412 = vmatpush1.msra.mxu0 0.0
    %413 = vmatprep.subr.mxu0 0.0
    %414 = vmatpush1.msra.mxu0 0.0
    %415 = vmatprep.subr.mxu0 0.0
    %416 = vmatpush1.msra.mxu0 0.0
    %417 = vmatprep.subr.mxu0 0.0
    %418 = vmatpush1.msra.mxu0 0.0
    %419 = vmatprep.subr.mxu0 0.0
    %420 = vmatpush1.msra.mxu0 0.0
    %421 = vmatprep.subr.mxu0 0.0
    %422 = vmatpush1.msra.mxu0 0.0
    %423 = vmatprep.subr.mxu0 0.0
    %424 = vmatpush1.msra.mxu0 0.0
    %425 = vmatprep.subr.mxu0 0.0
    %426 = vmatpush1.msra.mxu0 0.0
    %427 = vmatprep.subr.mxu0 0.0
    %428 = vmatpush1.msra.mxu0 0.0
    %429 = vmatprep.subr.mxu0 0.0
    %430 = vmatpush1.msra.mxu0 0.0
    %431 = vmatprep.subr.mxu0 0.0
    %432 = vmatpush1.msra.mxu0 0.0
    %433 = vmatprep.mubr.f32.mxu0 0.0
    %434 = vmatmul.mubr.f32.gmra.mrb[0].mxu0 %v367
    %v435 = vpop.f32.mrb[0].mxu0
    %v436 = vadd.f32 0.0, %v435
    %v437 = vpop.f32.mrb[0].mxu0
    %438 = vdwg.mxu0
    %439 = vrot.lane.b32.xlu0 %v167, 64
    %v440 = vpop.permute.xlu0 %439
    %v443 = vsel %vm173, %v362, 0
    %445 = vmatprep.subr.mxu0 0.0
    %446 = vmatpush1.msra.mxu0 %v440
    %447 = vmatprep.subr.mxu0 0.0
    %448 = vmatpush1.msra.mxu0 0.0
    %449 = vmatprep.subr.mxu0 0.0
    %450 = vmatpush1.msra.mxu0 0.0
    %451 = vmatprep.subr.mxu0 0.0
    %452 = vmatpush1.msra.mxu0 0.0
    %453 = vmatprep.subr.mxu0 0.0
    %454 = vmatpush1.msra.mxu0 0.0
    %455 = vmatprep.subr.mxu0 0.0
    %456 = vmatpush1.msra.mxu0 0.0
    %457 = vmatprep.subr.mxu0 0.0
    %458 = vmatpush1.msra.mxu0 0.0
    %459 = vmatprep.subr.mxu0 0.0
    %460 = vmatpush1.msra.mxu0 0.0
    %461 = vmatprep.subr.mxu0 0.0
    %462 = vmatpush1.msra.mxu0 0.0
    %463 = vmatprep.subr.mxu0 0.0
    %464 = vmatpush1.msra.mxu0 0.0
    %465 = vmatprep.subr.mxu0 0.0
    %466 = vmatpush1.msra.mxu0 0.0
    %467 = vmatprep.subr.mxu0 0.0
    %468 = vmatpush1.msra.mxu0 0.0
    %469 = vmatprep.subr.mxu0 0.0
    %470 = vmatpush1.msra.mxu0 0.0
    %471 = vmatprep.subr.mxu0 0.0
    %472 = vmatpush1.msra.mxu0 0.0
    %473 = vmatprep.subr.mxu0 0.0
    %474 = vmatpush1.msra.mxu0 0.0
    %475 = vmatprep.subr.mxu0 0.0
    %476 = vmatpush1.msra.mxu0 0.0
    %477 = vmatprep.subr.mxu0 0.0
    %478 = vmatpush1.msra.mxu0 0.0
    %479 = vmatprep.subr.mxu0 0.0
    %480 = vmatpush1.msra.mxu0 0.0
    %481 = vmatprep.subr.mxu0 0.0
    %482 = vmatpush1.msra.mxu0 0.0
    %483 = vmatprep.subr.mxu0 0.0
    %484 = vmatpush1.msra.mxu0 0.0
    %485 = vmatprep.subr.mxu0 0.0
    %486 = vmatpush1.msra.mxu0 0.0
    %487 = vmatprep.subr.mxu0 0.0
    %488 = vmatpush1.msra.mxu0 0.0
    %489 = vmatprep.subr.mxu0 0.0
    %490 = vmatpush1.msra.mxu0 0.0
    %491 = vmatprep.subr.mxu0 0.0
    %492 = vmatpush1.msra.mxu0 0.0
    %493 = vmatprep.subr.mxu0 0.0
    %494 = vmatpush1.msra.mxu0 0.0
    %495 = vmatprep.subr.mxu0 0.0
    %496 = vmatpush1.msra.mxu0 0.0
    %497 = vmatprep.subr.mxu0 0.0
    %498 = vmatpush1.msra.mxu0 0.0
    %499 = vmatprep.subr.mxu0 0.0
    %500 = vmatpush1.msra.mxu0 0.0
    %501 = vmatprep.subr.mxu0 0.0
    %502 = vmatpush1.msra.mxu0 0.0
    %503 = vmatprep.subr.mxu0 0.0
    %504 = vmatpush1.msra.mxu0 0.0
    %505 = vmatprep.subr.mxu0 0.0
    %506 = vmatpush1.msra.mxu0 0.0
    %507 = vmatprep.subr.mxu0 0.0
    %508 = vmatpush1.msra.mxu0 0.0
    %509 = vmatprep.mubr.f32.mxu0 0.0
    %510 = vmatmul.mubr.f32.gmra.mrb[0].mxu0 %v443
    %v511 = vpop.f32.mrb[0].mxu0
    %v512 = vadd.f32 0.0, %v511
    %v513 = vpop.f32.mrb[0].mxu0
    %514 = vdwg.mxu0
    %515 = vrot.lane.b32.xlu0 %v162, 120
    %v516 = vpop.permute.xlu0 %515
    %517 = vrot.lane.b32.xlu0 %v162, 88
    %v518 = vpop.permute.xlu0 %517
    %v519 = vsel %vm173, %v516, 0
    %v521 = vsel %vm173, %v518, 0
    %523 = vmatprep.subr.mxu0 0.0
    %524 = vmatpush1.xpose.msra.mxu0 %v521
    %525 = vmatprep.subr.mxu0 0.0
    %526 = vmatpush1.xpose.msra.mxu0 0.0
    %527 = vmatprep.subr.mxu0 0.0
    %528 = vmatpush1.xpose.msra.mxu0 0.0
    %529 = vmatprep.subr.mxu0 0.0
    %530 = vmatpush1.xpose.msra.mxu0 0.0
    %531 = vmatprep.subr.mxu0 0.0
    %532 = vmatpush1.xpose.msra.mxu0 0.0
    %533 = vmatprep.subr.mxu0 0.0
    %534 = vmatpush1.xpose.msra.mxu0 0.0
    %535 = vmatprep.subr.mxu0 0.0
    %536 = vmatpush1.xpose.msra.mxu0 0.0
    %537 = vmatprep.subr.mxu0 0.0
    %538 = vmatpush1.xpose.msra.mxu0 0.0
    %539 = vmatprep.subr.mxu0 0.0
    %540 = vmatpush1.xpose.msra.mxu0 0.0
    %541 = vmatprep.subr.mxu0 0.0
    %542 = vmatpush1.xpose.msra.mxu0 0.0
    %543 = vmatprep.subr.mxu0 0.0
    %544 = vmatpush1.xpose.msra.mxu0 0.0
    %545 = vmatprep.subr.mxu0 0.0
    %546 = vmatpush1.xpose.msra.mxu0 0.0
    %547 = vmatprep.subr.mxu0 0.0
    %548 = vmatpush1.xpose.msra.mxu0 0.0
    %549 = vmatprep.subr.mxu0 0.0
    %550 = vmatpush1.xpose.msra.mxu0 0.0
    %551 = vmatprep.subr.mxu0 0.0
    %552 = vmatpush1.xpose.msra.mxu0 0.0
    %553 = vmatprep.subr.mxu0 0.0
    %554 = vmatpush1.xpose.msra.mxu0 0.0
    %555 = vmatprep.subr.mxu0 0.0
    %556 = vmatpush1.xpose.msra.mxu0 0.0
    %557 = vmatprep.subr.mxu0 0.0
    %558 = vmatpush1.xpose.msra.mxu0 0.0
    %559 = vmatprep.subr.mxu0 0.0
    %560 = vmatpush1.xpose.msra.mxu0 0.0
    %561 = vmatprep.subr.mxu0 0.0
    %562 = vmatpush1.xpose.msra.mxu0 0.0
    %563 = vmatprep.subr.mxu0 0.0
    %564 = vmatpush1.xpose.msra.mxu0 0.0
    %565 = vmatprep.subr.mxu0 0.0
    %566 = vmatpush1.xpose.msra.mxu0 0.0
    %567 = vmatprep.subr.mxu0 0.0
    %568 = vmatpush1.xpose.msra.mxu0 0.0
    %569 = vmatprep.subr.mxu0 0.0
    %570 = vmatpush1.xpose.msra.mxu0 0.0
    %571 = vmatprep.subr.mxu0 0.0
    %572 = vmatpush1.xpose.msra.mxu0 0.0
    %573 = vmatprep.subr.mxu0 0.0
    %574 = vmatpush1.xpose.msra.mxu0 0.0
    %575 = vmatprep.subr.mxu0 0.0
    %576 = vmatpush1.xpose.msra.mxu0 0.0
    %577 = vmatprep.subr.mxu0 0.0
    %578 = vmatpush1.xpose.msra.mxu0 0.0
    %579 = vmatprep.subr.mxu0 0.0
    %580 = vmatpush1.xpose.msra.mxu0 0.0
    %581 = vmatprep.subr.mxu0 0.0
    %582 = vmatpush1.xpose.msra.mxu0 0.0
    %583 = vmatprep.subr.mxu0 0.0
    %584 = vmatpush1.xpose.msra.mxu0 0.0
    %585 = vmatprep.subr.mxu0 0.0
    %586 = vmatpush1.xpose.msra.mxu0 0.0
    %587 = vmatprep.mubr.f32.mxu0 0.0
    %588 = vmatmul.mubr.f32.gmra.mrb[0].mxu0 %v519
    %v589 = vpop.f32.mrb[0].mxu0
    %v590 = vadd.f32 0.0, %v589
    %v591 = vpop.f32.mrb[0].mxu0
    %592 = vdwg.mxu0
    %593 = vrot.lane.b32.xlu0 %v167, 120
    %v594 = vpop.permute.xlu0 %593
    %595 = vrot.lane.b32.xlu0 %v167, 88
    %v596 = vpop.permute.xlu0 %595
    %v597 = vsel %vm173, %v594, 0
    %v599 = vsel %vm173, %v596, 0
    %601 = vmatprep.subr.mxu0 0.0
    %602 = vmatpush1.xpose.msra.mxu0 %v599
    %603 = vmatprep.subr.mxu0 0.0
    %604 = vmatpush1.xpose.msra.mxu0 0.0
    %605 = vmatprep.subr.mxu0 0.0
    %606 = vmatpush1.xpose.msra.mxu0 0.0
    %607 = vmatprep.subr.mxu0 0.0
    %608 = vmatpush1.xpose.msra.mxu0 0.0
    %609 = vmatprep.subr.mxu0 0.0
    %610 = vmatpush1.xpose.msra.mxu0 0.0
    %611 = vmatprep.subr.mxu0 0.0
    %612 = vmatpush1.xpose.msra.mxu0 0.0
    %613 = vmatprep.subr.mxu0 0.0
    %614 = vmatpush1.xpose.msra.mxu0 0.0
    %615 = vmatprep.subr.mxu0 0.0
    %616 = vmatpush1.xpose.msra.mxu0 0.0
    %617 = vmatprep.subr.mxu0 0.0
    %618 = vmatpush1.xpose.msra.mxu0 0.0
    %619 = vmatprep.subr.mxu0 0.0
    %620 = vmatpush1.xpose.msra.mxu0 0.0
    %621 = vmatprep.subr.mxu0 0.0
    %622 = vmatpush1.xpose.msra.mxu0 0.0
    %623 = vmatprep.subr.mxu0 0.0
    %624 = vmatpush1.xpose.msra.mxu0 0.0
    %625 = vmatprep.subr.mxu0 0.0
    %626 = vmatpush1.xpose.msra.mxu0 0.0
    %627 = vmatprep.subr.mxu0 0.0
    %628 = vmatpush1.xpose.msra.mxu0 0.0
    %629 = vmatprep.subr.mxu0 0.0
    %630 = vmatpush1.xpose.msra.mxu0 0.0
    %631 = vmatprep.subr.mxu0 0.0
    %632 = vmatpush1.xpose.msra.mxu0 0.0
    %633 = vmatprep.subr.mxu0 0.0
    %634 = vmatpush1.xpose.msra.mxu0 0.0
    %635 = vmatprep.subr.mxu0 0.0
    %636 = vmatpush1.xpose.msra.mxu0 0.0
    %637 = vmatprep.subr.mxu0 0.0
    %638 = vmatpush1.xpose.msra.mxu0 0.0
    %639 = vmatprep.subr.mxu0 0.0
    %640 = vmatpush1.xpose.msra.mxu0 0.0
    %641 = vmatprep.subr.mxu0 0.0
    %642 = vmatpush1.xpose.msra.mxu0 0.0
    %643 = vmatprep.subr.mxu0 0.0
    %644 = vmatpush1.xpose.msra.mxu0 0.0
    %645 = vmatprep.subr.mxu0 0.0
    %646 = vmatpush1.xpose.msra.mxu0 0.0
    %647 = vmatprep.subr.mxu0 0.0
    %648 = vmatpush1.xpose.msra.mxu0 0.0
    %649 = vmatprep.subr.mxu0 0.0
    %650 = vmatpush1.xpose.msra.mxu0 0.0
    %651 = vmatprep.subr.mxu0 0.0
    %652 = vmatpush1.xpose.msra.mxu0 0.0
    %653 = vmatprep.subr.mxu0 0.0
    %654 = vmatpush1.xpose.msra.mxu0 0.0
    %655 = vmatprep.subr.mxu0 0.0
    %656 = vmatpush1.xpose.msra.mxu0 0.0
    %657 = vmatprep.subr.mxu0 0.0
    %658 = vmatpush1.xpose.msra.mxu0 0.0
    %659 = vmatprep.subr.mxu0 0.0
    %660 = vmatpush1.xpose.msra.mxu0 0.0
    %661 = vmatprep.subr.mxu0 0.0
    %662 = vmatpush1.xpose.msra.mxu0 0.0
    %663 = vmatprep.subr.mxu0 0.0
    %664 = vmatpush1.xpose.msra.mxu0 0.0
    %665 = vmatprep.mubr.f32.mxu0 0.0
    %666 = vmatmul.mubr.f32.gmra.mrb[0].mxu0 %v597
    %v667 = vpop.f32.mrb[0].mxu0
    %v668 = vadd.f32 0.0, %v667
    %v669 = vpop.f32.mrb[0].mxu0
    %670 = vdwg.mxu0
    %v671 = vmul.f32 %v590, 0.35355338
    %v672 = vmul.f32 %v668, 0.35355338
    %v673 = vadd.f32 %v671, %v332
    %v674 = vadd.f32 %v672, %v336
    %v675 = vsel %vm173, %v673, -inf
    %676 = vmax.xlane.f32.xlu0 %v675
    %v677 = vpop.xlane.xlu0 %676
    %v678 = vsel %vm173, %v674, -inf
    %679 = vmax.xlane.f32.xlu0 %v678
    %v680 = vpop.xlane.xlu0 %679
    %v681 = vsub.f32 %v673, %v677
    %v682 = vsub.f32 %v674, %v680
    %v683 = vmul.f32 %v681, 1.442695
    %v684 = vpow.pop %v683
    %v685 = vmul.f32 %v682, 1.442695
    %v686 = vpow.pop %v685
    %v687 = vsel %vm173, %v684, 0.0
    %688 = vadd.xlane.f32.xlu0 %v687
    %v689 = vpop.xlane.xlu0 %688
    %v690 = vsel %vm173, %v686, 0.0
    %691 = vadd.xlane.f32.xlu0 %v690
    %v692 = vpop.xlane.xlu0 %691
    %v693 = vrcp.pop %v689
    %v694 = vrcp.pop %v692
    %v695 = vmul.f32 %v684, %v693
    %v696 = vmul.f32 %v686, %v694
    %697 = vrot.lane.b32.xlu0 %v162, 56
    %v698 = vpop.permute.xlu0 %697
    %v701 = vsel %vm173, %v695, 0
    %703 = vmatprep.subr.mxu0 0.0
    %704 = vmatpush1.msra.mxu0 %v698
    %705 = vmatprep.subr.mxu0 0.0
    %706 = vmatpush1.msra.mxu0 0.0
    %707 = vmatprep.subr.mxu0 0.0
    %708 = vmatpush1.msra.mxu0 0.0
    %709 = vmatprep.subr.mxu0 0.0
    %710 = vmatpush1.msra.mxu0 0.0
    %711 = vmatprep.subr.mxu0 0.0
    %712 = vmatpush1.msra.mxu0 0.0
    %713 = vmatprep.subr.mxu0 0.0
    %714 = vmatpush1.msra.mxu0 0.0
    %715 = vmatprep.subr.mxu0 0.0
    %716 = vmatpush1.msra.mxu0 0.0
    %717 = vmatprep.subr.mxu0 0.0
    %718 = vmatpush1.msra.mxu0 0.0
    %719 = vmatprep.subr.mxu0 0.0
    %720 = vmatpush1.msra.mxu0 0.0
    %721 = vmatprep.subr.mxu0 0.0
    %722 = vmatpush1.msra.mxu0 0.0
    %723 = vmatprep.subr.mxu0 0.0
    %724 = vmatpush1.msra.mxu0 0.0
    %725 = vmatprep.subr.mxu0 0.0
    %726 = vmatpush1.msra.mxu0 0.0
    %727 = vmatprep.subr.mxu0 0.0
    %728 = vmatpush1.msra.mxu0 0.0
    %729 = vmatprep.subr.mxu0 0.0
    %730 = vmatpush1.msra.mxu0 0.0
    %731 = vmatprep.subr.mxu0 0.0
    %732 = vmatpush1.msra.mxu0 0.0
    %733 = vmatprep.subr.mxu0 0.0
    %734 = vmatpush1.msra.mxu0 0.0
    %735 = vmatprep.subr.mxu0 0.0
    %736 = vmatpush1.msra.mxu0 0.0
    %737 = vmatprep.subr.mxu0 0.0
    %738 = vmatpush1.msra.mxu0 0.0
    %739 = vmatprep.subr.mxu0 0.0
    %740 = vmatpush1.msra.mxu0 0.0
    %741 = vmatprep.subr.mxu0 0.0
    %742 = vmatpush1.msra.mxu0 0.0
    %743 = vmatprep.subr.mxu0 0.0
    %744 = vmatpush1.msra.mxu0 0.0
    %745 = vmatprep.subr.mxu0 0.0
    %746 = vmatpush1.msra.mxu0 0.0
    %747 = vmatprep.subr.mxu0 0.0
    %748 = vmatpush1.msra.mxu0 0.0
    %749 = vmatprep.subr.mxu0 0.0
    %750 = vmatpush1.msra.mxu0 0.0
    %751 = vmatprep.subr.mxu0 0.0
    %752 = vmatpush1.msra.mxu0 0.0
    %753 = vmatprep.subr.mxu0 0.0
    %754 = vmatpush1.msra.mxu0 0.0
    %755 = vmatprep.subr.mxu0 0.0
    %756 = vmatpush1.msra.mxu0 0.0
    %757 = vmatprep.subr.mxu0 0.0
    %758 = vmatpush1.msra.mxu0 0.0
    %759 = vmatprep.subr.mxu0 0.0
    %760 = vmatpush1.msra.mxu0 0.0
    %761 = vmatprep.subr.mxu0 0.0
    %762 = vmatpush1.msra.mxu0 0.0
    %763 = vmatprep.subr.mxu0 0.0
    %764 = vmatpush1.msra.mxu0 0.0
    %765 = vmatprep.subr.mxu0 0.0
    %766 = vmatpush1.msra.mxu0 0.0
    %767 = vmatprep.mubr.f32.mxu0 0.0
    %768 = vmatmul.mubr.f32.gmra.mrb[0].mxu0 %v701
    %v769 = vpop.f32.mrb[0].mxu0
    %v770 = vadd.f32 0.0, %v769
    %v771 = vpop.f32.mrb[0].mxu0
    %772 = vdwg.mxu0
    %773 = vrot.lane.b32.xlu0 %v167, 56
    %v774 = vpop.permute.xlu0 %773
    %v777 = vsel %vm173, %v696, 0
    %779 = vmatprep.subr.mxu0 0.0
    %780 = vmatpush1.msra.mxu0 %v774
    %781 = vmatprep.subr.mxu0 0.0
    %782 = vmatpush1.msra.mxu0 0.0
    %783 = vmatprep.subr.mxu0 0.0
    %784 = vmatpush1.msra.mxu0 0.0
    %785 = vmatprep.subr.mxu0 0.0
    %786 = vmatpush1.msra.mxu0 0.0
    %787 = vmatprep.subr.mxu0 0.0
    %788 = vmatpush1.msra.mxu0 0.0
    %789 = vmatprep.subr.mxu0 0.0
    %790 = vmatpush1.msra.mxu0 0.0
    %791 = vmatprep.subr.mxu0 0.0
    %792 = vmatpush1.msra.mxu0 0.0
    %793 = vmatprep.subr.mxu0 0.0
    %794 = vmatpush1.msra.mxu0 0.0
    %795 = vmatprep.subr.mxu0 0.0
    %796 = vmatpush1.msra.mxu0 0.0
    %797 = vmatprep.subr.mxu0 0.0
    %798 = vmatpush1.msra.mxu0 0.0
    %799 = vmatprep.subr.mxu0 0.0
    %800 = vmatpush1.msra.mxu0 0.0
    %801 = vmatprep.subr.mxu0 0.0
    %802 = vmatpush1.msra.mxu0 0.0
    %803 = vmatprep.subr.mxu0 0.0
    %804 = vmatpush1.msra.mxu0 0.0
    %805 = vmatprep.subr.mxu0 0.0
    %806 = vmatpush1.msra.mxu0 0.0
    %807 = vmatprep.subr.mxu0 0.0
    %808 = vmatpush1.msra.mxu0 0.0
    %809 = vmatprep.subr.mxu0 0.0
    %810 = vmatpush1.msra.mxu0 0.0
    %811 = vmatprep.subr.mxu0 0.0
    %812 = vmatpush1.msra.mxu0 0.0
    %813 = vmatprep.subr.mxu0 0.0
    %814 = vmatpush1.msra.mxu0 0.0
    %815 = vmatprep.subr.mxu0 0.0
    %816 = vmatpush1.msra.mxu0 0.0
    %817 = vmatprep.subr.mxu0 0.0
    %818 = vmatpush1.msra.mxu0 0.0
    %819 = vmatprep.subr.mxu0 0.0
    %820 = vmatpush1.msra.mxu0 0.0
    %821 = vmatprep.subr.mxu0 0.0
    %822 = vmatpush1.msra.mxu0 0.0
    %823 = vmatprep.subr.mxu0 0.0
    %824 = vmatpush1.msra.mxu0 0.0
    %825 = vmatprep.subr.mxu0 0.0
    %826 = vmatpush1.msra.mxu0 0.0
    %827 = vmatprep.subr.mxu0 0.0
    %828 = vmatpush1.msra.mxu0 0.0
    %829 = vmatprep.subr.mxu0 0.0
    %830 = vmatpush1.msra.mxu0 0.0
    %831 = vmatprep.subr.mxu0 0.0
    %832 = vmatpush1.msra.mxu0 0.0
    %833 = vmatprep.subr.mxu0 0.0
    %834 = vmatpush1.msra.mxu0 0.0
    %835 = vmatprep.subr.mxu0 0.0
    %836 = vmatpush1.msra.mxu0 0.0
    %837 = vmatprep.subr.mxu0 0.0
    %838 = vmatpush1.msra.mxu0 0.0
    %839 = vmatprep.subr.mxu0 0.0
    %840 = vmatpush1.msra.mxu0 0.0
    %841 = vmatprep.subr.mxu0 0.0
    %842 = vmatpush1.msra.mxu0 0.0
    %843 = vmatprep.mubr.f32.mxu0 0.0
    %844 = vmatmul.mubr.f32.gmra.mrb[0].mxu0 %v777
    %v845 = vpop.f32.mrb[0].mxu0
    %v846 = vadd.f32 0.0, %v845
    %v847 = vpop.f32.mrb[0].mxu0
    %848 = vdwg.mxu0
    %849 = vrot.lane.b32.xlu0 %v162, 112
    %v850 = vpop.permute.xlu0 %849
    %851 = vrot.lane.b32.xlu0 %v162, 80
    %v852 = vpop.permute.xlu0 %851
    %v853 = vsel %vm173, %v850, 0
    %v855 = vsel %vm173, %v852, 0
    %857 = vmatprep.subr.mxu0 0.0
    %858 = vmatpush1.xpose.msra.mxu0 %v855
    %859 = vmatprep.subr.mxu0 0.0
    %860 = vmatpush1.xpose.msra.mxu0 0.0
    %861 = vmatprep.subr.mxu0 0.0
    %862 = vmatpush1.xpose.msra.mxu0 0.0
    %863 = vmatprep.subr.mxu0 0.0
    %864 = vmatpush1.xpose.msra.mxu0 0.0
    %865 = vmatprep.subr.mxu0 0.0
    %866 = vmatpush1.xpose.msra.mxu0 0.0
    %867 = vmatprep.subr.mxu0 0.0
    %868 = vmatpush1.xpose.msra.mxu0 0.0
    %869 = vmatprep.subr.mxu0 0.0
    %870 = vmatpush1.xpose.msra.mxu0 0.0
    %871 = vmatprep.subr.mxu0 0.0
    %872 = vmatpush1.xpose.msra.mxu0 0.0
    %873 = vmatprep.subr.mxu0 0.0
    %874 = vmatpush1.xpose.msra.mxu0 0.0
    %875 = vmatprep.subr.mxu0 0.0
    %876 = vmatpush1.xpose.msra.mxu0 0.0
    %877 = vmatprep.subr.mxu0 0.0
    %878 = vmatpush1.xpose.msra.mxu0 0.0
    %879 = vmatprep.subr.mxu0 0.0
    %880 = vmatpush1.xpose.msra.mxu0 0.0
    %881 = vmatprep.subr.mxu0 0.0
    %882 = vmatpush1.xpose.msra.mxu0 0.0
    %883 = vmatprep.subr.mxu0 0.0
    %884 = vmatpush1.xpose.msra.mxu0 0.0
    %885 = vmatprep.subr.mxu0 0.0
    %886 = vmatpush1.xpose.msra.mxu0 0.0
    %887 = vmatprep.subr.mxu0 0.0
    %888 = vmatpush1.xpose.msra.mxu0 0.0
    %889 = vmatprep.subr.mxu0 0.0
    %890 = vmatpush1.xpose.msra.mxu0 0.0
    %891 = vmatprep.subr.mxu0 0.0
    %892 = vmatpush1.xpose.msra.mxu0 0.0
    %893 = vmatprep.subr.mxu0 0.0
    %894 = vmatpush1.xpose.msra.mxu0 0.0
    %895 = vmatprep.subr.mxu0 0.0
    %896 = vmatpush1.xpose.msra.mxu0 0.0
    %897 = vmatprep.subr.mxu0 0.0
    %898 = vmatpush1.xpose.msra.mxu0 0.0
    %899 = vmatprep.subr.mxu0 0.0
    %900 = vmatpush1.xpose.msra.mxu0 0.0
    %901 = vmatprep.subr.mxu0 0.0
    %902 = vmatpush1.xpose.msra.mxu0 0.0
    %903 = vmatprep.subr.mxu0 0.0
    %904 = vmatpush1.xpose.msra.mxu0 0.0
    %905 = vmatprep.subr.mxu0 0.0
    %906 = vmatpush1.xpose.msra.mxu0 0.0
    %907 = vmatprep.subr.mxu0 0.0
    %908 = vmatpush1.xpose.msra.mxu0 0.0
    %909 = vmatprep.subr.mxu0 0.0
    %910 = vmatpush1.xpose.msra.mxu0 0.0
    %911 = vmatprep.subr.mxu0 0.0
    %912 = vmatpush1.xpose.msra.mxu0 0.0
    %913 = vmatprep.subr.mxu0 0.0
    %914 = vmatpush1.xpose.msra.mxu0 0.0
    %915 = vmatprep.subr.mxu0 0.0
    %916 = vmatpush1.xpose.msra.mxu0 0.0
    %917 = vmatprep.subr.mxu0 0.0
    %918 = vmatpush1.xpose.msra.mxu0 0.0
    %919 = vmatprep.subr.mxu0 0.0
    %920 = vmatpush1.xpose.msra.mxu0 0.0
    %921 = vmatprep.mubr.f32.mxu0 0.0
    %922 = vmatmul.mubr.f32.gmra.mrb[0].mxu0 %v853
    %v923 = vpop.f32.mrb[0].mxu0
    %v924 = vadd.f32 0.0, %v923
    %v925 = vpop.f32.mrb[0].mxu0
    %926 = vdwg.mxu0
    %927 = vrot.lane.b32.xlu0 %v167, 112
    %v928 = vpop.permute.xlu0 %927
    %929 = vrot.lane.b32.xlu0 %v167, 80
    %v930 = vpop.permute.xlu0 %929
    %v931 = vsel %vm173, %v928, 0
    %v933 = vsel %vm173, %v930, 0
    %935 = vmatprep.subr.mxu0 0.0
    %936 = vmatpush1.xpose.msra.mxu0 %v933
    %937 = vmatprep.subr.mxu0 0.0
    %938 = vmatpush1.xpose.msra.mxu0 0.0
    %939 = vmatprep.subr.mxu0 0.0
    %940 = vmatpush1.xpose.msra.mxu0 0.0
    %941 = vmatprep.subr.mxu0 0.0
    %942 = vmatpush1.xpose.msra.mxu0 0.0
    %943 = vmatprep.subr.mxu0 0.0
    %944 = vmatpush1.xpose.msra.mxu0 0.0
    %945 = vmatprep.subr.mxu0 0.0
    %946 = vmatpush1.xpose.msra.mxu0 0.0
    %947 = vmatprep.subr.mxu0 0.0
    %948 = vmatpush1.xpose.msra.mxu0 0.0
    %949 = vmatprep.subr.mxu0 0.0
    %950 = vmatpush1.xpose.msra.mxu0 0.0
    %951 = vmatprep.subr.mxu0 0.0
    %952 = vmatpush1.xpose.msra.mxu0 0.0
    %953 = vmatprep.subr.mxu0 0.0
    %954 = vmatpush1.xpose.msra.mxu0 0.0
    %955 = vmatprep.subr.mxu0 0.0
    %956 = vmatpush1.xpose.msra.mxu0 0.0
    %957 = vmatprep.subr.mxu0 0.0
    %958 = vmatpush1.xpose.msra.mxu0 0.0
    %959 = vmatprep.subr.mxu0 0.0
    %960 = vmatpush1.xpose.msra.mxu0 0.0
    %961 = vmatprep.subr.mxu0 0.0
    %962 = vmatpush1.xpose.msra.mxu0 0.0
    %963 = vmatprep.subr.mxu0 0.0
    %964 = vmatpush1.xpose.msra.mxu0 0.0
    %965 = vmatprep.subr.mxu0 0.0
    %966 = vmatpush1.xpose.msra.mxu0 0.0
    %967 = vmatprep.subr.mxu0 0.0
    %968 = vmatpush1.xpose.msra.mxu0 0.0
    %969 = vmatprep.subr.mxu0 0.0
    %970 = vmatpush1.xpose.msra.mxu0 0.0
    %971 = vmatprep.subr.mxu0 0.0
    %972 = vmatpush1.xpose.msra.mxu0 0.0
    %973 = vmatprep.subr.mxu0 0.0
    %974 = vmatpush1.xpose.msra.mxu0 0.0
    %975 = vmatprep.subr.mxu0 0.0
    %976 = vmatpush1.xpose.msra.mxu0 0.0
    %977 = vmatprep.subr.mxu0 0.0
    %978 = vmatpush1.xpose.msra.mxu0 0.0
    %979 = vmatprep.subr.mxu0 0.0
    %980 = vmatpush1.xpose.msra.mxu0 0.0
    %981 = vmatprep.subr.mxu0 0.0
    %982 = vmatpush1.xpose.msra.mxu0 0.0
    %983 = vmatprep.subr.mxu0 0.0
    %984 = vmatpush1.xpose.msra.mxu0 0.0
    %985 = vmatprep.subr.mxu0 0.0
    %986 = vmatpush1.xpose.msra.mxu0 0.0
    %987 = vmatprep.subr.mxu0 0.0
    %988 = vmatpush1.xpose.msra.mxu0 0.0
    %989 = vmatprep.subr.mxu0 0.0
    %990 = vmatpush1.xpose.msra.mxu0 0.0
    %991 = vmatprep.subr.mxu0 0.0
    %992 = vmatpush1.xpose.msra.mxu0 0.0
    %993 = vmatprep.subr.mxu0 0.0
    %994 = vmatpush1.xpose.msra.mxu0 0.0
    %995 = vmatprep.subr.mxu0 0.0
    %996 = vmatpush1.xpose.msra.mxu0 0.0
    %997 = vmatprep.subr.mxu0 0.0
    %998 = vmatpush1.xpose.msra.mxu0 0.0
    %999 = vmatprep.mubr.f32.mxu0 0.0
    %1000 = vmatmul.mubr.f32.gmra.mrb[0].mxu0 %v931
    %v1001 = vpop.f32.mrb[0].mxu0
    %v1002 = vadd.f32 0.0, %v1001
    %v1003 = vpop.f32.mrb[0].mxu0
    %1004 = vdwg.mxu0
    %v1005 = vmul.f32 %v924, 0.35355338
    %v1006 = vmul.f32 %v1002, 0.35355338
    %v1007 = vadd.f32 %v1005, %v332
    %v1008 = vadd.f32 %v1006, %v336
    %v1009 = vsel %vm173, %v1007, -inf
    %1010 = vmax.xlane.f32.xlu0 %v1009
    %v1011 = vpop.xlane.xlu0 %1010
    %v1012 = vsel %vm173, %v1008, -inf
    %1013 = vmax.xlane.f32.xlu0 %v1012
    %v1014 = vpop.xlane.xlu0 %1013
    %v1015 = vsub.f32 %v1007, %v1011
    %v1016 = vsub.f32 %v1008, %v1014
    %v1017 = vmul.f32 %v1015, 1.442695
    %v1018 = vpow.pop %v1017
    %v1019 = vmul.f32 %v1016, 1.442695
    %v1020 = vpow.pop %v1019
    %v1021 = vsel %vm173, %v1018, 0.0
    %1022 = vadd.xlane.f32.xlu0 %v1021
    %v1023 = vpop.xlane.xlu0 %1022
    %v1024 = vsel %vm173, %v1020, 0.0
    %1025 = vadd.xlane.f32.xlu0 %v1024
    %v1026 = vpop.xlane.xlu0 %1025
    %v1027 = vrcp.pop %v1023
    %v1028 = vrcp.pop %v1026
    %v1029 = vmul.f32 %v1018, %v1027
    %v1030 = vmul.f32 %v1020, %v1028
    %1031 = vrot.lane.b32.xlu0 %v162, 48
    %v1032 = vpop.permute.xlu0 %1031
    %v1035 = vsel %vm173, %v1029, 0
    %1037 = vmatprep.subr.mxu0 0.0
    %1038 = vmatpush1.msra.mxu0 %v1032
    %1039 = vmatprep.subr.mxu0 0.0
    %1040 = vmatpush1.msra.mxu0 0.0
    %1041 = vmatprep.subr.mxu0 0.0
    %1042 = vmatpush1.msra.mxu0 0.0
    %1043 = vmatprep.subr.mxu0 0.0
    %1044 = vmatpush1.msra.mxu0 0.0
    %1045 = vmatprep.subr.mxu0 0.0
    %1046 = vmatpush1.msra.mxu0 0.0
    %1047 = vmatprep.subr.mxu0 0.0
    %1048 = vmatpush1.msra.mxu0 0.0
    %1049 = vmatprep.subr.mxu0 0.0
    %1050 = vmatpush1.msra.mxu0 0.0
    %1051 = vmatprep.subr.mxu0 0.0
    %1052 = vmatpush1.msra.mxu0 0.0
    %1053 = vmatprep.subr.mxu0 0.0
    %1054 = vmatpush1.msra.mxu0 0.0
    %1055 = vmatprep.subr.mxu0 0.0
    %1056 = vmatpush1.msra.mxu0 0.0
    %1057 = vmatprep.subr.mxu0 0.0
    %1058 = vmatpush1.msra.mxu0 0.0
    %1059 = vmatprep.subr.mxu0 0.0
    %1060 = vmatpush1.msra.mxu0 0.0
    %1061 = vmatprep.subr.mxu0 0.0
    %1062 = vmatpush1.msra.mxu0 0.0
    %1063 = vmatprep.subr.mxu0 0.0
    %1064 = vmatpush1.msra.mxu0 0.0
    %1065 = vmatprep.subr.mxu0 0.0
    %1066 = vmatpush1.msra.mxu0 0.0
    %1067 = vmatprep.subr.mxu0 0.0
    %1068 = vmatpush1.msra.mxu0 0.0
    %1069 = vmatprep.subr.mxu0 0.0
    %1070 = vmatpush1.msra.mxu0 0.0
    %1071 = vmatprep.subr.mxu0 0.0
    %1072 = vmatpush1.msra.mxu0 0.0
    %1073 = vmatprep.subr.mxu0 0.0
    %1074 = vmatpush1.msra.mxu0 0.0
    %1075 = vmatprep.subr.mxu0 0.0
    %1076 = vmatpush1.msra.mxu0 0.0
    %1077 = vmatprep.subr.mxu0 0.0
    %1078 = vmatpush1.msra.mxu0 0.0
    %1079 = vmatprep.subr.mxu0 0.0
    %1080 = vmatpush1.msra.mxu0 0.0
    %1081 = vmatprep.subr.mxu0 0.0
    %1082 = vmatpush1.msra.mxu0 0.0
    %1083 = vmatprep.subr.mxu0 0.0
    %1084 = vmatpush1.msra.mxu0 0.0
    %1085 = vmatprep.subr.mxu0 0.0
    %1086 = vmatpush1.msra.mxu0 0.0
    %1087 = vmatprep.subr.mxu0 0.0
    %1088 = vmatpush1.msra.mxu0 0.0
    %1089 = vmatprep.subr.mxu0 0.0
    %1090 = vmatpush1.msra.mxu0 0.0
    %1091 = vmatprep.subr.mxu0 0.0
    %1092 = vmatpush1.msra.mxu0 0.0
    %1093 = vmatprep.subr.mxu0 0.0
    %1094 = vmatpush1.msra.mxu0 0.0
    %1095 = vmatprep.subr.mxu0 0.0
    %1096 = vmatpush1.msra.mxu0 0.0
    %1097 = vmatprep.subr.mxu0 0.0
    %1098 = vmatpush1.msra.mxu0 0.0
    %1099 = vmatprep.subr.mxu0 0.0
    %1100 = vmatpush1.msra.mxu0 0.0
    %1101 = vmatprep.mubr.f32.mxu0 0.0
    %1102 = vmatmul.mubr.f32.gmra.mrb[0].mxu0 %v1035
    %v1103 = vpop.f32.mrb[0].mxu0
    %v1104 = vadd.f32 0.0, %v1103
    %v1105 = vpop.f32.mrb[0].mxu0
    %1106 = vdwg.mxu0
    %1107 = vrot.lane.b32.xlu0 %v167, 48
    %v1108 = vpop.permute.xlu0 %1107
    %v1111 = vsel %vm173, %v1030, 0
    %1113 = vmatprep.subr.mxu0 0.0
    %1114 = vmatpush1.msra.mxu0 %v1108
    %1115 = vmatprep.subr.mxu0 0.0
    %1116 = vmatpush1.msra.mxu0 0.0
    %1117 = vmatprep.subr.mxu0 0.0
    %1118 = vmatpush1.msra.mxu0 0.0
    %1119 = vmatprep.subr.mxu0 0.0
    %1120 = vmatpush1.msra.mxu0 0.0
    %1121 = vmatprep.subr.mxu0 0.0
    %1122 = vmatpush1.msra.mxu0 0.0
    %1123 = vmatprep.subr.mxu0 0.0
    %1124 = vmatpush1.msra.mxu0 0.0
    %1125 = vmatprep.subr.mxu0 0.0
    %1126 = vmatpush1.msra.mxu0 0.0
    %1127 = vmatprep.subr.mxu0 0.0
    %1128 = vmatpush1.msra.mxu0 0.0
    %1129 = vmatprep.subr.mxu0 0.0
    %1130 = vmatpush1.msra.mxu0 0.0
    %1131 = vmatprep.subr.mxu0 0.0
    %1132 = vmatpush1.msra.mxu0 0.0
    %1133 = vmatprep.subr.mxu0 0.0
    %1134 = vmatpush1.msra.mxu0 0.0
    %1135 = vmatprep.subr.mxu0 0.0
    %1136 = vmatpush1.msra.mxu0 0.0
    %1137 = vmatprep.subr.mxu0 0.0
    %1138 = vmatpush1.msra.mxu0 0.0
    %1139 = vmatprep.subr.mxu0 0.0
    %1140 = vmatpush1.msra.mxu0 0.0
    %1141 = vmatprep.subr.mxu0 0.0
    %1142 = vmatpush1.msra.mxu0 0.0
    %1143 = vmatprep.subr.mxu0 0.0
    %1144 = vmatpush1.msra.mxu0 0.0
    %1145 = vmatprep.subr.mxu0 0.0
    %1146 = vmatpush1.msra.mxu0 0.0
    %1147 = vmatprep.subr.mxu0 0.0
    %1148 = vmatpush1.msra.mxu0 0.0
    %1149 = vmatprep.subr.mxu0 0.0
    %1150 = vmatpush1.msra.mxu0 0.0
    %1151 = vmatprep.subr.mxu0 0.0
    %1152 = vmatpush1.msra.mxu0 0.0
    %1153 = vmatprep.subr.mxu0 0.0
    %1154 = vmatpush1.msra.mxu0 0.0
    %1155 = vmatprep.subr.mxu0 0.0
    %1156 = vmatpush1.msra.mxu0 0.0
    %1157 = vmatprep.subr.mxu0 0.0
    %1158 = vmatpush1.msra.mxu0 0.0
    %1159 = vmatprep.subr.mxu0 0.0
    %1160 = vmatpush1.msra.mxu0 0.0
    %1161 = vmatprep.subr.mxu0 0.0
    %1162 = vmatpush1.msra.mxu0 0.0
    %1163 = vmatprep.subr.mxu0 0.0
    %1164 = vmatpush1.msra.mxu0 0.0
    %1165 = vmatprep.subr.mxu0 0.0
    %1166 = vmatpush1.msra.mxu0 0.0
    %1167 = vmatprep.subr.mxu0 0.0
    %1168 = vmatpush1.msra.mxu0 0.0
    %1169 = vmatprep.subr.mxu0 0.0
    %1170 = vmatpush1.msra.mxu0 0.0
    %1171 = vmatprep.subr.mxu0 0.0
    %1172 = vmatpush1.msra.mxu0 0.0
    %1173 = vmatprep.subr.mxu0 0.0
    %1174 = vmatpush1.msra.mxu0 0.0
    %1175 = vmatprep.subr.mxu0 0.0
    %1176 = vmatpush1.msra.mxu0 0.0
    %1177 = vmatprep.mubr.f32.mxu0 0.0
    %1178 = vmatmul.mubr.f32.gmra.mrb[0].mxu0 %v1111
    %v1179 = vpop.f32.mrb[0].mxu0
    %v1180 = vadd.f32 0.0, %v1179
    %v1181 = vpop.f32.mrb[0].mxu0
    %1182 = vdwg.mxu0
    %1183 = vrot.lane.b32.xlu0 %v162, 104
    %v1184 = vpop.permute.xlu0 %1183
    %1185 = vrot.lane.b32.xlu0 %v162, 72
    %v1186 = vpop.permute.xlu0 %1185
    %v1187 = vsel %vm173, %v1184, 0
    %v1189 = vsel %vm173, %v1186, 0
    %1191 = vmatprep.subr.mxu0 0.0
    %1192 = vmatpush1.xpose.msra.mxu0 %v1189
    %1193 = vmatprep.subr.mxu0 0.0
    %1194 = vmatpush1.xpose.msra.mxu0 0.0
    %1195 = vmatprep.subr.mxu0 0.0
    %1196 = vmatpush1.xpose.msra.mxu0 0.0
    %1197 = vmatprep.subr.mxu0 0.0
    %1198 = vmatpush1.xpose.msra.mxu0 0.0
    %1199 = vmatprep.subr.mxu0 0.0
    %1200 = vmatpush1.xpose.msra.mxu0 0.0
    %1201 = vmatprep.subr.mxu0 0.0
    %1202 = vmatpush1.xpose.msra.mxu0 0.0
    %1203 = vmatprep.subr.mxu0 0.0
    %1204 = vmatpush1.xpose.msra.mxu0 0.0
    %1205 = vmatprep.subr.mxu0 0.0
    %1206 = vmatpush1.xpose.msra.mxu0 0.0
    %1207 = vmatprep.subr.mxu0 0.0
    %1208 = vmatpush1.xpose.msra.mxu0 0.0
    %1209 = vmatprep.subr.mxu0 0.0
    %1210 = vmatpush1.xpose.msra.mxu0 0.0
    %1211 = vmatprep.subr.mxu0 0.0
    %1212 = vmatpush1.xpose.msra.mxu0 0.0
    %1213 = vmatprep.subr.mxu0 0.0
    %1214 = vmatpush1.xpose.msra.mxu0 0.0
    %1215 = vmatprep.subr.mxu0 0.0
    %1216 = vmatpush1.xpose.msra.mxu0 0.0
    %1217 = vmatprep.subr.mxu0 0.0
    %1218 = vmatpush1.xpose.msra.mxu0 0.0
    %1219 = vmatprep.subr.mxu0 0.0
    %1220 = vmatpush1.xpose.msra.mxu0 0.0
    %1221 = vmatprep.subr.mxu0 0.0
    %1222 = vmatpush1.xpose.msra.mxu0 0.0
    %1223 = vmatprep.subr.mxu0 0.0
    %1224 = vmatpush1.xpose.msra.mxu0 0.0
    %1225 = vmatprep.subr.mxu0 0.0
    %1226 = vmatpush1.xpose.msra.mxu0 0.0
    %1227 = vmatprep.subr.mxu0 0.0
    %1228 = vmatpush1.xpose.msra.mxu0 0.0
    %1229 = vmatprep.subr.mxu0 0.0
    %1230 = vmatpush1.xpose.msra.mxu0 0.0
    %1231 = vmatprep.subr.mxu0 0.0
    %1232 = vmatpush1.xpose.msra.mxu0 0.0
    %1233 = vmatprep.subr.mxu0 0.0
    %1234 = vmatpush1.xpose.msra.mxu0 0.0
    %1235 = vmatprep.subr.mxu0 0.0
    %1236 = vmatpush1.xpose.msra.mxu0 0.0
    %1237 = vmatprep.subr.mxu0 0.0
    %1238 = vmatpush1.xpose.msra.mxu0 0.0
    %1239 = vmatprep.subr.mxu0 0.0
    %1240 = vmatpush1.xpose.msra.mxu0 0.0
    %1241 = vmatprep.subr.mxu0 0.0
    %1242 = vmatpush1.xpose.msra.mxu0 0.0
    %1243 = vmatprep.subr.mxu0 0.0
    %1244 = vmatpush1.xpose.msra.mxu0 0.0
    %1245 = vmatprep.subr.mxu0 0.0
    %1246 = vmatpush1.xpose.msra.mxu0 0.0
    %1247 = vmatprep.subr.mxu0 0.0
    %1248 = vmatpush1.xpose.msra.mxu0 0.0
    %1249 = vmatprep.subr.mxu0 0.0
    %1250 = vmatpush1.xpose.msra.mxu0 0.0
    %1251 = vmatprep.subr.mxu0 0.0
    %1252 = vmatpush1.xpose.msra.mxu0 0.0
    %1253 = vmatprep.subr.mxu0 0.0
    %1254 = vmatpush1.xpose.msra.mxu0 0.0
    %1255 = vmatprep.mubr.f32.mxu0 0.0
    %1256 = vmatmul.mubr.f32.gmra.mrb[0].mxu0 %v1187
    %v1257 = vpop.f32.mrb[0].mxu0
    %v1258 = vadd.f32 0.0, %v1257
    %v1259 = vpop.f32.mrb[0].mxu0
    %1260 = vdwg.mxu0
    %1261 = vrot.lane.b32.xlu0 %v167, 104
    %v1262 = vpop.permute.xlu0 %1261
    %1263 = vrot.lane.b32.xlu0 %v167, 72
    %v1264 = vpop.permute.xlu0 %1263
    %v1265 = vsel %vm173, %v1262, 0
    %v1267 = vsel %vm173, %v1264, 0
    %1269 = vmatprep.subr.mxu0 0.0
    %1270 = vmatpush1.xpose.msra.mxu0 %v1267
    %1271 = vmatprep.subr.mxu0 0.0
    %1272 = vmatpush1.xpose.msra.mxu0 0.0
    %1273 = vmatprep.subr.mxu0 0.0
    %1274 = vmatpush1.xpose.msra.mxu0 0.0
    %1275 = vmatprep.subr.mxu0 0.0
    %1276 = vmatpush1.xpose.msra.mxu0 0.0
    %1277 = vmatprep.subr.mxu0 0.0
    %1278 = vmatpush1.xpose.msra.mxu0 0.0
    %1279 = vmatprep.subr.mxu0 0.0
    %1280 = vmatpush1.xpose.msra.mxu0 0.0
    %1281 = vmatprep.subr.mxu0 0.0
    %1282 = vmatpush1.xpose.msra.mxu0 0.0
    %1283 = vmatprep.subr.mxu0 0.0
    %1284 = vmatpush1.xpose.msra.mxu0 0.0
    %1285 = vmatprep.subr.mxu0 0.0
    %1286 = vmatpush1.xpose.msra.mxu0 0.0
    %1287 = vmatprep.subr.mxu0 0.0
    %1288 = vmatpush1.xpose.msra.mxu0 0.0
    %1289 = vmatprep.subr.mxu0 0.0
    %1290 = vmatpush1.xpose.msra.mxu0 0.0
    %1291 = vmatprep.subr.mxu0 0.0
    %1292 = vmatpush1.xpose.msra.mxu0 0.0
    %1293 = vmatprep.subr.mxu0 0.0
    %1294 = vmatpush1.xpose.msra.mxu0 0.0
    %1295 = vmatprep.subr.mxu0 0.0
    %1296 = vmatpush1.xpose.msra.mxu0 0.0
    %1297 = vmatprep.subr.mxu0 0.0
    %1298 = vmatpush1.xpose.msra.mxu0 0.0
    %1299 = vmatprep.subr.mxu0 0.0
    %1300 = vmatpush1.xpose.msra.mxu0 0.0
    %1301 = vmatprep.subr.mxu0 0.0
    %1302 = vmatpush1.xpose.msra.mxu0 0.0
    %1303 = vmatprep.subr.mxu0 0.0
    %1304 = vmatpush1.xpose.msra.mxu0 0.0
    %1305 = vmatprep.subr.mxu0 0.0
    %1306 = vmatpush1.xpose.msra.mxu0 0.0
    %1307 = vmatprep.subr.mxu0 0.0
    %1308 = vmatpush1.xpose.msra.mxu0 0.0
    %1309 = vmatprep.subr.mxu0 0.0
    %1310 = vmatpush1.xpose.msra.mxu0 0.0
    %1311 = vmatprep.subr.mxu0 0.0
    %1312 = vmatpush1.xpose.msra.mxu0 0.0
    %1313 = vmatprep.subr.mxu0 0.0
    %1314 = vmatpush1.xpose.msra.mxu0 0.0
    %1315 = vmatprep.subr.mxu0 0.0
    %1316 = vmatpush1.xpose.msra.mxu0 0.0
    %1317 = vmatprep.subr.mxu0 0.0
    %1318 = vmatpush1.xpose.msra.mxu0 0.0
    %1319 = vmatprep.subr.mxu0 0.0
    %1320 = vmatpush1.xpose.msra.mxu0 0.0
    %1321 = vmatprep.subr.mxu0 0.0
    %1322 = vmatpush1.xpose.msra.mxu0 0.0
    %1323 = vmatprep.subr.mxu0 0.0
    %1324 = vmatpush1.xpose.msra.mxu0 0.0
    %1325 = vmatprep.subr.mxu0 0.0
    %1326 = vmatpush1.xpose.msra.mxu0 0.0
    %1327 = vmatprep.subr.mxu0 0.0
    %1328 = vmatpush1.xpose.msra.mxu0 0.0
    %1329 = vmatprep.subr.mxu0 0.0
    %1330 = vmatpush1.xpose.msra.mxu0 0.0
    %1331 = vmatprep.subr.mxu0 0.0
    %1332 = vmatpush1.xpose.msra.mxu0 0.0
    %1333 = vmatprep.mubr.f32.mxu0 0.0
    %1334 = vmatmul.mubr.f32.gmra.mrb[0].mxu0 %v1265
    %v1335 = vpop.f32.mrb[0].mxu0
    %v1336 = vadd.f32 0.0, %v1335
    %v1337 = vpop.f32.mrb[0].mxu0
    %1338 = vdwg.mxu0
    %v1339 = vmul.f32 %v1258, 0.35355338
    %v1340 = vmul.f32 %v1336, 0.35355338
    %v1341 = vadd.f32 %v1339, %v332
    %v1342 = vadd.f32 %v1340, %v336
    %v1343 = vsel %vm173, %v1341, -inf
    %1344 = vmax.xlane.f32.xlu0 %v1343
    %v1345 = vpop.xlane.xlu0 %1344
    %v1346 = vsel %vm173, %v1342, -inf
    %1347 = vmax.xlane.f32.xlu0 %v1346
    %v1348 = vpop.xlane.xlu0 %1347
    %v1349 = vsub.f32 %v1341, %v1345
    %v1350 = vsub.f32 %v1342, %v1348
    %v1351 = vmul.f32 %v1349, 1.442695
    %v1352 = vpow.pop %v1351
    %v1353 = vmul.f32 %v1350, 1.442695
    %v1354 = vpow.pop %v1353
    %v1355 = vsel %vm173, %v1352, 0.0
    %1356 = vadd.xlane.f32.xlu0 %v1355
    %v1357 = vpop.xlane.xlu0 %1356
    %v1358 = vsel %vm173, %v1354, 0.0
    %1359 = vadd.xlane.f32.xlu0 %v1358
    %v1360 = vpop.xlane.xlu0 %1359
    %v1361 = vrcp.pop %v1357
    %v1362 = vrcp.pop %v1360
    %v1363 = vmul.f32 %v1352, %v1361
    %v1364 = vmul.f32 %v1354, %v1362
    %1365 = vrot.lane.b32.xlu0 %v162, 40
    %v1366 = vpop.permute.xlu0 %1365
    %v1369 = vsel %vm173, %v1363, 0
    %1371 = vmatprep.subr.mxu0 0.0
    %1372 = vmatpush1.msra.mxu0 %v1366
    %1373 = vmatprep.subr.mxu0 0.0
    %1374 = vmatpush1.msra.mxu0 0.0
    %1375 = vmatprep.subr.mxu0 0.0
    %1376 = vmatpush1.msra.mxu0 0.0
    %1377 = vmatprep.subr.mxu0 0.0
    %1378 = vmatpush1.msra.mxu0 0.0
    %1379 = vmatprep.subr.mxu0 0.0
    %1380 = vmatpush1.msra.mxu0 0.0
    %1381 = vmatprep.subr.mxu0 0.0
    %1382 = vmatpush1.msra.mxu0 0.0
    %1383 = vmatprep.subr.mxu0 0.0
    %1384 = vmatpush1.msra.mxu0 0.0
    %1385 = vmatprep.subr.mxu0 0.0
    %1386 = vmatpush1.msra.mxu0 0.0
    %1387 = vmatprep.subr.mxu0 0.0
    %1388 = vmatpush1.msra.mxu0 0.0
    %1389 = vmatprep.subr.mxu0 0.0
    %1390 = vmatpush1.msra.mxu0 0.0
    %1391 = vmatprep.subr.mxu0 0.0
    %1392 = vmatpush1.msra.mxu0 0.0
    %1393 = vmatprep.subr.mxu0 0.0
    %1394 = vmatpush1.msra.mxu0 0.0
    %1395 = vmatprep.subr.mxu0 0.0
    %1396 = vmatpush1.msra.mxu0 0.0
    %1397 = vmatprep.subr.mxu0 0.0
    %1398 = vmatpush1.msra.mxu0 0.0
    %1399 = vmatprep.subr.mxu0 0.0
    %1400 = vmatpush1.msra.mxu0 0.0
    %1401 = vmatprep.subr.mxu0 0.0
    %1402 = vmatpush1.msra.mxu0 0.0
    %1403 = vmatprep.subr.mxu0 0.0
    %1404 = vmatpush1.msra.mxu0 0.0
    %1405 = vmatprep.subr.mxu0 0.0
    %1406 = vmatpush1.msra.mxu0 0.0
    %1407 = vmatprep.subr.mxu0 0.0
    %1408 = vmatpush1.msra.mxu0 0.0
    %1409 = vmatprep.subr.mxu0 0.0
    %1410 = vmatpush1.msra.mxu0 0.0
    %1411 = vmatprep.subr.mxu0 0.0
    %1412 = vmatpush1.msra.mxu0 0.0
    %1413 = vmatprep.subr.mxu0 0.0
    %1414 = vmatpush1.msra.mxu0 0.0
    %1415 = vmatprep.subr.mxu0 0.0
    %1416 = vmatpush1.msra.mxu0 0.0
    %1417 = vmatprep.subr.mxu0 0.0
    %1418 = vmatpush1.msra.mxu0 0.0
    %1419 = vmatprep.subr.mxu0 0.0
    %1420 = vmatpush1.msra.mxu0 0.0
    %1421 = vmatprep.subr.mxu0 0.0
    %1422 = vmatpush1.msra.mxu0 0.0
    %1423 = vmatprep.subr.mxu0 0.0
    %1424 = vmatpush1.msra.mxu0 0.0
    %1425 = vmatprep.subr.mxu0 0.0
    %1426 = vmatpush1.msra.mxu0 0.0
    %1427 = vmatprep.subr.mxu0 0.0
    %1428 = vmatpush1.msra.mxu0 0.0
    %1429 = vmatprep.subr.mxu0 0.0
    %1430 = vmatpush1.msra.mxu0 0.0
    %1431 = vmatprep.subr.mxu0 0.0
    %1432 = vmatpush1.msra.mxu0 0.0
    %1433 = vmatprep.subr.mxu0 0.0
    %1434 = vmatpush1.msra.mxu0 0.0
    %1435 = vmatprep.mubr.f32.mxu0 0.0
    %1436 = vmatmul.mubr.f32.gmra.mrb[0].mxu0 %v1369
    %v1437 = vpop.f32.mrb[0].mxu0
    %v1438 = vadd.f32 0.0, %v1437
    %v1439 = vpop.f32.mrb[0].mxu0
    %1440 = vdwg.mxu0
    %1441 = vrot.lane.b32.xlu0 %v167, 40
    %v1442 = vpop.permute.xlu0 %1441
    %v1445 = vsel %vm173, %v1364, 0
    %1447 = vmatprep.subr.mxu0 0.0
    %1448 = vmatpush1.msra.mxu0 %v1442
    %1449 = vmatprep.subr.mxu0 0.0
    %1450 = vmatpush1.msra.mxu0 0.0
    %1451 = vmatprep.subr.mxu0 0.0
    %1452 = vmatpush1.msra.mxu0 0.0
    %1453 = vmatprep.subr.mxu0 0.0
    %1454 = vmatpush1.msra.mxu0 0.0
    %1455 = vmatprep.subr.mxu0 0.0
    %1456 = vmatpush1.msra.mxu0 0.0
    %1457 = vmatprep.subr.mxu0 0.0
    %1458 = vmatpush1.msra.mxu0 0.0
    %1459 = vmatprep.subr.mxu0 0.0
    %1460 = vmatpush1.msra.mxu0 0.0
    %1461 = vmatprep.subr.mxu0 0.0
    %1462 = vmatpush1.msra.mxu0 0.0
    %1463 = vmatprep.subr.mxu0 0.0
    %1464 = vmatpush1.msra.mxu0 0.0
    %1465 = vmatprep.subr.mxu0 0.0
    %1466 = vmatpush1.msra.mxu0 0.0
    %1467 = vmatprep.subr.mxu0 0.0
    %1468 = vmatpush1.msra.mxu0 0.0
    %1469 = vmatprep.subr.mxu0 0.0
    %1470 = vmatpush1.msra.mxu0 0.0
    %1471 = vmatprep.subr.mxu0 0.0
    %1472 = vmatpush1.msra.mxu0 0.0
    %1473 = vmatprep.subr.mxu0 0.0
    %1474 = vmatpush1.msra.mxu0 0.0
    %1475 = vmatprep.subr.mxu0 0.0
    %1476 = vmatpush1.msra.mxu0 0.0
    %1477 = vmatprep.subr.mxu0 0.0
    %1478 = vmatpush1.msra.mxu0 0.0
    %1479 = vmatprep.subr.mxu0 0.0
    %1480 = vmatpush1.msra.mxu0 0.0
    %1481 = vmatprep.subr.mxu0 0.0
    %1482 = vmatpush1.msra.mxu0 0.0
    %1483 = vmatprep.subr.mxu0 0.0
    %1484 = vmatpush1.msra.mxu0 0.0
    %1485 = vmatprep.subr.mxu0 0.0
    %1486 = vmatpush1.msra.mxu0 0.0
    %1487 = vmatprep.subr.mxu0 0.0
    %1488 = vmatpush1.msra.mxu0 0.0
    %1489 = vmatprep.subr.mxu0 0.0
    %1490 = vmatpush1.msra.mxu0 0.0
    %1491 = vmatprep.subr.mxu0 0.0
    %1492 = vmatpush1.msra.mxu0 0.0
    %1493 = vmatprep.subr.mxu0 0.0
    %1494 = vmatpush1.msra.mxu0 0.0
    %1495 = vmatprep.subr.mxu0 0.0
    %1496 = vmatpush1.msra.mxu0 0.0
    %1497 = vmatprep.subr.mxu0 0.0
    %1498 = vmatpush1.msra.mxu0 0.0
    %1499 = vmatprep.subr.mxu0 0.0
    %1500 = vmatpush1.msra.mxu0 0.0
    %1501 = vmatprep.subr.mxu0 0.0
    %1502 = vmatpush1.msra.mxu0 0.0
    %1503 = vmatprep.subr.mxu0 0.0
    %1504 = vmatpush1.msra.mxu0 0.0
    %1505 = vmatprep.subr.mxu0 0.0
    %1506 = vmatpush1.msra.mxu0 0.0
    %1507 = vmatprep.subr.mxu0 0.0
    %1508 = vmatpush1.msra.mxu0 0.0
    %1509 = vmatprep.subr.mxu0 0.0
    %1510 = vmatpush1.msra.mxu0 0.0
    %1511 = vmatprep.mubr.f32.mxu0 0.0
    %1512 = vmatmul.mubr.f32.gmra.mrb[0].mxu0 %v1445
    %v1513 = vpop.f32.mrb[0].mxu0
    %v1514 = vadd.f32 0.0, %v1513
    %v1515 = vpop.f32.mrb[0].mxu0
    %1516 = vdwg.mxu0
    %1519 = vrot.lane.b32.xlu0 %v770, 8
    %v1520 = vpop.permute.xlu0 %1519
    %1521 = vrot.lane.b32.xlu0 %v846, 8
    %v1522 = vpop.permute.xlu0 %1521
    %1527 = vrot.lane.b32.xlu0 %v1104, 16
    %v1528 = vpop.permute.xlu0 %1527
    %1529 = vrot.lane.b32.xlu0 %v1180, 16
    %v1530 = vpop.permute.xlu0 %1529
    %1535 = vrot.lane.b32.xlu0 %v1438, 24
    %v1536 = vpop.permute.xlu0 %1535
    %1537 = vrot.lane.b32.xlu0 %v1514, 24
    %v1538 = vpop.permute.xlu0 %1537
    %v1541 = vsel %vm173, %v436, %v1520
    %v1542 = vsel %vm173, %v512, %v1522
    %vm1543 = vcmask 130048
    %v1544 = vsel %vm1543, %v1541, %v1528
    %v1545 = vsel %vm1543, %v1542, %v1530
    %vm1546 = vcmask 195584
    %v1547 = vsel %vm1546, %v1544, %v1536
    %v1548 = vsel %vm1546, %v1545, %v1538
    %v1549 = vld [vmem:[%s6] sm:$0xff]
    %v1550 = vld [vmem:[%s6 + $0x8] sm:$0xff]
    %v1551 = vld [vmem:[%s6 + $0x10] sm:$0xff]
    %v1552 = vld [vmem:[%s6 + $0x18] sm:$0xff]
    %v1553 = vld [vmem:[%s7] sm:$0x1]
    %v1555 = vlaneseq
    %v1556 = vshrl.u32 %v1555, 7
    %v1557 = vsub.s32 0, %v1556
    %v1558 = vrot.slane %v1553, %v1557
    %v1561 = vsel %vm64, %v1547, 0
    %v1564 = vsel %vm64, %v1548, 0
    %1566 = vmatprep.subr.mxu0 0.0
    %1567 = vmatpush1.msra.mxu0 %v1549
    %1568 = vmatprep.subr.mxu0 0.0
    %1569 = vmatpush1.msra.mxu0 %v1550
    %1570 = vmatprep.subr.mxu0 0.0
    %1571 = vmatpush1.msra.mxu0 %v1551
    %1572 = vmatprep.subr.mxu0 0.0
    %1573 = vmatpush1.msra.mxu0 %v1552
    %1574 = vmatprep.subr.mxu0 0.0
    %1575 = vmatpush1.msra.mxu0 0.0
    %1576 = vmatprep.subr.mxu0 0.0
    %1577 = vmatpush1.msra.mxu0 0.0
    %1578 = vmatprep.subr.mxu0 0.0
    %1579 = vmatpush1.msra.mxu0 0.0
    %1580 = vmatprep.subr.mxu0 0.0
    %1581 = vmatpush1.msra.mxu0 0.0
    %1582 = vmatprep.subr.mxu0 0.0
    %1583 = vmatpush1.msra.mxu0 0.0
    %1584 = vmatprep.subr.mxu0 0.0
    %1585 = vmatpush1.msra.mxu0 0.0
    %1586 = vmatprep.subr.mxu0 0.0
    %1587 = vmatpush1.msra.mxu0 0.0
    %1588 = vmatprep.subr.mxu0 0.0
    %1589 = vmatpush1.msra.mxu0 0.0
    %1590 = vmatprep.subr.mxu0 0.0
    %1591 = vmatpush1.msra.mxu0 0.0
    %1592 = vmatprep.subr.mxu0 0.0
    %1593 = vmatpush1.msra.mxu0 0.0
    %1594 = vmatprep.subr.mxu0 0.0
    %1595 = vmatpush1.msra.mxu0 0.0
    %1596 = vmatprep.subr.mxu0 0.0
    %1597 = vmatpush1.msra.mxu0 0.0
    %1598 = vmatprep.subr.mxu0 0.0
    %1599 = vmatpush1.msra.mxu0 0.0
    %1600 = vmatprep.subr.mxu0 0.0
    %1601 = vmatpush1.msra.mxu0 0.0
    %1602 = vmatprep.subr.mxu0 0.0
    %1603 = vmatpush1.msra.mxu0 0.0
    %1604 = vmatprep.subr.mxu0 0.0
    %1605 = vmatpush1.msra.mxu0 0.0
    %1606 = vmatprep.subr.mxu0 0.0
    %1607 = vmatpush1.msra.mxu0 0.0
    %1608 = vmatprep.subr.mxu0 0.0
    %1609 = vmatpush1.msra.mxu0 0.0
    %1610 = vmatprep.subr.mxu0 0.0
    %1611 = vmatpush1.msra.mxu0 0.0
    %1612 = vmatprep.subr.mxu0 0.0
    %1613 = vmatpush1.msra.mxu0 0.0
    %1614 = vmatprep.subr.mxu0 0.0
    %1615 = vmatpush1.msra.mxu0 0.0
    %1616 = vmatprep.subr.mxu0 0.0
    %1617 = vmatpush1.msra.mxu0 0.0
    %1618 = vmatprep.subr.mxu0 0.0
    %1619 = vmatpush1.msra.mxu0 0.0
    %1620 = vmatprep.subr.mxu0 0.0
    %1621 = vmatpush1.msra.mxu0 0.0
    %1622 = vmatprep.subr.mxu0 0.0
    %1623 = vmatpush1.msra.mxu0 0.0
    %1624 = vmatprep.subr.mxu0 0.0
    %1625 = vmatpush1.msra.mxu0 0.0
    %1626 = vmatprep.subr.mxu0 0.0
    %1627 = vmatpush1.msra.mxu0 0.0
    %1628 = vmatprep.subr.mxu0 0.0
    %1629 = vmatpush1.msra.mxu0 0.0
    %1630 = vmatprep.mubr.f32.mxu0 0.0
    %1631 = vmatmul.mubr.f32.gmra.mrb[0].mxu0 %v1561
    %v1632 = vpop.f32.mrb[0].mxu0
    %v1633 = vadd.f32 %v1558, %v1632
    %v1634 = vpop.f32.mrb[0].mxu0
    %1635 = vmatprep.mubr.f32.mxu0 0.0
    %1636 = vmatmul.mubr.f32.gmra.mrb[0].mxu0 %v1564
    %v1637 = vpop.f32.mrb[0].mxu0
    %v1638 = vadd.f32 %v1558, %v1637
    %v1639 = vpop.f32.mrb[0].mxu0
    %1640 = vdwg.mxu0
    %v1641 = vadd.f32 %v74, %v1633
    %v1642 = vadd.f32 %v75, %v1638
    %v1643 = vld [vmem:[%s8] sm:$0x1]
    %v1644 = vld [vmem:[%s9] sm:$0x1]
    %v1645 = vsel %vm64, %v1641, 0.0
    %1646 = vadd.xlane.f32.xlu0 %v1645
    %v1647 = vpop.xlane.xlu0 %1646
    %v1648 = vsel %vm64, %v1642, 0.0
    %1649 = vadd.xlane.f32.xlu0 %v1648
    %v1650 = vpop.xlane.xlu0 %1649
    %v1651 = vrcp.pop 32.0
    %v1652 = vmul.f32 %v1647, %v1651
    %v1653 = vmul.f32 %v1650, %v1651
    %v1654 = vsub.f32 %v1641, %v1652
    %v1655 = vsub.f32 %v1642, %v1653
    %v1656 = vmul.f32 %v1654, %v1654
    %v1657 = vmul.f32 %v1655, %v1655
    %v1658 = vsel %vm64, %v1656, 0.0
    %1659 = vadd.xlane.f32.xlu0 %v1658
    %v1660 = vpop.xlane.xlu0 %1659
    %v1661 = vsel %vm64, %v1657, 0.0
    %1662 = vadd.xlane.f32.xlu0 %v1661
    %v1663 = vpop.xlane.xlu0 %1662
    %v1664 = vmul.f32 %v1660, %v1651
    %v1665 = vmul.f32 %v1663, %v1651
    %v1666 = vadd.f32 %v1664, 1e-05
    %v1667 = vadd.f32 %v1665, 1e-05
    %v1668 = vrsqrt.pop %v1666
    %v1669 = vrsqrt.pop %v1667
    %v1670 = vmul.f32 %v1654, %v1668
    %v1671 = vmul.f32 %v1655, %v1669
    %v1673 = vlaneseq
    %v1674 = vshrl.u32 %v1673, 7
    %v1675 = vsub.s32 0, %v1674
    %v1676 = vrot.slane %v1643, %v1675
    %v1678 = vmul.f32 %v1670, %v1676
    %v1679 = vmul.f32 %v1671, %v1676
    %v1681 = vlaneseq
    %v1682 = vshrl.u32 %v1681, 7
    %v1683 = vsub.s32 0, %v1682
    %v1684 = vrot.slane %v1644, %v1683
    %v1686 = vadd.f32 %v1678, %v1684
    %v1687 = vadd.f32 %v1679, %v1684
    %v1688 = vld [vmem:[%s10] sm:$0xff]
    %v1689 = vld [vmem:[%s10 + $0x8] sm:$0xff]
    %v1690 = vld [vmem:[%s10 + $0x10] sm:$0xff]
    %v1691 = vld [vmem:[%s10 + $0x18] sm:$0xff]
    %v1692 = vld [vmem:[%s11] sm:$0x1]
    %v1694 = vlaneseq
    %v1695 = vshrl.u32 %v1694, 7
    %v1696 = vsub.s32 0, %v1695
    %v1697 = vrot.slane %v1692, %v1696
    %v1700 = vsel %vm64, %v1686, 0
    %v1703 = vsel %vm64, %v1687, 0
    %1705 = vmatprep.subr.mxu0 0.0
    %1706 = vmatpush1.msra.mxu0 %v1688
    %1707 = vmatprep.subr.mxu0 0.0
    %1708 = vmatpush1.msra.mxu0 %v1689
    %1709 = vmatprep.subr.mxu0 0.0
    %1710 = vmatpush1.msra.mxu0 %v1690
    %1711 = vmatprep.subr.mxu0 0.0
    %1712 = vmatpush1.msra.mxu0 %v1691
    %1713 = vmatprep.subr.mxu0 0.0
    %1714 = vmatpush1.msra.mxu0 0.0
    %1715 = vmatprep.subr.mxu0 0.0
    %1716 = vmatpush1.msra.mxu0 0.0
    %1717 = vmatprep.subr.mxu0 0.0
    %1718 = vmatpush1.msra.mxu0 0.0
    %1719 = vmatprep.subr.mxu0 0.0
    %1720 = vmatpush1.msra.mxu0 0.0
    %1721 = vmatprep.subr.mxu0 0.0
    %1722 = vmatpush1.msra.mxu0 0.0
    %1723 = vmatprep.subr.mxu0 0.0
    %1724 = vmatpush1.msra.mxu0 0.0
    %1725 = vmatprep.subr.mxu0 0.0
    %1726 = vmatpush1.msra.mxu0 0.0
    %1727 = vmatprep.subr.mxu0 0.0
    %1728 = vmatpush1.msra.mxu0 0.0
    %1729 = vmatprep.subr.mxu0 0.0
    %1730 = vmatpush1.msra.mxu0 0.0
    %1731 = vmatprep.subr.mxu0 0.0
    %1732 = vmatpush1.msra.mxu0 0.0
    %1733 = vmatprep.subr.mxu0 0.0
    %1734 = vmatpush1.msra.mxu0 0.0
    %1735 = vmatprep.subr.mxu0 0.0
    %1736 = vmatpush1.msra.mxu0 0.0
    %1737 = vmatprep.subr.mxu0 0.0
    %1738 = vmatpush1.msra.mxu0 0.0
    %1739 = vmatprep.subr.mxu0 0.0
    %1740 = vmatpush1.msra.mxu0 0.0
    %1741 = vmatprep.subr.mxu0 0.0
    %1742 = vmatpush1.msra.mxu0 0.0
    %1743 = vmatprep.subr.mxu0 0.0
    %1744 = vmatpush1.msra.mxu0 0.0
    %1745 = vmatprep.subr.mxu0 0.0
    %1746 = vmatpush1.msra.mxu0 0.0
    %1747 = vmatprep.subr.mxu0 0.0
    %1748 = vmatpush1.msra.mxu0 0.0
    %1749 = vmatprep.subr.mxu0 0.0
    %1750 = vmatpush1.msra.mxu0 0.0
    %1751 = vmatprep.subr.mxu0 0.0
    %1752 = vmatpush1.msra.mxu0 0.0
    %1753 = vmatprep.subr.mxu0 0.0
    %1754 = vmatpush1.msra.mxu0 0.0
    %1755 = vmatprep.subr.mxu0 0.0
    %1756 = vmatpush1.msra.mxu0 0.0
    %1757 = vmatprep.subr.mxu0 0.0
    %1758 = vmatpush1.msra.mxu0 0.0
    %1759 = vmatprep.subr.mxu0 0.0
    %1760 = vmatpush1.msra.mxu0 0.0
    %1761 = vmatprep.subr.mxu0 0.0
    %1762 = vmatpush1.msra.mxu0 0.0
    %1763 = vmatprep.subr.mxu0 0.0
    %1764 = vmatpush1.msra.mxu0 0.0
    %1765 = vmatprep.subr.mxu0 0.0
    %1766 = vmatpush1.msra.mxu0 0.0
    %1767 = vmatprep.subr.mxu0 0.0
    %1768 = vmatpush1.msra.mxu0 0.0
    %1769 = vmatprep.mubr.f32.mxu0 0.0
    %1770 = vmatmul.mubr.f32.gmra.mrb[0].mxu0 %v1700
    %v1771 = vpop.f32.mrb[0].mxu0
    %v1772 = vadd.f32 %v1697, %v1771
    %v1773 = vpop.f32.mrb[0].mxu0
    %1774 = vmatprep.mubr.f32.mxu0 0.0
    %1775 = vmatmul.mubr.f32.gmra.mrb[0].mxu0 %v1703
    %v1776 = vpop.f32.mrb[0].mxu0
    %v1777 = vadd.f32 %v1697, %v1776
    %v1778 = vpop.f32.mrb[0].mxu0
    %1779 = vdwg.mxu0
    %v1780 = vmax.f32 %v1772, 0.0
    %v1781 = vmax.f32 %v1777, 0.0
    %v1782 = vld [vmem:[%s12] sm:$0xff]
    %v1783 = vld [vmem:[%s12 + $0x8] sm:$0xff]
    %v1784 = vld [vmem:[%s12 + $0x10] sm:$0xff]
    %v1785 = vld [vmem:[%s12 + $0x18] sm:$0xff]
    %v1786 = vld [vmem:[%s12 + $0x20] sm:$0xff]
    %v1787 = vld [vmem:[%s12 + $0x28] sm:$0xff]
    %v1788 = vld [vmem:[%s12 + $0x30] sm:$0xff]
    %v1789 = vld [vmem:[%s12 + $0x38] sm:$0xff]
    %v1790 = vld [vmem:[%s13] sm:$0x1]
    %v1792 = vlaneseq
    %v1793 = vshrl.u32 %v1792, 7
    %v1794 = vsub.s32 0, %v1793
    %v1795 = vrot.slane %v1790, %v1794
    %vm1797 = vcmask 523264
    %v1799 = vsel %vm1797, %v1780, 0
    %v1802 = vsel %vm1797, %v1781, 0
    %1804 = vmatprep.subr.mxu0 0.0
    %1805 = vmatpush1.msra.mxu0 %v1782
    %1806 = vmatprep.subr.mxu0 0.0
    %1807 = vmatpush1.msra.mxu0 %v1783
    %1808 = vmatprep.subr.mxu0 0.0
    %1809 = vmatpush1.msra.mxu0 %v1784
    %1810 = vmatprep.subr.mxu0 0.0
    %1811 = vmatpush1.msra.mxu0 %v1785
    %1812 = vmatprep.subr.mxu0 0.0
    %1813 = vmatpush1.msra.mxu0 %v1786
    %1814 = vmatprep.subr.mxu0 0.0
    %1815 = vmatpush1.msra.mxu0 %v1787
    %1816 = vmatprep.subr.mxu0 0.0
    %1817 = vmatpush1.msra.mxu0 %v1788
    %1818 = vmatprep.subr.mxu0 0.0
    %1819 = vmatpush1.msra.mxu0 %v1789
    %1820 = vmatprep.subr.mxu0 0.0
    %1821 = vmatpush1.msra.mxu0 0.0
    %1822 = vmatprep.subr.mxu0 0.0
    %1823 = vmatpush1.msra.mxu0 0.0
    %1824 = vmatprep.subr.mxu0 0.0
    %1825 = vmatpush1.msra.mxu0 0.0
    %1826 = vmatprep.subr.mxu0 0.0
    %1827 = vmatpush1.msra.mxu0 0.0
    %1828 = vmatprep.subr.mxu0 0.0
    %1829 = vmatpush1.msra.mxu0 0.0
    %1830 = vmatprep.subr.mxu0 0.0
    %1831 = vmatpush1.msra.mxu0 0.0
    %1832 = vmatprep.subr.mxu0 0.0
    %1833 = vmatpush1.msra.mxu0 0.0
    %1834 = vmatprep.subr.mxu0 0.0
    %1835 = vmatpush1.msra.mxu0 0.0
    %1836 = vmatprep.subr.mxu0 0.0
    %1837 = vmatpush1.msra.mxu0 0.0
    %1838 = vmatprep.subr.mxu0 0.0
    %1839 = vmatpush1.msra.mxu0 0.0
    %1840 = vmatprep.subr.mxu0 0.0
    %1841 = vmatpush1.msra.mxu0 0.0
    %1842 = vmatprep.subr.mxu0 0.0
    %1843 = vmatpush1.msra.mxu0 0.0
    %1844 = vmatprep.subr.mxu0 0.0
    %1845 = vmatpush1.msra.mxu0 0.0
    %1846 = vmatprep.subr.mxu0 0.0
    %1847 = vmatpush1.msra.mxu0 0.0
    %1848 = vmatprep.subr.mxu0 0.0
    %1849 = vmatpush1.msra.mxu0 0.0
    %1850 = vmatprep.subr.mxu0 0.0
    %1851 = vmatpush1.msra.mxu0 0.0
    %1852 = vmatprep.subr.mxu0 0.0
    %1853 = vmatpush1.msra.mxu0 0.0
    %1854 = vmatprep.subr.mxu0 0.0
    %1855 = vmatpush1.msra.mxu0 0.0
    %1856 = vmatprep.subr.mxu0 0.0
    %1857 = vmatpush1.msra.mxu0 0.0
    %1858 = vmatprep.subr.mxu0 0.0
    %1859 = vmatpush1.msra.mxu0 0.0
    %1860 = vmatprep.subr.mxu0 0.0
    %1861 = vmatpush1.msra.mxu0 0.0
    %1862 = vmatprep.subr.mxu0 0.0
    %1863 = vmatpush1.msra.mxu0 0.0
    %1864 = vmatprep.subr.mxu0 0.0
    %1865 = vmatpush1.msra.mxu0 0.0
    %1866 = vmatprep.subr.mxu0 0.0
    %1867 = vmatpush1.msra.mxu0 0.0
    %1868 = vmatprep.mubr.f32.mxu0 0.0
    %1869 = vmatmul.mubr.f32.gmra.mrb[0].mxu0 %v1799
    %v1870 = vpop.f32.mrb[0].mxu0
    %v1871 = vadd.f32 %v1795, %v1870
    %v1872 = vpop.f32.mrb[0].mxu0
    %1873 = vmatprep.mubr.f32.mxu0 0.0
    %1874 = vmatmul.mubr.f32.gmra.mrb[0].mxu0 %v1802
    %v1875 = vpop.f32.mrb[0].mxu0
    %v1876 = vadd.f32 %v1795, %v1875
    %v1877 = vpop.f32.mrb[0].mxu0
    %1878 = vdwg.mxu0
    %v1879 = vadd.f32 %v1686, %v1871
    %v1880 = vadd.f32 %v1687, %v1876
    %v1881 = vld [vmem:[%s14] sm:$0x1]
    %v1882 = vld [vmem:[%s15] sm:$0x1]
    %v1883 = vsel %vm64, %v1879, 0.0
    %1884 = vadd.xlane.f32.xlu0 %v1883
    %v1885 = vpop.xlane.xlu0 %1884
    %v1886 = vsel %vm64, %v1880, 0.0
    %1887 = vadd.xlane.f32.xlu0 %v1886
    %v1888 = vpop.xlane.xlu0 %1887
    %v1889 = vmul.f32 %v1885, %v1651
    %v1890 = vmul.f32 %v1888, %v1651
    %v1891 = vsub.f32 %v1879, %v1889
    %v1892 = vsub.f32 %v1880, %v1890
    %v1893 = vmul.f32 %v1891, %v1891
    %v1894 = vmul.f32 %v1892, %v1892
    %v1895 = vsel %vm64, %v1893, 0.0
    %1896 = vadd.xlane.f32.xlu0 %v1895
    %v1897 = vpop.xlane.xlu0 %1896
    %v1898 = vsel %vm64, %v1894, 0.0
    %1899 = vadd.xlane.f32.xlu0 %v1898
    %v1900 = vpop.xlane.xlu0 %1899
    %v1901 = vmul.f32 %v1897, %v1651
    %v1902 = vmul.f32 %v1900, %v1651
    %v1903 = vadd.f32 %v1901, 1e-05
    %v1904 = vadd.f32 %v1902, 1e-05
    %v1905 = vrsqrt.pop %v1903
    %v1906 = vrsqrt.pop %v1904
    %v1907 = vmul.f32 %v1891, %v1905
    %v1908 = vmul.f32 %v1892, %v1906
    %v1910 = vlaneseq
    %v1911 = vshrl.u32 %v1910, 7
    %v1912 = vsub.s32 0, %v1911
    %v1913 = vrot.slane %v1881, %v1912
    %v1915 = vmul.f32 %v1907, %v1913
    %v1916 = vmul.f32 %v1908, %v1913
    %v1918 = vlaneseq
    %v1919 = vshrl.u32 %v1918, 7
    %v1920 = vsub.s32 0, %v1919
    %v1921 = vrot.slane %v1882, %v1920
    %v1923 = vadd.f32 %v1915, %v1921
    %v1924 = vadd.f32 %v1916, %v1921
    %v1925 = vld [vmem:[%s2] sm:$0xff]
    %v1926 = vld [vmem:[%s2 + $0x8] sm:$0xff]
    %1928 = vset.pattern.permute.xlu0 0
    %1929 = vperm.xlu0 %1928, %v1925
    %v1930 = vpop.permute.xlu0 %1929
    %1933 = vset.pattern.permute.xlu0 0
    %1934 = vperm.xlu0 %1933, %v1926
    %v1935 = vpop.permute.xlu0 %1934
    %v1937 = vmul.f32 %v1923, %v1930
    %v1938 = vmul.f32 %v1924, %v1935
    %v1939 = vsel %vm64, %v1937, 0.0
    %v1940 = vrot.slane %v1939, 4
    %v1941 = vadd.f32 %v1939, %v1940
    %v1942 = vrot.slane %v1941, 2
    %v1943 = vadd.f32 %v1941, %v1942
    %v1944 = vrot.slane %v1943, 1
    %v1945 = vadd.f32 %v1943, %v1944
    %v1946 = vsel %vm64, %v1938, 0.0
    %v1947 = vrot.slane %v1946, 4
    %v1948 = vadd.f32 %v1946, %v1947
    %v1949 = vrot.slane %v1948, 2
    %v1950 = vadd.f32 %v1948, %v1949
    %v1951 = vrot.slane %v1950, 1
    %v1952 = vadd.f32 %v1950, %v1951
    %v1953 = vld [vmem:[%s16] sm:$0xff]
    %v1954 = vld [vmem:[%s16 + $0x8] sm:$0xff]
    %v1955 = vld [vmem:[%s16 + $0x10] sm:$0xff]
    %v1956 = vld [vmem:[%s16 + $0x18] sm:$0xff]
    %v1957 = vld [vmem:[%s17] sm:$0x1]
    %v1959 = vlaneseq
    %v1960 = vshrl.u32 %v1959, 7
    %v1961 = vsub.s32 0, %v1960
    %v1962 = vrot.slane %v1957, %v1961
    %vm1966 = vcmask 1041409
    %v1967 = vsel %vm1966, %v1952, %v1945
    %v1968 = vsel %vm64, %v1967, 0
    %1970 = vmatprep.subr.mxu0 0.0
    %1971 = vmatpush1.msra.mxu0 %v1953
    %1972 = vmatprep.subr.mxu0 0.0
    %1973 = vmatpush1.msra.mxu0 %v1954
    %1974 = vmatprep.subr.mxu0 0.0
    %1975 = vmatpush1.msra.mxu0 %v1955
    %1976 = vmatprep.subr.mxu0 0.0
    %1977 = vmatpush1.msra.mxu0 %v1956
    %1978 = vmatprep.subr.mxu0 0.0
    %1979 = vmatpush1.msra.mxu0 0.0
    %1980 = vmatprep.subr.mxu0 0.0
    %1981 = vmatpush1.msra.mxu0 0.0
    %1982 = vmatprep.subr.mxu0 0.0
    %1983 = vmatpush1.msra.mxu0 0.0
    %1984 = vmatprep.subr.mxu0 0.0
    %1985 = vmatpush1.msra.mxu0 0.0
    %1986 = vmatprep.subr.mxu0 0.0
    %1987 = vmatpush1.msra.mxu0 0.0
    %1988 = vmatprep.subr.mxu0 0.0
    %1989 = vmatpush1.msra.mxu0 0.0
    %1990 = vmatprep.subr.mxu0 0.0
    %1991 = vmatpush1.msra.mxu0 0.0
    %1992 = vmatprep.subr.mxu0 0.0
    %1993 = vmatpush1.msra.mxu0 0.0
    %1994 = vmatprep.subr.mxu0 0.0
    %1995 = vmatpush1.msra.mxu0 0.0
    %1996 = vmatprep.subr.mxu0 0.0
    %1997 = vmatpush1.msra.mxu0 0.0
    %1998 = vmatprep.subr.mxu0 0.0
    %1999 = vmatpush1.msra.mxu0 0.0
    %2000 = vmatprep.subr.mxu0 0.0
    %2001 = vmatpush1.msra.mxu0 0.0
    %2002 = vmatprep.subr.mxu0 0.0
    %2003 = vmatpush1.msra.mxu0 0.0
    %2004 = vmatprep.subr.mxu0 0.0
    %2005 = vmatpush1.msra.mxu0 0.0
    %2006 = vmatprep.subr.mxu0 0.0
    %2007 = vmatpush1.msra.mxu0 0.0
    %2008 = vmatprep.subr.mxu0 0.0
    %2009 = vmatpush1.msra.mxu0 0.0
    %2010 = vmatprep.subr.mxu0 0.0
    %2011 = vmatpush1.msra.mxu0 0.0
    %2012 = vmatprep.subr.mxu0 0.0
    %2013 = vmatpush1.msra.mxu0 0.0
    %2014 = vmatprep.subr.mxu0 0.0
    %2015 = vmatpush1.msra.mxu0 0.0
    %2016 = vmatprep.subr.mxu0 0.0
    %2017 = vmatpush1.msra.mxu0 0.0
    %2018 = vmatprep.subr.mxu0 0.0
    %2019 = vmatpush1.msra.mxu0 0.0
    %2020 = vmatprep.subr.mxu0 0.0
    %2021 = vmatpush1.msra.mxu0 0.0
    %2022 = vmatprep.subr.mxu0 0.0
    %2023 = vmatpush1.msra.mxu0 0.0
    %2024 = vmatprep.subr.mxu0 0.0
    %2025 = vmatpush1.msra.mxu0 0.0
    %2026 = vmatprep.subr.mxu0 0.0
    %2027 = vmatpush1.msra.mxu0 0.0
    %2028 = vmatprep.subr.mxu0 0.0
    %2029 = vmatpush1.msra.mxu0 0.0
    %2030 = vmatprep.subr.mxu0 0.0
    %2031 = vmatpush1.msra.mxu0 0.0
    %2032 = vmatprep.subr.mxu0 0.0
    %2033 = vmatpush1.msra.mxu0 0.0
    %2034 = vmatprep.mubr.f32.mxu0 0.0
    %2035 = vmatmul.mubr.f32.gmra.mrb[0].mxu0 %v1968
    %v2036 = vpop.f32.mrb[0].mxu0
    %v2037 = vadd.f32 %v1962, %v2036
    %v2038 = vpop.f32.mrb[0].mxu0
    %2039 = vdwg.mxu0
    %vm2040 = vcmask 33792
    %2041 = vst.msk [vmem:[#allocation2] sm:$0x3] %vm2040, %v2037
    // Predicated region
    $region74: #{run_masked.3} parent=1 // pred_check
      _
    $region75: #{run_masked.3} parent=1 // pred_check_branch
      %2043 = sbr.rel (0) target = $region77
    $region76: #{run_masked.3} parent=1 // pred_region
      %s2045 = ssub.s32 32, 32
      %2046 = vsyncadd [#allocation3], %s2045
      %s2048 = sshll.u32 [#allocation2], 4
      %s2049 = int_to_ptr.vmem [resolvable:$true] %s2048
      %2051 = dma.vmem_to_hbm [thread:$0]  %s2049, 32, %s18, [#allocation3]
    $region77: #{run_masked.3} parent=1 // pred_fallthru
      _
    // Predicated region
    $region78: #{run_masked.3} parent=1 // pred_check
      _
    $region79: #{run_masked.3} parent=1 // pred_check_branch
      %2053 = sbr.rel (0) target = $region81
    $region80: #{run_masked.3} parent=1 // pred_region
      %2054 = dma.done [#allocation3], 32
    $region81: #{run_masked.3} parent=1 // pred_fallthru
      _
    %2055 = vsyncpa [#allocation3], 1

// kernel: run_masked.2
$region0: #{run_masked.2}
  #allocation0 [shape = 'u32[]', space=smem, size = 0x4, offset = 0x4, fixed_abs, tag = 'smem constant byte address 0x4 - core index']
  #allocation1 [shape = 'u32[144,128]{1,0:T(1,128)}', space=vmem, size = 0x12000, scoped, tag = 'internal scratch']
  %s0 = inlined_call_operand.vmem [shape: f32[8,16,32], index: 0, kind: input, shape index: {}]
  %s1 = inlined_call_operand.vmem [shape: f32[1,32,96], index: 1, kind: input, shape index: {}]
  %s2 = inlined_call_operand.vmem [shape: f32[1,1,96], index: 2, kind: input, shape index: {}]
  %s3 = inlined_call_operand.vmem [shape: f32[1,32,32], index: 3, kind: input, shape index: {}]
  %s4 = inlined_call_operand.vmem [shape: f32[1,1,32], index: 4, kind: input, shape index: {}]
  %s5 = inlined_call_operand.vmem [shape: f32[1,1,32], index: 5, kind: input, shape index: {}]
  %s6 = inlined_call_operand.vmem [shape: f32[1,1,32], index: 6, kind: input, shape index: {}]
  %s7 = inlined_call_operand.vmem [shape: f32[1,32,64], index: 7, kind: input, shape index: {}]
  %s8 = inlined_call_operand.vmem [shape: f32[1,1,64], index: 8, kind: input, shape index: {}]
  %s9 = inlined_call_operand.vmem [shape: f32[1,64,32], index: 9, kind: input, shape index: {}]
  %s10 = inlined_call_operand.vmem [shape: f32[1,1,32], index: 10, kind: input, shape index: {}]
  %s11 = inlined_call_operand.vmem [shape: f32[1,1,32], index: 11, kind: input, shape index: {}]
  %s12 = inlined_call_operand.vmem [shape: f32[1,1,32], index: 12, kind: input, shape index: {}]
  %s13 = inlined_call_operand.vmem [shape: f32[2,16,32], index: 13, kind: output, shape index: {}]
  %s14 = sld [smem:[#allocation0]]
  $region85: #{run_masked.2} parent=0
    _
  %s16 = ssub.s32 1, %s14
  %s17 = scalar_select 0, %s16, %s14
  loop: start=0, step=1, limit=4
  $region2: #{run_masked.2} parent=0 // loop_pre_header
    _
  $region3: #{run_masked.2} parent=0 // loop_header
    %s19 = sphi 0, %s23
    %p20 = scmp.ge.s32.totalorder %s19, 4
    %s29 = sphi 0, %s31
    %s32 = sphi 0, %s29
    %s33 = sphi 0, %s32
    %s49 = sphi 0, %s33
    %s53 = sphi 0, %s53
    %s55 = sphi 0, %s53
    %s56 = sphi 0, %s55
    %s70 = sphi 0, %s56
    %s74 = sphi 0, %s74
    %s76 = sphi 0, %s74
    %s77 = sphi 0, %s76
    %s91 = sphi 0, %s77
    %s95 = sphi 0, %s95
    %s97 = sphi 0, %s95
    %s98 = sphi 0, %s97
    %s112 = sphi 0, %s98
    %s116 = sphi 0, %s116
    %s118 = sphi 0, %s116
    %s119 = sphi 0, %s118
    %s133 = sphi 0, %s119
    %s137 = sphi 0, %s137
    %s139 = sphi 0, %s137
    %s140 = sphi 0, %s139
    %s154 = sphi 0, %s140
    %s158 = sphi 0, %s158
    %s160 = sphi 0, %s158
    %s161 = sphi 0, %s160
    %s175 = sphi 0, %s161
    %s179 = sphi 0, %s179
    %s181 = sphi 0, %s179
    %s182 = sphi 0, %s181
    %s196 = sphi 0, %s182
    %s200 = sphi 0, %s200
    %s202 = sphi 0, %s200
    %s203 = sphi 0, %s202
    %s217 = sphi 0, %s203
    %s221 = sphi 0, %s221
    %s223 = sphi 0, %s221
    %s224 = sphi 0, %s223
    %s238 = sphi 0, %s224
    %s242 = sphi 0, %s242
    %s244 = sphi 0, %s242
    %s245 = sphi 0, %s244
    %s259 = sphi 0, %s245
    %s263 = sphi 0, %s263
    %s265 = sphi 0, %s263
    %s266 = sphi 0, %s265
    %s280 = sphi 0, %s266
    %s284 = sphi 0, %s284
    %s286 = sphi 0, %s284
    %s287 = sphi 0, %s286
    %s301 = sphi 0, %s287
    %s307 = sphi 0, %s309
    %s310 = sphi 0, %s307
    %s311 = sphi 0, %s310
    %s327 = sphi 0, %s311
  $region4: #{run_masked.2} parent=0 // loop_header_branch
    %22 = sbr.rel (%p20) target = $region8
  $region5: #{run_masked.2} parent=0 // loop_body
    %s24 = ssub.s32 %s19, 1
    %s25 = ssub.s32 %s19, 2
    %s26 = sadd.s32 %s19, 1
    %s27 = ssub.s32 %s19, %s26
    %p28 = scmp.eq.s32.totalorder %s27, 0
    %s30 = sadd.s32 %s29, 1
    %s31 = scalar_select %p28, %s29, %s30
    %p34 = pneg %p28
    %p35 = scmp.eq.s32.totalorder %s19, 1
    %p36 = por %p34, %p35
    %p37 = scmp.ne.s32.totalorder %s29, %s32
    %p38 = scmp.eq.s32.totalorder %s19, 0
    %p39 = por %p37, %p38
    %p40 = scmp.ne.s32.totalorder %s29, %s32
    %p41 = scmp.eq.s32.totalorder %s24, 1
    %p42 = por %p40, %p41
    %p43 = scmp.ne.s32.totalorder %s32, %s33
    %p44 = scmp.eq.s32.totalorder %s24, 0
    %p45 = por %p43, %p44
    %p46 = scmp.ne.s32.totalorder %s32, %s33
    %p47 = scmp.eq.s32.totalorder %s25, 1
    %p48 = por %p46, %p47
    %p50 = scmp.ne.s32.totalorder %s33, %s49
    %p51 = scmp.eq.s32.totalorder %s25, 0
    %p52 = por %p50, %p51
    %s54 = sadd.s32 %s53, 1
    %p57 = scmp.eq.s32.totalorder %s19, 1
    %p58 = scmp.ne.s32.totalorder %s53, %s55
    %p59 = scmp.eq.s32.totalorder %s19, 0
    %p60 = por %p58, %p59
    %p61 = scmp.ne.s32.totalorder %s53, %s55
    %p62 = scmp.eq.s32.totalorder %s24, 1
    %p63 = por %p61, %p62
    %p64 = scmp.ne.s32.totalorder %s55, %s56
    %p65 = scmp.eq.s32.totalorder %s24, 0
    %p66 = por %p64, %p65
    %p67 = scmp.ne.s32.totalorder %s55, %s56
    %p68 = scmp.eq.s32.totalorder %s25, 1
    %p69 = por %p67, %p68
    %p71 = scmp.ne.s32.totalorder %s56, %s70
    %p72 = scmp.eq.s32.totalorder %s25, 0
    %p73 = por %p71, %p72
    %s75 = sadd.s32 %s74, 1
    %p78 = scmp.eq.s32.totalorder %s19, 1
    %p79 = scmp.ne.s32.totalorder %s74, %s76
    %p80 = scmp.eq.s32.totalorder %s19, 0
    %p81 = por %p79, %p80
    %p82 = scmp.ne.s32.totalorder %s74, %s76
    %p83 = scmp.eq.s32.totalorder %s24, 1
    %p84 = por %p82, %p83
    %p85 = scmp.ne.s32.totalorder %s76, %s77
    %p86 = scmp.eq.s32.totalorder %s24, 0
    %p87 = por %p85, %p86
    %p88 = scmp.ne.s32.totalorder %s76, %s77
    %p89 = scmp.eq.s32.totalorder %s25, 1
    %p90 = por %p88, %p89
    %p92 = scmp.ne.s32.totalorder %s77, %s91
    %p93 = scmp.eq.s32.totalorder %s25, 0
    %p94 = por %p92, %p93
    %s96 = sadd.s32 %s95, 1
    %p99 = scmp.eq.s32.totalorder %s19, 1
    %p100 = scmp.ne.s32.totalorder %s95, %s97
    %p101 = scmp.eq.s32.totalorder %s19, 0
    %p102 = por %p100, %p101
    %p103 = scmp.ne.s32.totalorder %s95, %s97
    %p104 = scmp.eq.s32.totalorder %s24, 1
    %p105 = por %p103, %p104
    %p106 = scmp.ne.s32.totalorder %s97, %s98
    %p107 = scmp.eq.s32.totalorder %s24, 0
    %p108 = por %p106, %p107
    %p109 = scmp.ne.s32.totalorder %s97, %s98
    %p110 = scmp.eq.s32.totalorder %s25, 1
    %p111 = por %p109, %p110
    %p113 = scmp.ne.s32.totalorder %s98, %s112
    %p114 = scmp.eq.s32.totalorder %s25, 0
    %p115 = por %p113, %p114
    %s117 = sadd.s32 %s116, 1
    %p120 = scmp.eq.s32.totalorder %s19, 1
    %p121 = scmp.ne.s32.totalorder %s116, %s118
    %p122 = scmp.eq.s32.totalorder %s19, 0
    %p123 = por %p121, %p122
    %p124 = scmp.ne.s32.totalorder %s116, %s118
    %p125 = scmp.eq.s32.totalorder %s24, 1
    %p126 = por %p124, %p125
    %p127 = scmp.ne.s32.totalorder %s118, %s119
    %p128 = scmp.eq.s32.totalorder %s24, 0
    %p129 = por %p127, %p128
    %p130 = scmp.ne.s32.totalorder %s118, %s119
    %p131 = scmp.eq.s32.totalorder %s25, 1
    %p132 = por %p130, %p131
    %p134 = scmp.ne.s32.totalorder %s119, %s133
    %p135 = scmp.eq.s32.totalorder %s25, 0
    %p136 = por %p134, %p135
    %s138 = sadd.s32 %s137, 1
    %p141 = scmp.eq.s32.totalorder %s19, 1
    %p142 = scmp.ne.s32.totalorder %s137, %s139
    %p143 = scmp.eq.s32.totalorder %s19, 0
    %p144 = por %p142, %p143
    %p145 = scmp.ne.s32.totalorder %s137, %s139
    %p146 = scmp.eq.s32.totalorder %s24, 1
    %p147 = por %p145, %p146
    %p148 = scmp.ne.s32.totalorder %s139, %s140
    %p149 = scmp.eq.s32.totalorder %s24, 0
    %p150 = por %p148, %p149
    %p151 = scmp.ne.s32.totalorder %s139, %s140
    %p152 = scmp.eq.s32.totalorder %s25, 1
    %p153 = por %p151, %p152
    %p155 = scmp.ne.s32.totalorder %s140, %s154
    %p156 = scmp.eq.s32.totalorder %s25, 0
    %p157 = por %p155, %p156
    %s159 = sadd.s32 %s158, 1
    %p162 = scmp.eq.s32.totalorder %s19, 1
    %p163 = scmp.ne.s32.totalorder %s158, %s160
    %p164 = scmp.eq.s32.totalorder %s19, 0
    %p165 = por %p163, %p164
    %p166 = scmp.ne.s32.totalorder %s158, %s160
    %p167 = scmp.eq.s32.totalorder %s24, 1
    %p168 = por %p166, %p167
    %p169 = scmp.ne.s32.totalorder %s160, %s161
    %p170 = scmp.eq.s32.totalorder %s24, 0
    %p171 = por %p169, %p170
    %p172 = scmp.ne.s32.totalorder %s160, %s161
    %p173 = scmp.eq.s32.totalorder %s25, 1
    %p174 = por %p172, %p173
    %p176 = scmp.ne.s32.totalorder %s161, %s175
    %p177 = scmp.eq.s32.totalorder %s25, 0
    %p178 = por %p176, %p177
    %s180 = sadd.s32 %s179, 1
    %p183 = scmp.eq.s32.totalorder %s19, 1
    %p184 = scmp.ne.s32.totalorder %s179, %s181
    %p185 = scmp.eq.s32.totalorder %s19, 0
    %p186 = por %p184, %p185
    %p187 = scmp.ne.s32.totalorder %s179, %s181
    %p188 = scmp.eq.s32.totalorder %s24, 1
    %p189 = por %p187, %p188
    %p190 = scmp.ne.s32.totalorder %s181, %s182
    %p191 = scmp.eq.s32.totalorder %s24, 0
    %p192 = por %p190, %p191
    %p193 = scmp.ne.s32.totalorder %s181, %s182
    %p194 = scmp.eq.s32.totalorder %s25, 1
    %p195 = por %p193, %p194
    %p197 = scmp.ne.s32.totalorder %s182, %s196
    %p198 = scmp.eq.s32.totalorder %s25, 0
    %p199 = por %p197, %p198
    %s201 = sadd.s32 %s200, 1
    %p204 = scmp.eq.s32.totalorder %s19, 1
    %p205 = scmp.ne.s32.totalorder %s200, %s202
    %p206 = scmp.eq.s32.totalorder %s19, 0
    %p207 = por %p205, %p206
    %p208 = scmp.ne.s32.totalorder %s200, %s202
    %p209 = scmp.eq.s32.totalorder %s24, 1
    %p210 = por %p208, %p209
    %p211 = scmp.ne.s32.totalorder %s202, %s203
    %p212 = scmp.eq.s32.totalorder %s24, 0
    %p213 = por %p211, %p212
    %p214 = scmp.ne.s32.totalorder %s202, %s203
    %p215 = scmp.eq.s32.totalorder %s25, 1
    %p216 = por %p214, %p215
    %p218 = scmp.ne.s32.totalorder %s203, %s217
    %p219 = scmp.eq.s32.totalorder %s25, 0
    %p220 = por %p218, %p219
    %s222 = sadd.s32 %s221, 1
    %p225 = scmp.eq.s32.totalorder %s19, 1
    %p226 = scmp.ne.s32.totalorder %s221, %s223
    %p227 = scmp.eq.s32.totalorder %s19, 0
    %p228 = por %p226, %p227
    %p229 = scmp.ne.s32.totalorder %s221, %s223
    %p230 = scmp.eq.s32.totalorder %s24, 1
    %p231 = por %p229, %p230
    %p232 = scmp.ne.s32.totalorder %s223, %s224
    %p233 = scmp.eq.s32.totalorder %s24, 0
    %p234 = por %p232, %p233
    %p235 = scmp.ne.s32.totalorder %s223, %s224
    %p236 = scmp.eq.s32.totalorder %s25, 1
    %p237 = por %p235, %p236
    %p239 = scmp.ne.s32.totalorder %s224, %s238
    %p240 = scmp.eq.s32.totalorder %s25, 0
    %p241 = por %p239, %p240
    %s243 = sadd.s32 %s242, 1
    %p246 = scmp.eq.s32.totalorder %s19, 1
    %p247 = scmp.ne.s32.totalorder %s242, %s244
    %p248 = scmp.eq.s32.totalorder %s19, 0
    %p249 = por %p247, %p248
    %p250 = scmp.ne.s32.totalorder %s242, %s244
    %p251 = scmp.eq.s32.totalorder %s24, 1
    %p252 = por %p250, %p251
    %p253 = scmp.ne.s32.totalorder %s244, %s245
    %p254 = scmp.eq.s32.totalorder %s24, 0
    %p255 = por %p253, %p254
    %p256 = scmp.ne.s32.totalorder %s244, %s245
    %p257 = scmp.eq.s32.totalorder %s25, 1
    %p258 = por %p256, %p257
    %p260 = scmp.ne.s32.totalorder %s245, %s259
    %p261 = scmp.eq.s32.totalorder %s25, 0
    %p262 = por %p260, %p261
    %s264 = sadd.s32 %s263, 1
    %p267 = scmp.eq.s32.totalorder %s19, 1
    %p268 = scmp.ne.s32.totalorder %s263, %s265
    %p269 = scmp.eq.s32.totalorder %s19, 0
    %p270 = por %p268, %p269
    %p271 = scmp.ne.s32.totalorder %s263, %s265
    %p272 = scmp.eq.s32.totalorder %s24, 1
    %p273 = por %p271, %p272
    %p274 = scmp.ne.s32.totalorder %s265, %s266
    %p275 = scmp.eq.s32.totalorder %s24, 0
    %p276 = por %p274, %p275
    %p277 = scmp.ne.s32.totalorder %s265, %s266
    %p278 = scmp.eq.s32.totalorder %s25, 1
    %p279 = por %p277, %p278
    %p281 = scmp.ne.s32.totalorder %s266, %s280
    %p282 = scmp.eq.s32.totalorder %s25, 0
    %p283 = por %p281, %p282
    %s285 = sadd.s32 %s284, 1
    %p288 = scmp.eq.s32.totalorder %s19, 1
    %p289 = scmp.ne.s32.totalorder %s284, %s286
    %p290 = scmp.eq.s32.totalorder %s19, 0
    %p291 = por %p289, %p290
    %p292 = scmp.ne.s32.totalorder %s284, %s286
    %p293 = scmp.eq.s32.totalorder %s24, 1
    %p294 = por %p292, %p293
    %p295 = scmp.ne.s32.totalorder %s286, %s287
    %p296 = scmp.eq.s32.totalorder %s24, 0
    %p297 = por %p295, %p296
    %p298 = scmp.ne.s32.totalorder %s286, %s287
    %p299 = scmp.eq.s32.totalorder %s25, 1
    %p300 = por %p298, %p299
    %p302 = scmp.ne.s32.totalorder %s287, %s301
    %p303 = scmp.eq.s32.totalorder %s25, 0
    %p304 = por %p302, %p303
    %s305 = ssub.s32 %s19, %s26
    %p306 = scmp.eq.s32.totalorder %s305, 0
    %s308 = sadd.s32 %s307, 1
    %s309 = scalar_select %p306, %s307, %s308
    %p312 = pneg %p306
    %p313 = scmp.eq.s32.totalorder %s19, 1
    %p314 = por %p312, %p313
    %p315 = scmp.ne.s32.totalorder %s307, %s310
    %p316 = scmp.eq.s32.totalorder %s19, 0
    %p317 = por %p315, %p316
    %p318 = scmp.ne.s32.totalorder %s307, %s310
    %p319 = scmp.eq.s32.totalorder %s24, 1
    %p320 = por %p318, %p319
    %p321 = scmp.ne.s32.totalorder %s310, %s311
    %p322 = scmp.eq.s32.totalorder %s24, 0
    %p323 = por %p321, %p322
    %p324 = scmp.ne.s32.totalorder %s310, %s311
    %p325 = scmp.eq.s32.totalorder %s25, 1
    %p326 = por %p324, %p325
    %p328 = scmp.ne.s32.totalorder %s311, %s327
    %p329 = scmp.eq.s32.totalorder %s25, 0
    %p330 = por %p328, %p329
    %p331 = scmp.le.s32.totalorder 1, %s19
    %p332 = scmp.lt.s32.totalorder %s19, 3
    %p333 = pnand %p331, %p332
    %p334 = pneg %p333
    // Predicated region
    $region9: #{run_masked.2} parent=5 // pred_check
      _
    $region10: #{run_masked.2} parent=5 // pred_check_branch
      %336 = sbr.rel (%p333) target = $region12
    $region11: #{run_masked.2} parent=5 // pred_region
      %s337 = ssub.s32 %s19, 1
      // Predicated region
      $region13: #{run_masked.2} parent=11 // pred_check
        %p338 = pneg %p66
      $region14: #{run_masked.2} parent=11 // pred_check_branch
        %340 = sbr.rel (%p338) target = $region16
      $region15: #{run_masked.2} parent=11 // pred_region
        _
      $region16: #{run_masked.2} parent=11 // pred_fallthru
        _
      // Predicated region
      $region17: #{run_masked.2} parent=11 // pred_check
        %p341 = pneg %p87
      $region18: #{run_masked.2} parent=11 // pred_check_branch
        %343 = sbr.rel (%p341) target = $region20
      $region19: #{run_masked.2} parent=11 // pred_region
        _
      $region20: #{run_masked.2} parent=11 // pred_fallthru
        _
      // Predicated region
      $region21: #{run_masked.2} parent=11 // pred_check
        %p344 = pneg %p108
      $region22: #{run_masked.2} parent=11 // pred_check_branch
        %346 = sbr.rel (%p344) target = $region24
      $region23: #{run_masked.2} parent=11 // pred_region
        _
      $region24: #{run_masked.2} parent=11 // pred_fallthru
        _
      // Predicated region
      $region25: #{run_masked.2} parent=11 // pred_check
        %p347 = pneg %p129
      $region26: #{run_masked.2} parent=11 // pred_check_branch
        %349 = sbr.rel (%p347) target = $region28
      $region27: #{run_masked.2} parent=11 // pred_region
        _
      $region28: #{run_masked.2} parent=11 // pred_fallthru
        _
      // Predicated region
      $region29: #{run_masked.2} parent=11 // pred_check
        %p350 = pneg %p150
      $region30: #{run_masked.2} parent=11 // pred_check_branch
        %352 = sbr.rel (%p350) target = $region32
      $region31: #{run_masked.2} parent=11 // pred_region
        _
      $region32: #{run_masked.2} parent=11 // pred_fallthru
        _
      // Predicated region
      $region33: #{run_masked.2} parent=11 // pred_check
        %p353 = pneg %p171
      $region34: #{run_masked.2} parent=11 // pred_check_branch
        %355 = sbr.rel (%p353) target = $region36
      $region35: #{run_masked.2} parent=11 // pred_region
        _
      $region36: #{run_masked.2} parent=11 // pred_fallthru
        _
      // Predicated region
      $region37: #{run_masked.2} parent=11 // pred_check
        %p356 = pneg %p192
      $region38: #{run_masked.2} parent=11 // pred_check_branch
        %358 = sbr.rel (%p356) target = $region40
      $region39: #{run_masked.2} parent=11 // pred_region
        _
      $region40: #{run_masked.2} parent=11 // pred_fallthru
        _
      // Predicated region
      $region41: #{run_masked.2} parent=11 // pred_check
        %p359 = pneg %p213
      $region42: #{run_masked.2} parent=11 // pred_check_branch
        %361 = sbr.rel (%p359) target = $region44
      $region43: #{run_masked.2} parent=11 // pred_region
        _
      $region44: #{run_masked.2} parent=11 // pred_fallthru
        _
      // Predicated region
      $region45: #{run_masked.2} parent=11 // pred_check
        %p362 = pneg %p234
      $region46: #{run_masked.2} parent=11 // pred_check_branch
        %364 = sbr.rel (%p362) target = $region48
      $region47: #{run_masked.2} parent=11 // pred_region
        _
      $region48: #{run_masked.2} parent=11 // pred_fallthru
        _
      // Predicated region
      $region49: #{run_masked.2} parent=11 // pred_check
        %p365 = pneg %p255
      $region50: #{run_masked.2} parent=11 // pred_check_branch
        %367 = sbr.rel (%p365) target = $region52
      $region51: #{run_masked.2} parent=11 // pred_region
        _
      $region52: #{run_masked.2} parent=11 // pred_fallthru
        _
      // Predicated region
      $region53: #{run_masked.2} parent=11 // pred_check
        %p368 = pneg %p276
      $region54: #{run_masked.2} parent=11 // pred_check_branch
        %370 = sbr.rel (%p368) target = $region56
      $region55: #{run_masked.2} parent=11 // pred_region
        _
      $region56: #{run_masked.2} parent=11 // pred_fallthru
        _
      // Predicated region
      $region57: #{run_masked.2} parent=11 // pred_check
        %p371 = pneg %p297
      $region58: #{run_masked.2} parent=11 // pred_check_branch
        %373 = sbr.rel (%p371) target = $region60
      $region59: #{run_masked.2} parent=11 // pred_region
        _
      $region60: #{run_masked.2} parent=11 // pred_fallthru
        _
    $region12: #{run_masked.2} parent=5 // pred_fallthru
      _
    %p374 = scmp.lt.s32.totalorder %s19, 2
    // Predicated region
    $region61: #{run_masked.2} parent=5 // pred_check
      %p375 = pneg %p374
    $region62: #{run_masked.2} parent=5 // pred_check_branch
      %377 = sbr.rel (%p375) target = $region64
    $region63: #{run_masked.2} parent=5 // pred_region
      // Predicated region
      $region65: #{run_masked.2} parent=63 // pred_check
        %p378 = pneg %p39
      $region66: #{run_masked.2} parent=63 // pred_check_branch
        %380 = sbr.rel (%p378) target = $region68
      $region67: #{run_masked.2} parent=63 // pred_region
        %s381 = smul.u32 4, %s19
        %p382 = scmp.lt.s32.totalorder %s381, 7
        %s383 = scalar_select %p382, %s381, 7
        %s384 = smul.addr %s383, 2
        %s385 = smul.addr %s384, 8
        %s386 = scalar_lea.vmem %s0, %s385
        %s387 = smul.u32 4, %s19
      $region68: #{run_masked.2} parent=63 // pred_fallthru
        _
    $region64: #{run_masked.2} parent=5 // pred_fallthru
      _
    %p388 = scmp.le.s32.totalorder 1, %s19
    %p389 = scmp.lt.s32.totalorder %s19, 3
    %p390 = pnand %p388, %p389
    %p391 = pneg %p390
    // Predicated region
    $region69: #{run_masked.2} parent=5 // pred_check
      _
    $region70: #{run_masked.2} parent=5 // pred_check_branch
      %393 = sbr.rel (%p390) target = $region72
    $region71: #{run_masked.2} parent=5 // pred_region
      %s394 = ssub.s32 %s19, 1
      %s395 = smul.u32 4, %s24
      %p396 = scmp.lt.s32.totalorder %s395, 7
      %s397 = scalar_select %p396, %s395, 7
      %s398 = smul.addr %s397, 2
      %s399 = smul.addr %s398, 8
      %s400 = scalar_lea.vmem %s0, %s399
      %p401 = pneg %p45
      %p402 = pneg %p42
      %p403 = pneg %p66
      %p404 = pneg %p63
      %p405 = pneg %p87
      %p406 = pneg %p84
      %p407 = pneg %p108
      %p408 = pneg %p105
      %p409 = pneg %p129
      %p410 = pneg %p126
      %p411 = pneg %p150
      %p412 = pneg %p147
      %p413 = pneg %p171
      %p414 = pneg %p168
      %p415 = pneg %p192
      %p416 = pneg %p189
      %p417 = pneg %p213
      %p418 = pneg %p210
      %p419 = pneg %p234
      %p420 = pneg %p231
      %p421 = pneg %p255
      %p422 = pneg %p252
      %p423 = pneg %p276
      %p424 = pneg %p273
      %p425 = pneg %p297
      %p426 = pneg %p294
      %p427 = pneg %p323
      %p428 = pneg %p320
      %p429 = scmp.lt.s32.totalorder %s24, 1
      %s430 = scalar_select %p429, %s24, 1
      %s431 = smul.addr %s430, 2
      %s432 = smul.addr %s431, 8
      %s433 = scalar_lea.vmem %s13, %s432
      %s434 = smul.u32 4, %s24
      %p435 = scmp.lt.s32.totalorder %s434, 7
      %s436 = scalar_select %p435, %s434, 7
      %s437 = smul.addr %s436, 2
      %s438 = smul.addr %s437, 8
      %s439 = scalar_lea.vmem %s0, %s438
      %s440 = smul.u32 4, %s24
      %p441 = scmp.lt.s32.totalorder %s24, 1
      %s442 = scalar_select %p441, %s24, 1
      %s443 = smul.addr %s442, 2
      %s444 = smul.addr %s443, 8
      %s445 = scalar_lea.vmem %s13, %s444
      %v446 = vld [vmem:[%s439] sm:$0xff]
      %v447 = vld [vmem:[%s439 + $0x8] sm:$0xff]
      %v448 = vld [vmem:[%s439 + $0x10] sm:$0xff]
      %v449 = vld [vmem:[%s439 + $0x18] sm:$0xff]
      %v450 = vld [vmem:[%s439 + $0x20] sm:$0xff]
      %v451 = vld [vmem:[%s439 + $0x28] sm:$0xff]
      %v452 = vld [vmem:[%s439 + $0x30] sm:$0xff]
      %v453 = vld [vmem:[%s439 + $0x38] sm:$0xff]
      %v454 = vld [vmem:[%s1] sm:$0xff]
      %v455 = vld [vmem:[%s1 + $0x8] sm:$0xff]
      %v456 = vld [vmem:[%s1 + $0x10] sm:$0xff]
      %v457 = vld [vmem:[%s1 + $0x18] sm:$0xff]
      %v458 = vld [vmem:[%s2] sm:$0x1]
      %v460 = vlaneseq
      %v461 = vshrl.u32 %v460, 7
      %v462 = vsub.s32 0, %v461
      %v463 = vrot.slane %v458, %v462
      %vm465 = vcmask 261120
      %v467 = vsel %vm465, %v446, 0
      %v470 = vsel %vm465, %v447, 0
      %v473 = vsel %vm465, %v448, 0
      %v476 = vsel %vm465, %v449, 0
      %v479 = vsel %vm465, %v450, 0
      %v482 = vsel %vm465, %v451, 0
      %v485 = vsel %vm465, %v452, 0
      %v488 = vsel %vm465, %v453, 0
      %490 = vmatprep.subr.mxu0 0.0
      %491 = vmatpush1.msra.mxu0 %v454
      %492 = vmatprep.subr.mxu0 0.0
      %493 = vmatpush1.msra.mxu0 %v455
      %494 = vmatprep.subr.mxu0 0.0
      %495 = vmatpush1.msra.mxu0 %v456
      %496 = vmatprep.subr.mxu0 0.0
      %497 = vmatpush1.msra.mxu0 %v457
      %498 = vmatprep.subr.mxu0 0.0
      %499 = vmatpush1.msra.mxu0 0.0
      %500 = vmatprep.subr.mxu0 0.0
      %501 = vmatpush1.msra.mxu0 0.0
      %502 = vmatprep.subr.mxu0 0.0
      %503 = vmatpush1.msra.mxu0 0.0
      %504 = vmatprep.subr.mxu0 0.0
      %505 = vmatpush1.msra.mxu0 0.0
      %506 = vmatprep.subr.mxu0 0.0
      %507 = vmatpush1.msra.mxu0 0.0
      %508 = vmatprep.subr.mxu0 0.0
      %509 = vmatpush1.msra.mxu0 0.0
      %510 = vmatprep.subr.mxu0 0.0
      %511 = vmatpush1.msra.mxu0 0.0
      %512 = vmatprep.subr.mxu0 0.0
      %513 = vmatpush1.msra.mxu0 0.0
      %514 = vmatprep.subr.mxu0 0.0
      %515 = vmatpush1.msra.mxu0 0.0
      %516 = vmatprep.subr.mxu0 0.0
      %517 = vmatpush1.msra.mxu0 0.0
      %518 = vmatprep.subr.mxu0 0.0
      %519 = vmatpush1.msra.mxu0 0.0
      %520 = vmatprep.subr.mxu0 0.0
      %521 = vmatpush1.msra.mxu0 0.0
      %522 = vmatprep.subr.mxu0 0.0
      %523 = vmatpush1.msra.mxu0 0.0
      %524 = vmatprep.subr.mxu0 0.0
      %525 = vmatpush1.msra.mxu0 0.0
      %526 = vmatprep.subr.mxu0 0.0
      %527 = vmatpush1.msra.mxu0 0.0
      %528 = vmatprep.subr.mxu0 0.0
      %529 = vmatpush1.msra.mxu0 0.0
      %530 = vmatprep.subr.mxu0 0.0
      %531 = vmatpush1.msra.mxu0 0.0
      %532 = vmatprep.subr.mxu0 0.0
      %533 = vmatpush1.msra.mxu0 0.0
      %534 = vmatprep.subr.mxu0 0.0
      %535 = vmatpush1.msra.mxu0 0.0
      %536 = vmatprep.subr.mxu0 0.0
      %537 = vmatpush1.msra.mxu0 0.0
      %538 = vmatprep.subr.mxu0 0.0
      %539 = vmatpush1.msra.mxu0 0.0
      %540 = vmatprep.subr.mxu0 0.0
      %541 = vmatpush1.msra.mxu0 0.0
      %542 = vmatprep.subr.mxu0 0.0
      %543 = vmatpush1.msra.mxu0 0.0
      %544 = vmatprep.subr.mxu0 0.0
      %545 = vmatpush1.msra.mxu0 0.0
      %546 = vmatprep.subr.mxu0 0.0
      %547 = vmatpush1.msra.mxu0 0.0
      %548 = vmatprep.subr.mxu0 0.0
      %549 = vmatpush1.msra.mxu0 0.0
      %550 = vmatprep.subr.mxu0 0.0
      %551 = vmatpush1.msra.mxu0 0.0
      %552 = vmatprep.subr.mxu0 0.0
      %553 = vmatpush1.msra.mxu0 0.0
      %554 = vmatprep.mubr.f32.mxu0 0.0
      %555 = vmatmul.mubr.f32.gmra.mrb[0].mxu0 %v467
      %v556 = vpop.f32.mrb[0].mxu0
      %v557 = vadd.f32 %v463, %v556
      %v558 = vpop.f32.mrb[0].mxu0
      %559 = vmatprep.mubr.f32.mxu0 0.0
      %560 = vmatmul.mubr.f32.gmra.mrb[0].mxu0 %v470
      %v561 = vpop.f32.mrb[0].mxu0
      %v562 = vadd.f32 %v463, %v561
      %v563 = vpop.f32.mrb[0].mxu0
      %564 = vmatprep.mubr.f32.mxu0 0.0
      %565 = vmatmul.mubr.f32.gmra.mrb[0].mxu0 %v473
      %v566 = vpop.f32.mrb[0].mxu0
      %v567 = vadd.f32 %v463, %v566
      %v568 = vpop.f32.mrb[0].mxu0
      %569 = vmatprep.mubr.f32.mxu0 0.0
      %570 = vmatmul.mubr.f32.gmra.mrb[0].mxu0 %v476
      %v571 = vpop.f32.mrb[0].mxu0
      %v572 = vadd.f32 %v463, %v571
      %v573 = vpop.f32.mrb[0].mxu0
      %574 = vmatprep.mubr.f32.mxu0 0.0
      %575 = vmatmul.mubr.f32.gmra.mrb[0].mxu0 %v479
      %v576 = vpop.f32.mrb[0].mxu0
      %v577 = vadd.f32 %v463, %v576
      %v578 = vpop.f32.mrb[0].mxu0
      %579 = vmatprep.mubr.f32.mxu0 0.0
      %580 = vmatmul.mubr.f32.gmra.mrb[0].mxu0 %v482
      %v581 = vpop.f32.mrb[0].mxu0
      %v582 = vadd.f32 %v463, %v581
      %v583 = vpop.f32.mrb[0].mxu0
      %584 = vmatprep.mubr.f32.mxu0 0.0
      %585 = vmatmul.mubr.f32.gmra.mrb[0].mxu0 %v485
      %v586 = vpop.f32.mrb[0].mxu0
      %v587 = vadd.f32 %v463, %v586
      %v588 = vpop.f32.mrb[0].mxu0
      %589 = vmatprep.mubr.f32.mxu0 0.0
      %590 = vmatmul.mubr.f32.gmra.mrb[0].mxu0 %v488
      %v591 = vpop.f32.mrb[0].mxu0
      %v592 = vadd.f32 %v463, %v591
      %v593 = vpop.f32.mrb[0].mxu0
      %594 = vdwg.mxu0
      %597 = vrot.lane.b32.xlu0 %v557, 96
      %v598 = vpop.permute.xlu0 %597
      %599 = vrot.lane.b32.xlu0 %v562, 96
      %v600 = vpop.permute.xlu0 %599
      %vm601 = vcmask 64512
      %v602 = vsel %vm601, %v557, 0
      %v604 = vsel %vm601, %v562, 0
      %v606 = vsel %vm601, %v598, 0
      %v608 = vsel %vm601, %v600, 0
      %610 = vmatprep.subr.mxu0 0.0
      %611 = vmatpush1.xpose.msra.mxu0 %v606
      %612 = vmatprep.subr.mxu0 0.0
      %613 = vmatpush1.xpose.msra.mxu0 %v608
      %614 = vmatprep.subr.mxu0 0.0
      %615 = vmatpush1.xpose.msra.mxu0 0.0
      %616 = vmatprep.subr.mxu0 0.0
      %617 = vmatpush1.xpose.msra.mxu0 0.0
      %618 = vmatprep.subr.mxu0 0.0
      %619 = vmatpush1.xpose.msra.mxu0 0.0
      %620 = vmatprep.subr.mxu0 0.0
      %621 = vmatpush1.xpose.msra.mxu0 0.0
      %622 = vmatprep.subr.mxu0 0.0
      %623 = vmatpush1.xpose.msra.mxu0 0.0
      %624 = vmatprep.subr.mxu0 0.0
      %625 = vmatpush1.xpose.msra.mxu0 0.0
      %626 = vmatprep.subr.mxu0 0.0
      %627 = vmatpush1.xpose.msra.mxu0 0.0
      %628 = vmatprep.subr.mxu0 0.0
      %629 = vmatpush1.xpose.msra.mxu0 0.0
      %630 = vmatprep.subr.mxu0 0.0
      %631 = vmatpush1.xpose.msra.mxu0 0.0
      %632 = vmatprep.subr.mxu0 0.0
      %633 = vmatpush1.xpose.msra.mxu0 0.0
      %634 = vmatprep.subr.mxu0 0.0
      %635 = vmatpush1.xpose.msra.mxu0 0.0
      %636 = vmatprep.subr.mxu0 0.0
      %637 = vmatpush1.xpose.msra.mxu0 0.0
      %638 = vmatprep.subr.mxu0 0.0
      %639 = vmatpush1.xpose.msra.mxu0 0.0
      %640 = vmatprep.subr.mxu0 0.0
      %641 = vmatpush1.xpose.msra.mxu0 0.0
      %642 = vmatprep.subr.mxu0 0.0
      %643 = vmatpush1.xpose.msra.mxu0 0.0
      %644 = vmatprep.subr.mxu0 0.0
      %645 = vmatpush1.xpose.msra.mxu0 0.0
      %646 = vmatprep.subr.mxu0 0.0
      %647 = vmatpush1.xpose.msra.mxu0 0.0
      %648 = vmatprep.subr.mxu0 0.0
      %649 = vmatpush1.xpose.msra.mxu0 0.0
      %650 = vmatprep.subr.mxu0 0.0
      %651 = vmatpush1.xpose.msra.mxu0 0.0
      %652 = vmatprep.subr.mxu0 0.0
      %653 = vmatpush1.xpose.msra.mxu0 0.0
      %654 = vmatprep.subr.mxu0 0.0
      %655 = vmatpush1.xpose.msra.mxu0 0.0
      %656 = vmatprep.subr.mxu0 0.0
      %657 = vmatpush1.xpose.msra.mxu0 0.0
      %658 = vmatprep.subr.mxu0 0.0
      %659 = vmatpush1.xpose.msra.mxu0 0.0
      %660 = vmatprep.subr.mxu0 0.0
      %661 = vmatpush1.xpose.msra.mxu0 0.0
      %662 = vmatprep.subr.mxu0 0.0
      %663 = vmatpush1.xpose.msra.mxu0 0.0
      %664 = vmatprep.subr.mxu0 0.0
      %665 = vmatpush1.xpose.msra.mxu0 0.0
      %666 = vmatprep.subr.mxu0 0.0
      %667 = vmatpush1.xpose.msra.mxu0 0.0
      %668 = vmatprep.subr.mxu0 0.0
      %669 = vmatpush1.xpose.msra.mxu0 0.0
      %670 = vmatprep.subr.mxu0 0.0
      %671 = vmatpush1.xpose.msra.mxu0 0.0
      %672 = vmatprep.subr.mxu0 0.0
      %673 = vmatpush1.xpose.msra.mxu0 0.0
      %674 = vmatprep.mubr.f32.mxu0 0.0
      %675 = vmatmul.mubr.f32.gmra.mrb[0].mxu0 %v602
      %v676 = vpop.f32.mrb[0].mxu0
      %v677 = vadd.f32 0.0, %v676
      %v678 = vpop.f32.mrb[0].mxu0
      %679 = vmatprep.mubr.f32.mxu0 0.0
      %680 = vmatmul.mubr.f32.gmra.mrb[0].mxu0 %v604
      %v681 = vpop.f32.mrb[0].mxu0
      %v682 = vadd.f32 0.0, %v681
      %v683 = vpop.f32.mrb[0].mxu0
      %684 = vdwg.mxu0
      %687 = vrot.lane.b32.xlu0 %v567, 96
      %v688 = vpop.permute.xlu0 %687
      %689 = vrot.lane.b32.xlu0 %v572, 96
      %v690 = vpop.permute.xlu0 %689
      %v691 = vsel %vm601, %v567, 0
      %v693 = vsel %vm601, %v572, 0
      %v695 = vsel %vm601, %v688, 0
      %v697 = vsel %vm601, %v690, 0
      %699 = vmatprep.subr.mxu0 0.0
      %700 = vmatpush1.xpose.msra.mxu0 %v695
      %701 = vmatprep.subr.mxu0 0.0
      %702 = vmatpush1.xpose.msra.mxu0 %v697
      %703 = vmatprep.subr.mxu0 0.0
      %704 = vmatpush1.xpose.msra.mxu0 0.0
      %705 = vmatprep.subr.mxu0 0.0
      %706 = vmatpush1.xpose.msra.mxu0 0.0
      %707 = vmatprep.subr.mxu0 0.0
      %708 = vmatpush1.xpose.msra.mxu0 0.0
      %709 = vmatprep.subr.mxu0 0.0
      %710 = vmatpush1.xpose.msra.mxu0 0.0
      %711 = vmatprep.subr.mxu0 0.0
      %712 = vmatpush1.xpose.msra.mxu0 0.0
      %713 = vmatprep.subr.mxu0 0.0
      %714 = vmatpush1.xpose.msra.mxu0 0.0
      %715 = vmatprep.subr.mxu0 0.0
      %716 = vmatpush1.xpose.msra.mxu0 0.0
      %717 = vmatprep.subr.mxu0 0.0
      %718 = vmatpush1.xpose.msra.mxu0 0.0
      %719 = vmatprep.subr.mxu0 0.0
      %720 = vmatpush1.xpose.msra.mxu0 0.0
      %721 = vmatprep.subr.mxu0 0.0
      %722 = vmatpush1.xpose.msra.mxu0 0.0
      %723 = vmatprep.subr.mxu0 0.0
      %724 = vmatpush1.xpose.msra.mxu0 0.0
      %725 = vmatprep.subr.mxu0 0.0
      %726 = vmatpush1.xpose.msra.mxu0 0.0
      %727 = vmatprep.subr.mxu0 0.0
      %728 = vmatpush1.xpose.msra.mxu0 0.0
      %729 = vmatprep.subr.mxu0 0.0
      %730 = vmatpush1.xpose.msra.mxu0 0.0
      %731 = vmatprep.subr.mxu0 0.0
      %732 = vmatpush1.xpose.msra.mxu0 0.0
      %733 = vmatprep.subr.mxu0 0.0
      %734 = vmatpush1.xpose.msra.mxu0 0.0
      %735 = vmatprep.subr.mxu0 0.0
      %736 = vmatpush1.xpose.msra.mxu0 0.0
      %737 = vmatprep.subr.mxu0 0.0
      %738 = vmatpush1.xpose.msra.mxu0 0.0
      %739 = vmatprep.subr.mxu0 0.0
      %740 = vmatpush1.xpose.msra.mxu0 0.0
      %741 = vmatprep.subr.mxu0 0.0
      %742 = vmatpush1.xpose.msra.mxu0 0.0
      %743 = vmatprep.subr.mxu0 0.0
      %744 = vmatpush1.xpose.msra.mxu0 0.0
      %745 = vmatprep.subr.mxu0 0.0
      %746 = vmatpush1.xpose.msra.mxu0 0.0
      %747 = vmatprep.subr.mxu0 0.0
      %748 = vmatpush1.xpose.msra.mxu0 0.0
      %749 = vmatprep.subr.mxu0 0.0
      %750 = vmatpush1.xpose.msra.mxu0 0.0
      %751 = vmatprep.subr.mxu0 0.0
      %752 = vmatpush1.xpose.msra.mxu0 0.0
      %753 = vmatprep.subr.mxu0 0.0
      %754 = vmatpush1.xpose.msra.mxu0 0.0
      %755 = vmatprep.subr.mxu0 0.0
      %756 = vmatpush1.xpose.msra.mxu0 0.0
      %757 = vmatprep.subr.mxu0 0.0
      %758 = vmatpush1.xpose.msra.mxu0 0.0
      %759 = vmatprep.subr.mxu0 0.0
      %760 = vmatpush1.xpose.msra.mxu0 0.0
      %761 = vmatprep.subr.mxu0 0.0
      %762 = vmatpush1.xpose.msra.mxu0 0.0
      %763 = vmatprep.mubr.f32.mxu0 0.0
      %764 = vmatmul.mubr.f32.gmra.mrb[0].mxu0 %v691
      %v765 = vpop.f32.mrb[0].mxu0
      %v766 = vadd.f32 0.0, %v765
      %v767 = vpop.f32.mrb[0].mxu0
      %768 = vmatprep.mubr.f32.mxu0 0.0
      %769 = vmatmul.mubr.f32.gmra.mrb[0].mxu0 %v693
      %v770 = vpop.f32.mrb[0].mxu0
      %v771 = vadd.f32 0.0, %v770
      %v772 = vpop.f32.mrb[0].mxu0
      %773 = vdwg.mxu0
      %776 = vrot.lane.b32.xlu0 %v577, 96
      %v777 = vpop.permute.xlu0 %776
      %778 = vrot.lane.b32.xlu0 %v582, 96
      %v779 = vpop.permute.xlu0 %778
      %v780 = vsel %vm601, %v577, 0
      %v782 = vsel %vm601, %v582, 0
      %v784 = vsel %vm601, %v777, 0
      %v786 = vsel %vm601, %v779, 0
      %788 = vmatprep.subr.mxu0 0.0
      %789 = vmatpush1.xpose.msra.mxu0 %v784
      %790 = vmatprep.subr.mxu0 0.0
      %791 = vmatpush1.xpose.msra.mxu0 %v786
      %792 = vmatprep.subr.mxu0 0.0
      %793 = vmatpush1.xpose.msra.mxu0 0.0
      %794 = vmatprep.subr.mxu0 0.0
      %795 = vmatpush1.xpose.msra.mxu0 0.0
      %796 = vmatprep.subr.mxu0 0.0
      %797 = vmatpush1.xpose.msra.mxu0 0.0
      %798 = vmatprep.subr.mxu0 0.0
      %799 = vmatpush1.xpose.msra.mxu0 0.0
      %800 = vmatprep.subr.mxu0 0.0
      %801 = vmatpush1.xpose.msra.mxu0 0.0
      %802 = vmatprep.subr.mxu0 0.0
      %803 = vmatpush1.xpose.msra.mxu0 0.0
      %804 = vmatprep.subr.mxu0 0.0
      %805 = vmatpush1.xpose.msra.mxu0 0.0
      %806 = vmatprep.subr.mxu0 0.0
      %807 = vmatpush1.xpose.msra.mxu0 0.0
      %808 = vmatprep.subr.mxu0 0.0
      %809 = vmatpush1.xpose.msra.mxu0 0.0
      %810 = vmatprep.subr.mxu0 0.0
      %811 = vmatpush1.xpose.msra.mxu0 0.0
      %812 = vmatprep.subr.mxu0 0.0
      %813 = vmatpush1.xpose.msra.mxu0 0.0
      %814 = vmatprep.subr.mxu0 0.0
      %815 = vmatpush1.xpose.msra.mxu0 0.0
      %816 = vmatprep.subr.mxu0 0.0
      %817 = vmatpush1.xpose.msra.mxu0 0.0
      %818 = vmatprep.subr.mxu0 0.0
      %819 = vmatpush1.xpose.msra.mxu0 0.0
      %820 = vmatprep.subr.mxu0 0.0
      %821 = vmatpush1.xpose.msra.mxu0 0.0
      %822 = vmatprep.subr.mxu0 0.0
      %823 = vmatpush1.xpose.msra.mxu0 0.0
      %824 = vmatprep.subr.mxu0 0.0
      %825 = vmatpush1.xpose.msra.mxu0 0.0
      %826 = vmatprep.subr.mxu0 0.0
      %827 = vmatpush1.xpose.msra.mxu0 0.0
      %828 = vmatprep.subr.mxu0 0.0
      %829 = vmatpush1.xpose.msra.mxu0 0.0
      %830 = vmatprep.subr.mxu0 0.0
      %831 = vmatpush1.xpose.msra.mxu0 0.0
      %832 = vmatprep.subr.mxu0 0.0
      %833 = vmatpush1.xpose.msra.mxu0 0.0
      %834 = vmatprep.subr.mxu0 0.0
      %835 = vmatpush1.xpose.msra.mxu0 0.0
      %836 = vmatprep.subr.mxu0 0.0
      %837 = vmatpush1.xpose.msra.mxu0 0.0
      %838 = vmatprep.subr.mxu0 0.0
      %839 = vmatpush1.xpose.msra.mxu0 0.0
      %840 = vmatprep.subr.mxu0 0.0
      %841 = vmatpush1.xpose.msra.mxu0 0.0
      %842 = vmatprep.subr.mxu0 0.0
      %843 = vmatpush1.xpose.msra.mxu0 0.0
      %844 = vmatprep.subr.mxu0 0.0
      %845 = vmatpush1.xpose.msra.mxu0 0.0
      %846 = vmatprep.subr.mxu0 0.0
      %847 = vmatpush1.xpose.msra.mxu0 0.0
      %848 = vmatprep.subr.mxu0 0.0
      %849 = vmatpush1.xpose.msra.mxu0 0.0
      %850 = vmatprep.subr.mxu0 0.0
      %851 = vmatpush1.xpose.msra.mxu0 0.0
      %852 = vmatprep.mubr.f32.mxu0 0.0
      %853 = vmatmul.mubr.f32.gmra.mrb[0].mxu0 %v780
      %v854 = vpop.f32.mrb[0].mxu0
      %v855 = vadd.f32 0.0, %v854
      %v856 = vpop.f32.mrb[0].mxu0
      %857 = vmatprep.mubr.f32.mxu0 0.0
      %858 = vmatmul.mubr.f32.gmra.mrb[0].mxu0 %v782
      %v859 = vpop.f32.mrb[0].mxu0
      %v860 = vadd.f32 0.0, %v859
      %v861 = vpop.f32.mrb[0].mxu0
      %862 = vdwg.mxu0
      %865 = vrot.lane.b32.xlu0 %v587, 96
      %v866 = vpop.permute.xlu0 %865
      %867 = vrot.lane.b32.xlu0 %v592, 96
      %v868 = vpop.permute.xlu0 %867
      %v869 = vsel %vm601, %v587, 0
      %v871 = vsel %vm601, %v592, 0
      %v873 = vsel %vm601, %v866, 0
      %v875 = vsel %vm601, %v868, 0
      %877 = vmatprep.subr.mxu0 0.0
      %878 = vmatpush1.xpose.msra.mxu0 %v873
      %879 = vmatprep.subr.mxu0 0.0
      %880 = vmatpush1.xpose.msra.mxu0 %v875
      %881 = vmatprep.subr.mxu0 0.0
      %882 = vmatpush1.xpose.msra.mxu0 0.0
      %883 = vmatprep.subr.mxu0 0.0
      %884 = vmatpush1.xpose.msra.mxu0 0.0
      %885 = vmatprep.subr.mxu0 0.0
      %886 = vmatpush1.xpose.msra.mxu0 0.0
      %887 = vmatprep.subr.mxu0 0.0
      %888 = vmatpush1.xpose.msra.mxu0 0.0
      %889 = vmatprep.subr.mxu0 0.0
      %890 = vmatpush1.xpose.msra.mxu0 0.0
      %891 = vmatprep.subr.mxu0 0.0
      %892 = vmatpush1.xpose.msra.mxu0 0.0
      %893 = vmatprep.subr.mxu0 0.0
      %894 = vmatpush1.xpose.msra.mxu0 0.0
      %895 = vmatprep.subr.mxu0 0.0
      %896 = vmatpush1.xpose.msra.mxu0 0.0
      %897 = vmatprep.subr.mxu0 0.0
      %898 = vmatpush1.xpose.msra.mxu0 0.0
      %899 = vmatprep.subr.mxu0 0.0
      %900 = vmatpush1.xpose.msra.mxu0 0.0
      %901 = vmatprep.subr.mxu0 0.0
      %902 = vmatpush1.xpose.msra.mxu0 0.0
      %903 = vmatprep.subr.mxu0 0.0
      %904 = vmatpush1.xpose.msra.mxu0 0.0
      %905 = vmatprep.subr.mxu0 0.0
      %906 = vmatpush1.xpose.msra.mxu0 0.0
      %907 = vmatprep.subr.mxu0 0.0
      %908 = vmatpush1.xpose.msra.mxu0 0.0
      %909 = vmatprep.subr.mxu0 0.0
      %910 = vmatpush1.xpose.msra.mxu0 0.0
      %911 = vmatprep.subr.mxu0 0.0
      %912 = vmatpush1.xpose.msra.mxu0 0.0
      %913 = vmatprep.subr.mxu0 0.0
      %914 = vmatpush1.xpose.msra.mxu0 0.0
      %915 = vmatprep.subr.mxu0 0.0
      %916 = vmatpush1.xpose.msra.mxu0 0.0
      %917 = vmatprep.subr.mxu0 0.0
      %918 = vmatpush1.xpose.msra.mxu0 0.0
      %919 = vmatprep.subr.mxu0 0.0
      %920 = vmatpush1.xpose.msra.mxu0 0.0
      %921 = vmatprep.subr.mxu0 0.0
      %922 = vmatpush1.xpose.msra.mxu0 0.0
      %923 = vmatprep.subr.mxu0 0.0
      %924 = vmatpush1.xpose.msra.mxu0 0.0
      %925 = vmatprep.subr.mxu0 0.0
      %926 = vmatpush1.xpose.msra.mxu0 0.0
      %927 = vmatprep.subr.mxu0 0.0
      %928 = vmatpush1.xpose.msra.mxu0 0.0
      %929 = vmatprep.subr.mxu0 0.0
      %930 = vmatpush1.xpose.msra.mxu0 0.0
      %931 = vmatprep.subr.mxu0 0.0
      %932 = vmatpush1.xpose.msra.mxu0 0.0
      %933 = vmatprep.subr.mxu0 0.0
      %934 = vmatpush1.xpose.msra.mxu0 0.0
      %935 = vmatprep.subr.mxu0 0.0
      %936 = vmatpush1.xpose.msra.mxu0 0.0
      %937 = vmatprep.subr.mxu0 0.0
      %938 = vmatpush1.xpose.msra.mxu0 0.0
      %939 = vmatprep.subr.mxu0 0.0
      %940 = vmatpush1.xpose.msra.mxu0 0.0
      %941 = vmatprep.mubr.f32.mxu0 0.0
      %942 = vmatmul.mubr.f32.gmra.mrb[0].mxu0 %v869
      %v943 = vpop.f32.mrb[0].mxu0
      %v944 = vadd.f32 0.0, %v943
      %v945 = vpop.f32.mrb[0].mxu0
      %946 = vmatprep.mubr.f32.mxu0 0.0
      %947 = vmatmul.mubr.f32.gmra.mrb[0].mxu0 %v871
      %v948 = vpop.f32.mrb[0].mxu0
      %v949 = vadd.f32 0.0, %v948
      %v950 = vpop.f32.mrb[0].mxu0
      %951 = vdwg.mxu0
      %v952 = vmul.f32 %v677, 0.35355338
      %v953 = vmul.f32 %v682, 0.35355338
      %v954 = vmul.f32 %v766, 0.35355338
      %v955 = vmul.f32 %v771, 0.35355338
      %v956 = vmul.f32 %v855, 0.35355338
      %v957 = vmul.f32 %v860, 0.35355338
      %v958 = vmul.f32 %v944, 0.35355338
      %v959 = vmul.f32 %v949, 0.35355338
      %vm960 = vcmask 130048
      %v961 = vsel %vm960, %v952, -inf
      %962 = vmax.xlane.f32.xlu0 %v961
      %v963 = vpop.xlane.xlu0 %962
      %v964 = vsel %vm960, %v953, -inf
      %965 = vmax.xlane.f32.xlu0 %v964
      %v966 = vpop.xlane.xlu0 %965
      %v967 = vsel %vm960, %v954, -inf
      %968 = vmax.xlane.f32.xlu0 %v967
      %v969 = vpop.xlane.xlu0 %968
      %v970 = vsel %vm960, %v955, -inf
      %971 = vmax.xlane.f32.xlu0 %v970
      %v972 = vpop.xlane.xlu0 %971
      %v973 = vsel %vm960, %v956, -inf
      %974 = vmax.xlane.f32.xlu0 %v973
      %v975 = vpop.xlane.xlu0 %974
      %v976 = vsel %vm960, %v957, -inf
      %977 = vmax.xlane.f32.xlu0 %v976
      %v978 = vpop.xlane.xlu0 %977
      %v979 = vsel %vm960, %v958, -inf
      %980 = vmax.xlane.f32.xlu0 %v979
      %v981 = vpop.xlane.xlu0 %980
      %v982 = vsel %vm960, %v959, -inf
      %983 = vmax.xlane.f32.xlu0 %v982
      %v984 = vpop.xlane.xlu0 %983
      %v985 = vsub.f32 %v952, %v963
      %v986 = vsub.f32 %v953, %v966
      %v987 = vsub.f32 %v954, %v969
      %v988 = vsub.f32 %v955, %v972
      %v989 = vsub.f32 %v956, %v975
      %v990 = vsub.f32 %v957, %v978
      %v991 = vsub.f32 %v958, %v981
      %v992 = vsub.f32 %v959, %v984
      %v993 = vmul.f32 %v985, 1.442695
      %v994 = vpow.pop %v993
      %v995 = vmul.f32 %v986, 1.442695
      %v996 = vpow.pop %v995
      %v997 = vmul.f32 %v987, 1.442695
      %v998 = vpow.pop %v997
      %v999 = vmul.f32 %v988, 1.442695
      %v1000 = vpow.pop %v999
      %v1001 = vmul.f32 %v989, 1.442695
      %v1002 = vpow.pop %v1001
      %v1003 = vmul.f32 %v990, 1.442695
      %v1004 = vpow.pop %v1003
      %v1005 = vmul.f32 %v991, 1.442695
      %v1006 = vpow.pop %v1005
      %v1007 = vmul.f32 %v992, 1.442695
      %v1008 = vpow.pop %v1007
      %v1009 = vsel %vm960, %v994, 0.0
      %1010 = vadd.xlane.f32.xlu0 %v1009
      %v1011 = vpop.xlane.xlu0 %1010
      %v1012 = vsel %vm960, %v996, 0.0
      %1013 = vadd.xlane.f32.xlu0 %v1012
      %v1014 = vpop.xlane.xlu0 %1013
      %v1015 = vsel %vm960, %v998, 0.0
      %1016 = vadd.xlane.f32.xlu0 %v1015
      %v1017 = vpop.xlane.xlu0 %1016
      %v1018 = vsel %vm960, %v1000, 0.0
      %1019 = vadd.xlane.f32.xlu0 %v1018
      %v1020 = vpop.xlane.xlu0 %1019
      %v1021 = vsel %vm960, %v1002, 0.0
      %1022 = vadd.xlane.f32.xlu0 %v1021
      %v1023 = vpop.xlane.xlu0 %1022
      %v1024 = vsel %vm960, %v1004, 0.0
      %1025 = vadd.xlane.f32.xlu0 %v1024
      %v1026 = vpop.xlane.xlu0 %1025
      %v1027 = vsel %vm960, %v1006, 0.0
      %1028 = vadd.xlane.f32.xlu0 %v1027
      %v1029 = vpop.xlane.xlu0 %1028
      %v1030 = vsel %vm960, %v1008, 0.0
      %1031 = vadd.xlane.f32.xlu0 %v1030
      %v1032 = vpop.xlane.xlu0 %1031
      %v1033 = vrcp.pop %v1011
      %v1034 = vrcp.pop %v1014
      %v1035 = vrcp.pop %v1017
      %v1036 = vrcp.pop %v1020
      %v1037 = vrcp.pop %v1023
      %v1038 = vrcp.pop %v1026
      %v1039 = vrcp.pop %v1029
      %v1040 = vrcp.pop %v1032
      %v1041 = vmul.f32 %v994, %v1033
      %v1042 = vmul.f32 %v996, %v1034
      %v1043 = vmul.f32 %v998, %v1035
      %v1044 = vmul.f32 %v1000, %v1036
      %v1045 = vmul.f32 %v1002, %v1037
      %v1046 = vmul.f32 %v1004, %v1038
      %v1047 = vmul.f32 %v1006, %v1039
      %v1048 = vmul.f32 %v1008, %v1040
      %1049 = vrot.lane.b32.xlu0 %v557, 64
      %v1050 = vpop.permute.xlu0 %1049
      %1051 = vrot.lane.b32.xlu0 %v562, 64
      %v1052 = vpop.permute.xlu0 %1051
      %v1056 = vsel %vm960, %v1041, 0
      %v1059 = vsel %vm960, %v1042, 0
      %1061 = vmatprep.subr.mxu0 0.0
      %1062 = vmatpush1.msra.mxu0 %v1050
      %1063 = vmatprep.subr.mxu0 0.0
      %1064 = vmatpush1.msra.mxu0 %v1052
      %1065 = vmatprep.subr.mxu0 0.0
      %1066 = vmatpush1.msra.mxu0 0.0
      %1067 = vmatprep.subr.mxu0 0.0
      %1068 = vmatpush1.msra.mxu0 0.0
      %1069 = vmatprep.subr.mxu0 0.0
      %1070 = vmatpush1.msra.mxu0 0.0
      %1071 = vmatprep.subr.mxu0 0.0
      %1072 = vmatpush1.msra.mxu0 0.0
      %1073 = vmatprep.subr.mxu0 0.0
      %1074 = vmatpush1.msra.mxu0 0.0
      %1075 = vmatprep.subr.mxu0 0.0
      %1076 = vmatpush1.msra.mxu0 0.0
      %1077 = vmatprep.subr.mxu0 0.0
      %1078 = vmatpush1.msra.mxu0 0.0
      %1079 = vmatprep.subr.mxu0 0.0
      %1080 = vmatpush1.msra.mxu0 0.0
      %1081 = vmatprep.subr.mxu0 0.0
      %1082 = vmatpush1.msra.mxu0 0.0
      %1083 = vmatprep.subr.mxu0 0.0
      %1084 = vmatpush1.msra.mxu0 0.0
      %1085 = vmatprep.subr.mxu0 0.0
      %1086 = vmatpush1.msra.mxu0 0.0
      %1087 = vmatprep.subr.mxu0 0.0
      %1088 = vmatpush1.msra.mxu0 0.0
      %1089 = vmatprep.subr.mxu0 0.0
      %1090 = vmatpush1.msra.mxu0 0.0
      %1091 = vmatprep.subr.mxu0 0.0
      %1092 = vmatpush1.msra.mxu0 0.0
      %1093 = vmatprep.subr.mxu0 0.0
      %1094 = vmatpush1.msra.mxu0 0.0
      %1095 = vmatprep.subr.mxu0 0.0
      %1096 = vmatpush1.msra.mxu0 0.0
      %1097 = vmatprep.subr.mxu0 0.0
      %1098 = vmatpush1.msra.mxu0 0.0
      %1099 = vmatprep.subr.mxu0 0.0
      %1100 = vmatpush1.msra.mxu0 0.0
      %1101 = vmatprep.subr.mxu0 0.0
      %1102 = vmatpush1.msra.mxu0 0.0
      %1103 = vmatprep.subr.mxu0 0.0
      %1104 = vmatpush1.msra.mxu0 0.0
      %1105 = vmatprep.subr.mxu0 0.0
      %1106 = vmatpush1.msra.mxu0 0.0
      %1107 = vmatprep.subr.mxu0 0.0
      %1108 = vmatpush1.msra.mxu0 0.0
      %1109 = vmatprep.subr.mxu0 0.0
      %1110 = vmatpush1.msra.mxu0 0.0
      %1111 = vmatprep.subr.mxu0 0.0
      %1112 = vmatpush1.msra.mxu0 0.0
      %1113 = vmatprep.subr.mxu0 0.0
      %1114 = vmatpush1.msra.mxu0 0.0
      %1115 = vmatprep.subr.mxu0 0.0
      %1116 = vmatpush1.msra.mxu0 0.0
      %1117 = vmatprep.subr.mxu0 0.0
      %1118 = vmatpush1.msra.mxu0 0.0
      %1119 = vmatprep.subr.mxu0 0.0
      %1120 = vmatpush1.msra.mxu0 0.0
      %1121 = vmatprep.subr.mxu0 0.0
      %1122 = vmatpush1.msra.mxu0 0.0
      %1123 = vmatprep.subr.mxu0 0.0
      %1124 = vmatpush1.msra.mxu0 0.0
      %1125 = vmatprep.mubr.f32.mxu0 0.0
      %1126 = vmatmul.mubr.f32.gmra.mrb[0].mxu0 %v1056
      %v1127 = vpop.f32.mrb[0].mxu0
      %v1128 = vadd.f32 0.0, %v1127
      %v1129 = vpop.f32.mrb[0].mxu0
      %1130 = vmatprep.mubr.f32.mxu0 0.0
      %1131 = vmatmul.mubr.f32.gmra.mrb[0].mxu0 %v1059
      %v1132 = vpop.f32.mrb[0].mxu0
      %v1133 = vadd.f32 0.0, %v1132
      %v1134 = vpop.f32.mrb[0].mxu0
      %1135 = vdwg.mxu0
      %1136 = vrot.lane.b32.xlu0 %v567, 64
      %v1137 = vpop.permute.xlu0 %1136
      %1138 = vrot.lane.b32.xlu0 %v572, 64
      %v1139 = vpop.permute.xlu0 %1138
      %v1143 = vsel %vm960, %v1043, 0
      %v1146 = vsel %vm960, %v1044, 0
      %1148 = vmatprep.subr.mxu0 0.0
      %1149 = vmatpush1.msra.mxu0 %v1137
      %1150 = vmatprep.subr.mxu0 0.0
      %1151 = vmatpush1.msra.mxu0 %v1139
      %1152 = vmatprep.subr.mxu0 0.0
      %1153 = vmatpush1.msra.mxu0 0.0
      %1154 = vmatprep.subr.mxu0 0.0
      %1155 = vmatpush1.msra.mxu0 0.0
      %1156 = vmatprep.subr.mxu0 0.0
      %1157 = vmatpush1.msra.mxu0 0.0
      %1158 = vmatprep.subr.mxu0 0.0
      %1159 = vmatpush1.msra.mxu0 0.0
      %1160 = vmatprep.subr.mxu0 0.0
      %1161 = vmatpush1.msra.mxu0 0.0
      %1162 = vmatprep.subr.mxu0 0.0
      %1163 = vmatpush1.msra.mxu0 0.0
      %1164 = vmatprep.subr.mxu0 0.0
      %1165 = vmatpush1.msra.mxu0 0.0
      %1166 = vmatprep.subr.mxu0 0.0
      %1167 = vmatpush1.msra.mxu0 0.0
      %1168 = vmatprep.subr.mxu0 0.0
      %1169 = vmatpush1.msra.mxu0 0.0
      %1170 = vmatprep.subr.mxu0 0.0
      %1171 = vmatpush1.msra.mxu0 0.0
      %1172 = vmatprep.subr.mxu0 0.0
      %1173 = vmatpush1.msra.mxu0 0.0
      %1174 = vmatprep.subr.mxu0 0.0
      %1175 = vmatpush1.msra.mxu0 0.0
      %1176 = vmatprep.subr.mxu0 0.0
      %1177 = vmatpush1.msra.mxu0 0.0
      %1178 = vmatprep.subr.mxu0 0.0
      %1179 = vmatpush1.msra.mxu0 0.0
      %1180 = vmatprep.subr.mxu0 0.0
      %1181 = vmatpush1.msra.mxu0 0.0
      %1182 = vmatprep.subr.mxu0 0.0
      %1183 = vmatpush1.msra.mxu0 0.0
      %1184 = vmatprep.subr.mxu0 0.0
      %1185 = vmatpush1.msra.mxu0 0.0
      %1186 = vmatprep.subr.mxu0 0.0
      %1187 = vmatpush1.msra.mxu0 0.0
      %1188 = vmatprep.subr.mxu0 0.0
      %1189 = vmatpush1.msra.mxu0 0.0
      %1190 = vmatprep.subr.mxu0 0.0
      %1191 = vmatpush1.msra.mxu0 0.0
      %1192 = vmatprep.subr.mxu0 0.0
      %1193 = vmatpush1.msra.mxu0 0.0
      %1194 = vmatprep.subr.mxu0 0.0
      %1195 = vmatpush1.msra.mxu0 0.0
      %1196 = vmatprep.subr.mxu0 0.0
      %1197 = vmatpush1.msra.mxu0 0.0
      %1198 = vmatprep.subr.mxu0 0.0
      %1199 = vmatpush1.msra.mxu0 0.0
      %1200 = vmatprep.subr.mxu0 0.0
      %1201 = vmatpush1.msra.mxu0 0.0
      %1202 = vmatprep.subr.mxu0 0.0
      %1203 = vmatpush1.msra.mxu0 0.0
      %1204 = vmatprep.subr.mxu0 0.0
      %1205 = vmatpush1.msra.mxu0 0.0
      %1206 = vmatprep.subr.mxu0 0.0
      %1207 = vmatpush1.msra.mxu0 0.0
      %1208 = vmatprep.subr.mxu0 0.0
      %1209 = vmatpush1.msra.mxu0 0.0
      %1210 = vmatprep.subr.mxu0 0.0
      %1211 = vmatpush1.msra.mxu0 0.0
      %1212 = vmatprep.mubr.f32.mxu0 0.0
      %1213 = vmatmul.mubr.f32.gmra.mrb[0].mxu0 %v1143
      %v1214 = vpop.f32.mrb[0].mxu0
      %v1215 = vadd.f32 0.0, %v1214
      %v1216 = vpop.f32.mrb[0].mxu0
      %1217 = vmatprep.mubr.f32.mxu0 0.0
      %1218 = vmatmul.mubr.f32.gmra.mrb[0].mxu0 %v1146
      %v1219 = vpop.f32.mrb[0].mxu0
      %v1220 = vadd.f32 0.0, %v1219
      %v1221 = vpop.f32.mrb[0].mxu0
      %1222 = vdwg.mxu0
      %1223 = vrot.lane.b32.xlu0 %v577, 64
      %v1224 = vpop.permute.xlu0 %1223
      %1225 = vrot.lane.b32.xlu0 %v582, 64
      %v1226 = vpop.permute.xlu0 %1225
      %v1230 = vsel %vm960, %v1045, 0
      %v1233 = vsel %vm960, %v1046, 0
      %1235 = vmatprep.subr.mxu0 0.0
      %1236 = vmatpush1.msra.mxu0 %v1224
      %1237 = vmatprep.subr.mxu0 0.0
      %1238 = vmatpush1.msra.mxu0 %v1226
      %1239 = vmatprep.subr.mxu0 0.0
      %1240 = vmatpush1.msra.mxu0 0.0
      %1241 = vmatprep.subr.mxu0 0.0
      %1242 = vmatpush1.msra.mxu0 0.0
      %1243 = vmatprep.subr.mxu0 0.0
      %1244 = vmatpush1.msra.mxu0 0.0
      %1245 = vmatprep.subr.mxu0 0.0
      %1246 = vmatpush1.msra.mxu0 0.0
      %1247 = vmatprep.subr.mxu0 0.0
      %1248 = vmatpush1.msra.mxu0 0.0
      %1249 = vmatprep.subr.mxu0 0.0
      %1250 = vmatpush1.msra.mxu0 0.0
      %1251 = vmatprep.subr.mxu0 0.0
      %1252 = vmatpush1.msra.mxu0 0.0
      %1253 = vmatprep.subr.mxu0 0.0
      %1254 = vmatpush1.msra.mxu0 0.0
      %1255 = vmatprep.subr.mxu0 0.0
      %1256 = vmatpush1.msra.mxu0 0.0
      %1257 = vmatprep.subr.mxu0 0.0
      %1258 = vmatpush1.msra.mxu0 0.0
      %1259 = vmatprep.subr.mxu0 0.0
      %1260 = vmatpush1.msra.mxu0 0.0
      %1261 = vmatprep.subr.mxu0 0.0
      %1262 = vmatpush1.msra.mxu0 0.0
      %1263 = vmatprep.subr.mxu0 0.0
      %1264 = vmatpush1.msra.mxu0 0.0
      %1265 = vmatprep.subr.mxu0 0.0
      %1266 = vmatpush1.msra.mxu0 0.0
      %1267 = vmatprep.subr.mxu0 0.0
      %1268 = vmatpush1.msra.mxu0 0.0
      %1269 = vmatprep.subr.mxu0 0.0
      %1270 = vmatpush1.msra.mxu0 0.0
      %1271 = vmatprep.subr.mxu0 0.0
      %1272 = vmatpush1.msra.mxu0 0.0
      %1273 = vmatprep.subr.mxu0 0.0
      %1274 = vmatpush1.msra.mxu0 0.0
      %1275 = vmatprep.subr.mxu0 0.0
      %1276 = vmatpush1.msra.mxu0 0.0
      %1277 = vmatprep.subr.mxu0 0.0
      %1278 = vmatpush1.msra.mxu0 0.0
      %1279 = vmatprep.subr.mxu0 0.0
      %1280 = vmatpush1.msra.mxu0 0.0
      %1281 = vmatprep.subr.mxu0 0.0
      %1282 = vmatpush1.msra.mxu0 0.0
      %1283 = vmatprep.subr.mxu0 0.0
      %1284 = vmatpush1.msra.mxu0 0.0
      %1285 = vmatprep.subr.mxu0 0.0
      %1286 = vmatpush1.msra.mxu0 0.0
      %1287 = vmatprep.subr.mxu0 0.0
      %1288 = vmatpush1.msra.mxu0 0.0
      %1289 = vmatprep.subr.mxu0 0.0
      %1290 = vmatpush1.msra.mxu0 0.0
      %1291 = vmatprep.subr.mxu0 0.0
      %1292 = vmatpush1.msra.mxu0 0.0
      %1293 = vmatprep.subr.mxu0 0.0
      %1294 = vmatpush1.msra.mxu0 0.0
      %1295 = vmatprep.subr.mxu0 0.0
      %1296 = vmatpush1.msra.mxu0 0.0
      %1297 = vmatprep.subr.mxu0 0.0
      %1298 = vmatpush1.msra.mxu0 0.0
      %1299 = vmatprep.mubr.f32.mxu0 0.0
      %1300 = vmatmul.mubr.f32.gmra.mrb[0].mxu0 %v1230
      %v1301 = vpop.f32.mrb[0].mxu0
      %v1302 = vadd.f32 0.0, %v1301
      %v1303 = vpop.f32.mrb[0].mxu0
      %1304 = vmatprep.mubr.f32.mxu0 0.0
      %1305 = vmatmul.mubr.f32.gmra.mrb[0].mxu0 %v1233
      %v1306 = vpop.f32.mrb[0].mxu0
      %v1307 = vadd.f32 0.0, %v1306
      %v1308 = vpop.f32.mrb[0].mxu0
      %1309 = vdwg.mxu0
      %1310 = vrot.lane.b32.xlu0 %v587, 64
      %v1311 = vpop.permute.xlu0 %1310
      %1312 = vrot.lane.b32.xlu0 %v592, 64
      %v1313 = vpop.permute.xlu0 %1312
      %v1317 = vsel %vm960, %v1047, 0
      %v1320 = vsel %vm960, %v1048, 0
      %1322 = vmatprep.subr.mxu0 0.0
      %1323 = vmatpush1.msra.mxu0 %v1311
      %1324 = vmatprep.subr.mxu0 0.0
      %1325 = vmatpush1.msra.mxu0 %v1313
      %1326 = vmatprep.subr.mxu0 0.0
      %1327 = vmatpush1.msra.mxu0 0.0
      %1328 = vmatprep.subr.mxu0 0.0
      %1329 = vmatpush1.msra.mxu0 0.0
      %1330 = vmatprep.subr.mxu0 0.0
      %1331 = vmatpush1.msra.mxu0 0.0
      %1332 = vmatprep.subr.mxu0 0.0
      %1333 = vmatpush1.msra.mxu0 0.0
      %1334 = vmatprep.subr.mxu0 0.0
      %1335 = vmatpush1.msra.mxu0 0.0
      %1336 = vmatprep.subr.mxu0 0.0
      %1337 = vmatpush1.msra.mxu0 0.0
      %1338 = vmatprep.subr.mxu0 0.0
      %1339 = vmatpush1.msra.mxu0 0.0
      %1340 = vmatprep.subr.mxu0 0.0
      %1341 = vmatpush1.msra.mxu0 0.0
      %1342 = vmatprep.subr.mxu0 0.0
      %1343 = vmatpush1.msra.mxu0 0.0
      %1344 = vmatprep.subr.mxu0 0.0
      %1345 = vmatpush1.msra.mxu0 0.0
      %1346 = vmatprep.subr.mxu0 0.0
      %1347 = vmatpush1.msra.mxu0 0.0
      %1348 = vmatprep.subr.mxu0 0.0
      %1349 = vmatpush1.msra.mxu0 0.0
      %1350 = vmatprep.subr.mxu0 0.0
      %1351 = vmatpush1.msra.mxu0 0.0
      %1352 = vmatprep.subr.mxu0 0.0
      %1353 = vmatpush1.msra.mxu0 0.0
      %1354 = vmatprep.subr.mxu0 0.0
      %1355 = vmatpush1.msra.mxu0 0.0
      %1356 = vmatprep.subr.mxu0 0.0
      %1357 = vmatpush1.msra.mxu0 0.0
      %1358 = vmatprep.subr.mxu0 0.0
      %1359 = vmatpush1.msra.mxu0 0.0
      %1360 = vmatprep.subr.mxu0 0.0
      %1361 = vmatpush1.msra.mxu0 0.0
      %1362 = vmatprep.subr.mxu0 0.0
      %1363 = vmatpush1.msra.mxu0 0.0
      %1364 = vmatprep.subr.mxu0 0.0
      %1365 = vmatpush1.msra.mxu0 0.0
      %1366 = vmatprep.subr.mxu0 0.0
      %1367 = vmatpush1.msra.mxu0 0.0
      %1368 = vmatprep.subr.mxu0 0.0
      %1369 = vmatpush1.msra.mxu0 0.0
      %1370 = vmatprep.subr.mxu0 0.0
      %1371 = vmatpush1.msra.mxu0 0.0
      %1372 = vmatprep.subr.mxu0 0.0
      %1373 = vmatpush1.msra.mxu0 0.0
      %1374 = vmatprep.subr.mxu0 0.0
      %1375 = vmatpush1.msra.mxu0 0.0
      %1376 = vmatprep.subr.mxu0 0.0
      %1377 = vmatpush1.msra.mxu0 0.0
      %1378 = vmatprep.subr.mxu0 0.0
      %1379 = vmatpush1.msra.mxu0 0.0
      %1380 = vmatprep.subr.mxu0 0.0
      %1381 = vmatpush1.msra.mxu0 0.0
      %1382 = vmatprep.subr.mxu0 0.0
      %1383 = vmatpush1.msra.mxu0 0.0
      %1384 = vmatprep.subr.mxu0 0.0
      %1385 = vmatpush1.msra.mxu0 0.0
      %1386 = vmatprep.mubr.f32.mxu0 0.0
      %1387 = vmatmul.mubr.f32.gmra.mrb[0].mxu0 %v1317
      %v1388 = vpop.f32.mrb[0].mxu0
      %v1389 = vadd.f32 0.0, %v1388
      %v1390 = vpop.f32.mrb[0].mxu0
      %1391 = vmatprep.mubr.f32.mxu0 0.0
      %1392 = vmatmul.mubr.f32.gmra.mrb[0].mxu0 %v1320
      %v1393 = vpop.f32.mrb[0].mxu0
      %v1394 = vadd.f32 0.0, %v1393
      %v1395 = vpop.f32.mrb[0].mxu0
      %1396 = vdwg.mxu0
      %1397 = vrot.lane.b32.xlu0 %v557, 120
      %v1398 = vpop.permute.xlu0 %1397
      %1399 = vrot.lane.b32.xlu0 %v562, 120
      %v1400 = vpop.permute.xlu0 %1399
      %1401 = vrot.lane.b32.xlu0 %v557, 88
      %v1402 = vpop.permute.xlu0 %1401
      %1403 = vrot.lane.b32.xlu0 %v562, 88
      %v1404 = vpop.permute.xlu0 %1403
      %v1405 = vsel %vm601, %v1398, 0
      %v1407 = vsel %vm601, %v1400, 0
      %v1409 = vsel %vm601, %v1402, 0
      %v1411 = vsel %vm601, %v1404, 0
      %1413 = vmatprep.subr.mxu0 0.0
      %1414 = vmatpush1.xpose.msra.mxu0 %v1409
      %1415 = vmatprep.subr.mxu0 0.0
      %1416 = vmatpush1.xpose.msra.mxu0 %v1411
      %1417 = vmatprep.subr.mxu0 0.0
      %1418 = vmatpush1.xpose.msra.mxu0 0.0
      %1419 = vmatprep.subr.mxu0 0.0
      %1420 = vmatpush1.xpose.msra.mxu0 0.0
      %1421 = vmatprep.subr.mxu0 0.0
      %1422 = vmatpush1.xpose.msra.mxu0 0.0
      %1423 = vmatprep.subr.mxu0 0.0
      %1424 = vmatpush1.xpose.msra.mxu0 0.0
      %1425 = vmatprep.subr.mxu0 0.0
      %1426 = vmatpush1.xpose.msra.mxu0 0.0
      %1427 = vmatprep.subr.mxu0 0.0
      %1428 = vmatpush1.xpose.msra.mxu0 0.0
      %1429 = vmatprep.subr.mxu0 0.0
      %1430 = vmatpush1.xpose.msra.mxu0 0.0
      %1431 = vmatprep.subr.mxu0 0.0
      %1432 = vmatpush1.xpose.msra.mxu0 0.0
      %1433 = vmatprep.subr.mxu0 0.0
      %1434 = vmatpush1.xpose.msra.mxu0 0.0
      %1435 = vmatprep.subr.mxu0 0.0
      %1436 = vmatpush1.xpose.msra.mxu0 0.0
      %1437 = vmatprep.subr.mxu0 0.0
      %1438 = vmatpush1.xpose.msra.mxu0 0.0
      %1439 = vmatprep.subr.mxu0 0.0
      %1440 = vmatpush1.xpose.msra.mxu0 0.0
      %1441 = vmatprep.subr.mxu0 0.0
      %1442 = vmatpush1.xpose.msra.mxu0 0.0
      %1443 = vmatprep.subr.mxu0 0.0
      %1444 = vmatpush1.xpose.msra.mxu0 0.0
      %1445 = vmatprep.subr.mxu0 0.0
      %1446 = vmatpush1.xpose.msra.mxu0 0.0
      %1447 = vmatprep.subr.mxu0 0.0
      %1448 = vmatpush1.xpose.msra.mxu0 0.0
      %1449 = vmatprep.subr.mxu0 0.0
      %1450 = vmatpush1.xpose.msra.mxu0 0.0
      %1451 = vmatprep.subr.mxu0 0.0
      %1452 = vmatpush1.xpose.msra.mxu0 0.0
      %1453 = vmatprep.subr.mxu0 0.0
      %1454 = vmatpush1.xpose.msra.mxu0 0.0
      %1455 = vmatprep.subr.mxu0 0.0
      %1456 = vmatpush1.xpose.msra.mxu0 0.0
      %1457 = vmatprep.subr.mxu0 0.0
      %1458 = vmatpush1.xpose.msra.mxu0 0.0
      %1459 = vmatprep.subr.mxu0 0.0
      %1460 = vmatpush1.xpose.msra.mxu0 0.0
      %1461 = vmatprep.subr.mxu0 0.0
      %1462 = vmatpush1.xpose.msra.mxu0 0.0
      %1463 = vmatprep.subr.mxu0 0.0
      %1464 = vmatpush1.xpose.msra.mxu0 0.0
      %1465 = vmatprep.subr.mxu0 0.0
      %1466 = vmatpush1.xpose.msra.mxu0 0.0
      %1467 = vmatprep.subr.mxu0 0.0
      %1468 = vmatpush1.xpose.msra.mxu0 0.0
      %1469 = vmatprep.subr.mxu0 0.0
      %1470 = vmatpush1.xpose.msra.mxu0 0.0
      %1471 = vmatprep.subr.mxu0 0.0
      %1472 = vmatpush1.xpose.msra.mxu0 0.0
      %1473 = vmatprep.subr.mxu0 0.0
      %1474 = vmatpush1.xpose.msra.mxu0 0.0
      %1475 = vmatprep.subr.mxu0 0.0
      %1476 = vmatpush1.xpose.msra.mxu0 0.0
      %1477 = vmatprep.mubr.f32.mxu0 0.0
      %1478 = vmatmul.mubr.f32.gmra.mrb[0].mxu0 %v1405
      %v1479 = vpop.f32.mrb[0].mxu0
      %v1480 = vadd.f32 0.0, %v1479
      %v1481 = vpop.f32.mrb[0].mxu0
      %1482 = vmatprep.mubr.f32.mxu0 0.0
      %1483 = vmatmul.mubr.f32.gmra.mrb[0].mxu0 %v1407
      %v1484 = vpop.f32.mrb[0].mxu0
      %v1485 = vadd.f32 0.0, %v1484
      %v1486 = vpop.f32.mrb[0].mxu0
      %1487 = vdwg.mxu0
      %1488 = vrot.lane.b32.xlu0 %v567, 120
      %v1489 = vpop.permute.xlu0 %1488
      %1490 = vrot.lane.b32.xlu0 %v572, 120
      %v1491 = vpop.permute.xlu0 %1490
      %1492 = vrot.lane.b32.xlu0 %v567, 88
      %v1493 = vpop.permute.xlu0 %1492
      %1494 = vrot.lane.b32.xlu0 %v572, 88
      %v1495 = vpop.permute.xlu0 %1494
      %v1496 = vsel %vm601, %v1489, 0
      %v1498 = vsel %vm601, %v1491, 0
      %v1500 = vsel %vm601, %v1493, 0
      %v1502 = vsel %vm601, %v1495, 0
      %1504 = vmatprep.subr.mxu0 0.0
      %1505 = vmatpush1.xpose.msra.mxu0 %v1500
      %1506 = vmatprep.subr.mxu0 0.0
      %1507 = vmatpush1.xpose.msra.mxu0 %v1502
      %1508 = vmatprep.subr.mxu0 0.0
      %1509 = vmatpush1.xpose.msra.mxu0 0.0
      %1510 = vmatprep.subr.mxu0 0.0
      %1511 = vmatpush1.xpose.msra.mxu0 0.0
      %1512 = vmatprep.subr.mxu0 0.0
      %1513 = vmatpush1.xpose.msra.mxu0 0.0
      %1514 = vmatprep.subr.mxu0 0.0
      %1515 = vmatpush1.xpose.msra.mxu0 0.0
      %1516 = vmatprep.subr.mxu0 0.0
      %1517 = vmatpush1.xpose.msra.mxu0 0.0
      %1518 = vmatprep.subr.mxu0 0.0
      %1519 = vmatpush1.xpose.msra.mxu0 0.0
      %1520 = vmatprep.subr.mxu0 0.0
      %1521 = vmatpush1.xpose.msra.mxu0 0.0
      %1522 = vmatprep.subr.mxu0 0.0
      %1523 = vmatpush1.xpose.msra.mxu0 0.0
      %1524 = vmatprep.subr.mxu0 0.0
      %1525 = vmatpush1.xpose.msra.mxu0 0.0
      %1526 = vmatprep.subr.mxu0 0.0
      %1527 = vmatpush1.xpose.msra.mxu0 0.0
      %1528 = vmatprep.subr.mxu0 0.0
      %1529 = vmatpush1.xpose.msra.mxu0 0.0
      %1530 = vmatprep.subr.mxu0 0.0
      %1531 = vmatpush1.xpose.msra.mxu0 0.0
      %1532 = vmatprep.subr.mxu0 0.0
      %1533 = vmatpush1.xpose.msra.mxu0 0.0
      %1534 = vmatprep.subr.mxu0 0.0
      %1535 = vmatpush1.xpose.msra.mxu0 0.0
      %1536 = vmatprep.subr.mxu0 0.0
      %1537 = vmatpush1.xpose.msra.mxu0 0.0
      %1538 = vmatprep.subr.mxu0 0.0
      %1539 = vmatpush1.xpose.msra.mxu0 0.0
      %1540 = vmatprep.subr.mxu0 0.0
      %1541 = vmatpush1.xpose.msra.mxu0 0.0
      %1542 = vmatprep.subr.mxu0 0.0
      %1543 = vmatpush1.xpose.msra.mxu0 0.0
      %1544 = vmatprep.subr.mxu0 0.0
      %1545 = vmatpush1.xpose.msra.mxu0 0.0
      %1546 = vmatprep.subr.mxu0 0.0
      %1547 = vmatpush1.xpose.msra.mxu0 0.0
      %1548 = vmatprep.subr.mxu0 0.0
      %1549 = vmatpush1.xpose.msra.mxu0 0.0
      %1550 = vmatprep.subr.mxu0 0.0
      %1551 = vmatpush1.xpose.msra.mxu0 0.0
      %1552 = vmatprep.subr.mxu0 0.0
      %1553 = vmatpush1.xpose.msra.mxu0 0.0
      %1554 = vmatprep.subr.mxu0 0.0
      %1555 = vmatpush1.xpose.msra.mxu0 0.0
      %1556 = vmatprep.subr.mxu0 0.0
      %1557 = vmatpush1.xpose.msra.mxu0 0.0
      %1558 = vmatprep.subr.mxu0 0.0
      %1559 = vmatpush1.xpose.msra.mxu0 0.0
      %1560 = vmatprep.subr.mxu0 0.0
      %1561 = vmatpush1.xpose.msra.mxu0 0.0
      %1562 = vmatprep.subr.mxu0 0.0
      %1563 = vmatpush1.xpose.msra.mxu0 0.0
      %1564 = vmatprep.subr.mxu0 0.0
      %1565 = vmatpush1.xpose.msra.mxu0 0.0
      %1566 = vmatprep.subr.mxu0 0.0
      %1567 = vmatpush1.xpose.msra.mxu0 0.0
      %1568 = vmatprep.mubr.f32.mxu0 0.0
      %1569 = vmatmul.mubr.f32.gmra.mrb[0].mxu0 %v1496
      %v1570 = vpop.f32.mrb[0].mxu0
      %v1571 = vadd.f32 0.0, %v1570
      %v1572 = vpop.f32.mrb[0].mxu0
      %1573 = vmatprep.mubr.f32.mxu0 0.0
      %1574 = vmatmul.mubr.f32.gmra.mrb[0].mxu0 %v1498
      %v1575 = vpop.f32.mrb[0].mxu0
      %v1576 = vadd.f32 0.0, %v1575
      %v1577 = vpop.f32.mrb[0].mxu0
      %1578 = vdwg.mxu0
      %1579 = vrot.lane.b32.xlu0 %v577, 120
      %v1580 = vpop.permute.xlu0 %1579
      %1581 = vrot.lane.b32.xlu0 %v582, 120
      %v1582 = vpop.permute.xlu0 %1581
      %1583 = vrot.lane.b32.xlu0 %v577, 88
      %v1584 = vpop.permute.xlu0 %1583
      %1585 = vrot.lane.b32.xlu0 %v582, 88
      %v1586 = vpop.permute.xlu0 %1585
      %v1587 = vsel %vm601, %v1580, 0
      %v1589 = vsel %vm601, %v1582, 0
      %v1591 = vsel %vm601, %v1584, 0
      %v1593 = vsel %vm601, %v1586, 0
      %1595 = vmatprep.subr.mxu0 0.0
      %1596 = vmatpush1.xpose.msra.mxu0 %v1591
      %1597 = vmatprep.subr.mxu0 0.0
      %1598 = vmatpush1.xpose.msra.mxu0 %v1593
      %1599 = vmatprep.subr.mxu0 0.0
      %1600 = vmatpush1.xpose.msra.mxu0 0.0
      %1601 = vmatprep.subr.mxu0 0.0
      %1602 = vmatpush1.xpose.msra.mxu0 0.0
      %1603 = vmatprep.subr.mxu0 0.0
      %1604 = vmatpush1.xpose.msra.mxu0 0.0
      %1605 = vmatprep.subr.mxu0 0.0
      %1606 = vmatpush1.xpose.msra.mxu0 0.0
      %1607 = vmatprep.subr.mxu0 0.0
      %1608 = vmatpush1.xpose.msra.mxu0 0.0
      %1609 = vmatprep.subr.mxu0 0.0
      %1610 = vmatpush1.xpose.msra.mxu0 0.0
      %1611 = vmatprep.subr.mxu0 0.0
      %1612 = vmatpush1.xpose.msra.mxu0 0.0
      %1613 = vmatprep.subr.mxu0 0.0
      %1614 = vmatpush1.xpose.msra.mxu0 0.0
      %1615 = vmatprep.subr.mxu0 0.0
      %1616 = vmatpush1.xpose.msra.mxu0 0.0
      %1617 = vmatprep.subr.mxu0 0.0
      %1618 = vmatpush1.xpose.msra.mxu0 0.0
      %1619 = vmatprep.subr.mxu0 0.0
      %1620 = vmatpush1.xpose.msra.mxu0 0.0
      %1621 = vmatprep.subr.mxu0 0.0
      %1622 = vmatpush1.xpose.msra.mxu0 0.0
      %1623 = vmatprep.subr.mxu0 0.0
      %1624 = vmatpush1.xpose.msra.mxu0 0.0
      %1625 = vmatprep.subr.mxu0 0.0
      %1626 = vmatpush1.xpose.msra.mxu0 0.0
      %1627 = vmatprep.subr.mxu0 0.0
      %1628 = vmatpush1.xpose.msra.mxu0 0.0
      %1629 = vmatprep.subr.mxu0 0.0
      %1630 = vmatpush1.xpose.msra.mxu0 0.0
      %1631 = vmatprep.subr.mxu0 0.0
      %1632 = vmatpush1.xpose.msra.mxu0 0.0
      %1633 = vmatprep.subr.mxu0 0.0
      %1634 = vmatpush1.xpose.msra.mxu0 0.0
      %1635 = vmatprep.subr.mxu0 0.0
      %1636 = vmatpush1.xpose.msra.mxu0 0.0
      %1637 = vmatprep.subr.mxu0 0.0
      %1638 = vmatpush1.xpose.msra.mxu0 0.0
      %1639 = vmatprep.subr.mxu0 0.0
      %1640 = vmatpush1.xpose.msra.mxu0 0.0
      %1641 = vmatprep.subr.mxu0 0.0
      %1642 = vmatpush1.xpose.msra.mxu0 0.0
      %1643 = vmatprep.subr.mxu0 0.0
      %1644 = vmatpush1.xpose.msra.mxu0 0.0
      %1645 = vmatprep.subr.mxu0 0.0
      %1646 = vmatpush1.xpose.msra.mxu0 0.0
      %1647 = vmatprep.subr.mxu0 0.0
      %1648 = vmatpush1.xpose.msra.mxu0 0.0
      %1649 = vmatprep.subr.mxu0 0.0
      %1650 = vmatpush1.xpose.msra.mxu0 0.0
      %1651 = vmatprep.subr.mxu0 0.0
      %1652 = vmatpush1.xpose.msra.mxu0 0.0
      %1653 = vmatprep.subr.mxu0 0.0
      %1654 = vmatpush1.xpose.msra.mxu0 0.0
      %1655 = vmatprep.subr.mxu0 0.0
      %1656 = vmatpush1.xpose.msra.mxu0 0.0
      %1657 = vmatprep.subr.mxu0 0.0
      %1658 = vmatpush1.xpose.msra.mxu0 0.0
      %1659 = vmatprep.mubr.f32.mxu0 0.0
      %1660 = vmatmul.mubr.f32.gmra.mrb[0].mxu0 %v1587
      %v1661 = vpop.f32.mrb[0].mxu0
      %v1662 = vadd.f32 0.0, %v1661
      %v1663 = vpop.f32.mrb[0].mxu0
      %1664 = vmatprep.mubr.f32.mxu0 0.0
      %1665 = vmatmul.mubr.f32.gmra.mrb[0].mxu0 %v1589
      %v1666 = vpop.f32.mrb[0].mxu0
      %v1667 = vadd.f32 0.0, %v1666
      %v1668 = vpop.f32.mrb[0].mxu0
      %1669 = vdwg.mxu0
      %1670 = vrot.lane.b32.xlu0 %v587, 120
      %v1671 = vpop.permute.xlu0 %1670
      %1672 = vrot.lane.b32.xlu0 %v592, 120
      %v1673 = vpop.permute.xlu0 %1672
      %1674 = vrot.lane.b32.xlu0 %v587, 88
      %v1675 = vpop.permute.xlu0 %1674
      %1676 = vrot.lane.b32.xlu0 %v592, 88
      %v1677 = vpop.permute.xlu0 %1676
      %v1678 = vsel %vm601, %v1671, 0
      %v1680 = vsel %vm601, %v1673, 0
      %v1682 = vsel %vm601, %v1675, 0
      %v1684 = vsel %vm601, %v1677, 0
      %1686 = vmatprep.subr.mxu0 0.0
      %1687 = vmatpush1.xpose.msra.mxu0 %v1682
      %1688 = vmatprep.subr.mxu0 0.0
      %1689 = vmatpush1.xpose.msra.mxu0 %v1684
      %1690 = vmatprep.subr.mxu0 0.0
      %1691 = vmatpush1.xpose.msra.mxu0 0.0
      %1692 = vmatprep.subr.mxu0 0.0
      %1693 = vmatpush1.xpose.msra.mxu0 0.0
      %1694 = vmatprep.subr.mxu0 0.0
      %1695 = vmatpush1.xpose.msra.mxu0 0.0
      %1696 = vmatprep.subr.mxu0 0.0
      %1697 = vmatpush1.xpose.msra.mxu0 0.0
      %1698 = vmatprep.subr.mxu0 0.0
      %1699 = vmatpush1.xpose.msra.mxu0 0.0
      %1700 = vmatprep.subr.mxu0 0.0
      %1701 = vmatpush1.xpose.msra.mxu0 0.0
      %1702 = vmatprep.subr.mxu0 0.0
      %1703 = vmatpush1.xpose.msra.mxu0 0.0
      %1704 = vmatprep.subr.mxu0 0.0
      %1705 = vmatpush1.xpose.msra.mxu0 0.0
      %1706 = vmatprep.subr.mxu0 0.0
      %1707 = vmatpush1.xpose.msra.mxu0 0.0
      %1708 = vmatprep.subr.mxu0 0.0
      %1709 = vmatpush1.xpose.msra.mxu0 0.0
      %1710 = vmatprep.subr.mxu0 0.0
      %1711 = vmatpush1.xpose.msra.mxu0 0.0
      %1712 = vmatprep.subr.mxu0 0.0
      %1713 = vmatpush1.xpose.msra.mxu0 0.0
      %1714 = vmatprep.subr.mxu0 0.0
      %1715 = vmatpush1.xpose.msra.mxu0 0.0
      %1716 = vmatprep.subr.mxu0 0.0
      %1717 = vmatpush1.xpose.msra.mxu0 0.0
      %1718 = vmatprep.subr.mxu0 0.0
      %1719 = vmatpush1.xpose.msra.mxu0 0.0
      %1720 = vmatprep.subr.mxu0 0.0
      %1721 = vmatpush1.xpose.msra.mxu0 0.0
      %1722 = vmatprep.subr.mxu0 0.0
      %1723 = vmatpush1.xpose.msra.mxu0 0.0
      %1724 = vmatprep.subr.mxu0 0.0
      %1725 = vmatpush1.xpose.msra.mxu0 0.0
      %1726 = vmatprep.subr.mxu0 0.0
      %1727 = vmatpush1.xpose.msra.mxu0 0.0
      %1728 = vmatprep.subr.mxu0 0.0
      %1729 = vmatpush1.xpose.msra.mxu0 0.0
      %1730 = vmatprep.subr.mxu0 0.0
      %1731 = vmatpush1.xpose.msra.mxu0 0.0
      %1732 = vmatprep.subr.mxu0 0.0
      %1733 = vmatpush1.xpose.msra.mxu0 0.0
      %1734 = vmatprep.subr.mxu0 0.0
      %1735 = vmatpush1.xpose.msra.mxu0 0.0
      %1736 = vmatprep.subr.mxu0 0.0
      %1737 = vmatpush1.xpose.msra.mxu0 0.0
      %1738 = vmatprep.subr.mxu0 0.0
      %1739 = vmatpush1.xpose.msra.mxu0 0.0
      %1740 = vmatprep.subr.mxu0 0.0
      %1741 = vmatpush1.xpose.msra.mxu0 0.0
      %1742 = vmatprep.subr.mxu0 0.0
      %1743 = vmatpush1.xpose.msra.mxu0 0.0
      %1744 = vmatprep.subr.mxu0 0.0
      %1745 = vmatpush1.xpose.msra.mxu0 0.0
      %1746 = vmatprep.subr.mxu0 0.0
      %1747 = vmatpush1.xpose.msra.mxu0 0.0
      %1748 = vmatprep.subr.mxu0 0.0
      %1749 = vmatpush1.xpose.msra.mxu0 0.0
      %1750 = vmatprep.mubr.f32.mxu0 0.0
      %1751 = vmatmul.mubr.f32.gmra.mrb[0].mxu0 %v1678
      %v1752 = vpop.f32.mrb[0].mxu0
      %v1753 = vadd.f32 0.0, %v1752
      %v1754 = vpop.f32.mrb[0].mxu0
      %1755 = vmatprep.mubr.f32.mxu0 0.0
      %1756 = vmatmul.mubr.f32.gmra.mrb[0].mxu0 %v1680
      %v1757 = vpop.f32.mrb[0].mxu0
      %v1758 = vadd.f32 0.0, %v1757
      %v1759 = vpop.f32.mrb[0].mxu0
      %1760 = vdwg.mxu0
      %v1761 = vmul.f32 %v1480, 0.35355338
      %v1762 = vmul.f32 %v1485, 0.35355338
      %v1763 = vmul.f32 %v1571, 0.35355338
      %v1764 = vmul.f32 %v1576, 0.35355338
      %v1765 = vmul.f32 %v1662, 0.35355338
      %v1766 = vmul.f32 %v1667, 0.35355338
      %v1767 = vmul.f32 %v1753, 0.35355338
      %v1768 = vmul.f32 %v1758, 0.35355338
      %v1769 = vsel %vm960, %v1761, -inf
      %1770 = vmax.xlane.f32.xlu0 %v1769
      %v1771 = vpop.xlane.xlu0 %1770
      %v1772 = vsel %vm960, %v1762, -inf
      %1773 = vmax.xlane.f32.xlu0 %v1772
      %v1774 = vpop.xlane.xlu0 %1773
      %v1775 = vsel %vm960, %v1763, -inf
      %1776 = vmax.xlane.f32.xlu0 %v1775
      %v1777 = vpop.xlane.xlu0 %1776
      %v1778 = vsel %vm960, %v1764, -inf
      %1779 = vmax.xlane.f32.xlu0 %v1778
      %v1780 = vpop.xlane.xlu0 %1779
      %v1781 = vsel %vm960, %v1765, -inf
      %1782 = vmax.xlane.f32.xlu0 %v1781
      %v1783 = vpop.xlane.xlu0 %1782
      %v1784 = vsel %vm960, %v1766, -inf
      %1785 = vmax.xlane.f32.xlu0 %v1784
      %v1786 = vpop.xlane.xlu0 %1785
      %v1787 = vsel %vm960, %v1767, -inf
      %1788 = vmax.xlane.f32.xlu0 %v1787
      %v1789 = vpop.xlane.xlu0 %1788
      %v1790 = vsel %vm960, %v1768, -inf
      %1791 = vmax.xlane.f32.xlu0 %v1790
      %v1792 = vpop.xlane.xlu0 %1791
      %v1793 = vsub.f32 %v1761, %v1771
      %v1794 = vsub.f32 %v1762, %v1774
      %v1795 = vsub.f32 %v1763, %v1777
      %v1796 = vsub.f32 %v1764, %v1780
      %v1797 = vsub.f32 %v1765, %v1783
      %v1798 = vsub.f32 %v1766, %v1786
      %v1799 = vsub.f32 %v1767, %v1789
      %v1800 = vsub.f32 %v1768, %v1792
      %v1801 = vmul.f32 %v1793, 1.442695
      %v1802 = vpow.pop %v1801
      %v1803 = vmul.f32 %v1794, 1.442695
      %v1804 = vpow.pop %v1803
      %v1805 = vmul.f32 %v1795, 1.442695
      %v1806 = vpow.pop %v1805
      %v1807 = vmul.f32 %v1796, 1.442695
      %v1808 = vpow.pop %v1807
      %v1809 = vmul.f32 %v1797, 1.442695
      %v1810 = vpow.pop %v1809
      %v1811 = vmul.f32 %v1798, 1.442695
      %v1812 = vpow.pop %v1811
      %v1813 = vmul.f32 %v1799, 1.442695
      %v1814 = vpow.pop %v1813
      %v1815 = vmul.f32 %v1800, 1.442695
      %v1816 = vpow.pop %v1815
      %v1817 = vsel %vm960, %v1802, 0.0
      %1818 = vadd.xlane.f32.xlu0 %v1817
      %v1819 = vpop.xlane.xlu0 %1818
      %v1820 = vsel %vm960, %v1804, 0.0
      %1821 = vadd.xlane.f32.xlu0 %v1820
      %v1822 = vpop.xlane.xlu0 %1821
      %v1823 = vsel %vm960, %v1806, 0.0
      %1824 = vadd.xlane.f32.xlu0 %v1823
      %v1825 = vpop.xlane.xlu0 %1824
      %v1826 = vsel %vm960, %v1808, 0.0
      %1827 = vadd.xlane.f32.xlu0 %v1826
      %v1828 = vpop.xlane.xlu0 %1827
      %v1829 = vsel %vm960, %v1810, 0.0
      %1830 = vadd.xlane.f32.xlu0 %v1829
      %v1831 = vpop.xlane.xlu0 %1830
      %v1832 = vsel %vm960, %v1812, 0.0
      %1833 = vadd.xlane.f32.xlu0 %v1832
      %v1834 = vpop.xlane.xlu0 %1833
      %v1835 = vsel %vm960, %v1814, 0.0
      %1836 = vadd.xlane.f32.xlu0 %v1835
      %v1837 = vpop.xlane.xlu0 %1836
      %v1838 = vsel %vm960, %v1816, 0.0
      %1839 = vadd.xlane.f32.xlu0 %v1838
      %v1840 = vpop.xlane.xlu0 %1839
      %v1841 = vrcp.pop %v1819
      %v1842 = vrcp.pop %v1822
      %v1843 = vrcp.pop %v1825
      %v1844 = vrcp.pop %v1828
      %v1845 = vrcp.pop %v1831
      %v1846 = vrcp.pop %v1834
      %v1847 = vrcp.pop %v1837
      %v1848 = vrcp.pop %v1840
      %v1849 = vmul.f32 %v1802, %v1841
      %v1850 = vmul.f32 %v1804, %v1842
      %v1851 = vmul.f32 %v1806, %v1843
      %v1852 = vmul.f32 %v1808, %v1844
      %v1853 = vmul.f32 %v1810, %v1845
      %v1854 = vmul.f32 %v1812, %v1846
      %v1855 = vmul.f32 %v1814, %v1847
      %v1856 = vmul.f32 %v1816, %v1848
      %1857 = vrot.lane.b32.xlu0 %v557, 56
      %v1858 = vpop.permute.xlu0 %1857
      %1859 = vrot.lane.b32.xlu0 %v562, 56
      %v1860 = vpop.permute.xlu0 %1859
      %v1864 = vsel %vm960, %v1849, 0
      %v1867 = vsel %vm960, %v1850, 0
      %1869 = vmatprep.subr.mxu0 0.0
      %1870 = vmatpush1.msra.mxu0 %v1858
      %1871 = vmatprep.subr.mxu0 0.0
      %1872 = vmatpush1.msra.mxu0 %v1860
      %1873 = vmatprep.subr.mxu0 0.0
      %1874 = vmatpush1.msra.mxu0 0.0
      %1875 = vmatprep.subr.mxu0 0.0
      %1876 = vmatpush1.msra.mxu0 0.0
      %1877 = vmatprep.subr.mxu0 0.0
      %1878 = vmatpush1.msra.mxu0 0.0
      %1879 = vmatprep.subr.mxu0 0.0
      %1880 = vmatpush1.msra.mxu0 0.0
      %1881 = vmatprep.subr.mxu0 0.0
      %1882 = vmatpush1.msra.mxu0 0.0
      %1883 = vmatprep.subr.mxu0 0.0
      %1884 = vmatpush1.msra.mxu0 0.0
      %1885 = vmatprep.subr.mxu0 0.0
      %1886 = vmatpush1.msra.mxu0 0.0
      %1887 = vmatprep.subr.mxu0 0.0
      %1888 = vmatpush1.msra.mxu0 0.0
      %1889 = vmatprep.subr.mxu0 0.0
      %1890 = vmatpush1.msra.mxu0 0.0
      %1891 = vmatprep.subr.mxu0 0.0
      %1892 = vmatpush1.msra.mxu0 0.0
      %1893 = vmatprep.subr.mxu0 0.0
      %1894 = vmatpush1.msra.mxu0 0.0
      %1895 = vmatprep.subr.mxu0 0.0
      %1896 = vmatpush1.msra.mxu0 0.0
      %1897 = vmatprep.subr.mxu0 0.0
      %1898 = vmatpush1.msra.mxu0 0.0
      %1899 = vmatprep.subr.mxu0 0.0
      %1900 = vmatpush1.msra.mxu0 0.0
      %1901 = vmatprep.subr.mxu0 0.0
      %1902 = vmatpush1.msra.mxu0 0.0
      %1903 = vmatprep.subr.mxu0 0.0
      %1904 = vmatpush1.msra.mxu0 0.0
      %1905 = vmatprep.subr.mxu0 0.0
      %1906 = vmatpush1.msra.mxu0 0.0
      %1907 = vmatprep.subr.mxu0 0.0
      %1908 = vmatpush1.msra.mxu0 0.0
      %1909 = vmatprep.subr.mxu0 0.0
      %1910 = vmatpush1.msra.mxu0 0.0
      %1911 = vmatprep.subr.mxu0 0.0
      %1912 = vmatpush1.msra.mxu0 0.0
      %1913 = vmatprep.subr.mxu0 0.0
      %1914 = vmatpush1.msra.mxu0 0.0
      %1915 = vmatprep.subr.mxu0 0.0
      %1916 = vmatpush1.msra.mxu0 0.0
      %1917 = vmatprep.subr.mxu0 0.0
      %1918 = vmatpush1.msra.mxu0 0.0
      %1919 = vmatprep.subr.mxu0 0.0
      %1920 = vmatpush1.msra.mxu0 0.0
      %1921 = vmatprep.subr.mxu0 0.0
      %1922 = vmatpush1.msra.mxu0 0.0
      %1923 = vmatprep.subr.mxu0 0.0
      %1924 = vmatpush1.msra.mxu0 0.0
      %1925 = vmatprep.subr.mxu0 0.0
      %1926 = vmatpush1.msra.mxu0 0.0
      %1927 = vmatprep.subr.mxu0 0.0
      %1928 = vmatpush1.msra.mxu0 0.0
      %1929 = vmatprep.subr.mxu0 0.0
      %1930 = vmatpush1.msra.mxu0 0.0
      %1931 = vmatprep.subr.mxu0 0.0
      %1932 = vmatpush1.msra.mxu0 0.0
      %1933 = vmatprep.mubr.f32.mxu0 0.0
      %1934 = vmatmul.mubr.f32.gmra.mrb[0].mxu0 %v1864
      %v1935 = vpop.f32.mrb[0].mxu0
      %v1936 = vadd.f32 0.0, %v1935
      %v1937 = vpop.f32.mrb[0].mxu0
      %1938 = vmatprep.mubr.f32.mxu0 0.0
      %1939 = vmatmul.mubr.f32.gmra.mrb[0].mxu0 %v1867
      %v1940 = vpop.f32.mrb[0].mxu0
      %v1941 = vadd.f32 0.0, %v1940
      %v1942 = vpop.f32.mrb[0].mxu0
      %1943 = vdwg.mxu0
      %1944 = vrot.lane.b32.xlu0 %v567, 56
      %v1945 = vpop.permute.xlu0 %1944
      %1946 = vrot.lane.b32.xlu0 %v572, 56
      %v1947 = vpop.permute.xlu0 %1946
      %v1951 = vsel %vm960, %v1851, 0
      %v1954 = vsel %vm960, %v1852, 0
      %1956 = vmatprep.subr.mxu0 0.0
      %1957 = vmatpush1.msra.mxu0 %v1945
      %1958 = vmatprep.subr.mxu0 0.0
      %1959 = vmatpush1.msra.mxu0 %v1947
      %1960 = vmatprep.subr.mxu0 0.0
      %1961 = vmatpush1.msra.mxu0 0.0
      %1962 = vmatprep.subr.mxu0 0.0
      %1963 = vmatpush1.msra.mxu0 0.0
      %1964 = vmatprep.subr.mxu0 0.0
      %1965 = vmatpush1.msra.mxu0 0.0
      %1966 = vmatprep.subr.mxu0 0.0
      %1967 = vmatpush1.msra.mxu0 0.0
      %1968 = vmatprep.subr.mxu0 0.0
      %1969 = vmatpush1.msra.mxu0 0.0
      %1970 = vmatprep.subr.mxu0 0.0
      %1971 = vmatpush1.msra.mxu0 0.0
      %1972 = vmatprep.subr.mxu0 0.0
      %1973 = vmatpush1.msra.mxu0 0.0
      %1974 = vmatprep.subr.mxu0 0.0
      %1975 = vmatpush1.msra.mxu0 0.0
      %1976 = vmatprep.subr.mxu0 0.0
      %1977 = vmatpush1.msra.mxu0 0.0
      %1978 = vmatprep.subr.mxu0 0.0
      %1979 = vmatpush1.msra.mxu0 0.0
      %1980 = vmatprep.subr.mxu0 0.0
      %1981 = vmatpush1.msra.mxu0 0.0
      %1982 = vmatprep.subr.mxu0 0.0
      %1983 = vmatpush1.msra.mxu0 0.0
      %1984 = vmatprep.subr.mxu0 0.0
      %1985 = vmatpush1.msra.mxu0 0.0
      %1986 = vmatprep.subr.mxu0 0.0
      %1987 = vmatpush1.msra.mxu0 0.0
      %1988 = vmatprep.subr.mxu0 0.0
      %1989 = vmatpush1.msra.mxu0 0.0
      %1990 = vmatprep.subr.mxu0 0.0
      %1991 = vmatpush1.msra.mxu0 0.0
      %1992 = vmatprep.subr.mxu0 0.0
      %1993 = vmatpush1.msra.mxu0 0.0
      %1994 = vmatprep.subr.mxu0 0.0
      %1995 = vmatpush1.msra.mxu0 0.0
      %1996 = vmatprep.subr.mxu0 0.0
      %1997 = vmatpush1.msra.mxu0 0.0
      %1998 = vmatprep.subr.mxu0 0.0
      %1999 = vmatpush1.msra.mxu0 0.0
      %2000 = vmatprep.subr.mxu0 0.0
      %2001 = vmatpush1.msra.mxu0 0.0
      %2002 = vmatprep.subr.mxu0 0.0
      %2003 = vmatpush1.msra.mxu0 0.0
      %2004 = vmatprep.subr.mxu0 0.0
      %2005 = vmatpush1.msra.mxu0 0.0
      %2006 = vmatprep.subr.mxu0 0.0
      %2007 = vmatpush1.msra.mxu0 0.0
      %2008 = vmatprep.subr.mxu0 0.0
      %2009 = vmatpush1.msra.mxu0 0.0
      %2010 = vmatprep.subr.mxu0 0.0
      %2011 = vmatpush1.msra.mxu0 0.0
      %2012 = vmatprep.subr.mxu0 0.0
      %2013 = vmatpush1.msra.mxu0 0.0
      %2014 = vmatprep.subr.mxu0 0.0
      %2015 = vmatpush1.msra.mxu0 0.0
      %2016 = vmatprep.subr.mxu0 0.0
      %2017 = vmatpush1.msra.mxu0 0.0
      %2018 = vmatprep.subr.mxu0 0.0
      %2019 = vmatpush1.msra.mxu0 0.0
      %2020 = vmatprep.mubr.f32.mxu0 0.0
      %2021 = vmatmul.mubr.f32.gmra.mrb[0].mxu0 %v1951
      %v2022 = vpop.f32.mrb[0].mxu0
      %v2023 = vadd.f32 0.0, %v2022
      %v2024 = vpop.f32.mrb[0].mxu0
      %2025 = vmatprep.mubr.f32.mxu0 0.0
      %2026 = vmatmul.mubr.f32.gmra.mrb[0].mxu0 %v1954
      %v2027 = vpop.f32.mrb[0].mxu0
      %v2028 = vadd.f32 0.0, %v2027
      %v2029 = vpop.f32.mrb[0].mxu0
      %2030 = vdwg.mxu0
      %2031 = vrot.lane.b32.xlu0 %v577, 56
      %v2032 = vpop.permute.xlu0 %2031
      %2033 = vrot.lane.b32.xlu0 %v582, 56
      %v2034 = vpop.permute.xlu0 %2033
      %v2038 = vsel %vm960, %v1853, 0
      %v2041 = vsel %vm960, %v1854, 0
      %2043 = vmatprep.subr.mxu0 0.0
      %2044 = vmatpush1.msra.mxu0 %v2032
      %2045 = vmatprep.subr.mxu0 0.0
      %2046 = vmatpush1.msra.mxu0 %v2034
      %2047 = vmatprep.subr.mxu0 0.0
      %2048 = vmatpush1.msra.mxu0 0.0
      %2049 = vmatprep.subr.mxu0 0.0
      %2050 = vmatpush1.msra.mxu0 0.0
      %2051 = vmatprep.subr.mxu0 0.0
      %2052 = vmatpush1.msra.mxu0 0.0
      %2053 = vmatprep.subr.mxu0 0.0
      %2054 = vmatpush1.msra.mxu0 0.0
      %2055 = vmatprep.subr.mxu0 0.0
      %2056 = vmatpush1.msra.mxu0 0.0
      %2057 = vmatprep.subr.mxu0 0.0
      %2058 = vmatpush1.msra.mxu0 0.0
      %2059 = vmatprep.subr.mxu0 0.0
      %2060 = vmatpush1.msra.mxu0 0.0
      %2061 = vmatprep.subr.mxu0 0.0
      %2062 = vmatpush1.msra.mxu0 0.0
      %2063 = vmatprep.subr.mxu0 0.0
      %2064 = vmatpush1.msra.mxu0 0.0
      %2065 = vmatprep.subr.mxu0 0.0
      %2066 = vmatpush1.msra.mxu0 0.0
      %2067 = vmatprep.subr.mxu0 0.0
      %2068 = vmatpush1.msra.mxu0 0.0
      %2069 = vmatprep.subr.mxu0 0.0
      %2070 = vmatpush1.msra.mxu0 0.0
      %2071 = vmatprep.subr.mxu0 0.0
      %2072 = vmatpush1.msra.mxu0 0.0
      %2073 = vmatprep.subr.mxu0 0.0
      %2074 = vmatpush1.msra.mxu0 0.0
      %2075 = vmatprep.subr.mxu0 0.0
      %2076 = vmatpush1.msra.mxu0 0.0
      %2077 = vmatprep.subr.mxu0 0.0
      %2078 = vmatpush1.msra.mxu0 0.0
      %2079 = vmatprep.subr.mxu0 0.0
      %2080 = vmatpush1.msra.mxu0 0.0
      %2081 = vmatprep.subr.mxu0 0.0
      %2082 = vmatpush1.msra.mxu0 0.0
      %2083 = vmatprep.subr.mxu0 0.0
      %2084 = vmatpush1.msra.mxu0 0.0
      %2085 = vmatprep.subr.mxu0 0.0
      %2086 = vmatpush1.msra.mxu0 0.0
      %2087 = vmatprep.subr.mxu0 0.0
      %2088 = vmatpush1.msra.mxu0 0.0
      %2089 = vmatprep.subr.mxu0 0.0
      %2090 = vmatpush1.msra.mxu0 0.0
      %2091 = vmatprep.subr.mxu0 0.0
      %2092 = vmatpush1.msra.mxu0 0.0
      %2093 = vmatprep.subr.mxu0 0.0
      %2094 = vmatpush1.msra.mxu0 0.0
      %2095 = vmatprep.subr.mxu0 0.0
      %2096 = vmatpush1.msra.mxu0 0.0
      %2097 = vmatprep.subr.mxu0 0.0
      %2098 = vmatpush1.msra.mxu0 0.0
      %2099 = vmatprep.subr.mxu0 0.0
      %2100 = vmatpush1.msra.mxu0 0.0
      %2101 = vmatprep.subr.mxu0 0.0
      %2102 = vmatpush1.msra.mxu0 0.0
      %2103 = vmatprep.subr.mxu0 0.0
      %2104 = vmatpush1.msra.mxu0 0.0
      %2105 = vmatprep.subr.mxu0 0.0
      %2106 = vmatpush1.msra.mxu0 0.0
      %2107 = vmatprep.mubr.f32.mxu0 0.0
      %2108 = vmatmul.mubr.f32.gmra.mrb[0].mxu0 %v2038
      %v2109 = vpop.f32.mrb[0].mxu0
      %v2110 = vadd.f32 0.0, %v2109
      %v2111 = vpop.f32.mrb[0].mxu0
      %2112 = vmatprep.mubr.f32.mxu0 0.0
      %2113 = vmatmul.mubr.f32.gmra.mrb[0].mxu0 %v2041
      %v2114 = vpop.f32.mrb[0].mxu0
      %v2115 = vadd.f32 0.0, %v2114
      %v2116 = vpop.f32.mrb[0].mxu0
      %2117 = vdwg.mxu0
      %2118 = vrot.lane.b32.xlu0 %v587, 56
      %v2119 = vpop.permute.xlu0 %2118
      %2120 = vrot.lane.b32.xlu0 %v592, 56
      %v2121 = vpop.permute.xlu0 %2120
      %v2125 = vsel %vm960, %v1855, 0
      %v2128 = vsel %vm960, %v1856, 0
      %2130 = vmatprep.subr.mxu0 0.0
      %2131 = vmatpush1.msra.mxu0 %v2119
      %2132 = vmatprep.subr.mxu0 0.0
      %2133 = vmatpush1.msra.mxu0 %v2121
      %2134 = vmatprep.subr.mxu0 0.0
      %2135 = vmatpush1.msra.mxu0 0.0
      %2136 = vmatprep.subr.mxu0 0.0
      %2137 = vmatpush1.msra.mxu0 0.0
      %2138 = vmatprep.subr.mxu0 0.0
      %2139 = vmatpush1.msra.mxu0 0.0
      %2140 = vmatprep.subr.mxu0 0.0
      %2141 = vmatpush1.msra.mxu0 0.0
      %2142 = vmatprep.subr.mxu0 0.0
      %2143 = vmatpush1.msra.mxu0 0.0
      %2144 = vmatprep.subr.mxu0 0.0
      %2145 = vmatpush1.msra.mxu0 0.0
      %2146 = vmatprep.subr.mxu0 0.0
      %2147 = vmatpush1.msra.mxu0 0.0
      %2148 = vmatprep.subr.mxu0 0.0
      %2149 = vmatpush1.msra.mxu0 0.0
      %2150 = vmatprep.subr.mxu0 0.0
      %2151 = vmatpush1.msra.mxu0 0.0
      %2152 = vmatprep.subr.mxu0 0.0
      %2153 = vmatpush1.msra.mxu0 0.0
      %2154 = vmatprep.subr.mxu0 0.0
      %2155 = vmatpush1.msra.mxu0 0.0
      %2156 = vmatprep.subr.mxu0 0.0
      %2157 = vmatpush1.msra.mxu0 0.0
      %2158 = vmatprep.subr.mxu0 0.0
      %2159 = vmatpush1.msra.mxu0 0.0
      %2160 = vmatprep.subr.mxu0 0.0
      %2161 = vmatpush1.msra.mxu0 0.0
      %2162 = vmatprep.subr.mxu0 0.0
      %2163 = vmatpush1.msra.mxu0 0.0
      %2164 = vmatprep.subr.mxu0 0.0
      %2165 = vmatpush1.msra.mxu0 0.0
      %2166 = vmatprep.subr.mxu0 0.0
      %2167 = vmatpush1.msra.mxu0 0.0
      %2168 = vmatprep.subr.mxu0 0.0
      %2169 = vmatpush1.msra.mxu0 0.0
      %2170 = vmatprep.subr.mxu0 0.0
      %2171 = vmatpush1.msra.mxu0 0.0
      %2172 = vmatprep.subr.mxu0 0.0
      %2173 = vmatpush1.msra.mxu0 0.0
      %2174 = vmatprep.subr.mxu0 0.0
      %2175 = vmatpush1.msra.mxu0 0.0
      %2176 = vmatprep.subr.mxu0 0.0
      %2177 = vmatpush1.msra.mxu0 0.0
      %2178 = vmatprep.subr.mxu0 0.0
      %2179 = vmatpush1.msra.mxu0 0.0
      %2180 = vmatprep.subr.mxu0 0.0
      %2181 = vmatpush1.msra.mxu0 0.0
      %2182 = vmatprep.subr.mxu0 0.0
      %2183 = vmatpush1.msra.mxu0 0.0
      %2184 = vmatprep.subr.mxu0 0.0
      %2185 = vmatpush1.msra.mxu0 0.0
      %2186 = vmatprep.subr.mxu0 0.0
      %2187 = vmatpush1.msra.mxu0 0.0
      %2188 = vmatprep.subr.mxu0 0.0
      %2189 = vmatpush1.msra.mxu0 0.0
      %2190 = vmatprep.subr.mxu0 0.0
      %2191 = vmatpush1.msra.mxu0 0.0
      %2192 = vmatprep.subr.mxu0 0.0
      %2193 = vmatpush1.msra.mxu0 0.0
      %2194 = vmatprep.mubr.f32.mxu0 0.0
      %2195 = vmatmul.mubr.f32.gmra.mrb[0].mxu0 %v2125
      %v2196 = vpop.f32.mrb[0].mxu0
      %v2197 = vadd.f32 0.0, %v2196
      %v2198 = vpop.f32.mrb[0].mxu0
      %2199 = vmatprep.mubr.f32.mxu0 0.0
      %2200 = vmatmul.mubr.f32.gmra.mrb[0].mxu0 %v2128
      %v2201 = vpop.f32.mrb[0].mxu0
      %v2202 = vadd.f32 0.0, %v2201
      %v2203 = vpop.f32.mrb[0].mxu0
      %2204 = vdwg.mxu0
      %2205 = vrot.lane.b32.xlu0 %v557, 112
      %v2206 = vpop.permute.xlu0 %2205
      %2207 = vrot.lane.b32.xlu0 %v562, 112
      %v2208 = vpop.permute.xlu0 %2207
      %2209 = vrot.lane.b32.xlu0 %v557, 80
      %v2210 = vpop.permute.xlu0 %2209
      %2211 = vrot.lane.b32.xlu0 %v562, 80
      %v2212 = vpop.permute.xlu0 %2211
      %v2213 = vsel %vm601, %v2206, 0
      %v2215 = vsel %vm601, %v2208, 0
      %v2217 = vsel %vm601, %v2210, 0
      %v2219 = vsel %vm601, %v2212, 0
      %2221 = vmatprep.subr.mxu0 0.0
      %2222 = vmatpush1.xpose.msra.mxu0 %v2217
      %2223 = vmatprep.subr.mxu0 0.0
      %2224 = vmatpush1.xpose.msra.mxu0 %v2219
      %2225 = vmatprep.subr.mxu0 0.0
      %2226 = vmatpush1.xpose.msra.mxu0 0.0
      %2227 = vmatprep.subr.mxu0 0.0
      %2228 = vmatpush1.xpose.msra.mxu0 0.0
      %2229 = vmatprep.subr.mxu0 0.0
      %2230 = vmatpush1.xpose.msra.mxu0 0.0
      %2231 = vmatprep.subr.mxu0 0.0
      %2232 = vmatpush1.xpose.msra.mxu0 0.0
      %2233 = vmatprep.subr.mxu0 0.0
      %2234 = vmatpush1.xpose.msra.mxu0 0.0
      %2235 = vmatprep.subr.mxu0 0.0
      %2236 = vmatpush1.xpose.msra.mxu0 0.0
      %2237 = vmatprep.subr.mxu0 0.0
      %2238 = vmatpush1.xpose.msra.mxu0 0.0
      %2239 = vmatprep.subr.mxu0 0.0
      %2240 = vmatpush1.xpose.msra.mxu0 0.0
      %2241 = vmatprep.subr.mxu0 0.0
      %2242 = vmatpush1.xpose.msra.mxu0 0.0
      %2243 = vmatprep.subr.mxu0 0.0
      %2244 = vmatpush1.xpose.msra.mxu0 0.0
      %2245 = vmatprep.subr.mxu0 0.0
      %2246 = vmatpush1.xpose.msra.mxu0 0.0
      %2247 = vmatprep.subr.mxu0 0.0
      %2248 = vmatpush1.xpose.msra.mxu0 0.0
      %2249 = vmatprep.subr.mxu0 0.0
      %2250 = vmatpush1.xpose.msra.mxu0 0.0
      %2251 = vmatprep.subr.mxu0 0.0
      %2252 = vmatpush1.xpose.msra.mxu0 0.0
      %2253 = vmatprep.subr.mxu0 0.0
      %2254 = vmatpush1.xpose.msra.mxu0 0.0
      %2255 = vmatprep.subr.mxu0 0.0
      %2256 = vmatpush1.xpose.msra.mxu0 0.0
      %2257 = vmatprep.subr.mxu0 0.0
      %2258 = vmatpush1.xpose.msra.mxu0 0.0
      %2259 = vmatprep.subr.mxu0 0.0
      %2260 = vmatpush1.xpose.msra.mxu0 0.0
      %2261 = vmatprep.subr.mxu0 0.0
      %2262 = vmatpush1.xpose.msra.mxu0 0.0
      %2263 = vmatprep.subr.mxu0 0.0
      %2264 = vmatpush1.xpose.msra.mxu0 0.0
      %2265 = vmatprep.subr.mxu0 0.0
      %2266 = vmatpush1.xpose.msra.mxu0 0.0
      %2267 = vmatprep.subr.mxu0 0.0
      %2268 = vmatpush1.xpose.msra.mxu0 0.0
      %2269 = vmatprep.subr.mxu0 0.0
      %2270 = vmatpush1.xpose.msra.mxu0 0.0
      %2271 = vmatprep.subr.mxu0 0.0
      %2272 = vmatpush1.xpose.msra.mxu0 0.0
      %2273 = vmatprep.subr.mxu0 0.0
      %2274 = vmatpush1.xpose.msra.mxu0 0.0
      %2275 = vmatprep.subr.mxu0 0.0
      %2276 = vmatpush1.xpose.msra.mxu0 0.0
      %2277 = vmatprep.subr.mxu0 0.0
      %2278 = vmatpush1.xpose.msra.mxu0 0.0
      %2279 = vmatprep.subr.mxu0 0.0
      %2280 = vmatpush1.xpose.msra.mxu0 0.0
      %2281 = vmatprep.subr.mxu0 0.0
      %2282 = vmatpush1.xpose.msra.mxu0 0.0
      %2283 = vmatprep.subr.mxu0 0.0
      %2284 = vmatpush1.xpose.msra.mxu0 0.0
      %2285 = vmatprep.mubr.f32.mxu0 0.0
      %2286 = vmatmul.mubr.f32.gmra.mrb[0].mxu0 %v2213
      %v2287 = vpop.f32.mrb[0].mxu0
      %v2288 = vadd.f32 0.0, %v2287
      %v2289 = vpop.f32.mrb[0].mxu0
      %2290 = vmatprep.mubr.f32.mxu0 0.0
      %2291 = vmatmul.mubr.f32.gmra.mrb[0].mxu0 %v2215
      %v2292 = vpop.f32.mrb[0].mxu0
      %v2293 = vadd.f32 0.0, %v2292
      %v2294 = vpop.f32.mrb[0].mxu0
      %2295 = vdwg.mxu0
      %2296 = vrot.lane.b32.xlu0 %v567, 112
      %v2297 = vpop.permute.xlu0 %2296
      %2298 = vrot.lane.b32.xlu0 %v572, 112
      %v2299 = vpop.permute.xlu0 %2298
      %2300 = vrot.lane.b32.xlu0 %v567, 80
      %v2301 = vpop.permute.xlu0 %2300
      %2302 = vrot.lane.b32.xlu0 %v572, 80
      %v2303 = vpop.permute.xlu0 %2302
      %v2304 = vsel %vm601, %v2297, 0
      %v2306 = vsel %vm601, %v2299, 0
      %v2308 = vsel %vm601, %v2301, 0
      %v2310 = vsel %vm601, %v2303, 0
      %2312 = vmatprep.subr.mxu0 0.0
      %2313 = vmatpush1.xpose.msra.mxu0 %v2308
      %2314 = vmatprep.subr.mxu0 0.0
      %2315 = vmatpush1.xpose.msra.mxu0 %v2310
      %2316 = vmatprep.subr.mxu0 0.0
      %2317 = vmatpush1.xpose.msra.mxu0 0.0
      %2318 = vmatprep.subr.mxu0 0.0
      %2319 = vmatpush1.xpose.msra.mxu0 0.0
      %2320 = vmatprep.subr.mxu0 0.0
      %2321 = vmatpush1.xpose.msra.mxu0 0.0
      %2322 = vmatprep.subr.mxu0 0.0
      %2323 = vmatpush1.xpose.msra.mxu0 0.0
      %2324 = vmatprep.subr.mxu0 0.0
      %2325 = vmatpush1.xpose.msra.mxu0 0.0
      %2326 = vmatprep.subr.mxu0 0.0
      %2327 = vmatpush1.xpose.msra.mxu0 0.0
      %2328 = vmatprep.subr.mxu0 0.0
      %2329 = vmatpush1.xpose.msra.mxu0 0.0
      %2330 = vmatprep.subr.mxu0 0.0
      %2331 = vmatpush1.xpose.msra.mxu0 0.0
      %2332 = vmatprep.subr.mxu0 0.0
      %2333 = vmatpush1.xpose.msra.mxu0 0.0
      %2334 = vmatprep.subr.mxu0 0.0
      %2335 = vmatpush1.xpose.msra.mxu0 0.0
      %2336 = vmatprep.subr.mxu0 0.0
      %2337 = vmatpush1.xpose.msra.mxu0 0.0
      %2338 = vmatprep.subr.mxu0 0.0
      %2339 = vmatpush1.xpose.msra.mxu0 0.0
      %2340 = vmatprep.subr.mxu0 0.0
      %2341 = vmatpush1.xpose.msra.mxu0 0.0
      %2342 = vmatprep.subr.mxu0 0.0
      %2343 = vmatpush1.xpose.msra.mxu0 0.0
      %2344 = vmatprep.subr.mxu0 0.0
      %2345 = vmatpush1.xpose.msra.mxu0 0.0
      %2346 = vmatprep.subr.mxu0 0.0
      %2347 = vmatpush1.xpose.msra.mxu0 0.0
      %2348 = vmatprep.subr.mxu0 0.0
      %2349 = vmatpush1.xpose.msra.mxu0 0.0
      %2350 = vmatprep.subr.mxu0 0.0
      %2351 = vmatpush1.xpose.msra.mxu0 0.0
      %2352 = vmatprep.subr.mxu0 0.0
      %2353 = vmatpush1.xpose.msra.mxu0 0.0
      %2354 = vmatprep.subr.mxu0 0.0
      %2355 = vmatpush1.xpose.msra.mxu0 0.0
      %2356 = vmatprep.subr.mxu0 0.0
      %2357 = vmatpush1.xpose.msra.mxu0 0.0
      %2358 = vmatprep.subr.mxu0 0.0
      %2359 = vmatpush1.xpose.msra.mxu0 0.0
      %2360 = vmatprep.subr.mxu0 0.0
      %2361 = vmatpush1.xpose.msra.mxu0 0.0
      %2362 = vmatprep.subr.mxu0 0.0
      %2363 = vmatpush1.xpose.msra.mxu0 0.0
      %2364 = vmatprep.subr.mxu0 0.0
      %2365 = vmatpush1.xpose.msra.mxu0 0.0
      %2366 = vmatprep.subr.mxu0 0.0
      %2367 = vmatpush1.xpose.msra.mxu0 0.0
      %2368 = vmatprep.subr.mxu0 0.0
      %2369 = vmatpush1.xpose.msra.mxu0 0.0
      %2370 = vmatprep.subr.mxu0 0.0
      %2371 = vmatpush1.xpose.msra.mxu0 0.0
      %2372 = vmatprep.subr.mxu0 0.0
      %2373 = vmatpush1.xpose.msra.mxu0 0.0
      %2374 = vmatprep.subr.mxu0 0.0
      %2375 = vmatpush1.xpose.msra.mxu0 0.0
      %2376 = vmatprep.mubr.f32.mxu0 0.0
      %2377 = vmatmul.mubr.f32.gmra.mrb[0].mxu0 %v2304
      %v2378 = vpop.f32.mrb[0].mxu0
      %v2379 = vadd.f32 0.0, %v2378
      %v2380 = vpop.f32.mrb[0].mxu0
      %2381 = vmatprep.mubr.f32.mxu0 0.0
      %2382 = vmatmul.mubr.f32.gmra.mrb[0].mxu0 %v2306
      %v2383 = vpop.f32.mrb[0].mxu0
      %v2384 = vadd.f32 0.0, %v2383
      %v2385 = vpop.f32.mrb[0].mxu0
      %2386 = vdwg.mxu0
      %2387 = vrot.lane.b32.xlu0 %v577, 112
      %v2388 = vpop.permute.xlu0 %2387
      %2389 = vrot.lane.b32.xlu0 %v582, 112
      %v2390 = vpop.permute.xlu0 %2389
      %2391 = vrot.lane.b32.xlu0 %v577, 80
      %v2392 = vpop.permute.xlu0 %2391
      %2393 = vrot.lane.b32.xlu0 %v582, 80
      %v2394 = vpop.permute.xlu0 %2393
      %v2395 = vsel %vm601, %v2388, 0
      %v2397 = vsel %vm601, %v2390, 0
      %v2399 = vsel %vm601, %v2392, 0
      %v2401 = vsel %vm601, %v2394, 0
      %2403 = vmatprep.subr.mxu0 0.0
      %2404 = vmatpush1.xpose.msra.mxu0 %v2399
      %2405 = vmatprep.subr.mxu0 0.0
      %2406 = vmatpush1.xpose.msra.mxu0 %v2401
      %2407 = vmatprep.subr.mxu0 0.0
      %2408 = vmatpush1.xpose.msra.mxu0 0.0
      %2409 = vmatprep.subr.mxu0 0.0
      %2410 = vmatpush1.xpose.msra.mxu0 0.0
      %2411 = vmatprep.subr.mxu0 0.0
      %2412 = vmatpush1.xpose.msra.mxu0 0.0
      %2413 = vmatprep.subr.mxu0 0.0
      %2414 = vmatpush1.xpose.msra.mxu0 0.0
      %2415 = vmatprep.subr.mxu0 0.0
      %2416 = vmatpush1.xpose.msra.mxu0 0.0
      %2417 = vmatprep.subr.mxu0 0.0
      %2418 = vmatpush1.xpose.msra.mxu0 0.0
      %2419 = vmatprep.subr.mxu0 0.0
      %2420 = vmatpush1.xpose.msra.mxu0 0.0
      %2421 = vmatprep.subr.mxu0 0.0
      %2422 = vmatpush1.xpose.msra.mxu0 0.0
      %2423 = vmatprep.subr.mxu0 0.0
      %2424 = vmatpush1.xpose.msra.mxu0 0.0
      %2425 = vmatprep.subr.mxu0 0.0
      %2426 = vmatpush1.xpose.msra.mxu0 0.0
      %2427 = vmatprep.subr.mxu0 0.0
      %2428 = vmatpush1.xpose.msra.mxu0 0.0
      %2429 = vmatprep.subr.mxu0 0.0
      %2430 = vmatpush1.xpose.msra.mxu0 0.0
      %2431 = vmatprep.subr.mxu0 0.0
      %2432 = vmatpush1.xpose.msra.mxu0 0.0
      %2433 = vmatprep.subr.mxu0 0.0
      %2434 = vmatpush1.xpose.msra.mxu0 0.0
      %2435 = vmatprep.subr.mxu0 0.0
      %2436 = vmatpush1.xpose.msra.mxu0 0.0
      %2437 = vmatprep.subr.mxu0 0.0
      %2438 = vmatpush1.xpose.msra.mxu0 0.0
      %2439 = vmatprep.subr.mxu0 0.0
      %2440 = vmatpush1.xpose.msra.mxu0 0.0
      %2441 = vmatprep.subr.mxu0 0.0
      %2442 = vmatpush1.xpose.msra.mxu0 0.0
      %2443 = vmatprep.subr.mxu0 0.0
      %2444 = vmatpush1.xpose.msra.mxu0 0.0
      %2445 = vmatprep.subr.mxu0 0.0
      %2446 = vmatpush1.xpose.msra.mxu0 0.0
      %2447 = vmatprep.subr.mxu0 0.0
      %2448 = vmatpush1.xpose.msra.mxu0 0.0
      %2449 = vmatprep.subr.mxu0 0.0
      %2450 = vmatpush1.xpose.msra.mxu0 0.0
      %2451 = vmatprep.subr.mxu0 0.0
      %2452 = vmatpush1.xpose.msra.mxu0 0.0
      %2453 = vmatprep.subr.mxu0 0.0
      %2454 = vmatpush1.xpose.msra.mxu0 0.0
      %2455 = vmatprep.subr.mxu0 0.0
      %2456 = vmatpush1.xpose.msra.mxu0 0.0
      %2457 = vmatprep.subr.mxu0 0.0
      %2458 = vmatpush1.xpose.msra.mxu0 0.0
      %2459 = vmatprep.subr.mxu0 0.0
      %2460 = vmatpush1.xpose.msra.mxu0 0.0
      %2461 = vmatprep.subr.mxu0 0.0
      %2462 = vmatpush1.xpose.msra.mxu0 0.0
      %2463 = vmatprep.subr.mxu0 0.0
      %2464 = vmatpush1.xpose.msra.mxu0 0.0
      %2465 = vmatprep.subr.mxu0 0.0
      %2466 = vmatpush1.xpose.msra.mxu0 0.0
      %2467 = vmatprep.mubr.f32.mxu0 0.0
      %2468 = vmatmul.mubr.f32.gmra.mrb[0].mxu0 %v2395
      %v2469 = vpop.f32.mrb[0].mxu0
      %v2470 = vadd.f32 0.0, %v2469
      %v2471 = vpop.f32.mrb[0].mxu0
      %2472 = vmatprep.mubr.f32.mxu0 0.0
      %2473 = vmatmul.mubr.f32.gmra.mrb[0].mxu0 %v2397
      %v2474 = vpop.f32.mrb[0].mxu0
      %v2475 = vadd.f32 0.0, %v2474
      %v2476 = vpop.f32.mrb[0].mxu0
      %2477 = vdwg.mxu0
      %2478 = vrot.lane.b32.xlu0 %v587, 112
      %v2479 = vpop.permute.xlu0 %2478
      %2480 = vrot.lane.b32.xlu0 %v592, 112
      %v2481 = vpop.permute.xlu0 %2480
      %2482 = vrot.lane.b32.xlu0 %v587, 80
      %v2483 = vpop.permute.xlu0 %2482
      %2484 = vrot.lane.b32.xlu0 %v592, 80
      %v2485 = vpop.permute.xlu0 %2484
      %v2486 = vsel %vm601, %v2479, 0
      %v2488 = vsel %vm601, %v2481, 0
      %v2490 = vsel %vm601, %v2483, 0
      %v2492 = vsel %vm601, %v2485, 0
      %2494 = vmatprep.subr.mxu0 0.0
      %2495 = vmatpush1.xpose.msra.mxu0 %v2490
      %2496 = vmatprep.subr.mxu0 0.0
      %2497 = vmatpush1.xpose.msra.mxu0 %v2492
      %2498 = vmatprep.subr.mxu0 0.0
      %2499 = vmatpush1.xpose.msra.mxu0 0.0
      %2500 = vmatprep.subr.mxu0 0.0
      %2501 = vmatpush1.xpose.msra.mxu0 0.0
      %2502 = vmatprep.subr.mxu0 0.0
      %2503 = vmatpush1.xpose.msra.mxu0 0.0
      %2504 = vmatprep.subr.mxu0 0.0
      %2505 = vmatpush1.xpose.msra.mxu0 0.0
      %2506 = vmatprep.subr.mxu0 0.0
      %2507 = vmatpush1.xpose.msra.mxu0 0.0
      %2508 = vmatprep.subr.mxu0 0.0
      %2509 = vmatpush1.xpose.msra.mxu0 0.0
      %2510 = vmatprep.subr.mxu0 0.0
      %2511 = vmatpush1.xpose.msra.mxu0 0.0
      %2512 = vmatprep.subr.mxu0 0.0
      %2513 = vmatpush1.xpose.msra.mxu0 0.0
      %2514 = vmatprep.subr.mxu0 0.0
      %2515 = vmatpush1.xpose.msra.mxu0 0.0
      %2516 = vmatprep.subr.mxu0 0.0
      %2517 = vmatpush1.xpose.msra.mxu0 0.0
      %2518 = vmatprep.subr.mxu0 0.0
      %2519 = vmatpush1.xpose.msra.mxu0 0.0
      %2520 = vmatprep.subr.mxu0 0.0
      %2521 = vmatpush1.xpose.msra.mxu0 0.0
      %2522 = vmatprep.subr.mxu0 0.0
      %2523 = vmatpush1.xpose.msra.mxu0 0.0
      %2524 = vmatprep.subr.mxu0 0.0
      %2525 = vmatpush1.xpose.msra.mxu0 0.0
      %2526 = vmatprep.subr.mxu0 0.0
      %2527 = vmatpush1.xpose.msra.mxu0 0.0
      %2528 = vmatprep.subr.mxu0 0.0
      %2529 = vmatpush1.xpose.msra.mxu0 0.0
      %2530 = vmatprep.subr.mxu0 0.0
      %2531 = vmatpush1.xpose.msra.mxu0 0.0
      %2532 = vmatprep.subr.mxu0 0.0
      %2533 = vmatpush1.xpose.msra.mxu0 0.0
      %2534 = vmatprep.subr.mxu0 0.0
      %2535 = vmatpush1.xpose.msra.mxu0 0.0
      %2536 = vmatprep.subr.mxu0 0.0
      %2537 = vmatpush1.xpose.msra.mxu0 0.0
      %2538 = vmatprep.subr.mxu0 0.0
      %2539 = vmatpush1.xpose.msra.mxu0 0.0
      %2540 = vmatprep.subr.mxu0 0.0
      %2541 = vmatpush1.xpose.msra.mxu0 0.0
      %2542 = vmatprep.subr.mxu0 0.0
      %2543 = vmatpush1.xpose.msra.mxu0 0.0
      %2544 = vmatprep.subr.mxu0 0.0
      %2545 = vmatpush1.xpose.msra.mxu0 0.0
      %2546 = vmatprep.subr.mxu0 0.0
      %2547 = vmatpush1.xpose.msra.mxu0 0.0
      %2548 = vmatprep.subr.mxu0 0.0
      %2549 = vmatpush1.xpose.msra.mxu0 0.0
      %2550 = vmatprep.subr.mxu0 0.0
      %2551 = vmatpush1.xpose.msra.mxu0 0.0
      %2552 = vmatprep.subr.mxu0 0.0
      %2553 = vmatpush1.xpose.msra.mxu0 0.0
      %2554 = vmatprep.subr.mxu0 0.0
      %2555 = vmatpush1.xpose.msra.mxu0 0.0
      %2556 = vmatprep.subr.mxu0 0.0
      %2557 = vmatpush1.xpose.msra.mxu0 0.0
      %2558 = vmatprep.mubr.f32.mxu0 0.0
      %2559 = vmatmul.mubr.f32.gmra.mrb[0].mxu0 %v2486
      %v2560 = vpop.f32.mrb[0].mxu0
      %v2561 = vadd.f32 0.0, %v2560
      %v2562 = vpop.f32.mrb[0].mxu0
      %2563 = vmatprep.mubr.f32.mxu0 0.0
      %2564 = vmatmul.mubr.f32.gmra.mrb[0].mxu0 %v2488
      %v2565 = vpop.f32.mrb[0].mxu0
      %v2566 = vadd.f32 0.0, %v2565
      %v2567 = vpop.f32.mrb[0].mxu0
      %2568 = vdwg.mxu0
      %v2569 = vmul.f32 %v2288, 0.35355338
      %v2570 = vmul.f32 %v2293, 0.35355338
      %v2571 = vmul.f32 %v2379, 0.35355338
      %v2572 = vmul.f32 %v2384, 0.35355338
      %v2573 = vmul.f32 %v2470, 0.35355338
      %v2574 = vmul.f32 %v2475, 0.35355338
      %v2575 = vmul.f32 %v2561, 0.35355338
      %v2576 = vmul.f32 %v2566, 0.35355338
      %v2577 = vsel %vm960, %v2569, -inf
      %2578 = vmax.xlane.f32.xlu0 %v2577
      %v2579 = vpop.xlane.xlu0 %2578
      %v2580 = vsel %vm960, %v2570, -inf
      %2581 = vmax.xlane.f32.xlu0 %v2580
      %v2582 = vpop.xlane.xlu0 %2581
      %v2583 = vsel %vm960, %v2571, -inf
      %2584 = vmax.xlane.f32.xlu0 %v2583
      %v2585 = vpop.xlane.xlu0 %2584
      %v2586 = vsel %vm960, %v2572, -inf
      %2587 = vmax.xlane.f32.xlu0 %v2586
      %v2588 = vpop.xlane.xlu0 %2587
      %v2589 = vsel %vm960, %v2573, -inf
      %2590 = vmax.xlane.f32.xlu0 %v2589
      %v2591 = vpop.xlane.xlu0 %2590
      %v2592 = vsel %vm960, %v2574, -inf
      %2593 = vmax.xlane.f32.xlu0 %v2592
      %v2594 = vpop.xlane.xlu0 %2593
      %v2595 = vsel %vm960, %v2575, -inf
      %2596 = vmax.xlane.f32.xlu0 %v2595
      %v2597 = vpop.xlane.xlu0 %2596
      %v2598 = vsel %vm960, %v2576, -inf
      %2599 = vmax.xlane.f32.xlu0 %v2598
      %v2600 = vpop.xlane.xlu0 %2599
      %v2601 = vsub.f32 %v2569, %v2579
      %v2602 = vsub.f32 %v2570, %v2582
      %v2603 = vsub.f32 %v2571, %v2585
      %v2604 = vsub.f32 %v2572, %v2588
      %v2605 = vsub.f32 %v2573, %v2591
      %v2606 = vsub.f32 %v2574, %v2594
      %v2607 = vsub.f32 %v2575, %v2597
      %v2608 = vsub.f32 %v2576, %v2600
      %v2609 = vmul.f32 %v2601, 1.442695
      %v2610 = vpow.pop %v2609
      %v2611 = vmul.f32 %v2602, 1.442695
      %v2612 = vpow.pop %v2611
      %v2613 = vmul.f32 %v2603, 1.442695
      %v2614 = vpow.pop %v2613
      %v2615 = vmul.f32 %v2604, 1.442695
      %v2616 = vpow.pop %v2615
      %v2617 = vmul.f32 %v2605, 1.442695
      %v2618 = vpow.pop %v2617
      %v2619 = vmul.f32 %v2606, 1.442695
      %v2620 = vpow.pop %v2619
      %v2621 = vmul.f32 %v2607, 1.442695
      %v2622 = vpow.pop %v2621
      %v2623 = vmul.f32 %v2608, 1.442695
      %v2624 = vpow.pop %v2623
      %v2625 = vsel %vm960, %v2610, 0.0
      %2626 = vadd.xlane.f32.xlu0 %v2625
      %v2627 = vpop.xlane.xlu0 %2626
      %v2628 = vsel %vm960, %v2612, 0.0
      %2629 = vadd.xlane.f32.xlu0 %v2628
      %v2630 = vpop.xlane.xlu0 %2629
      %v2631 = vsel %vm960, %v2614, 0.0
      %2632 = vadd.xlane.f32.xlu0 %v2631
      %v2633 = vpop.xlane.xlu0 %2632
      %v2634 = vsel %vm960, %v2616, 0.0
      %2635 = vadd.xlane.f32.xlu0 %v2634
      %v2636 = vpop.xlane.xlu0 %2635
      %v2637 = vsel %vm960, %v2618, 0.0
      %2638 = vadd.xlane.f32.xlu0 %v2637
      %v2639 = vpop.xlane.xlu0 %2638
      %v2640 = vsel %vm960, %v2620, 0.0
      %2641 = vadd.xlane.f32.xlu0 %v2640
      %v2642 = vpop.xlane.xlu0 %2641
      %v2643 = vsel %vm960, %v2622, 0.0
      %2644 = vadd.xlane.f32.xlu0 %v2643
      %v2645 = vpop.xlane.xlu0 %2644
      %v2646 = vsel %vm960, %v2624, 0.0
      %2647 = vadd.xlane.f32.xlu0 %v2646
      %v2648 = vpop.xlane.xlu0 %2647
      %v2649 = vrcp.pop %v2627
      %v2650 = vrcp.pop %v2630
      %v2651 = vrcp.pop %v2633
      %v2652 = vrcp.pop %v2636
      %v2653 = vrcp.pop %v2639
      %v2654 = vrcp.pop %v2642
      %v2655 = vrcp.pop %v2645
      %v2656 = vrcp.pop %v2648
      %v2657 = vmul.f32 %v2610, %v2649
      %v2658 = vmul.f32 %v2612, %v2650
      %v2659 = vmul.f32 %v2614, %v2651
      %v2660 = vmul.f32 %v2616, %v2652
      %v2661 = vmul.f32 %v2618, %v2653
      %v2662 = vmul.f32 %v2620, %v2654
      %v2663 = vmul.f32 %v2622, %v2655
      %v2664 = vmul.f32 %v2624, %v2656
      %2665 = vrot.lane.b32.xlu0 %v557, 48
      %v2666 = vpop.permute.xlu0 %2665
      %2667 = vrot.lane.b32.xlu0 %v562, 48
      %v2668 = vpop.permute.xlu0 %2667
      %v2672 = vsel %vm960, %v2657, 0
      %v2675 = vsel %vm960, %v2658, 0
      %2677 = vmatprep.subr.mxu0 0.0
      %2678 = vmatpush1.msra.mxu0 %v2666
      %2679 = vmatprep.subr.mxu0 0.0
      %2680 = vmatpush1.msra.mxu0 %v2668
      %2681 = vmatprep.subr.mxu0 0.0
      %2682 = vmatpush1.msra.mxu0 0.0
      %2683 = vmatprep.subr.mxu0 0.0
      %2684 = vmatpush1.msra.mxu0 0.0
      %2685 = vmatprep.subr.mxu0 0.0
      %2686 = vmatpush1.msra.mxu0 0.0
      %2687 = vmatprep.subr.mxu0 0.0
      %2688 = vmatpush1.msra.mxu0 0.0
      %2689 = vmatprep.subr.mxu0 0.0
      %2690 = vmatpush1.msra.mxu0 0.0
      %2691 = vmatprep.subr.mxu0 0.0
      %2692 = vmatpush1.msra.mxu0 0.0
      %2693 = vmatprep.subr.mxu0 0.0
      %2694 = vmatpush1.msra.mxu0 0.0
      %2695 = vmatprep.subr.mxu0 0.0
      %2696 = vmatpush1.msra.mxu0 0.0
      %2697 = vmatprep.subr.mxu0 0.0
      %2698 = vmatpush1.msra.mxu0 0.0
      %2699 = vmatprep.subr.mxu0 0.0
      %2700 = vmatpush1.msra.mxu0 0.0
      %2701 = vmatprep.subr.mxu0 0.0
      %2702 = vmatpush1.msra.mxu0 0.0
      %2703 = vmatprep.subr.mxu0 0.0
      %2704 = vmatpush1.msra.mxu0 0.0
      %2705 = vmatprep.subr.mxu0 0.0
      %2706 = vmatpush1.msra.mxu0 0.0
      %2707 = vmatprep.subr.mxu0 0.0
      %2708 = vmatpush1.msra.mxu0 0.0
      %2709 = vmatprep.subr.mxu0 0.0
      %2710 = vmatpush1.msra.mxu0 0.0
      %2711 = vmatprep.subr.mxu0 0.0
      %2712 = vmatpush1.msra.mxu0 0.0
      %2713 = vmatprep.subr.mxu0 0.0
      %2714 = vmatpush1.msra.mxu0 0.0
      %2715 = vmatprep.subr.mxu0 0.0
      %2716 = vmatpush1.msra.mxu0 0.0
      %2717 = vmatprep.subr.mxu0 0.0
      %2718 = vmatpush1.msra.mxu0 0.0
      %2719 = vmatprep.subr.mxu0 0.0
      %2720 = vmatpush1.msra.mxu0 0.0
      %2721 = vmatprep.subr.mxu0 0.0
      %2722 = vmatpush1.msra.mxu0 0.0
      %2723 = vmatprep.subr.mxu0 0.0
      %2724 = vmatpush1.msra.mxu0 0.0
      %2725 = vmatprep.subr.mxu0 0.0
      %2726 = vmatpush1.msra.mxu0 0.0
      %2727 = vmatprep.subr.mxu0 0.0
      %2728 = vmatpush1.msra.mxu0 0.0
      %2729 = vmatprep.subr.mxu0 0.0
      %2730 = vmatpush1.msra.mxu0 0.0
      %2731 = vmatprep.subr.mxu0 0.0
      %2732 = vmatpush1.msra.mxu0 0.0
      %2733 = vmatprep.subr.mxu0 0.0
      %2734 = vmatpush1.msra.mxu0 0.0
      %2735 = vmatprep.subr.mxu0 0.0
      %2736 = vmatpush1.msra.mxu0 0.0
      %2737 = vmatprep.subr.mxu0 0.0
      %2738 = vmatpush1.msra.mxu0 0.0
      %2739 = vmatprep.subr.mxu0 0.0
      %2740 = vmatpush1.msra.mxu0 0.0
      %2741 = vmatprep.mubr.f32.mxu0 0.0
      %2742 = vmatmul.mubr.f32.gmra.mrb[0].mxu0 %v2672
      %v2743 = vpop.f32.mrb[0].mxu0
      %v2744 = vadd.f32 0.0, %v2743
      %v2745 = vpop.f32.mrb[0].mxu0
      %2746 = vmatprep.mubr.f32.mxu0 0.0
      %2747 = vmatmul.mubr.f32.gmra.mrb[0].mxu0 %v2675
      %v2748 = vpop.f32.mrb[0].mxu0
      %v2749 = vadd.f32 0.0, %v2748
      %v2750 = vpop.f32.mrb[0].mxu0
      %2751 = vdwg.mxu0
      %2752 = vrot.lane.b32.xlu0 %v567, 48
      %v2753 = vpop.permute.xlu0 %2752
      %2754 = vrot.lane.b32.xlu0 %v572, 48
      %v2755 = vpop.permute.xlu0 %2754
      %v2759 = vsel %vm960, %v2659, 0
      %v2762 = vsel %vm960, %v2660, 0
      %2764 = vmatprep.subr.mxu0 0.0
      %2765 = vmatpush1.msra.mxu0 %v2753
      %2766 = vmatprep.subr.mxu0 0.0
      %2767 = vmatpush1.msra.mxu0 %v2755
      %2768 = vmatprep.subr.mxu0 0.0
      %2769 = vmatpush1.msra.mxu0 0.0
      %2770 = vmatprep.subr.mxu0 0.0
      %2771 = vmatpush1.msra.mxu0 0.0
      %2772 = vmatprep.subr.mxu0 0.0
      %2773 = vmatpush1.msra.mxu0 0.0
      %2774 = vmatprep.subr.mxu0 0.0
      %2775 = vmatpush1.msra.mxu0 0.0
      %2776 = vmatprep.subr.mxu0 0.0
      %2777 = vmatpush1.msra.mxu0 0.0
      %2778 = vmatprep.subr.mxu0 0.0
      %2779 = vmatpush1.msra.mxu0 0.0
      %2780 = vmatprep.subr.mxu0 0.0
      %2781 = vmatpush1.msra.mxu0 0.0
      %2782 = vmatprep.subr.mxu0 0.0
      %2783 = vmatpush1.msra.mxu0 0.0
      %2784 = vmatprep.subr.mxu0 0.0
      %2785 = vmatpush1.msra.mxu0 0.0
      %2786 = vmatprep.subr.mxu0 0.0
      %2787 = vmatpush1.msra.mxu0 0.0
      %2788 = vmatprep.subr.mxu0 0.0
      %2789 = vmatpush1.msra.mxu0 0.0
      %2790 = vmatprep.subr.mxu0 0.0
      %2791 = vmatpush1.msra.mxu0 0.0
      %2792 = vmatprep.subr.mxu0 0.0
      %2793 = vmatpush1.msra.mxu0 0.0
      %2794 = vmatprep.subr.mxu0 0.0
      %2795 = vmatpush1.msra.mxu0 0.0
      %2796 = vmatprep.subr.mxu0 0.0
      %2797 = vmatpush1.msra.mxu0 0.0
      %2798 = vmatprep.subr.mxu0 0.0
      %2799 = vmatpush1.msra.mxu0 0.0
      %2800 = vmatprep.subr.mxu0 0.0
      %2801 = vmatpush1.msra.mxu0 0.0
      %2802 = vmatprep.subr.mxu0 0.0
      %2803 = vmatpush1.msra.mxu0 0.0
      %2804 = vmatprep.subr.mxu0 0.0
      %2805 = vmatpush1.msra.mxu0 0.0
      %2806 = vmatprep.subr.mxu0 0.0
      %2807 = vmatpush1.msra.mxu0 0.0
      %2808 = vmatprep.subr.mxu0 0.0
      %2809 = vmatpush1.msra.mxu0 0.0
      %2810 = vmatprep.subr.mxu0 0.0
      %2811 = vmatpush1.msra.mxu0 0.0
      %2812 = vmatprep.subr.mxu0 0.0
      %2813 = vmatpush1.msra.mxu0 0.0
      %2814 = vmatprep.subr.mxu0 0.0
      %2815 = vmatpush1.msra.mxu0 0.0
      %2816 = vmatprep.subr.mxu0 0.0
      %2817 = vmatpush1.msra.mxu0 0.0
      %2818 = vmatprep.subr.mxu0 0.0
      %2819 = vmatpush1.msra.mxu0 0.0
      %2820 = vmatprep.subr.mxu0 0.0
      %2821 = vmatpush1.msra.mxu0 0.0
      %2822 = vmatprep.subr.mxu0 0.0
      %2823 = vmatpush1.msra.mxu0 0.0
      %2824 = vmatprep.subr.mxu0 0.0
      %2825 = vmatpush1.msra.mxu0 0.0
      %2826 = vmatprep.subr.mxu0 0.0
      %2827 = vmatpush1.msra.mxu0 0.0
      %2828 = vmatprep.mubr.f32.mxu0 0.0
      %2829 = vmatmul.mubr.f32.gmra.mrb[0].mxu0 %v2759
      %v2830 = vpop.f32.mrb[0].mxu0
      %v2831 = vadd.f32 0.0, %v2830
      %v2832 = vpop.f32.mrb[0].mxu0
      %2833 = vmatprep.mubr.f32.mxu0 0.0
      %2834 = vmatmul.mubr.f32.gmra.mrb[0].mxu0 %v2762
      %v2835 = vpop.f32.mrb[0].mxu0
      %v2836 = vadd.f32 0.0, %v2835
      %v2837 = vpop.f32.mrb[0].mxu0
      %2838 = vdwg.mxu0
      %2839 = vrot.lane.b32.xlu0 %v577, 48
      %v2840 = vpop.permute.xlu0 %2839
      %2841 = vrot.lane.b32.xlu0 %v582, 48
      %v2842 = vpop.permute.xlu0 %2841
      %v2846 = vsel %vm960, %v2661, 0
      %v2849 = vsel %vm960, %v2662, 0
      %2851 = vmatprep.subr.mxu0 0.0
      %2852 = vmatpush1.msra.mxu0 %v2840
      %2853 = vmatprep.subr.mxu0 0.0
      %2854 = vmatpush1.msra.mxu0 %v2842
      %2855 = vmatprep.subr.mxu0 0.0
      %2856 = vmatpush1.msra.mxu0 0.0
      %2857 = vmatprep.subr.mxu0 0.0
      %2858 = vmatpush1.msra.mxu0 0.0
      %2859 = vmatprep.subr.mxu0 0.0
      %2860 = vmatpush1.msra.mxu0 0.0
      %2861 = vmatprep.subr.mxu0 0.0
      %2862 = vmatpush1.msra.mxu0 0.0
      %2863 = vmatprep.subr.mxu0 0.0
      %2864 = vmatpush1.msra.mxu0 0.0
      %2865 = vmatprep.subr.mxu0 0.0
      %2866 = vmatpush1.msra.mxu0 0.0
      %2867 = vmatprep.subr.mxu0 0.0
      %2868 = vmatpush1.msra.mxu0 0.0
      %2869 = vmatprep.subr.mxu0 0.0
      %2870 = vmatpush1.msra.mxu0 0.0
      %2871 = vmatprep.subr.mxu0 0.0
      %2872 = vmatpush1.msra.mxu0 0.0
      %2873 = vmatprep.subr.mxu0 0.0
      %2874 = vmatpush1.msra.mxu0 0.0
      %2875 = vmatprep.subr.mxu0 0.0
      %2876 = vmatpush1.msra.mxu0 0.0
      %2877 = vmatprep.subr.mxu0 0.0
      %2878 = vmatpush1.msra.mxu0 0.0
      %2879 = vmatprep.subr.mxu0 0.0
      %2880 = vmatpush1.msra.mxu0 0.0
      %2881 = vmatprep.subr.mxu0 0.0
      %2882 = vmatpush1.msra.mxu0 0.0
      %2883 = vmatprep.subr.mxu0 0.0
      %2884 = vmatpush1.msra.mxu0 0.0
      %2885 = vmatprep.subr.mxu0 0.0
      %2886 = vmatpush1.msra.mxu0 0.0
      %2887 = vmatprep.subr.mxu0 0.0
      %2888 = vmatpush1.msra.mxu0 0.0
      %2889 = vmatprep.subr.mxu0 0.0
      %2890 = vmatpush1.msra.mxu0 0.0
      %2891 = vmatprep.subr.mxu0 0.0
      %2892 = vmatpush1.msra.mxu0 0.0
      %2893 = vmatprep.subr.mxu0 0.0
      %2894 = vmatpush1.msra.mxu0 0.0
      %2895 = vmatprep.subr.mxu0 0.0
      %2896 = vmatpush1.msra.mxu0 0.0
      %2897 = vmatprep.subr.mxu0 0.0
      %2898 = vmatpush1.msra.mxu0 0.0
      %2899 = vmatprep.subr.mxu0 0.0
      %2900 = vmatpush1.msra.mxu0 0.0
      %2901 = vmatprep.subr.mxu0 0.0
      %2902 = vmatpush1.msra.mxu0 0.0
      %2903 = vmatprep.subr.mxu0 0.0
      %2904 = vmatpush1.msra.mxu0 0.0
      %2905 = vmatprep.subr.mxu0 0.0
      %2906 = vmatpush1.msra.mxu0 0.0
      %2907 = vmatprep.subr.mxu0 0.0
      %2908 = vmatpush1.msra.mxu0 0.0
      %2909 = vmatprep.subr.mxu0 0.0
      %2910 = vmatpush1.msra.mxu0 0.0
      %2911 = vmatprep.subr.mxu0 0.0
      %2912 = vmatpush1.msra.mxu0 0.0
      %2913 = vmatprep.subr.mxu0 0.0
      %2914 = vmatpush1.msra.mxu0 0.0
      %2915 = vmatprep.mubr.f32.mxu0 0.0
      %2916 = vmatmul.mubr.f32.gmra.mrb[0].mxu0 %v2846
      %v2917 = vpop.f32.mrb[0].mxu0
      %v2918 = vadd.f32 0.0, %v2917
      %v2919 = vpop.f32.mrb[0].mxu0
      %2920 = vmatprep.mubr.f32.mxu0 0.0
      %2921 = vmatmul.mubr.f32.gmra.mrb[0].mxu0 %v2849
      %v2922 = vpop.f32.mrb[0].mxu0
      %v2923 = vadd.f32 0.0, %v2922
      %v2924 = vpop.f32.mrb[0].mxu0
      %2925 = vdwg.mxu0
      %2926 = vrot.lane.b32.xlu0 %v587, 48
      %v2927 = vpop.permute.xlu0 %2926
      %2928 = vrot.lane.b32.xlu0 %v592, 48
      %v2929 = vpop.permute.xlu0 %2928
      %v2933 = vsel %vm960, %v2663, 0
      %v2936 = vsel %vm960, %v2664, 0
      %2938 = vmatprep.subr.mxu0 0.0
      %2939 = vmatpush1.msra.mxu0 %v2927
      %2940 = vmatprep.subr.mxu0 0.0
      %2941 = vmatpush1.msra.mxu0 %v2929
      %2942 = vmatprep.subr.mxu0 0.0
      %2943 = vmatpush1.msra.mxu0 0.0
      %2944 = vmatprep.subr.mxu0 0.0
      %2945 = vmatpush1.msra.mxu0 0.0
      %2946 = vmatprep.subr.mxu0 0.0
      %2947 = vmatpush1.msra.mxu0 0.0
      %2948 = vmatprep.subr.mxu0 0.0
      %2949 = vmatpush1.msra.mxu0 0.0
      %2950 = vmatprep.subr.mxu0 0.0
      %2951 = vmatpush1.msra.mxu0 0.0
      %2952 = vmatprep.subr.mxu0 0.0
      %2953 = vmatpush1.msra.mxu0 0.0
      %2954 = vmatprep.subr.mxu0 0.0
      %2955 = vmatpush1.msra.mxu0 0.0
      %2956 = vmatprep.subr.mxu0 0.0
      %2957 = vmatpush1.msra.mxu0 0.0
      %2958 = vmatprep.subr.mxu0 0.0
      %2959 = vmatpush1.msra.mxu0 0.0
      %2960 = vmatprep.subr.mxu0 0.0
      %2961 = vmatpush1.msra.mxu0 0.0
      %2962 = vmatprep.subr.mxu0 0.0
      %2963 = vmatpush1.msra.mxu0 0.0
      %2964 = vmatprep.subr.mxu0 0.0
      %2965 = vmatpush1.msra.mxu0 0.0
      %2966 = vmatprep.subr.mxu0 0.0
      %2967 = vmatpush1.msra.mxu0 0.0
      %2968 = vmatprep.subr.mxu0 0.0
      %2969 = vmatpush1.msra.mxu0 0.0
      %2970 = vmatprep.subr.mxu0 0.0
      %2971 = vmatpush1.msra.mxu0 0.0
      %2972 = vmatprep.subr.mxu0 0.0
      %2973 = vmatpush1.msra.mxu0 0.0
      %2974 = vmatprep.subr.mxu0 0.0
      %2975 = vmatpush1.msra.mxu0 0.0
      %2976 = vmatprep.subr.mxu0 0.0
      %2977 = vmatpush1.msra.mxu0 0.0
      %2978 = vmatprep.subr.mxu0 0.0
      %2979 = vmatpush1.msra.mxu0 0.0
      %2980 = vmatprep.subr.mxu0 0.0
      %2981 = vmatpush1.msra.mxu0 0.0
      %2982 = vmatprep.subr.mxu0 0.0
      %2983 = vmatpush1.msra.mxu0 0.0
      %2984 = vmatprep.subr.mxu0 0.0
      %2985 = vmatpush1.msra.mxu0 0.0
      %2986 = vmatprep.subr.mxu0 0.0
      %2987 = vmatpush1.msra.mxu0 0.0
      %2988 = vmatprep.subr.mxu0 0.0
      %2989 = vmatpush1.msra.mxu0 0.0
      %2990 = vmatprep.subr.mxu0 0.0
      %2991 = vmatpush1.msra.mxu0 0.0
      %2992 = vmatprep.subr.mxu0 0.0
      %2993 = vmatpush1.msra.mxu0 0.0
      %2994 = vmatprep.subr.mxu0 0.0
      %2995 = vmatpush1.msra.mxu0 0.0
      %2996 = vmatprep.subr.mxu0 0.0
      %2997 = vmatpush1.msra.mxu0 0.0
      %2998 = vmatprep.subr.mxu0 0.0
      %2999 = vmatpush1.msra.mxu0 0.0
      %3000 = vmatprep.subr.mxu0 0.0
      %3001 = vmatpush1.msra.mxu0 0.0
      %3002 = vmatprep.mubr.f32.mxu0 0.0
      %3003 = vmatmul.mubr.f32.gmra.mrb[0].mxu0 %v2933
      %v3004 = vpop.f32.mrb[0].mxu0
      %v3005 = vadd.f32 0.0, %v3004
      %v3006 = vpop.f32.mrb[0].mxu0
      %3007 = vmatprep.mubr.f32.mxu0 0.0
      %3008 = vmatmul.mubr.f32.gmra.mrb[0].mxu0 %v2936
      %v3009 = vpop.f32.mrb[0].mxu0
      %v3010 = vadd.f32 0.0, %v3009
      %v3011 = vpop.f32.mrb[0].mxu0
      %3012 = vdwg.mxu0
      %3013 = vrot.lane.b32.xlu0 %v557, 104
      %v3014 = vpop.permute.xlu0 %3013
      %3015 = vrot.lane.b32.xlu0 %v562, 104
      %v3016 = vpop.permute.xlu0 %3015
      %3017 = vrot.lane.b32.xlu0 %v557, 72
      %v3018 = vpop.permute.xlu0 %3017
      %3019 = vrot.lane.b32.xlu0 %v562, 72
      %v3020 = vpop.permute.xlu0 %3019
      %v3021 = vsel %vm601, %v3014, 0
      %v3023 = vsel %vm601, %v3016, 0
      %v3025 = vsel %vm601, %v3018, 0
      %v3027 = vsel %vm601, %v3020, 0
      %3029 = vmatprep.subr.mxu0 0.0
      %3030 = vmatpush1.xpose.msra.mxu0 %v3025
      %3031 = vmatprep.subr.mxu0 0.0
      %3032 = vmatpush1.xpose.msra.mxu0 %v3027
      %3033 = vmatprep.subr.mxu0 0.0
      %3034 = vmatpush1.xpose.msra.mxu0 0.0
      %3035 = vmatprep.subr.mxu0 0.0
      %3036 = vmatpush1.xpose.msra.mxu0 0.0
      %3037 = vmatprep.subr.mxu0 0.0
      %3038 = vmatpush1.xpose.msra.mxu0 0.0
      %3039 = vmatprep.subr.mxu0 0.0
      %3040 = vmatpush1.xpose.msra.mxu0 0.0
      %3041 = vmatprep.subr.mxu0 0.0
      %3042 = vmatpush1.xpose.msra.mxu0 0.0
      %3043 = vmatprep.subr.mxu0 0.0
      %3044 = vmatpush1.xpose.msra.mxu0 0.0
      %3045 = vmatprep.subr.mxu0 0.0
      %3046 = vmatpush1.xpose.msra.mxu0 0.0
      %3047 = vmatprep.subr.mxu0 0.0
      %3048 = vmatpush1.xpose.msra.mxu0 0.0
      %3049 = vmatprep.subr.mxu0 0.0
      %3050 = vmatpush1.xpose.msra.mxu0 0.0
      %3051 = vmatprep.subr.mxu0 0.0
      %3052 = vmatpush1.xpose.msra.mxu0 0.0
      %3053 = vmatprep.subr.mxu0 0.0
      %3054 = vmatpush1.xpose.msra.mxu0 0.0
      %3055 = vmatprep.subr.mxu0 0.0
      %3056 = vmatpush1.xpose.msra.mxu0 0.0
      %3057 = vmatprep.subr.mxu0 0.0
      %3058 = vmatpush1.xpose.msra.mxu0 0.0
      %3059 = vmatprep.subr.mxu0 0.0
      %3060 = vmatpush1.xpose.msra.mxu0 0.0
      %3061 = vmatprep.subr.mxu0 0.0
      %3062 = vmatpush1.xpose.msra.mxu0 0.0
      %3063 = vmatprep.subr.mxu0 0.0
      %3064 = vmatpush1.xpose.msra.mxu0 0.0
      %3065 = vmatprep.subr.mxu0 0.0
      %3066 = vmatpush1.xpose.msra.mxu0 0.0
      %3067 = vmatprep.subr.mxu0 0.0
      %3068 = vmatpush1.xpose.msra.mxu0 0.0
      %3069 = vmatprep.subr.mxu0 0.0
      %3070 = vmatpush1.xpose.msra.mxu0 0.0
      %3071 = vmatprep.subr.mxu0 0.0
      %3072 = vmatpush1.xpose.msra.mxu0 0.0
      %3073 = vmatprep.subr.mxu0 0.0
      %3074 = vmatpush1.xpose.msra.mxu0 0.0
      %3075 = vmatprep.subr.mxu0 0.0
      %3076 = vmatpush1.xpose.msra.mxu0 0.0
      %3077 = vmatprep.subr.mxu0 0.0
      %3078 = vmatpush1.xpose.msra.mxu0 0.0
      %3079 = vmatprep.subr.mxu0 0.0
      %3080 = vmatpush1.xpose.msra.mxu0 0.0
      %3081 = vmatprep.subr.mxu0 0.0
      %3082 = vmatpush1.xpose.msra.mxu0 0.0
      %3083 = vmatprep.subr.mxu0 0.0
      %3084 = vmatpush1.xpose.msra.mxu0 0.0
      %3085 = vmatprep.subr.mxu0 0.0
      %3086 = vmatpush1.xpose.msra.mxu0 0.0
      %3087 = vmatprep.subr.mxu0 0.0
      %3088 = vmatpush1.xpose.msra.mxu0 0.0
      %3089 = vmatprep.subr.mxu0 0.0
      %3090 = vmatpush1.xpose.msra.mxu0 0.0
      %3091 = vmatprep.subr.mxu0 0.0
      %3092 = vmatpush1.xpose.msra.mxu0 0.0
      %3093 = vmatprep.mubr.f32.mxu0 0.0
      %3094 = vmatmul.mubr.f32.gmra.mrb[0].mxu0 %v3021
      %v3095 = vpop.f32.mrb[0].mxu0
      %v3096 = vadd.f32 0.0, %v3095
      %v3097 = vpop.f32.mrb[0].mxu0
      %3098 = vmatprep.mubr.f32.mxu0 0.0
      %3099 = vmatmul.mubr.f32.gmra.mrb[0].mxu0 %v3023
      %v3100 = vpop.f32.mrb[0].mxu0
      %v3101 = vadd.f32 0.0, %v3100
      %v3102 = vpop.f32.mrb[0].mxu0
      %3103 = vdwg.mxu0
      %3104 = vrot.lane.b32.xlu0 %v567, 104
      %v3105 = vpop.permute.xlu0 %3104
      %3106 = vrot.lane.b32.xlu0 %v572, 104
      %v3107 = vpop.permute.xlu0 %3106
      %3108 = vrot.lane.b32.xlu0 %v567, 72
      %v3109 = vpop.permute.xlu0 %3108
      %3110 = vrot.lane.b32.xlu0 %v572, 72
      %v3111 = vpop.permute.xlu0 %3110
      %v3112 = vsel %vm601, %v3105, 0
      %v3114 = vsel %vm601, %v3107, 0
      %v3116 = vsel %vm601, %v3109, 0
      %v3118 = vsel %vm601, %v3111, 0
      %3120 = vmatprep.subr.mxu0 0.0
      %3121 = vmatpush1.xpose.msra.mxu0 %v3116
      %3122 = vmatprep.subr.mxu0 0.0
      %3123 = vmatpush1.xpose.msra.mxu0 %v3118
      %3124 = vmatprep.subr.mxu0 0.0
      %3125 = vmatpush1.xpose.msra.mxu0 0.0
      %3126 = vmatprep.subr.mxu0 0.0
      %3127 = vmatpush1.xpose.msra.mxu0 0.0
      %3128 = vmatprep.subr.mxu0 0.0
      %3129 = vmatpush1.xpose.msra.mxu0 0.0
      %3130 = vmatprep.subr.mxu0 0.0
      %3131 = vmatpush1.xpose.msra.mxu0 0.0
      %3132 = vmatprep.subr.mxu0 0.0
      %3133 = vmatpush1.xpose.msra.mxu0 0.0
      %3134 = vmatprep.subr.mxu0 0.0
      %3135 = vmatpush1.xpose.msra.mxu0 0.0
      %3136 = vmatprep.subr.mxu0 0.0
      %3137 = vmatpush1.xpose.msra.mxu0 0.0
      %3138 = vmatprep.subr.mxu0 0.0
      %3139 = vmatpush1.xpose.msra.mxu0 0.0
      %3140 = vmatprep.subr.mxu0 0.0
      %3141 = vmatpush1.xpose.msra.mxu0 0.0
      %3142 = vmatprep.subr.mxu0 0.0
      %3143 = vmatpush1.xpose.msra.mxu0 0.0
      %3144 = vmatprep.subr.mxu0 0.0
      %3145 = vmatpush1.xpose.msra.mxu0 0.0
      %3146 = vmatprep.subr.mxu0 0.0
      %3147 = vmatpush1.xpose.msra.mxu0 0.0
      %3148 = vmatprep.subr.mxu0 0.0
      %3149 = vmatpush1.xpose.msra.mxu0 0.0
      %3150 = vmatprep.subr.mxu0 0.0
      %3151 = vmatpush1.xpose.msra.mxu0 0.0
      %3152 = vmatprep.subr.mxu0 0.0
      %3153 = vmatpush1.xpose.msra.mxu0 0.0
      %3154 = vmatprep.subr.mxu0 0.0
      %3155 = vmatpush1.xpose.msra.mxu0 0.0
      %3156 = vmatprep.subr.mxu0 0.0
      %3157 = vmatpush1.xpose.msra.mxu0 0.0
      %3158 = vmatprep.subr.mxu0 0.0
      %3159 = vmatpush1.xpose.msra.mxu0 0.0
      %3160 = vmatprep.subr.mxu0 0.0
      %3161 = vmatpush1.xpose.msra.mxu0 0.0
      %3162 = vmatprep.subr.mxu0 0.0
      %3163 = vmatpush1.xpose.msra.mxu0 0.0
      %3164 = vmatprep.subr.mxu0 0.0
      %3165 = vmatpush1.xpose.msra.mxu0 0.0
      %3166 = vmatprep.subr.mxu0 0.0
      %3167 = vmatpush1.xpose.msra.mxu0 0.0
      %3168 = vmatprep.subr.mxu0 0.0
      %3169 = vmatpush1.xpose.msra.mxu0 0.0
      %3170 = vmatprep.subr.mxu0 0.0
      %3171 = vmatpush1.xpose.msra.mxu0 0.0
      %3172 = vmatprep.subr.mxu0 0.0
      %3173 = vmatpush1.xpose.msra.mxu0 0.0
      %3174 = vmatprep.subr.mxu0 0.0
      %3175 = vmatpush1.xpose.msra.mxu0 0.0
      %3176 = vmatprep.subr.mxu0 0.0
      %3177 = vmatpush1.xpose.msra.mxu0 0.0
      %3178 = vmatprep.subr.mxu0 0.0
      %3179 = vmatpush1.xpose.msra.mxu0 0.0
      %3180 = vmatprep.subr.mxu0 0.0
      %3181 = vmatpush1.xpose.msra.mxu0 0.0
      %3182 = vmatprep.subr.mxu0 0.0
      %3183 = vmatpush1.xpose.msra.mxu0 0.0
      %3184 = vmatprep.mubr.f32.mxu0 0.0
      %3185 = vmatmul.mubr.f32.gmra.mrb[0].mxu0 %v3112
      %v3186 = vpop.f32.mrb[0].mxu0
      %v3187 = vadd.f32 0.0, %v3186
      %v3188 = vpop.f32.mrb[0].mxu0
      %3189 = vmatprep.mubr.f32.mxu0 0.0
      %3190 = vmatmul.mubr.f32.gmra.mrb[0].mxu0 %v3114
      %v3191 = vpop.f32.mrb[0].mxu0
      %v3192 = vadd.f32 0.0, %v3191
      %v3193 = vpop.f32.mrb[0].mxu0
      %3194 = vdwg.mxu0
      %3195 = vrot.lane.b32.xlu0 %v577, 104
      %v3196 = vpop.permute.xlu0 %3195
      %3197 = vrot.lane.b32.xlu0 %v582, 104
      %v3198 = vpop.permute.xlu0 %3197
      %3199 = vrot.lane.b32.xlu0 %v577, 72
      %v3200 = vpop.permute.xlu0 %3199
      %3201 = vrot.lane.b32.xlu0 %v582, 72
      %v3202 = vpop.permute.xlu0 %3201
      %v3203 = vsel %vm601, %v3196, 0
      %v3205 = vsel %vm601, %v3198, 0
      %v3207 = vsel %vm601, %v3200, 0
      %v3209 = vsel %vm601, %v3202, 0
      %3211 = vmatprep.subr.mxu0 0.0
      %3212 = vmatpush1.xpose.msra.mxu0 %v3207
      %3213 = vmatprep.subr.mxu0 0.0
      %3214 = vmatpush1.xpose.msra.mxu0 %v3209
      %3215 = vmatprep.subr.mxu0 0.0
      %3216 = vmatpush1.xpose.msra.mxu0 0.0
      %3217 = vmatprep.subr.mxu0 0.0
      %3218 = vmatpush1.xpose.msra.mxu0 0.0
      %3219 = vmatprep.subr.mxu0 0.0
      %3220 = vmatpush1.xpose.msra.mxu0 0.0
      %3221 = vmatprep.subr.mxu0 0.0
      %3222 = vmatpush1.xpose.msra.mxu0 0.0
      %3223 = vmatprep.subr.mxu0 0.0
      %3224 = vmatpush1.xpose.msra.mxu0 0.0
      %3225 = vmatprep.subr.mxu0 0.0
      %3226 = vmatpush1.xpose.msra.mxu0 0.0
      %3227 = vmatprep.subr.mxu0 0.0
      %3228 = vmatpush1.xpose.msra.mxu0 0.0
      %3229 = vmatprep.subr.mxu0 0.0
      %3230 = vmatpush1.xpose.msra.mxu0 0.0
      %3231 = vmatprep.subr.mxu0 0.0
      %3232 = vmatpush1.xpose.msra.mxu0 0.0
      %3233 = vmatprep.subr.mxu0 0.0
      %3234 = vmatpush1.xpose.msra.mxu0 0.0
      %3235 = vmatprep.subr.mxu0 0.0
      %3236 = vmatpush1.xpose.msra.mxu0 0.0
      %3237 = vmatprep.subr.mxu0 0.0
      %3238 = vmatpush1.xpose.msra.mxu0 0.0
      %3239 = vmatprep.subr.mxu0 0.0
      %3240 = vmatpush1.xpose.msra.mxu0 0.0
      %3241 = vmatprep.subr.mxu0 0.0
      %3242 = vmatpush1.xpose.msra.mxu0 0.0
      %3243 = vmatprep.subr.mxu0 0.0
      %3244 = vmatpush1.xpose.msra.mxu0 0.0
      %3245 = vmatprep.subr.mxu0 0.0
      %3246 = vmatpush1.xpose.msra.mxu0 0.0
      %3247 = vmatprep.subr.mxu0 0.0
      %3248 = vmatpush1.xpose.msra.mxu0 0.0
      %3249 = vmatprep.subr.mxu0 0.0
      %3250 = vmatpush1.xpose.msra.mxu0 0.0
      %3251 = vmatprep.subr.mxu0 0.0
      %3252 = vmatpush1.xpose.msra.mxu0 0.0
      %3253 = vmatprep.subr.mxu0 0.0
      %3254 = vmatpush1.xpose.msra.mxu0 0.0
      %3255 = vmatprep.subr.mxu0 0.0
      %3256 = vmatpush1.xpose.msra.mxu0 0.0
      %3257 = vmatprep.subr.mxu0 0.0
      %3258 = vmatpush1.xpose.msra.mxu0 0.0
      %3259 = vmatprep.subr.mxu0 0.0
      %3260 = vmatpush1.xpose.msra.mxu0 0.0
      %3261 = vmatprep.subr.mxu0 0.0
      %3262 = vmatpush1.xpose.msra.mxu0 0.0
      %3263 = vmatprep.subr.mxu0 0.0
      %3264 = vmatpush1.xpose.msra.mxu0 0.0
      %3265 = vmatprep.subr.mxu0 0.0
      %3266 = vmatpush1.xpose.msra.mxu0 0.0
      %3267 = vmatprep.subr.mxu0 0.0
      %3268 = vmatpush1.xpose.msra.mxu0 0.0
      %3269 = vmatprep.subr.mxu0 0.0
      %3270 = vmatpush1.xpose.msra.mxu0 0.0
      %3271 = vmatprep.subr.mxu0 0.0
      %3272 = vmatpush1.xpose.msra.mxu0 0.0
      %3273 = vmatprep.subr.mxu0 0.0
      %3274 = vmatpush1.xpose.msra.mxu0 0.0
      %3275 = vmatprep.mubr.f32.mxu0 0.0
      %3276 = vmatmul.mubr.f32.gmra.mrb[0].mxu0 %v3203
      %v3277 = vpop.f32.mrb[0].mxu0
      %v3278 = vadd.f32 0.0, %v3277
      %v3279 = vpop.f32.mrb[0].mxu0
      %3280 = vmatprep.mubr.f32.mxu0 0.0
      %3281 = vmatmul.mubr.f32.gmra.mrb[0].mxu0 %v3205
      %v3282 = vpop.f32.mrb[0].mxu0
      %v3283 = vadd.f32 0.0, %v3282
      %v3284 = vpop.f32.mrb[0].mxu0
      %3285 = vdwg.mxu0
      %3286 = vrot.lane.b32.xlu0 %v587, 104
      %v3287 = vpop.permute.xlu0 %3286
      %3288 = vrot.lane.b32.xlu0 %v592, 104
      %v3289 = vpop.permute.xlu0 %3288
      %3290 = vrot.lane.b32.xlu0 %v587, 72
      %v3291 = vpop.permute.xlu0 %3290
      %3292 = vrot.lane.b32.xlu0 %v592, 72
      %v3293 = vpop.permute.xlu0 %3292
      %v3294 = vsel %vm601, %v3287, 0
      %v3296 = vsel %vm601, %v3289, 0
      %v3298 = vsel %vm601, %v3291, 0
      %v3300 = vsel %vm601, %v3293, 0
      %3302 = vmatprep.subr.mxu0 0.0
      %3303 = vmatpush1.xpose.msra.mxu0 %v3298
      %3304 = vmatprep.subr.mxu0 0.0
      %3305 = vmatpush1.xpose.msra.mxu0 %v3300
      %3306 = vmatprep.subr.mxu0 0.0
      %3307 = vmatpush1.xpose.msra.mxu0 0.0
      %3308 = vmatprep.subr.mxu0 0.0
      %3309 = vmatpush1.xpose.msra.mxu0 0.0
      %3310 = vmatprep.subr.mxu0 0.0
      %3311 = vmatpush1.xpose.msra.mxu0 0.0
      %3312 = vmatprep.subr.mxu0 0.0
      %3313 = vmatpush1.xpose.msra.mxu0 0.0
      %3314 = vmatprep.subr.mxu0 0.0
      %3315 = vmatpush1.xpose.msra.mxu0 0.0
      %3316 = vmatprep.subr.mxu0 0.0
      %3317 = vmatpush1.xpose.msra.mxu0 0.0
      %3318 = vmatprep.subr.mxu0 0.0
      %3319 = vmatpush1.xpose.msra.mxu0 0.0
      %3320 = vmatprep.subr.mxu0 0.0
      %3321 = vmatpush1.xpose.msra.mxu0 0.0
      %3322 = vmatprep.subr.mxu0 0.0
      %3323 = vmatpush1.xpose.msra.mxu0 0.0
      %3324 = vmatprep.subr.mxu0 0.0
      %3325 = vmatpush1.xpose.msra.mxu0 0.0
      %3326 = vmatprep.subr.mxu0 0.0
      %3327 = vmatpush1.xpose.msra.mxu0 0.0
      %3328 = vmatprep.subr.mxu0 0.0
      %3329 = vmatpush1.xpose.msra.mxu0 0.0
      %3330 = vmatprep.subr.mxu0 0.0
      %3331 = vmatpush1.xpose.msra.mxu0 0.0
      %3332 = vmatprep.subr.mxu0 0.0
      %3333 = vmatpush1.xpose.msra.mxu0 0.0
      %3334 = vmatprep.subr.mxu0 0.0
      %3335 = vmatpush1.xpose.msra.mxu0 0.0
      %3336 = vmatprep.subr.mxu0 0.0
      %3337 = vmatpush1.xpose.msra.mxu0 0.0
      %3338 = vmatprep.subr.mxu0 0.0
      %3339 = vmatpush1.xpose.msra.mxu0 0.0
      %3340 = vmatprep.subr.mxu0 0.0
      %3341 = vmatpush1.xpose.msra.mxu0 0.0
      %3342 = vmatprep.subr.mxu0 0.0
      %3343 = vmatpush1.xpose.msra.mxu0 0.0
      %3344 = vmatprep.subr.mxu0 0.0
      %3345 = vmatpush1.xpose.msra.mxu0 0.0
      %3346 = vmatprep.subr.mxu0 0.0
      %3347 = vmatpush1.xpose.msra.mxu0 0.0
      %3348 = vmatprep.subr.mxu0 0.0
      %3349 = vmatpush1.xpose.msra.mxu0 0.0
      %3350 = vmatprep.subr.mxu0 0.0
      %3351 = vmatpush1.xpose.msra.mxu0 0.0
      %3352 = vmatprep.subr.mxu0 0.0
      %3353 = vmatpush1.xpose.msra.mxu0 0.0
      %3354 = vmatprep.subr.mxu0 0.0
      %3355 = vmatpush1.xpose.msra.mxu0 0.0
      %3356 = vmatprep.subr.mxu0 0.0
      %3357 = vmatpush1.xpose.msra.mxu0 0.0
      %3358 = vmatprep.subr.mxu0 0.0
      %3359 = vmatpush1.xpose.msra.mxu0 0.0
      %3360 = vmatprep.subr.mxu0 0.0
      %3361 = vmatpush1.xpose.msra.mxu0 0.0
      %3362 = vmatprep.subr.mxu0 0.0
      %3363 = vmatpush1.xpose.msra.mxu0 0.0
      %3364 = vmatprep.subr.mxu0 0.0
      %3365 = vmatpush1.xpose.msra.mxu0 0.0
      %3366 = vmatprep.mubr.f32.mxu0 0.0
      %3367 = vmatmul.mubr.f32.gmra.mrb[0].mxu0 %v3294
      %v3368 = vpop.f32.mrb[0].mxu0
      %v3369 = vadd.f32 0.0, %v3368
      %v3370 = vpop.f32.mrb[0].mxu0
      %3371 = vmatprep.mubr.f32.mxu0 0.0
      %3372 = vmatmul.mubr.f32.gmra.mrb[0].mxu0 %v3296
      %v3373 = vpop.f32.mrb[0].mxu0
      %v3374 = vadd.f32 0.0, %v3373
      %v3375 = vpop.f32.mrb[0].mxu0
      %3376 = vdwg.mxu0
      %v3377 = vmul.f32 %v3096, 0.35355338
      %v3378 = vmul.f32 %v3101, 0.35355338
      %v3379 = vmul.f32 %v3187, 0.35355338
      %v3380 = vmul.f32 %v3192, 0.35355338
      %v3381 = vmul.f32 %v3278, 0.35355338
      %v3382 = vmul.f32 %v3283, 0.35355338
      %v3383 = vmul.f32 %v3369, 0.35355338
      %v3384 = vmul.f32 %v3374, 0.35355338
      %v3385 = vsel %vm960, %v3377, -inf
      %3386 = vmax.xlane.f32.xlu0 %v3385
      %v3387 = vpop.xlane.xlu0 %3386
      %v3388 = vsel %vm960, %v3378, -inf
      %3389 = vmax.xlane.f32.xlu0 %v3388
      %v3390 = vpop.xlane.xlu0 %3389
      %v3391 = vsel %vm960, %v3379, -inf
      %3392 = vmax.xlane.f32.xlu0 %v3391
      %v3393 = vpop.xlane.xlu0 %3392
      %v3394 = vsel %vm960, %v3380, -inf
      %3395 = vmax.xlane.f32.xlu0 %v3394
      %v3396 = vpop.xlane.xlu0 %3395
      %v3397 = vsel %vm960, %v3381, -inf
      %3398 = vmax.xlane.f32.xlu0 %v3397
      %v3399 = vpop.xlane.xlu0 %3398
      %v3400 = vsel %vm960, %v3382, -inf
      %3401 = vmax.xlane.f32.xlu0 %v3400
      %v3402 = vpop.xlane.xlu0 %3401
      %v3403 = vsel %vm960, %v3383, -inf
      %3404 = vmax.xlane.f32.xlu0 %v3403
      %v3405 = vpop.xlane.xlu0 %3404
      %v3406 = vsel %vm960, %v3384, -inf
      %3407 = vmax.xlane.f32.xlu0 %v3406
      %v3408 = vpop.xlane.xlu0 %3407
      %v3409 = vsub.f32 %v3377, %v3387
      %v3410 = vsub.f32 %v3378, %v3390
      %v3411 = vsub.f32 %v3379, %v3393
      %v3412 = vsub.f32 %v3380, %v3396
      %v3413 = vsub.f32 %v3381, %v3399
      %v3414 = vsub.f32 %v3382, %v3402
      %v3415 = vsub.f32 %v3383, %v3405
      %v3416 = vsub.f32 %v3384, %v3408
      %v3417 = vmul.f32 %v3409, 1.442695
      %v3418 = vpow.pop %v3417
      %v3419 = vmul.f32 %v3410, 1.442695
      %v3420 = vpow.pop %v3419
      %v3421 = vmul.f32 %v3411, 1.442695
      %v3422 = vpow.pop %v3421
      %v3423 = vmul.f32 %v3412, 1.442695
      %v3424 = vpow.pop %v3423
      %v3425 = vmul.f32 %v3413, 1.442695
      %v3426 = vpow.pop %v3425
      %v3427 = vmul.f32 %v3414, 1.442695
      %v3428 = vpow.pop %v3427
      %v3429 = vmul.f32 %v3415, 1.442695
      %v3430 = vpow.pop %v3429
      %v3431 = vmul.f32 %v3416, 1.442695
      %v3432 = vpow.pop %v3431
      %v3433 = vsel %vm960, %v3418, 0.0
      %3434 = vadd.xlane.f32.xlu0 %v3433
      %v3435 = vpop.xlane.xlu0 %3434
      %v3436 = vsel %vm960, %v3420, 0.0
      %3437 = vadd.xlane.f32.xlu0 %v3436
      %v3438 = vpop.xlane.xlu0 %3437
      %v3439 = vsel %vm960, %v3422, 0.0
      %3440 = vadd.xlane.f32.xlu0 %v3439
      %v3441 = vpop.xlane.xlu0 %3440
      %v3442 = vsel %vm960, %v3424, 0.0
      %3443 = vadd.xlane.f32.xlu0 %v3442
      %v3444 = vpop.xlane.xlu0 %3443
      %v3445 = vsel %vm960, %v3426, 0.0
      %3446 = vadd.xlane.f32.xlu0 %v3445
      %v3447 = vpop.xlane.xlu0 %3446
      %v3448 = vsel %vm960, %v3428, 0.0
      %3449 = vadd.xlane.f32.xlu0 %v3448
      %v3450 = vpop.xlane.xlu0 %3449
      %v3451 = vsel %vm960, %v3430, 0.0
      %3452 = vadd.xlane.f32.xlu0 %v3451
      %v3453 = vpop.xlane.xlu0 %3452
      %v3454 = vsel %vm960, %v3432, 0.0
      %3455 = vadd.xlane.f32.xlu0 %v3454
      %v3456 = vpop.xlane.xlu0 %3455
      %v3457 = vrcp.pop %v3435
      %v3458 = vrcp.pop %v3438
      %v3459 = vrcp.pop %v3441
      %v3460 = vrcp.pop %v3444
      %v3461 = vrcp.pop %v3447
      %v3462 = vrcp.pop %v3450
      %v3463 = vrcp.pop %v3453
      %v3464 = vrcp.pop %v3456
      %v3465 = vmul.f32 %v3418, %v3457
      %v3466 = vmul.f32 %v3420, %v3458
      %v3467 = vmul.f32 %v3422, %v3459
      %v3468 = vmul.f32 %v3424, %v3460
      %v3469 = vmul.f32 %v3426, %v3461
      %v3470 = vmul.f32 %v3428, %v3462
      %v3471 = vmul.f32 %v3430, %v3463
      %v3472 = vmul.f32 %v3432, %v3464
      %3473 = vrot.lane.b32.xlu0 %v557, 40
      %v3474 = vpop.permute.xlu0 %3473
      %3475 = vrot.lane.b32.xlu0 %v562, 40
      %v3476 = vpop.permute.xlu0 %3475
      %v3480 = vsel %vm960, %v3465, 0
      %v3483 = vsel %vm960, %v3466, 0
      %3485 = vmatprep.subr.mxu0 0.0
      %3486 = vmatpush1.msra.mxu0 %v3474
      %3487 = vmatprep.subr.mxu0 0.0
      %3488 = vmatpush1.msra.mxu0 %v3476
      %3489 = vmatprep.subr.mxu0 0.0
      %3490 = vmatpush1.msra.mxu0 0.0
      %3491 = vmatprep.subr.mxu0 0.0
      %3492 = vmatpush1.msra.mxu0 0.0
      %3493 = vmatprep.subr.mxu0 0.0
      %3494 = vmatpush1.msra.mxu0 0.0
      %3495 = vmatprep.subr.mxu0 0.0
      %3496 = vmatpush1.msra.mxu0 0.0
      %3497 = vmatprep.subr.mxu0 0.0
      %3498 = vmatpush1.msra.mxu0 0.0
      %3499 = vmatprep.subr.mxu0 0.0
      %3500 = vmatpush1.msra.mxu0 0.0
      %3501 = vmatprep.subr.mxu0 0.0
      %3502 = vmatpush1.msra.mxu0 0.0
      %3503 = vmatprep.subr.mxu0 0.0
      %3504 = vmatpush1.msra.mxu0 0.0
      %3505 = vmatprep.subr.mxu0 0.0
      %3506 = vmatpush1.msra.mxu0 0.0
      %3507 = vmatprep.subr.mxu0 0.0
      %3508 = vmatpush1.msra.mxu0 0.0
      %3509 = vmatprep.subr.mxu0 0.0
      %3510 = vmatpush1.msra.mxu0 0.0
      %3511 = vmatprep.subr.mxu0 0.0
      %3512 = vmatpush1.msra.mxu0 0.0
      %3513 = vmatprep.subr.mxu0 0.0
      %3514 = vmatpush1.msra.mxu0 0.0
      %3515 = vmatprep.subr.mxu0 0.0
      %3516 = vmatpush1.msra.mxu0 0.0
      %3517 = vmatprep.subr.mxu0 0.0
      %3518 = vmatpush1.msra.mxu0 0.0
      %3519 = vmatprep.subr.mxu0 0.0
      %3520 = vmatpush1.msra.mxu0 0.0
      %3521 = vmatprep.subr.mxu0 0.0
      %3522 = vmatpush1.msra.mxu0 0.0
      %3523 = vmatprep.subr.mxu0 0.0
      %3524 = vmatpush1.msra.mxu0 0.0
      %3525 = vmatprep.subr.mxu0 0.0
      %3526 = vmatpush1.msra.mxu0 0.0
      %3527 = vmatprep.subr.mxu0 0.0
      %3528 = vmatpush1.msra.mxu0 0.0
      %3529 = vmatprep.subr.mxu0 0.0
      %3530 = vmatpush1.msra.mxu0 0.0
      %3531 = vmatprep.subr.mxu0 0.0
      %3532 = vmatpush1.msra.mxu0 0.0
      %3533 = vmatprep.subr.mxu0 0.0
      %3534 = vmatpush1.msra.mxu0 0.0
      %3535 = vmatprep.subr.mxu0 0.0
      %3536 = vmatpush1.msra.mxu0 0.0
      %3537 = vmatprep.subr.mxu0 0.0
      %3538 = vmatpush1.msra.mxu0 0.0
      %3539 = vmatprep.subr.mxu0 0.0
      %3540 = vmatpush1.msra.mxu0 0.0
      %3541 = vmatprep.subr.mxu0 0.0
      %3542 = vmatpush1.msra.mxu0 0.0
      %3543 = vmatprep.subr.mxu0 0.0
      %3544 = vmatpush1.msra.mxu0 0.0
      %3545 = vmatprep.subr.mxu0 0.0
      %3546 = vmatpush1.msra.mxu0 0.0
      %3547 = vmatprep.subr.mxu0 0.0
      %3548 = vmatpush1.msra.mxu0 0.0
      %3549 = vmatprep.mubr.f32.mxu0 0.0
      %3550 = vmatmul.mubr.f32.gmra.mrb[0].mxu0 %v3480
      %v3551 = vpop.f32.mrb[0].mxu0
      %v3552 = vadd.f32 0.0, %v3551
      %v3553 = vpop.f32.mrb[0].mxu0
      %3554 = vmatprep.mubr.f32.mxu0 0.0
      %3555 = vmatmul.mubr.f32.gmra.mrb[0].mxu0 %v3483
      %v3556 = vpop.f32.mrb[0].mxu0
      %v3557 = vadd.f32 0.0, %v3556
      %v3558 = vpop.f32.mrb[0].mxu0
      %3559 = vdwg.mxu0
      %3560 = vrot.lane.b32.xlu0 %v567, 40
      %v3561 = vpop.permute.xlu0 %3560
      %3562 = vrot.lane.b32.xlu0 %v572, 40
      %v3563 = vpop.permute.xlu0 %3562
      %v3567 = vsel %vm960, %v3467, 0
      %v3570 = vsel %vm960, %v3468, 0
      %3572 = vmatprep.subr.mxu0 0.0
      %3573 = vmatpush1.msra.mxu0 %v3561
      %3574 = vmatprep.subr.mxu0 0.0
      %3575 = vmatpush1.msra.mxu0 %v3563
      %3576 = vmatprep.subr.mxu0 0.0
      %3577 = vmatpush1.msra.mxu0 0.0
      %3578 = vmatprep.subr.mxu0 0.0
      %3579 = vmatpush1.msra.mxu0 0.0
      %3580 = vmatprep.subr.mxu0 0.0
      %3581 = vmatpush1.msra.mxu0 0.0
      %3582 = vmatprep.subr.mxu0 0.0
      %3583 = vmatpush1.msra.mxu0 0.0
      %3584 = vmatprep.subr.mxu0 0.0
      %3585 = vmatpush1.msra.mxu0 0.0
      %3586 = vmatprep.subr.mxu0 0.0
      %3587 = vmatpush1.msra.mxu0 0.0
      %3588 = vmatprep.subr.mxu0 0.0
      %3589 = vmatpush1.msra.mxu0 0.0
      %3590 = vmatprep.subr.mxu0 0.0
      %3591 = vmatpush1.msra.mxu0 0.0
      %3592 = vmatprep.subr.mxu0 0.0
      %3593 = vmatpush1.msra.mxu0 0.0
      %3594 = vmatprep.subr.mxu0 0.0
      %3595 = vmatpush1.msra.mxu0 0.0
      %3596 = vmatprep.subr.mxu0 0.0
      %3597 = vmatpush1.msra.mxu0 0.0
      %3598 = vmatprep.subr.mxu0 0.0
      %3599 = vmatpush1.msra.mxu0 0.0
      %3600 = vmatprep.subr.mxu0 0.0
      %3601 = vmatpush1.msra.mxu0 0.0
      %3602 = vmatprep.subr.mxu0 0.0
      %3603 = vmatpush1.msra.mxu0 0.0
      %3604 = vmatprep.subr.mxu0 0.0
      %3605 = vmatpush1.msra.mxu0 0.0
      %3606 = vmatprep.subr.mxu0 0.0
      %3607 = vmatpush1.msra.mxu0 0.0
      %3608 = vmatprep.subr.mxu0 0.0
      %3609 = vmatpush1.msra.mxu0 0.0
      %3610 = vmatprep.subr.mxu0 0.0
      %3611 = vmatpush1.msra.mxu0 0.0
      %3612 = vmatprep.subr.mxu0 0.0
      %3613 = vmatpush1.msra.mxu0 0.0
      %3614 = vmatprep.subr.mxu0 0.0
      %3615 = vmatpush1.msra.mxu0 0.0
      %3616 = vmatprep.subr.mxu0 0.0
      %3617 = vmatpush1.msra.mxu0 0.0
      %3618 = vmatprep.subr.mxu0 0.0
      %3619 = vmatpush1.msra.mxu0 0.0
      %3620 = vmatprep.subr.mxu0 0.0
      %3621 = vmatpush1.msra.mxu0 0.0
      %3622 = vmatprep.subr.mxu0 0.0
      %3623 = vmatpush1.msra.mxu0 0.0
      %3624 = vmatprep.subr.mxu0 0.0
      %3625 = vmatpush1.msra.mxu0 0.0
      %3626 = vmatprep.subr.mxu0 0.0
      %3627 = vmatpush1.msra.mxu0 0.0
      %3628 = vmatprep.subr.mxu0 0.0
      %3629 = vmatpush1.msra.mxu0 0.0
      %3630 = vmatprep.subr.mxu0 0.0
      %3631 = vmatpush1.msra.mxu0 0.0
      %3632 = vmatprep.subr.mxu0 0.0
      %3633 = vmatpush1.msra.mxu0 0.0
      %3634 = vmatprep.subr.mxu0 0.0
      %3635 = vmatpush1.msra.mxu0 0.0
      %3636 = vmatprep.mubr.f32.mxu0 0.0
      %3637 = vmatmul.mubr.f32.gmra.mrb[0].mxu0 %v3567
      %v3638 = vpop.f32.mrb[0].mxu0
      %v3639 = vadd.f32 0.0, %v3638
      %v3640 = vpop.f32.mrb[0].mxu0
      %3641 = vmatprep.mubr.f32.mxu0 0.0
      %3642 = vmatmul.mubr.f32.gmra.mrb[0].mxu0 %v3570
      %v3643 = vpop.f32.mrb[0].mxu0
      %v3644 = vadd.f32 0.0, %v3643
      %v3645 = vpop.f32.mrb[0].mxu0
      %3646 = vdwg.mxu0
      %3647 = vrot.lane.b32.xlu0 %v577, 40
      %v3648 = vpop.permute.xlu0 %3647
      %3649 = vrot.lane.b32.xlu0 %v582, 40
      %v3650 = vpop.permute.xlu0 %3649
      %v3654 = vsel %vm960, %v3469, 0
      %v3657 = vsel %vm960, %v3470, 0
      %3659 = vmatprep.subr.mxu0 0.0
      %3660 = vmatpush1.msra.mxu0 %v3648
      %3661 = vmatprep.subr.mxu0 0.0
      %3662 = vmatpush1.msra.mxu0 %v3650
      %3663 = vmatprep.subr.mxu0 0.0
      %3664 = vmatpush1.msra.mxu0 0.0
      %3665 = vmatprep.subr.mxu0 0.0
      %3666 = vmatpush1.msra.mxu0 0.0
      %3667 = vmatprep.subr.mxu0 0.0
      %3668 = vmatpush1.msra.mxu0 0.0
      %3669 = vmatprep.subr.mxu0 0.0
      %3670 = vmatpush1.msra.mxu0 0.0
      %3671 = vmatprep.subr.mxu0 0.0
      %3672 = vmatpush1.msra.mxu0 0.0
      %3673 = vmatprep.subr.mxu0 0.0
      %3674 = vmatpush1.msra.mxu0 0.0
      %3675 = vmatprep.subr.mxu0 0.0
      %3676 = vmatpush1.msra.mxu0 0.0
      %3677 = vmatprep.subr.mxu0 0.0
      %3678 = vmatpush1.msra.mxu0 0.0
      %3679 = vmatprep.subr.mxu0 0.0
      %3680 = vmatpush1.msra.mxu0 0.0
      %3681 = vmatprep.subr.mxu0 0.0
      %3682 = vmatpush1.msra.mxu0 0.0
      %3683 = vmatprep.subr.mxu0 0.0
      %3684 = vmatpush1.msra.mxu0 0.0
      %3685 = vmatprep.subr.mxu0 0.0
      %3686 = vmatpush1.msra.mxu0 0.0
      %3687 = vmatprep.subr.mxu0 0.0
      %3688 = vmatpush1.msra.mxu0 0.0
      %3689 = vmatprep.subr.mxu0 0.0
      %3690 = vmatpush1.msra.mxu0 0.0
      %3691 = vmatprep.subr.mxu0 0.0
      %3692 = vmatpush1.msra.mxu0 0.0
      %3693 = vmatprep.subr.mxu0 0.0
      %3694 = vmatpush1.msra.mxu0 0.0
      %3695 = vmatprep.subr.mxu0 0.0
      %3696 = vmatpush1.msra.mxu0 0.0
      %3697 = vmatprep.subr.mxu0 0.0
      %3698 = vmatpush1.msra.mxu0 0.0
      %3699 = vmatprep.subr.mxu0 0.0
      %3700 = vmatpush1.msra.mxu0 0.0
      %3701 = vmatprep.subr.mxu0 0.0
      %3702 = vmatpush1.msra.mxu0 0.0
      %3703 = vmatprep.subr.mxu0 0.0
      %3704 = vmatpush1.msra.mxu0 0.0
      %3705 = vmatprep.subr.mxu0 0.0
      %3706 = vmatpush1.msra.mxu0 0.0
      %3707 = vmatprep.subr.mxu0 0.0
      %3708 = vmatpush1.msra.mxu0 0.0
      %3709 = vmatprep.subr.mxu0 0.0
      %3710 = vmatpush1.msra.mxu0 0.0
      %3711 = vmatprep.subr.mxu0 0.0
      %3712 = vmatpush1.msra.mxu0 0.0
      %3713 = vmatprep.subr.mxu0 0.0
      %3714 = vmatpush1.msra.mxu0 0.0
      %3715 = vmatprep.subr.mxu0 0.0
      %3716 = vmatpush1.msra.mxu0 0.0
      %3717 = vmatprep.subr.mxu0 0.0
      %3718 = vmatpush1.msra.mxu0 0.0
      %3719 = vmatprep.subr.mxu0 0.0
      %3720 = vmatpush1.msra.mxu0 0.0
      %3721 = vmatprep.subr.mxu0 0.0
      %3722 = vmatpush1.msra.mxu0 0.0
      %3723 = vmatprep.mubr.f32.mxu0 0.0
      %3724 = vmatmul.mubr.f32.gmra.mrb[0].mxu0 %v3654
      %v3725 = vpop.f32.mrb[0].mxu0
      %v3726 = vadd.f32 0.0, %v3725
      %v3727 = vpop.f32.mrb[0].mxu0
      %3728 = vmatprep.mubr.f32.mxu0 0.0
      %3729 = vmatmul.mubr.f32.gmra.mrb[0].mxu0 %v3657
      %v3730 = vpop.f32.mrb[0].mxu0
      %v3731 = vadd.f32 0.0, %v3730
      %v3732 = vpop.f32.mrb[0].mxu0
      %3733 = vdwg.mxu0
      %3734 = vrot.lane.b32.xlu0 %v587, 40
      %v3735 = vpop.permute.xlu0 %3734
      %3736 = vrot.lane.b32.xlu0 %v592, 40
      %v3737 = vpop.permute.xlu0 %3736
      %v3741 = vsel %vm960, %v3471, 0
      %v3744 = vsel %vm960, %v3472, 0
      %3746 = vmatprep.subr.mxu0 0.0
      %3747 = vmatpush1.msra.mxu0 %v3735
      %3748 = vmatprep.subr.mxu0 0.0
      %3749 = vmatpush1.msra.mxu0 %v3737
      %3750 = vmatprep.subr.mxu0 0.0
      %3751 = vmatpush1.msra.mxu0 0.0
      %3752 = vmatprep.subr.mxu0 0.0
      %3753 = vmatpush1.msra.mxu0 0.0
      %3754 = vmatprep.subr.mxu0 0.0
      %3755 = vmatpush1.msra.mxu0 0.0
      %3756 = vmatprep.subr.mxu0 0.0
      %3757 = vmatpush1.msra.mxu0 0.0
      %3758 = vmatprep.subr.mxu0 0.0
      %3759 = vmatpush1.msra.mxu0 0.0
      %3760 = vmatprep.subr.mxu0 0.0
      %3761 = vmatpush1.msra.mxu0 0.0
      %3762 = vmatprep.subr.mxu0 0.0
      %3763 = vmatpush1.msra.mxu0 0.0
      %3764 = vmatprep.subr.mxu0 0.0
      %3765 = vmatpush1.msra.mxu0 0.0
      %3766 = vmatprep.subr.mxu0 0.0
      %3767 = vmatpush1.msra.mxu0 0.0
      %3768 = vmatprep.subr.mxu0 0.0
      %3769 = vmatpush1.msra.mxu0 0.0
      %3770 = vmatprep.subr.mxu0 0.0
      %3771 = vmatpush1.msra.mxu0 0.0
      %3772 = vmatprep.subr.mxu0 0.0
      %3773 = vmatpush1.msra.mxu0 0.0
      %3774 = vmatprep.subr.mxu0 0.0
      %3775 = vmatpush1.msra.mxu0 0.0
      %3776 = vmatprep.subr.mxu0 0.0
      %3777 = vmatpush1.msra.mxu0 0.0
      %3778 = vmatprep.subr.mxu0 0.0
      %3779 = vmatpush1.msra.mxu0 0.0
      %3780 = vmatprep.subr.mxu0 0.0
      %3781 = vmatpush1.msra.mxu0 0.0
      %3782 = vmatprep.subr.mxu0 0.0
      %3783 = vmatpush1.msra.mxu0 0.0
      %3784 = vmatprep.subr.mxu0 0.0
      %3785 = vmatpush1.msra.mxu0 0.0
      %3786 = vmatprep.subr.mxu0 0.0
      %3787 = vmatpush1.msra.mxu0 0.0
      %3788 = vmatprep.subr.mxu0 0.0
      %3789 = vmatpush1.msra.mxu0 0.0
      %3790 = vmatprep.subr.mxu0 0.0
      %3791 = vmatpush1.msra.mxu0 0.0
      %3792 = vmatprep.subr.mxu0 0.0
      %3793 = vmatpush1.msra.mxu0 0.0
      %3794 = vmatprep.subr.mxu0 0.0
      %3795 = vmatpush1.msra.mxu0 0.0
      %3796 = vmatprep.subr.mxu0 0.0
      %3797 = vmatpush1.msra.mxu0 0.0
      %3798 = vmatprep.subr.mxu0 0.0
      %3799 = vmatpush1.msra.mxu0 0.0
      %3800 = vmatprep.subr.mxu0 0.0
      %3801 = vmatpush1.msra.mxu0 0.0
      %3802 = vmatprep.subr.mxu0 0.0
      %3803 = vmatpush1.msra.mxu0 0.0
      %3804 = vmatprep.subr.mxu0 0.0
      %3805 = vmatpush1.msra.mxu0 0.0
      %3806 = vmatprep.subr.mxu0 0.0
      %3807 = vmatpush1.msra.mxu0 0.0
      %3808 = vmatprep.subr.mxu0 0.0
      %3809 = vmatpush1.msra.mxu0 0.0
      %3810 = vmatprep.mubr.f32.mxu0 0.0
      %3811 = vmatmul.mubr.f32.gmra.mrb[0].mxu0 %v3741
      %v3812 = vpop.f32.mrb[0].mxu0
      %v3813 = vadd.f32 0.0, %v3812
      %v3814 = vpop.f32.mrb[0].mxu0
      %3815 = vmatprep.mubr.f32.mxu0 0.0
      %3816 = vmatmul.mubr.f32.gmra.mrb[0].mxu0 %v3744
      %v3817 = vpop.f32.mrb[0].mxu0
      %v3818 = vadd.f32 0.0, %v3817
      %v3819 = vpop.f32.mrb[0].mxu0
      %3820 = vdwg.mxu0
      %3829 = vrot.lane.b32.xlu0 %v1936, 8
      %v3830 = vpop.permute.xlu0 %3829
      %3831 = vrot.lane.b32.xlu0 %v1941, 8
      %v3832 = vpop.permute.xlu0 %3831
      %3833 = vrot.lane.b32.xlu0 %v2023, 8
      %v3834 = vpop.permute.xlu0 %3833
      %3835 = vrot.lane.b32.xlu0 %v2028, 8
      %v3836 = vpop.permute.xlu0 %3835
      %3837 = vrot.lane.b32.xlu0 %v2110, 8
      %v3838 = vpop.permute.xlu0 %3837
      %3839 = vrot.lane.b32.xlu0 %v2115, 8
      %v3840 = vpop.permute.xlu0 %3839
      %3841 = vrot.lane.b32.xlu0 %v2197, 8
      %v3842 = vpop.permute.xlu0 %3841
      %3843 = vrot.lane.b32.xlu0 %v2202, 8
      %v3844 = vpop.permute.xlu0 %3843
      %3861 = vrot.lane.b32.xlu0 %v2744, 16
      %v3862 = vpop.permute.xlu0 %3861
      %3863 = vrot.lane.b32.xlu0 %v2749, 16
      %v3864 = vpop.permute.xlu0 %3863
      %3865 = vrot.lane.b32.xlu0 %v2831, 16
      %v3866 = vpop.permute.xlu0 %3865
      %3867 = vrot.lane.b32.xlu0 %v2836, 16
      %v3868 = vpop.permute.xlu0 %3867
      %3869 = vrot.lane.b32.xlu0 %v2918, 16
      %v3870 = vpop.permute.xlu0 %3869
      %3871 = vrot.lane.b32.xlu0 %v2923, 16
      %v3872 = vpop.permute.xlu0 %3871
      %3873 = vrot.lane.b32.xlu0 %v3005, 16
      %v3874 = vpop.permute.xlu0 %3873
      %3875 = vrot.lane.b32.xlu0 %v3010, 16
      %v3876 = vpop.permute.xlu0 %3875
      %3893 = vrot.lane.b32.xlu0 %v3552, 24
      %v3894 = vpop.permute.xlu0 %3893
      %3895 = vrot.lane.b32.xlu0 %v3557, 24
      %v3896 = vpop.permute.xlu0 %3895
      %3897 = vrot.lane.b32.xlu0 %v3639, 24
      %v3898 = vpop.permute.xlu0 %3897
      %3899 = vrot.lane.b32.xlu0 %v3644, 24
      %v3900 = vpop.permute.xlu0 %3899
      %3901 = vrot.lane.b32.xlu0 %v3726, 24
      %v3902 = vpop.permute.xlu0 %3901
      %3903 = vrot.lane.b32.xlu0 %v3731, 24
      %v3904 = vpop.permute.xlu0 %3903
      %3905 = vrot.lane.b32.xlu0 %v3813, 24
      %v3906 = vpop.permute.xlu0 %3905
      %3907 = vrot.lane.b32.xlu0 %v3818, 24
      %v3908 = vpop.permute.xlu0 %3907
      %v3917 = vsel %vm601, %v1128, %v3830
      %v3918 = vsel %vm601, %v1133, %v3832
      %v3919 = vsel %vm601, %v1215, %v3834
      %v3920 = vsel %vm601, %v1220, %v3836
      %v3921 = vsel %vm601, %v1302, %v3838
      %v3922 = vsel %vm601, %v1307, %v3840
      %v3923 = vsel %vm601, %v1389, %v3842
      %v3924 = vsel %vm601, %v1394, %v3844
      %v3925 = vsel %vm960, %v3917, %v3862
      %v3926 = vsel %vm960, %v3918, %v3864
      %v3927 = vsel %vm960, %v3919, %v3866
      %v3928 = vsel %vm960, %v3920, %v3868
      %v3929 = vsel %vm960, %v3921, %v3870
      %v3930 = vsel %vm960, %v3922, %v3872
      %v3931 = vsel %vm960, %v3923, %v3874
      %v3932 = vsel %vm960, %v3924, %v3876
      %vm3933 = vcmask 195584
      %v3934 = vsel %vm3933, %v3925, %v3894
      %v3935 = vsel %vm3933, %v3926, %v3896
      %v3936 = vsel %vm3933, %v3927, %v3898
      %v3937 = vsel %vm3933, %v3928, %v3900
      %v3938 = vsel %vm3933, %v3929, %v3902
      %v3939 = vsel %vm3933, %v3930, %v3904
      %v3940 = vsel %vm3933, %v3931, %v3906
      %v3941 = vsel %vm3933, %v3932, %v3908
      %v3942 = vld [vmem:[%s3] sm:$0xff]
      %v3943 = vld [vmem:[%s3 + $0x8] sm:$0xff]
      %v3944 = vld [vmem:[%s3 + $0x10] sm:$0xff]
      %v3945 = vld [vmem:[%s3 + $0x18] sm:$0xff]
      %v3946 = vld [vmem:[%s4] sm:$0x1]
      %v3948 = vlaneseq
      %v3949 = vshrl.u32 %v3948, 7
      %v3950 = vsub.s32 0, %v3949
      %v3951 = vrot.slane %v3946, %v3950
      %v3954 = vsel %vm465, %v3934, 0
      %v3957 = vsel %vm465, %v3935, 0
      %v3960 = vsel %vm465, %v3936, 0
      %v3963 = vsel %vm465, %v3937, 0
      %v3966 = vsel %vm465, %v3938, 0
      %v3969 = vsel %vm465, %v3939, 0
      %v3972 = vsel %vm465, %v3940, 0
      %v3975 = vsel %vm465, %v3941, 0
      %3977 = vmatprep.subr.mxu0 0.0
      %3978 = vmatpush1.msra.mxu0 %v3942
      %3979 = vmatprep.subr.mxu0 0.0
      %3980 = vmatpush1.msra.mxu0 %v3943
      %3981 = vmatprep.subr.mxu0 0.0
      %3982 = vmatpush1.msra.mxu0 %v3944
      %3983 = vmatprep.subr.mxu0 0.0
      %3984 = vmatpush1.msra.mxu0 %v3945
      %3985 = vmatprep.subr.mxu0 0.0
      %3986 = vmatpush1.msra.mxu0 0.0
      %3987 = vmatprep.subr.mxu0 0.0
      %3988 = vmatpush1.msra.mxu0 0.0
      %3989 = vmatprep.subr.mxu0 0.0
      %3990 = vmatpush1.msra.mxu0 0.0
      %3991 = vmatprep.subr.mxu0 0.0
      %3992 = vmatpush1.msra.mxu0 0.0
      %3993 = vmatprep.subr.mxu0 0.0
      %3994 = vmatpush1.msra.mxu0 0.0
      %3995 = vmatprep.subr.mxu0 0.0
      %3996 = vmatpush1.msra.mxu0 0.0
      %3997 = vmatprep.subr.mxu0 0.0
      %3998 = vmatpush1.msra.mxu0 0.0
      %3999 = vmatprep.subr.mxu0 0.0
      %4000 = vmatpush1.msra.mxu0 0.0
      %4001 = vmatprep.subr.mxu0 0.0
      %4002 = vmatpush1.msra.mxu0 0.0
      %4003 = vmatprep.subr.mxu0 0.0
      %4004 = vmatpush1.msra.mxu0 0.0
      %4005 = vmatprep.subr.mxu0 0.0
      %4006 = vmatpush1.msra.mxu0 0.0
      %4007 = vmatprep.subr.mxu0 0.0
      %4008 = vmatpush1.msra.mxu0 0.0
      %4009 = vmatprep.subr.mxu0 0.0
      %4010 = vmatpush1.msra.mxu0 0.0
      %4011 = vmatprep.subr.mxu0 0.0
      %4012 = vmatpush1.msra.mxu0 0.0
      %4013 = vmatprep.subr.mxu0 0.0
      %4014 = vmatpush1.msra.mxu0 0.0
      %4015 = vmatprep.subr.mxu0 0.0
      %4016 = vmatpush1.msra.mxu0 0.0
      %4017 = vmatprep.subr.mxu0 0.0
      %4018 = vmatpush1.msra.mxu0 0.0
      %4019 = vmatprep.subr.mxu0 0.0
      %4020 = vmatpush1.msra.mxu0 0.0
      %4021 = vmatprep.subr.mxu0 0.0
      %4022 = vmatpush1.msra.mxu0 0.0
      %4023 = vmatprep.subr.mxu0 0.0
      %4024 = vmatpush1.msra.mxu0 0.0
      %4025 = vmatprep.subr.mxu0 0.0
      %4026 = vmatpush1.msra.mxu0 0.0
      %4027 = vmatprep.subr.mxu0 0.0
      %4028 = vmatpush1.msra.mxu0 0.0
      %4029 = vmatprep.subr.mxu0 0.0
      %4030 = vmatpush1.msra.mxu0 0.0
      %4031 = vmatprep.subr.mxu0 0.0
      %4032 = vmatpush1.msra.mxu0 0.0
      %4033 = vmatprep.subr.mxu0 0.0
      %4034 = vmatpush1.msra.mxu0 0.0
      %4035 = vmatprep.subr.mxu0 0.0
      %4036 = vmatpush1.msra.mxu0 0.0
      %4037 = vmatprep.subr.mxu0 0.0
      %4038 = vmatpush1.msra.mxu0 0.0
      %4039 = vmatprep.subr.mxu0 0.0
      %4040 = vmatpush1.msra.mxu0 0.0
      %4041 = vmatprep.mubr.f32.mxu0 0.0
      %4042 = vmatmul.mubr.f32.gmra.mrb[0].mxu0 %v3954
      %v4043 = vpop.f32.mrb[0].mxu0
      %v4044 = vadd.f32 %v3951, %v4043
      %v4045 = vpop.f32.mrb[0].mxu0
      %4046 = vmatprep.mubr.f32.mxu0 0.0
      %4047 = vmatmul.mubr.f32.gmra.mrb[0].mxu0 %v3957
      %v4048 = vpop.f32.mrb[0].mxu0
      %v4049 = vadd.f32 %v3951, %v4048
      %v4050 = vpop.f32.mrb[0].mxu0
      %4051 = vmatprep.mubr.f32.mxu0 0.0
      %4052 = vmatmul.mubr.f32.gmra.mrb[0].mxu0 %v3960
      %v4053 = vpop.f32.mrb[0].mxu0
      %v4054 = vadd.f32 %v3951, %v4053
      %v4055 = vpop.f32.mrb[0].mxu0
      %4056 = vmatprep.mubr.f32.mxu0 0.0
      %4057 = vmatmul.mubr.f32.gmra.mrb[0].mxu0 %v3963
      %v4058 = vpop.f32.mrb[0].mxu0
      %v4059 = vadd.f32 %v3951, %v4058
      %v4060 = vpop.f32.mrb[0].mxu0
      %4061 = vmatprep.mubr.f32.mxu0 0.0
      %4062 = vmatmul.mubr.f32.gmra.mrb[0].mxu0 %v3966
      %v4063 = vpop.f32.mrb[0].mxu0
      %v4064 = vadd.f32 %v3951, %v4063
      %v4065 = vpop.f32.mrb[0].mxu0
      %4066 = vmatprep.mubr.f32.mxu0 0.0
      %4067 = vmatmul.mubr.f32.gmra.mrb[0].mxu0 %v3969
      %v4068 = vpop.f32.mrb[0].mxu0
      %v4069 = vadd.f32 %v3951, %v4068
      %v4070 = vpop.f32.mrb[0].mxu0
      %4071 = vmatprep.mubr.f32.mxu0 0.0
      %4072 = vmatmul.mubr.f32.gmra.mrb[0].mxu0 %v3972
      %v4073 = vpop.f32.mrb[0].mxu0
      %v4074 = vadd.f32 %v3951, %v4073
      %v4075 = vpop.f32.mrb[0].mxu0
      %4076 = vmatprep.mubr.f32.mxu0 0.0
      %4077 = vmatmul.mubr.f32.gmra.mrb[0].mxu0 %v3975
      %v4078 = vpop.f32.mrb[0].mxu0
      %v4079 = vadd.f32 %v3951, %v4078
      %v4080 = vpop.f32.mrb[0].mxu0
      %4081 = vdwg.mxu0
      %v4082 = vadd.f32 %v446, %v4044
      %v4083 = vadd.f32 %v447, %v4049
      %v4084 = vadd.f32 %v448, %v4054
      %v4085 = vadd.f32 %v449, %v4059
      %v4086 = vadd.f32 %v450, %v4064
      %v4087 = vadd.f32 %v451, %v4069
      %v4088 = vadd.f32 %v452, %v4074
      %v4089 = vadd.f32 %v453, %v4079
      %v4090 = vld [vmem:[%s5] sm:$0x1]
      %v4091 = vld [vmem:[%s6] sm:$0x1]
      %v4092 = vsel %vm465, %v4082, 0.0
      %4093 = vadd.xlane.f32.xlu0 %v4092
      %v4094 = vpop.xlane.xlu0 %4093
      %v4095 = vsel %vm465, %v4083, 0.0
      %4096 = vadd.xlane.f32.xlu0 %v4095
      %v4097 = vpop.xlane.xlu0 %4096
      %v4098 = vsel %vm465, %v4084, 0.0
      %4099 = vadd.xlane.f32.xlu0 %v4098
      %v4100 = vpop.xlane.xlu0 %4099
      %v4101 = vsel %vm465, %v4085, 0.0
      %4102 = vadd.xlane.f32.xlu0 %v4101
      %v4103 = vpop.xlane.xlu0 %4102
      %v4104 = vsel %vm465, %v4086, 0.0
      %4105 = vadd.xlane.f32.xlu0 %v4104
      %v4106 = vpop.xlane.xlu0 %4105
      %v4107 = vsel %vm465, %v4087, 0.0
      %4108 = vadd.xlane.f32.xlu0 %v4107
      %v4109 = vpop.xlane.xlu0 %4108
      %v4110 = vsel %vm465, %v4088, 0.0
      %4111 = vadd.xlane.f32.xlu0 %v4110
      %v4112 = vpop.xlane.xlu0 %4111
      %v4113 = vsel %vm465, %v4089, 0.0
      %4114 = vadd.xlane.f32.xlu0 %v4113
      %v4115 = vpop.xlane.xlu0 %4114
      %v4116 = vrcp.pop 32.0
      %v4117 = vmul.f32 %v4094, %v4116
      %v4118 = vmul.f32 %v4097, %v4116
      %v4119 = vmul.f32 %v4100, %v4116
      %v4120 = vmul.f32 %v4103, %v4116
      %v4121 = vmul.f32 %v4106, %v4116
      %v4122 = vmul.f32 %v4109, %v4116
      %v4123 = vmul.f32 %v4112, %v4116
      %v4124 = vmul.f32 %v4115, %v4116
      %v4125 = vsub.f32 %v4082, %v4117
      %v4126 = vsub.f32 %v4083, %v4118
      %v4127 = vsub.f32 %v4084, %v4119
      %v4128 = vsub.f32 %v4085, %v4120
      %v4129 = vsub.f32 %v4086, %v4121
      %v4130 = vsub.f32 %v4087, %v4122
      %v4131 = vsub.f32 %v4088, %v4123
      %v4132 = vsub.f32 %v4089, %v4124
      %v4133 = vmul.f32 %v4125, %v4125
      %v4134 = vmul.f32 %v4126, %v4126
      %v4135 = vmul.f32 %v4127, %v4127
      %v4136 = vmul.f32 %v4128, %v4128
      %v4137 = vmul.f32 %v4129, %v4129
      %v4138 = vmul.f32 %v4130, %v4130
      %v4139 = vmul.f32 %v4131, %v4131
      %v4140 = vmul.f32 %v4132, %v4132
      %v4141 = vsel %vm465, %v4133, 0.0
      %4142 = vadd.xlane.f32.xlu0 %v4141
      %v4143 = vpop.xlane.xlu0 %4142
      %v4144 = vsel %vm465, %v4134, 0.0
      %4145 = vadd.xlane.f32.xlu0 %v4144
      %v4146 = vpop.xlane.xlu0 %4145
      %v4147 = vsel %vm465, %v4135, 0.0
      %4148 = vadd.xlane.f32.xlu0 %v4147
      %v4149 = vpop.xlane.xlu0 %4148
      %v4150 = vsel %vm465, %v4136, 0.0
      %4151 = vadd.xlane.f32.xlu0 %v4150
      %v4152 = vpop.xlane.xlu0 %4151
      %v4153 = vsel %vm465, %v4137, 0.0
      %4154 = vadd.xlane.f32.xlu0 %v4153
      %v4155 = vpop.xlane.xlu0 %4154
      %v4156 = vsel %vm465, %v4138, 0.0
      %4157 = vadd.xlane.f32.xlu0 %v4156
      %v4158 = vpop.xlane.xlu0 %4157
      %v4159 = vsel %vm465, %v4139, 0.0
      %4160 = vadd.xlane.f32.xlu0 %v4159
      %v4161 = vpop.xlane.xlu0 %4160
      %v4162 = vsel %vm465, %v4140, 0.0
      %4163 = vadd.xlane.f32.xlu0 %v4162
      %v4164 = vpop.xlane.xlu0 %4163
      %v4165 = vmul.f32 %v4143, %v4116
      %v4166 = vmul.f32 %v4146, %v4116
      %v4167 = vmul.f32 %v4149, %v4116
      %v4168 = vmul.f32 %v4152, %v4116
      %v4169 = vmul.f32 %v4155, %v4116
      %v4170 = vmul.f32 %v4158, %v4116
      %v4171 = vmul.f32 %v4161, %v4116
      %v4172 = vmul.f32 %v4164, %v4116
      %v4173 = vadd.f32 %v4165, 1e-05
      %v4174 = vadd.f32 %v4166, 1e-05
      %v4175 = vadd.f32 %v4167, 1e-05
      %v4176 = vadd.f32 %v4168, 1e-05
      %v4177 = vadd.f32 %v4169, 1e-05
      %v4178 = vadd.f32 %v4170, 1e-05
      %v4179 = vadd.f32 %v4171, 1e-05
      %v4180 = vadd.f32 %v4172, 1e-05
      %v4181 = vrsqrt.pop %v4173
      %v4182 = vrsqrt.pop %v4174
      %v4183 = vrsqrt.pop %v4175
      %v4184 = vrsqrt.pop %v4176
      %v4185 = vrsqrt.pop %v4177
      %v4186 = vrsqrt.pop %v4178
      %v4187 = vrsqrt.pop %v4179
      %v4188 = vrsqrt.pop %v4180
      %v4189 = vmul.f32 %v4125, %v4181
      %v4190 = vmul.f32 %v4126, %v4182
      %v4191 = vmul.f32 %v4127, %v4183
      %v4192 = vmul.f32 %v4128, %v4184
      %v4193 = vmul.f32 %v4129, %v4185
      %v4194 = vmul.f32 %v4130, %v4186
      %v4195 = vmul.f32 %v4131, %v4187
      %v4196 = vmul.f32 %v4132, %v4188
      %v4198 = vlaneseq
      %v4199 = vshrl.u32 %v4198, 7
      %v4200 = vsub.s32 0, %v4199
      %v4201 = vrot.slane %v4090, %v4200
      %v4203 = vmul.f32 %v4189, %v4201
      %v4204 = vmul.f32 %v4190, %v4201
      %v4205 = vmul.f32 %v4191, %v4201
      %v4206 = vmul.f32 %v4192, %v4201
      %v4207 = vmul.f32 %v4193, %v4201
      %v4208 = vmul.f32 %v4194, %v4201
      %v4209 = vmul.f32 %v4195, %v4201
      %v4210 = vmul.f32 %v4196, %v4201
      %v4212 = vlaneseq
      %v4213 = vshrl.u32 %v4212, 7
      %v4214 = vsub.s32 0, %v4213
      %v4215 = vrot.slane %v4091, %v4214
      %v4217 = vadd.f32 %v4203, %v4215
      %v4218 = vadd.f32 %v4204, %v4215
      %v4219 = vadd.f32 %v4205, %v4215
      %v4220 = vadd.f32 %v4206, %v4215
      %v4221 = vadd.f32 %v4207, %v4215
      %v4222 = vadd.f32 %v4208, %v4215
      %v4223 = vadd.f32 %v4209, %v4215
      %v4224 = vadd.f32 %v4210, %v4215
      %v4225 = vld [vmem:[%s7] sm:$0xff]
      %v4226 = vld [vmem:[%s7 + $0x8] sm:$0xff]
      %v4227 = vld [vmem:[%s7 + $0x10] sm:$0xff]
      %v4228 = vld [vmem:[%s7 + $0x18] sm:$0xff]
      %v4229 = vld [vmem:[%s8] sm:$0x1]
      %v4231 = vlaneseq
      %v4232 = vshrl.u32 %v4231, 7
      %v4233 = vsub.s32 0, %v4232
      %v4234 = vrot.slane %v4229, %v4233
      %v4237 = vsel %vm465, %v4217, 0
      %v4240 = vsel %vm465, %v4218, 0
      %v4243 = vsel %vm465, %v4219, 0
      %v4246 = vsel %vm465, %v4220, 0
      %v4249 = vsel %vm465, %v4221, 0
      %v4252 = vsel %vm465, %v4222, 0
      %v4255 = vsel %vm465, %v4223, 0
      %v4258 = vsel %vm465, %v4224, 0
      %4260 = vmatprep.subr.mxu0 0.0
      %4261 = vmatpush1.msra.mxu0 %v4225
      %4262 = vmatprep.subr.mxu0 0.0
      %4263 = vmatpush1.msra.mxu0 %v4226
      %4264 = vmatprep.subr.mxu0 0.0
      %4265 = vmatpush1.msra.mxu0 %v4227
      %4266 = vmatprep.subr.mxu0 0.0
      %4267 = vmatpush1.msra.mxu0 %v4228
      %4268 = vmatprep.subr.mxu0 0.0
      %4269 = vmatpush1.msra.mxu0 0.0
      %4270 = vmatprep.subr.mxu0 0.0
      %4271 = vmatpush1.msra.mxu0 0.0
      %4272 = vmatprep.subr.mxu0 0.0
      %4273 = vmatpush1.msra.mxu0 0.0
      %4274 = vmatprep.subr.mxu0 0.0
      %4275 = vmatpush1.msra.mxu0 0.0
      %4276 = vmatprep.subr.mxu0 0.0
      %4277 = vmatpush1.msra.mxu0 0.0
      %4278 = vmatprep.subr.mxu0 0.0
      %4279 = vmatpush1.msra.mxu0 0.0
      %4280 = vmatprep.subr.mxu0 0.0
      %4281 = vmatpush1.msra.mxu0 0.0
      %4282 = vmatprep.subr.mxu0 0.0
      %4283 = vmatpush1.msra.mxu0 0.0
      %4284 = vmatprep.subr.mxu0 0.0
      %4285 = vmatpush1.msra.mxu0 0.0
      %4286 = vmatprep.subr.mxu0 0.0
      %4287 = vmatpush1.msra.mxu0 0.0
      %4288 = vmatprep.subr.mxu0 0.0
      %4289 = vmatpush1.msra.mxu0 0.0
      %4290 = vmatprep.subr.mxu0 0.0
      %4291 = vmatpush1.msra.mxu0 0.0
      %4292 = vmatprep.subr.mxu0 0.0
      %4293 = vmatpush1.msra.mxu0 0.0
      %4294 = vmatprep.subr.mxu0 0.0
      %4295 = vmatpush1.msra.mxu0 0.0
      %4296 = vmatprep.subr.mxu0 0.0
      %4297 = vmatpush1.msra.mxu0 0.0
      %4298 = vmatprep.subr.mxu0 0.0
      %4299 = vmatpush1.msra.mxu0 0.0
      %4300 = vmatprep.subr.mxu0 0.0
      %4301 = vmatpush1.msra.mxu0 0.0
      %4302 = vmatprep.subr.mxu0 0.0
      %4303 = vmatpush1.msra.mxu0 0.0
      %4304 = vmatprep.subr.mxu0 0.0
      %4305 = vmatpush1.msra.mxu0 0.0
      %4306 = vmatprep.subr.mxu0 0.0
      %4307 = vmatpush1.msra.mxu0 0.0
      %4308 = vmatprep.subr.mxu0 0.0
      %4309 = vmatpush1.msra.mxu0 0.0
      %4310 = vmatprep.subr.mxu0 0.0
      %4311 = vmatpush1.msra.mxu0 0.0
      %4312 = vmatprep.subr.mxu0 0.0
      %4313 = vmatpush1.msra.mxu0 0.0
      %4314 = vmatprep.subr.mxu0 0.0
      %4315 = vmatpush1.msra.mxu0 0.0
      %4316 = vmatprep.subr.mxu0 0.0
      %4317 = vmatpush1.msra.mxu0 0.0
      %4318 = vmatprep.subr.mxu0 0.0
      %4319 = vmatpush1.msra.mxu0 0.0
      %4320 = vmatprep.subr.mxu0 0.0
      %4321 = vmatpush1.msra.mxu0 0.0
      %4322 = vmatprep.subr.mxu0 0.0
      %4323 = vmatpush1.msra.mxu0 0.0
      %4324 = vmatprep.mubr.f32.mxu0 0.0
      %4325 = vmatmul.mubr.f32.gmra.mrb[0].mxu0 %v4237
      %v4326 = vpop.f32.mrb[0].mxu0
      %v4327 = vadd.f32 %v4234, %v4326
      %v4328 = vpop.f32.mrb[0].mxu0
      %4329 = vmatprep.mubr.f32.mxu0 0.0
      %4330 = vmatmul.mubr.f32.gmra.mrb[0].mxu0 %v4240
      %v4331 = vpop.f32.mrb[0].mxu0
      %v4332 = vadd.f32 %v4234, %v4331
      %v4333 = vpop.f32.mrb[0].mxu0
      %4334 = vmatprep.mubr.f32.mxu0 0.0
      %4335 = vmatmul.mubr.f32.gmra.mrb[0].mxu0 %v4243
      %v4336 = vpop.f32.mrb[0].mxu0
      %v4337 = vadd.f32 %v4234, %v4336
      %v4338 = vpop.f32.mrb[0].mxu0
      %4339 = vmatprep.mubr.f32.mxu0 0.0
      %4340 = vmatmul.mubr.f32.gmra.mrb[0].mxu0 %v4246
      %v4341 = vpop.f32.mrb[0].mxu0
      %v4342 = vadd.f32 %v4234, %v4341
      %v4343 = vpop.f32.mrb[0].mxu0
      %4344 = vmatprep.mubr.f32.mxu0 0.0
      %4345 = vmatmul.mubr.f32.gmra.mrb[0].mxu0 %v4249
      %v4346 = vpop.f32.mrb[0].mxu0
      %v4347 = vadd.f32 %v4234, %v4346
      %v4348 = vpop.f32.mrb[0].mxu0
      %4349 = vmatprep.mubr.f32.mxu0 0.0
      %4350 = vmatmul.mubr.f32.gmra.mrb[0].mxu0 %v4252
      %v4351 = vpop.f32.mrb[0].mxu0
      %v4352 = vadd.f32 %v4234, %v4351
      %v4353 = vpop.f32.mrb[0].mxu0
      %4354 = vmatprep.mubr.f32.mxu0 0.0
      %4355 = vmatmul.mubr.f32.gmra.mrb[0].mxu0 %v4255
      %v4356 = vpop.f32.mrb[0].mxu0
      %v4357 = vadd.f32 %v4234, %v4356
      %v4358 = vpop.f32.mrb[0].mxu0
      %4359 = vmatprep.mubr.f32.mxu0 0.0
      %4360 = vmatmul.mubr.f32.gmra.mrb[0].mxu0 %v4258
      %v4361 = vpop.f32.mrb[0].mxu0
      %v4362 = vadd.f32 %v4234, %v4361
      %v4363 = vpop.f32.mrb[0].mxu0
      %4364 = vdwg.mxu0
      %v4365 = vmax.f32 %v4327, 0.0
      %v4366 = vmax.f32 %v4332, 0.0
      %v4367 = vmax.f32 %v4337, 0.0
      %v4368 = vmax.f32 %v4342, 0.0
      %v4369 = vmax.f32 %v4347, 0.0
      %v4370 = vmax.f32 %v4352, 0.0
      %v4371 = vmax.f32 %v4357, 0.0
      %v4372 = vmax.f32 %v4362, 0.0
      %v4373 = vld [vmem:[%s9] sm:$0xff]
      %v4374 = vld [vmem:[%s9 + $0x8] sm:$0xff]
      %v4375 = vld [vmem:[%s9 + $0x10] sm:$0xff]
      %v4376 = vld [vmem:[%s9 + $0x18] sm:$0xff]
      %v4377 = vld [vmem:[%s9 + $0x20] sm:$0xff]
      %v4378 = vld [vmem:[%s9 + $0x28] sm:$0xff]
      %v4379 = vld [vmem:[%s9 + $0x30] sm:$0xff]
      %v4380 = vld [vmem:[%s9 + $0x38] sm:$0xff]
      %v4381 = vld [vmem:[%s10] sm:$0x1]
      %v4383 = vlaneseq
      %v4384 = vshrl.u32 %v4383, 7
      %v4385 = vsub.s32 0, %v4384
      %v4386 = vrot.slane %v4381, %v4385
      %vm4388 = vcmask 523264
      %v4390 = vsel %vm4388, %v4365, 0
      %v4393 = vsel %vm4388, %v4366, 0
      %v4396 = vsel %vm4388, %v4367, 0
      %v4399 = vsel %vm4388, %v4368, 0
      %v4402 = vsel %vm4388, %v4369, 0
      %v4405 = vsel %vm4388, %v4370, 0
      %v4408 = vsel %vm4388, %v4371, 0
      %v4411 = vsel %vm4388, %v4372, 0
      %4413 = vmatprep.subr.mxu0 0.0
      %4414 = vmatpush1.msra.mxu0 %v4373
      %4415 = vmatprep.subr.mxu0 0.0
      %4416 = vmatpush1.msra.mxu0 %v4374
      %4417 = vmatprep.subr.mxu0 0.0
      %4418 = vmatpush1.msra.mxu0 %v4375
      %4419 = vmatprep.subr.mxu0 0.0
      %4420 = vmatpush1.msra.mxu0 %v4376
      %4421 = vmatprep.subr.mxu0 0.0
      %4422 = vmatpush1.msra.mxu0 %v4377
      %4423 = vmatprep.subr.mxu0 0.0
      %4424 = vmatpush1.msra.mxu0 %v4378
      %4425 = vmatprep.subr.mxu0 0.0
      %4426 = vmatpush1.msra.mxu0 %v4379
      %4427 = vmatprep.subr.mxu0 0.0
      %4428 = vmatpush1.msra.mxu0 %v4380
      %4429 = vmatprep.subr.mxu0 0.0
      %4430 = vmatpush1.msra.mxu0 0.0
      %4431 = vmatprep.subr.mxu0 0.0
      %4432 = vmatpush1.msra.mxu0 0.0
      %4433 = vmatprep.subr.mxu0 0.0
      %4434 = vmatpush1.msra.mxu0 0.0
      %4435 = vmatprep.subr.mxu0 0.0
      %4436 = vmatpush1.msra.mxu0 0.0
      %4437 = vmatprep.subr.mxu0 0.0
      %4438 = vmatpush1.msra.mxu0 0.0
      %4439 = vmatprep.subr.mxu0 0.0
      %4440 = vmatpush1.msra.mxu0 0.0
      %4441 = vmatprep.subr.mxu0 0.0
      %4442 = vmatpush1.msra.mxu0 0.0
      %4443 = vmatprep.subr.mxu0 0.0
      %4444 = vmatpush1.msra.mxu0 0.0
      %4445 = vmatprep.subr.mxu0 0.0
      %4446 = vmatpush1.msra.mxu0 0.0
      %4447 = vmatprep.subr.mxu0 0.0
      %4448 = vmatpush1.msra.mxu0 0.0
      %4449 = vmatprep.subr.mxu0 0.0
      %4450 = vmatpush1.msra.mxu0 0.0
      %4451 = vmatprep.subr.mxu0 0.0
      %4452 = vmatpush1.msra.mxu0 0.0
      %4453 = vmatprep.subr.mxu0 0.0
      %4454 = vmatpush1.msra.mxu0 0.0
      %4455 = vmatprep.subr.mxu0 0.0
      %4456 = vmatpush1.msra.mxu0 0.0
      %4457 = vmatprep.subr.mxu0 0.0
      %4458 = vmatpush1.msra.mxu0 0.0
      %4459 = vmatprep.subr.mxu0 0.0
      %4460 = vmatpush1.msra.mxu0 0.0
      %4461 = vmatprep.subr.mxu0 0.0
      %4462 = vmatpush1.msra.mxu0 0.0
      %4463 = vmatprep.subr.mxu0 0.0
      %4464 = vmatpush1.msra.mxu0 0.0
      %4465 = vmatprep.subr.mxu0 0.0
      %4466 = vmatpush1.msra.mxu0 0.0
      %4467 = vmatprep.subr.mxu0 0.0
      %4468 = vmatpush1.msra.mxu0 0.0
      %4469 = vmatprep.subr.mxu0 0.0
      %4470 = vmatpush1.msra.mxu0 0.0
      %4471 = vmatprep.subr.mxu0 0.0
      %4472 = vmatpush1.msra.mxu0 0.0
      %4473 = vmatprep.subr.mxu0 0.0
      %4474 = vmatpush1.msra.mxu0 0.0
      %4475 = vmatprep.subr.mxu0 0.0
      %4476 = vmatpush1.msra.mxu0 0.0
      %4477 = vmatprep.mubr.f32.mxu0 0.0
      %4478 = vmatmul.mubr.f32.gmra.mrb[0].mxu0 %v4390
      %v4479 = vpop.f32.mrb[0].mxu0
      %v4480 = vadd.f32 %v4386, %v4479
      %v4481 = vpop.f32.mrb[0].mxu0
      %4482 = vmatprep.mubr.f32.mxu0 0.0
      %4483 = vmatmul.mubr.f32.gmra.mrb[0].mxu0 %v4393
      %v4484 = vpop.f32.mrb[0].mxu0
      %v4485 = vadd.f32 %v4386, %v4484
      %v4486 = vpop.f32.mrb[0].mxu0
      %4487 = vmatprep.mubr.f32.mxu0 0.0
      %4488 = vmatmul.mubr.f32.gmra.mrb[0].mxu0 %v4396
      %v4489 = vpop.f32.mrb[0].mxu0
      %v4490 = vadd.f32 %v4386, %v4489
      %v4491 = vpop.f32.mrb[0].mxu0
      %4492 = vmatprep.mubr.f32.mxu0 0.0
      %4493 = vmatmul.mubr.f32.gmra.mrb[0].mxu0 %v4399
      %v4494 = vpop.f32.mrb[0].mxu0
      %v4495 = vadd.f32 %v4386, %v4494
      %v4496 = vpop.f32.mrb[0].mxu0
      %4497 = vmatprep.mubr.f32.mxu0 0.0
      %4498 = vmatmul.mubr.f32.gmra.mrb[0].mxu0 %v4402
      %v4499 = vpop.f32.mrb[0].mxu0
      %v4500 = vadd.f32 %v4386, %v4499
      %v4501 = vpop.f32.mrb[0].mxu0
      %4502 = vmatprep.mubr.f32.mxu0 0.0
      %4503 = vmatmul.mubr.f32.gmra.mrb[0].mxu0 %v4405
      %v4504 = vpop.f32.mrb[0].mxu0
      %v4505 = vadd.f32 %v4386, %v4504
      %v4506 = vpop.f32.mrb[0].mxu0
      %4507 = vmatprep.mubr.f32.mxu0 0.0
      %4508 = vmatmul.mubr.f32.gmra.mrb[0].mxu0 %v4408
      %v4509 = vpop.f32.mrb[0].mxu0
      %v4510 = vadd.f32 %v4386, %v4509
      %v4511 = vpop.f32.mrb[0].mxu0
      %4512 = vmatprep.mubr.f32.mxu0 0.0
      %4513 = vmatmul.mubr.f32.gmra.mrb[0].mxu0 %v4411
      %v4514 = vpop.f32.mrb[0].mxu0
      %v4515 = vadd.f32 %v4386, %v4514
      %v4516 = vpop.f32.mrb[0].mxu0
      %4517 = vdwg.mxu0
      %v4518 = vadd.f32 %v4217, %v4480
      %v4519 = vadd.f32 %v4218, %v4485
      %v4520 = vadd.f32 %v4219, %v4490
      %v4521 = vadd.f32 %v4220, %v4495
      %v4522 = vadd.f32 %v4221, %v4500
      %v4523 = vadd.f32 %v4222, %v4505
      %v4524 = vadd.f32 %v4223, %v4510
      %v4525 = vadd.f32 %v4224, %v4515
      %v4526 = vld [vmem:[%s11] sm:$0x1]
      %v4527 = vld [vmem:[%s12] sm:$0x1]
      %v4528 = vsel %vm465, %v4518, 0.0
      %4529 = vadd.xlane.f32.xlu0 %v4528
      %v4530 = vpop.xlane.xlu0 %4529
      %v4531 = vsel %vm465, %v4519, 0.0
      %4532 = vadd.xlane.f32.xlu0 %v4531
      %v4533 = vpop.xlane.xlu0 %4532
      %v4534 = vsel %vm465, %v4520, 0.0
      %4535 = vadd.xlane.f32.xlu0 %v4534
      %v4536 = vpop.xlane.xlu0 %4535
      %v4537 = vsel %vm465, %v4521, 0.0
      %4538 = vadd.xlane.f32.xlu0 %v4537
      %v4539 = vpop.xlane.xlu0 %4538
      %v4540 = vsel %vm465, %v4522, 0.0
      %4541 = vadd.xlane.f32.xlu0 %v4540
      %v4542 = vpop.xlane.xlu0 %4541
      %v4543 = vsel %vm465, %v4523, 0.0
      %4544 = vadd.xlane.f32.xlu0 %v4543
      %v4545 = vpop.xlane.xlu0 %4544
      %v4546 = vsel %vm465, %v4524, 0.0
      %4547 = vadd.xlane.f32.xlu0 %v4546
      %v4548 = vpop.xlane.xlu0 %4547
      %v4549 = vsel %vm465, %v4525, 0.0
      %4550 = vadd.xlane.f32.xlu0 %v4549
      %v4551 = vpop.xlane.xlu0 %4550
      %v4552 = vmul.f32 %v4530, %v4116
      %v4553 = vmul.f32 %v4533, %v4116
      %v4554 = vmul.f32 %v4536, %v4116
      %v4555 = vmul.f32 %v4539, %v4116
      %v4556 = vmul.f32 %v4542, %v4116
      %v4557 = vmul.f32 %v4545, %v4116
      %v4558 = vmul.f32 %v4548, %v4116
      %v4559 = vmul.f32 %v4551, %v4116
      %v4560 = vsub.f32 %v4518, %v4552
      %v4561 = vsub.f32 %v4519, %v4553
      %v4562 = vsub.f32 %v4520, %v4554
      %v4563 = vsub.f32 %v4521, %v4555
      %v4564 = vsub.f32 %v4522, %v4556
      %v4565 = vsub.f32 %v4523, %v4557
      %v4566 = vsub.f32 %v4524, %v4558
      %v4567 = vsub.f32 %v4525, %v4559
      %v4568 = vmul.f32 %v4560, %v4560
      %v4569 = vmul.f32 %v4561, %v4561
      %v4570 = vmul.f32 %v4562, %v4562
      %v4571 = vmul.f32 %v4563, %v4563
      %v4572 = vmul.f32 %v4564, %v4564
      %v4573 = vmul.f32 %v4565, %v4565
      %v4574 = vmul.f32 %v4566, %v4566
      %v4575 = vmul.f32 %v4567, %v4567
      %v4576 = vsel %vm465, %v4568, 0.0
      %4577 = vadd.xlane.f32.xlu0 %v4576
      %v4578 = vpop.xlane.xlu0 %4577
      %v4579 = vsel %vm465, %v4569, 0.0
      %4580 = vadd.xlane.f32.xlu0 %v4579
      %v4581 = vpop.xlane.xlu0 %4580
      %v4582 = vsel %vm465, %v4570, 0.0
      %4583 = vadd.xlane.f32.xlu0 %v4582
      %v4584 = vpop.xlane.xlu0 %4583
      %v4585 = vsel %vm465, %v4571, 0.0
      %4586 = vadd.xlane.f32.xlu0 %v4585
      %v4587 = vpop.xlane.xlu0 %4586
      %v4588 = vsel %vm465, %v4572, 0.0
      %4589 = vadd.xlane.f32.xlu0 %v4588
      %v4590 = vpop.xlane.xlu0 %4589
      %v4591 = vsel %vm465, %v4573, 0.0
      %4592 = vadd.xlane.f32.xlu0 %v4591
      %v4593 = vpop.xlane.xlu0 %4592
      %v4594 = vsel %vm465, %v4574, 0.0
      %4595 = vadd.xlane.f32.xlu0 %v4594
      %v4596 = vpop.xlane.xlu0 %4595
      %v4597 = vsel %vm465, %v4575, 0.0
      %4598 = vadd.xlane.f32.xlu0 %v4597
      %v4599 = vpop.xlane.xlu0 %4598
      %v4600 = vmul.f32 %v4578, %v4116
      %v4601 = vmul.f32 %v4581, %v4116
      %v4602 = vmul.f32 %v4584, %v4116
      %v4603 = vmul.f32 %v4587, %v4116
      %v4604 = vmul.f32 %v4590, %v4116
      %v4605 = vmul.f32 %v4593, %v4116
      %v4606 = vmul.f32 %v4596, %v4116
      %v4607 = vmul.f32 %v4599, %v4116
      %v4608 = vadd.f32 %v4600, 1e-05
      %v4609 = vadd.f32 %v4601, 1e-05
      %v4610 = vadd.f32 %v4602, 1e-05
      %v4611 = vadd.f32 %v4603, 1e-05
      %v4612 = vadd.f32 %v4604, 1e-05
      %v4613 = vadd.f32 %v4605, 1e-05
      %v4614 = vadd.f32 %v4606, 1e-05
      %v4615 = vadd.f32 %v4607, 1e-05
      %v4616 = vrsqrt.pop %v4608
      %v4617 = vrsqrt.pop %v4609
      %v4618 = vrsqrt.pop %v4610
      %v4619 = vrsqrt.pop %v4611
      %v4620 = vrsqrt.pop %v4612
      %v4621 = vrsqrt.pop %v4613
      %v4622 = vrsqrt.pop %v4614
      %v4623 = vrsqrt.pop %v4615
      %v4624 = vmul.f32 %v4560, %v4616
      %v4625 = vmul.f32 %v4561, %v4617
      %v4626 = vmul.f32 %v4562, %v4618
      %v4627 = vmul.f32 %v4563, %v4619
      %v4628 = vmul.f32 %v4564, %v4620
      %v4629 = vmul.f32 %v4565, %v4621
      %v4630 = vmul.f32 %v4566, %v4622
      %v4631 = vmul.f32 %v4567, %v4623
      %v4633 = vlaneseq
      %v4634 = vshrl.u32 %v4633, 7
      %v4635 = vsub.s32 0, %v4634
      %v4636 = vrot.slane %v4526, %v4635
      %v4638 = vmul.f32 %v4624, %v4636
      %v4639 = vmul.f32 %v4625, %v4636
      %v4640 = vmul.f32 %v4626, %v4636
      %v4641 = vmul.f32 %v4627, %v4636
      %v4642 = vmul.f32 %v4628, %v4636
      %v4643 = vmul.f32 %v4629, %v4636
      %v4644 = vmul.f32 %v4630, %v4636
      %v4645 = vmul.f32 %v4631, %v4636
      %v4647 = vlaneseq
      %v4648 = vshrl.u32 %v4647, 7
      %v4649 = vsub.s32 0, %v4648
      %v4650 = vrot.slane %v4527, %v4649
      %v4652 = vadd.f32 %v4638, %v4650
      %v4653 = vadd.f32 %v4639, %v4650
      %v4654 = vadd.f32 %v4640, %v4650
      %v4655 = vadd.f32 %v4641, %v4650
      %v4656 = vadd.f32 %v4642, %v4650
      %v4657 = vadd.f32 %v4643, %v4650
      %v4658 = vadd.f32 %v4644, %v4650
      %v4659 = vadd.f32 %v4645, %v4650
      %v4660 = vsel %vm465, %v4652, 0.0
      %v4661 = vsel %vm465, %v4654, 0.0
      %v4662 = vadd.f32 %v4660, %v4661
      %v4663 = vsel %vm465, %v4656, 0.0
      %v4664 = vadd.f32 %v4662, %v4663
      %v4665 = vsel %vm465, %v4658, 0.0
      %v4666 = vadd.f32 %v4664, %v4665
      %v4667 = vsel %vm465, %v4653, 0.0
      %v4668 = vsel %vm465, %v4655, 0.0
      %v4669 = vadd.f32 %v4667, %v4668
      %v4670 = vsel %vm465, %v4657, 0.0
      %v4671 = vadd.f32 %v4669, %v4670
      %v4672 = vsel %vm465, %v4659, 0.0
      %v4673 = vadd.f32 %v4671, %v4672
      %4674 = vst.msk [vmem:[%s445] sm:$0xff] %vm465, %v4666
      %4675 = vst.msk [vmem:[%s445 + $0x8] sm:$0xff] %vm465, %v4673
      %p4676 = scmp.lt.s32.totalorder %s24, 1
      %s4677 = scalar_select %p4676, %s24, 1
      %s4678 = smul.addr %s4677, 2
      %s4679 = smul.addr %s4678, 8
      %s4680 = scalar_lea.vmem %s13, %s4679
      // Predicated region
      $region73: #{run_masked.2} parent=71 // pred_check
        %p4681 = pneg %p320
      $region74: #{run_masked.2} parent=71 // pred_check_branch
        %4683 = sbr.rel (%p4681) target = $region76
      $region75: #{run_masked.2} parent=71 // pred_region
        _
      $region76: #{run_masked.2} parent=71 // pred_fallthru
        _
    $region72: #{run_masked.2} parent=5 // pred_fallthru
      _
    %p4684 = scmp.le.s32.totalorder 2, %s19
    // Predicated region
    $region77: #{run_masked.2} parent=5 // pred_check
      %p4685 = pneg %p4684
    $region78: #{run_masked.2} parent=5 // pred_check_branch
      %4687 = sbr.rel (%p4685) target = $region80
    $region79: #{run_masked.2} parent=5 // pred_region
      %s4688 = ssub.s32 %s19, 2
      // Predicated region
      $region81: #{run_masked.2} parent=79 // pred_check
        %p4689 = pneg %p326
      $region82: #{run_masked.2} parent=79 // pred_check_branch
        %4691 = sbr.rel (%p4689) target = $region84
      $region83: #{run_masked.2} parent=79 // pred_region
        %p4692 = scmp.lt.s32.totalorder %s25, 1
        %s4693 = scalar_select %p4692, %s25, 1
        %s4694 = smul.addr %s4693, 2
        %s4695 = smul.addr %s4694, 8
        %s4696 = scalar_lea.vmem %s13, %s4695
      $region84: #{run_masked.2} parent=79 // pred_fallthru
        _
    $region80: #{run_masked.2} parent=5 // pred_fallthru
      _
  $region6: #{run_masked.2} parent=0 // loop_footer
    %s23 = sadd.s32 1, %s19
  $region7: #{run_masked.2} parent=0 // loop_footer_branch
    %18 = sbr.rel target = $region3
  $region8: #{run_masked.2} parent=0 // loop_exit
    _

</llo_original>
